<compile_context>
chip_gen: v5e
topology: v5e:2x2
jax: 0.10.0
libtpu: 0.0.40
codegen_flags: <defaults>
</compile_context>

<pallas_src>
import jax
import jax.numpy as jnp
from jax.experimental import pallas as pl
from jax.experimental.pallas import tpu as pltpu


def _sigmoid(v):
    return 1.0 / (1.0 + jnp.exp(-v))


def _rup(n, m):
    return ((n + m - 1) // m) * m


def _decoder_kernel(dec_i_ref, enc_hflat_ref, sch_ref, cat_f_ref,
                    enc_o_ref, enc_oT_ref, onehot_ref, keep_ref,
                    wh_ref, bh_ref, whs_ref, bhs_ref,
                    wih_ref, bih_ref, whh_ref, bhh_ref,
                    wcath_ref, wcata_ref, bp1_ref, wp2_ref, bp2_ref,
                    out_ref, h_scr, mask_scr):
    t_chunk = pl.program_id(1)
    Dp = h_scr.shape[-1]
    Dkp = enc_o_ref.shape[-1]
    Tc = dec_i_ref.shape[0]

    # ---- per batch tile: initial hidden (_proj) + t-invariant force_copy mask
    @pl.when(t_chunk == 0)
    def _():
        ph = jnp.dot(enc_hflat_ref[...], wh_ref[...],
                     preferred_element_type=jnp.float32) + bh_ref[...]
        ps = jnp.dot(sch_ref[...], whs_ref[...],
                     preferred_element_type=jnp.float32) + bhs_ref[...]
        h_scr[...] = jnp.maximum(ph, 0.0) + jnp.maximum(ps, 0.0)
        cat = cat_f_ref[...]                                  # (bt, 1)
        mask_scr[...] = cat + (1.0 - cat) * keep_ref[...]     # (bt, Vp), hoisted

    h = h_scr[...]                                            # (bt, Dp) f32 carry

    # Tc decode steps per grid iteration; Tc is small & static -> unrolled.
    # Wide (Vp) refs are indexed at their use site to bound live ranges.
    for i in range(Tc):
        x = dec_i_ref[i]                                      # (bt, Ep) f32
        xb = x.astype(jnp.bfloat16)
        hb = h.astype(jnp.bfloat16)

        # ---- GRU cell (gate order r,z,n); Wg_x/bg folded into last 128 lanes
        gi = jnp.dot(xb, wih_ref[...],
                     preferred_element_type=jnp.float32) + bih_ref[...]   # (bt, 3Dp+128)
        gh = jnp.dot(hb, whh_ref[...],
                     preferred_element_type=jnp.float32) + bhh_ref[...]   # (bt, 3Dp)
        r = _sigmoid(gi[:, :Dp] + gh[:, :Dp])
        z = _sigmoid(gi[:, Dp:2 * Dp] + gh[:, Dp:2 * Dp])
        n = jnp.tanh(gi[:, 2 * Dp:3 * Dp] + r * gh[:, 2 * Dp:3 * Dp])
        h = (1.0 - z) * n + z * h                                         # (bt, Dp)
        hb = h.astype(jnp.bfloat16)

        # ---- fused [Wattn | Wp1_h | Wg_h] on the new hidden ------------------
        hq = jnp.dot(hb, wcath_ref[...],
                     preferred_element_type=jnp.float32)      # (bt, Dkp+Dp+128)
        q = hq[:, :Dkp]

        # ---- attention (Luong "general") -------------------------------------
        scores = jnp.dot(q.astype(jnp.bfloat16), enc_oT_ref[...],
                         preferred_element_type=jnp.float32)  # (bt, S)
        scores = scores - jnp.max(scores, axis=-1, keepdims=True)
        es = jnp.exp(scores)
        dist = es * pl.reciprocal(jnp.sum(es, axis=-1, keepdims=True),
                                  approx=True)                # (bt, S)
        attn = jnp.dot(dist.astype(jnp.bfloat16), enc_o_ref[...],
                       preferred_element_type=jnp.float32)    # (bt, Dkp)

        # ---- fused [Wp1_a | Wg_a] on the context ------------------------------
        aq = jnp.dot(attn.astype(jnp.bfloat16), wcata_ref[...],
                     preferred_element_type=jnp.float32)      # (bt, Dp+128)

        # ---- extended-vocab softmax (pad/ext columns carry bias -1e30) -------
        p1 = hq[:, Dkp:Dkp + Dp] + aq[:, :Dp] + bp1_ref[...]  # (bt, Dp)
        lv = jnp.dot(p1.astype(jnp.bfloat16), wp2_ref[...],
                     preferred_element_type=jnp.float32) + bp2_ref[...]   # (bt, Vp)
        lv = lv - jnp.max(lv, axis=-1, keepdims=True)
        ev = jnp.exp(lv)
        vocab = ev * pl.reciprocal(jnp.sum(ev, axis=-1, keepdims=True),
                                   approx=True)               # (bt, Vp)

        # ---- copy gate: only lane 0 of each 128-lane gate block is nonzero ---
        gate_blk = gi[:, 3 * Dp:] + hq[:, Dkp + Dp:] + aq[:, Dp:]   # (bt, 128)
        gate = _sigmoid(jnp.sum(gate_blk, axis=-1, keepdims=True))  # (bt, 1)

        vocab_part = vocab * gate * mask_scr[...]             # force_copy masking
        copy_part = dist * (1.0 - gate)                       # (bt, S)

        # scatter_add of copy probs -> one (bt,S) x (S,Vp) MXU matmul
        scat = jnp.dot(copy_part.astype(jnp.bfloat16), onehot_ref[...],
                       preferred_element_type=jnp.float32)    # (bt, Vp)

        out_ref[:, pl.ds(i, 1), :] = (
            (vocab_part + scat)[:, None, :].astype(out_ref.dtype))

    h_scr[...] = h


def decoder_forward(weights, dec_i_all, enc_hflat, sch_o, enc_out, ext_i,
                    cat_f, special_tokens, n_ext, *, tc=None, bt=8):
    """weights: f32 dict in (in, out) layout (y = x @ W + b).
       dec_i_all:(T,B,E) f32   enc_hflat:(B,Dk*enc_lyr)   sch_o:(B,Dsch)
       enc_out:(S,Dk) (single source, NOT tiled to batch)  ext_i:(S,) int32
       cat_f:(B,1).  Returns (B, T, V+n_ext) bf16."""
    T, B, E = dec_i_all.shape
    S, Dk = enc_out.shape
    D = weights["Whh"].shape[0]
    V = weights["Wp2"].shape[1]
    VEXT = V + n_ext
    VP = _rup(VEXT, 128)
    DkL = enc_hflat.shape[-1]
    Dsch = sch_o.shape[-1]

    # lane-padded feature dims
    Dp, Ep, Dkp = _rup(D, 128), _rup(E, 128), _rup(Dk, 128)
    DkLp, Dschp = _rup(DkL, 128), _rup(Dsch, 128)
    G = 128                                     # gate lane block

    bt = max(8, bt)
    assert bt % 8 == 0
    Bp = _rup(B, bt)
    nb = Bp // bt

    tc = T if tc is None else tc
    nt = -(-T // tc)
    Tpad = nt * tc
    assert nt == 1 or tc % 8 == 0, "with nt > 1, tc must be a multiple of 8"

    f32, bf16 = jnp.float32, jnp.bfloat16

    def pad2(a, rows, cols):
        out = jnp.zeros((rows, cols), f32)
        return out.at[:a.shape[0], :a.shape[1]].set(a.astype(f32))

    # ---- weight prep (all slice boundaries at multiples of 128) --------------
    Wih, bih = weights["Wih"], weights["bih"]           # (E,3D), (1,3D)
    Whh, bhh = weights["Whh"], weights["bhh"]           # (D,3D), (1,3D)
    Wg, bg = weights["Wg"], weights["bg"]               # (Dk+D+E,1), (1,1)
    Wp1 = weights["Wp1"]                                # (D+Dk, D): [dec_r | attn]
    wg_a, wg_h, wg_x = Wg[:Dk], Wg[Dk:Dk + D], Wg[Dk + D:]

    gate_x_blk = jnp.zeros((Ep, G), f32).at[:E, :1].set(wg_x.astype(f32))
    wih_ext = jnp.concatenate(
        [pad2(Wih[:, g * D:(g + 1) * D], Ep, Dp) for g in range(3)]
        + [gate_x_blk], axis=1).astype(bf16)            # (Ep, 3Dp+G)
    bih_gate = jnp.zeros((1, G), f32).at[:, :1].set(bg.astype(f32))
    bih_ext = jnp.concatenate(
        [pad2(bih[:, g * D:(g + 1) * D], 1, Dp) for g in range(3)]
        + [bih_gate], axis=1)                           # (1, 3Dp+G)

    whh_pad = jnp.concatenate(
        [pad2(Whh[:, g * D:(g + 1) * D], Dp, Dp) for g in range(3)],
        axis=1).astype(bf16)                            # (Dp, 3Dp)
    bhh_pad = jnp.concatenate(
        [pad2(bhh[:, g * D:(g + 1) * D], 1, Dp) for g in range(3)], axis=1)

    gate_h_blk = jnp.zeros((Dp, G), f32).at[:D, :1].set(wg_h.astype(f32))
    wcat_h = jnp.concatenate(
        [pad2(weights["Wattn"], Dp, Dkp), pad2(Wp1[:D], Dp, Dp), gate_h_blk],
        axis=1).astype(bf16)                            # (Dp, Dkp+Dp+G)

    gate_a_blk = jnp.zeros((Dkp, G), f32).at[:Dk, :1].set(wg_a.astype(f32))
    wcat_a = jnp.concatenate(
        [pad2(Wp1[D:], Dkp, Dp), gate_a_blk], axis=1).astype(bf16)   # (Dkp, Dp+G)

    bp1_pad = pad2(weights["bp1"], 1, Dp)
    wp2_pad = pad2(weights["Wp2"], Dp, VP).astype(bf16)
    bp2_pad = jnp.full((1, VP), -1e30, f32).at[:, :V].set(weights["bp2"].astype(f32))

    wh_pad = pad2(weights["Wh"], DkLp, Dp).astype(bf16)
    bh_pad = pad2(weights["bh"], 1, Dp)
    whs_pad = pad2(weights["Whs"], Dschp, Dp).astype(bf16)
    bhs_pad = pad2(weights["bhs"], 1, Dp)

    # ---- input prep -----------------------------------------------------------
    dec_i_pad = jnp.zeros((Tpad, Bp, Ep), f32).at[:T, :B, :E].set(
        dec_i_all.astype(f32))
    enc_hflat_pad = pad2(enc_hflat, Bp, DkLp).astype(bf16)
    sch_pad = pad2(sch_o, Bp, Dschp).astype(bf16)
    cat_pad = jnp.ones((Bp, 1), f32).at[:B].set(cat_f.astype(f32))
    enc_o_pad = pad2(enc_out, S, Dkp).astype(bf16)           # (S, Dkp)
    enc_oT_pad = enc_o_pad.T                                 # (Dkp, S)
    keep = jnp.zeros((1, VP), f32).at[
        0, jnp.asarray(special_tokens, jnp.int32)].set(1.0)
    onehot = (ext_i.astype(jnp.int32)[:, None]
              == jnp.arange(VP, dtype=jnp.int32)[None, :]).astype(bf16)  # (S,VP)

    data = [dec_i_pad, enc_hflat_pad, sch_pad, cat_pad,
            enc_o_pad, enc_oT_pad, onehot, keep]
    params = [wh_pad, bh_pad, whs_pad, bhs_pad,
              wih_ext, bih_ext, whh_pad, bhh_pad,
              wcat_h, wcat_a, bp1_pad, wp2_pad, bp2_pad]

    # grid-invariant inputs: single-buffered (no 2x VMEM for constants)
    def const_spec(shape):
        nd = len(shape)
        return pl.BlockSpec(shape, lambda b, t, _nd=nd: (0,) * _nd,
                            pipeline_mode=pl.Buffered(buffer_count=1))

    in_specs = [
        pl.BlockSpec((tc, bt, Ep), lambda b, t: (t, b, 0)),   # dec_i
        pl.BlockSpec((bt, DkLp), lambda b, t: (b, 0)),        # enc_hflat
        pl.BlockSpec((bt, Dschp), lambda b, t: (b, 0)),       # sch_o
        pl.BlockSpec((bt, 1), lambda b, t: (b, 0)),           # cat_f
        const_spec((S, Dkp)),                                 # enc_o
        const_spec((Dkp, S)),                                 # enc_o^T
        const_spec((S, VP)),                                  # onehot scatter matrix
        const_spec((1, VP)),                                  # keep mask
    ] + [const_spec(p.shape) for p in params]

    # ---- VMEM budget: constants (x1) + varying tiles (x2) + out (x2) + scratch.
    # Capped at 64 MiB (valid on v7x); on v5e/v6e raise toward ~100 MiB.
    def nbytes(a):
        return int(a.size) * a.dtype.itemsize
    const_b = sum(nbytes(a) for a in data[4:]) + sum(nbytes(p) for p in params)
    vary_b = 2 * (tc * bt * Ep * 4 + bt * DkLp * 2 + bt * Dschp * 2 + bt * 4)
    out_b = 2 * (bt * tc * VP * 2)
    scratch_b = bt * Dp * 4 + bt * VP * 4
    vmem_limit = min(max(int(1.5 * (const_b + vary_b + out_b + scratch_b))
                         + (4 << 20), 32 << 20), 64 << 20)

    out = pl.pallas_call(
        _decoder_kernel,
        out_shape=jax.ShapeDtypeStruct((Bp, Tpad, VP), jnp.bfloat16),
        grid=(nb, nt),
        in_specs=in_specs,
        out_specs=pl.BlockSpec((bt, tc, VP), lambda b, t: (b, t, 0)),
        scratch_shapes=[pltpu.VMEM((bt, Dp), jnp.float32),
                        pltpu.VMEM((bt, VP), jnp.float32)],
        compiler_params=pltpu.CompilerParams(
            dimension_semantics=("parallel", "arbitrary"),
            vmem_limit_bytes=vmem_limit),
    )(*data, *params)

    # batch-leading output: no transpose, just drop padding.
    return out[:B, :T, :VEXT]


if __name__ == "__main__":
    # ---- small synthetic config ----------------------------------------------
    B, S, T = 4, 8, 6                 # slots (sch_o batch), src len, max_len
    ENC_DIM, BID, ENC_LYR = 8, 1, 1
    Dk = ENC_DIM * (1 + BID)          # 16
    DSCH = 16                         # config.sch.dim
    D, LYR = 16, 1                    # config.dec.dim, config.dec.lyr
    E = 16                            # config.emb.dim
    V, NEXT = 32, 8
    VEXT = V + NEXT
    BOS, EOS, UNK, PAD, DONTCARE = 0, 1, 2, 3, 4
    specials = [BOS, EOS, UNK, PAD, DONTCARE]

    key = jax.random.PRNGKey(0)
    ks = jax.random.split(key, 24)
    f32 = jnp.float32

    def nrm(k, shape, scale=0.1):
        return (scale * jax.random.normal(k, shape)).astype(f32)

    # deterministic synthetic parameters ((in, out) layout, i.e. y = x @ W + b)
    emb_w = nrm(ks[0], (V, E), 0.5)
    weights = dict(
        Wh=nrm(ks[1], (Dk * ENC_LYR, D * LYR)),  bh=nrm(ks[2], (1, D * LYR)),
        Whs=nrm(ks[3], (DSCH, D * LYR)),         bhs=nrm(ks[4], (1, D * LYR)),
        Wih=nrm(ks[5], (E, 3 * D)),              bih=nrm(ks[6], (1, 3 * D)),
        Whh=nrm(ks[7], (D, 3 * D)),              bhh=nrm(ks[8], (1, 3 * D)),
        Wattn=nrm(ks[9], (D * LYR, Dk)),
        Wg=nrm(ks[10], (Dk + D + E, 1)),         bg=nrm(ks[11], (1, 1)),
        Wp1=nrm(ks[12], (D + Dk, D)),            bp1=nrm(ks[13], (1, D)),
        Wp2=nrm(ks[14], (D, V)),                 bp2=nrm(ks[15], (1, V)),
    )

    # forward inputs
    enc_out = nrm(ks[16], (1, S, Dk), 1.0)                       # encoder outputs (batch 1)
    enc_h = nrm(ks[17], (ENC_LYR * (1 + BID), 1, ENC_DIM), 1.0)  # encoder final hidden
    sch_o = nrm(ks[18], (B, DSCH), 1.0)                          # schema/slot encodings
    ext_i = jax.random.randint(ks[19], (S,), 5, VEXT).astype(jnp.int32)
    unk_v = jax.random.randint(ks[20], (B, T), 0, V).astype(jnp.int32)  # teacher forcing
    cat_f = jnp.array([1.0, 0.0, 1.0, 0.0], dtype=f32).reshape(B, 1)

    # ---- plain-JAX glue (reshape / embedding lookup); enc_o stays un-tiled ---
    enc_o2d = enc_out[0]                                                   # (S, Dk)
    enc_hflat = jnp.tile(
        jnp.transpose(enc_h, (1, 0, 2)).reshape(1, -1), (B, 1))            # (B, Dk*lyr)
    tokens = jnp.concatenate(
        [jnp.full((B, 1), BOS, jnp.int32), unk_v[:, :T - 1]], axis=1)      # (B, T)
    dec_i_all = jnp.transpose(emb_w[tokens], (1, 0, 2))                    # (T, B, E)

    logits = decoder_forward(weights, dec_i_all, enc_hflat, sch_o,
                             enc_o2d, ext_i, cat_f, specials, NEXT,
                             tc=T, bt=8)
    logits = jax.block_until_ready(logits)

    assert logits.shape == (B, T, VEXT), logits.shape
    assert bool(jnp.all(jnp.isfinite(logits.astype(jnp.float32))))
    print("KERNEL_OK")
</pallas_src>

<mosaic_0001>
module attributes {stable_mosaic.version = 11 : i64} {
  func.func @_decoder_kernel(%arg0: i32, %arg1: i32, %arg2: memref<6x8x128xf32, #tpu.memory_space<vmem>>, %arg3: memref<8x128xbf16, #tpu.memory_space<vmem>>, %arg4: memref<8x128xbf16, #tpu.memory_space<vmem>>, %arg5: memref<8x1xf32, #tpu.memory_space<vmem>>, %arg6: memref<8x128xbf16, #tpu.memory_space<vmem>>, %arg7: memref<128x8xbf16, #tpu.memory_space<vmem>>, %arg8: memref<8x128xbf16, #tpu.memory_space<vmem>>, %arg9: memref<1x128xf32, #tpu.memory_space<vmem>>, %arg10: memref<128x128xbf16, #tpu.memory_space<vmem>>, %arg11: memref<1x128xf32, #tpu.memory_space<vmem>>, %arg12: memref<128x128xbf16, #tpu.memory_space<vmem>>, %arg13: memref<1x128xf32, #tpu.memory_space<vmem>>, %arg14: memref<128x512xbf16, #tpu.memory_space<vmem>>, %arg15: memref<1x512xf32, #tpu.memory_space<vmem>>, %arg16: memref<128x384xbf16, #tpu.memory_space<vmem>>, %arg17: memref<1x384xf32, #tpu.memory_space<vmem>>, %arg18: memref<128x384xbf16, #tpu.memory_space<vmem>>, %arg19: memref<128x256xbf16, #tpu.memory_space<vmem>>, %arg20: memref<1x128xf32, #tpu.memory_space<vmem>>, %arg21: memref<128x128xbf16, #tpu.memory_space<vmem>>, %arg22: memref<1x128xf32, #tpu.memory_space<vmem>>, %arg23: memref<8x6x128xbf16, #tpu.memory_space<vmem>>, %arg24: memref<8x128xf32, #tpu.memory_space<vmem>>, %arg25: memref<8x128xf32, #tpu.memory_space<vmem>>) attributes {dimension_semantics = [#tpu.dimension_semantics<parallel>, #tpu.dimension_semantics<arbitrary>], iteration_bounds = array<i64: 1, 1>, scalar_prefetch = 0 : i64, scratch_operands = 2 : i64, tpu.core_type = #tpu.core_type<tc>, window_params = [{transform_indices = @transform_0, window_bounds = array<i64: 6, 8, 128>}, {transform_indices = @transform_1, window_bounds = array<i64: 8, 128>}, {transform_indices = @transform_2, window_bounds = array<i64: 8, 128>}, {transform_indices = @transform_3, window_bounds = array<i64: 8, 1>}, {pipeline_mode = #tpu.pipeline_mode<synchronous>, transform_indices = @transform_4, window_bounds = array<i64: 8, 128>}, {pipeline_mode = #tpu.pipeline_mode<synchronous>, transform_indices = @transform_5, window_bounds = array<i64: 128, 8>}, {pipeline_mode = #tpu.pipeline_mode<synchronous>, transform_indices = @transform_6, window_bounds = array<i64: 8, 128>}, {pipeline_mode = #tpu.pipeline_mode<synchronous>, transform_indices = @transform_7, window_bounds = array<i64: 1, 128>}, {pipeline_mode = #tpu.pipeline_mode<synchronous>, transform_indices = @transform_8, window_bounds = array<i64: 128, 128>}, {pipeline_mode = #tpu.pipeline_mode<synchronous>, transform_indices = @transform_9, window_bounds = array<i64: 1, 128>}, {pipeline_mode = #tpu.pipeline_mode<synchronous>, transform_indices = @transform_10, window_bounds = array<i64: 128, 128>}, {pipeline_mode = #tpu.pipeline_mode<synchronous>, transform_indices = @transform_11, window_bounds = array<i64: 1, 128>}, {pipeline_mode = #tpu.pipeline_mode<synchronous>, transform_indices = @transform_12, window_bounds = array<i64: 128, 512>}, {pipeline_mode = #tpu.pipeline_mode<synchronous>, transform_indices = @transform_13, window_bounds = array<i64: 1, 512>}, {pipeline_mode = #tpu.pipeline_mode<synchronous>, transform_indices = @transform_14, window_bounds = array<i64: 128, 384>}, {pipeline_mode = #tpu.pipeline_mode<synchronous>, transform_indices = @transform_15, window_bounds = array<i64: 1, 384>}, {pipeline_mode = #tpu.pipeline_mode<synchronous>, transform_indices = @transform_16, window_bounds = array<i64: 128, 384>}, {pipeline_mode = #tpu.pipeline_mode<synchronous>, transform_indices = @transform_17, window_bounds = array<i64: 128, 256>}, {pipeline_mode = #tpu.pipeline_mode<synchronous>, transform_indices = @transform_18, window_bounds = array<i64: 1, 128>}, {pipeline_mode = #tpu.pipeline_mode<synchronous>, transform_indices = @transform_19, window_bounds = array<i64: 128, 128>}, {pipeline_mode = #tpu.pipeline_mode<synchronous>, transform_indices = @transform_20, window_bounds = array<i64: 1, 128>}, {transform_indices = @transform_21, window_bounds = array<i64: 8, 6, 128>}]} {
    %c0_i32 = arith.constant 0 : i32
    %0 = arith.cmpi eq, %arg1, %c0_i32 : i32
    %1 = arith.extui %0 : i1 to i32
    %c0_i32_0 = arith.constant 0 : i32
    %2 = arith.cmpi ne, %1, %c0_i32_0 : i32
    scf.if %2 {
      %c0_334 = arith.constant 0 : index
      %c0_335 = arith.constant 0 : index
      %713 = vector.load %arg3[%c0_334, %c0_335] : memref<8x128xbf16, #tpu.memory_space<vmem>>, vector<8x128xbf16>
      %c0_336 = arith.constant 0 : index
      %c0_337 = arith.constant 0 : index
      %714 = vector.load %arg10[%c0_336, %c0_337] : memref<128x128xbf16, #tpu.memory_space<vmem>>, vector<128x128xbf16>
      %cst_338 = arith.constant dense<0.000000e+00> : vector<8x128xf32>
      %715 = tpu.matmul %713, %714, %cst_338 {dimension_numbers = #tpu.dot_dimension_numbers<[1], [0], [0], [1], [0, 0, 1, 1], [], []>} : vector<8x128xbf16>, vector<128x128xbf16>, vector<8x128xf32> -> vector<8x128xf32>
      %c0_339 = arith.constant 0 : index
      %c0_340 = arith.constant 0 : index
      %716 = vector.load %arg11[%c0_339, %c0_340] : memref<1x128xf32, #tpu.memory_space<vmem>>, vector<1x128xf32>
      %717 = vector.broadcast %716 : vector<1x128xf32> to vector<8x128xf32>
      %718 = arith.addf %715, %717 : vector<8x128xf32>
      %c0_341 = arith.constant 0 : index
      %c0_342 = arith.constant 0 : index
      %719 = vector.load %arg4[%c0_341, %c0_342] : memref<8x128xbf16, #tpu.memory_space<vmem>>, vector<8x128xbf16>
      %c0_343 = arith.constant 0 : index
      %c0_344 = arith.constant 0 : index
      %720 = vector.load %arg12[%c0_343, %c0_344] : memref<128x128xbf16, #tpu.memory_space<vmem>>, vector<128x128xbf16>
      %cst_345 = arith.constant dense<0.000000e+00> : vector<8x128xf32>
      %721 = tpu.matmul %719, %720, %cst_345 {dimension_numbers = #tpu.dot_dimension_numbers<[1], [0], [0], [1], [0, 0, 1, 1], [], []>} : vector<8x128xbf16>, vector<128x128xbf16>, vector<8x128xf32> -> vector<8x128xf32>
      %c0_346 = arith.constant 0 : index
      %c0_347 = arith.constant 0 : index
      %722 = vector.load %arg13[%c0_346, %c0_347] : memref<1x128xf32, #tpu.memory_space<vmem>>, vector<1x128xf32>
      %723 = vector.broadcast %722 : vector<1x128xf32> to vector<8x128xf32>
      %724 = arith.addf %721, %723 : vector<8x128xf32>
      %cst_348 = arith.constant 0.000000e+00 : f32
      %725 = vector.broadcast %cst_348 : f32 to vector<8x128xf32>
      %726 = arith.maximumf %718, %725 : vector<8x128xf32>
      %cst_349 = arith.constant 0.000000e+00 : f32
      %727 = vector.broadcast %cst_349 : f32 to vector<8x128xf32>
      %728 = arith.maximumf %724, %727 : vector<8x128xf32>
      %729 = arith.addf %726, %728 : vector<8x128xf32>
      %c0_350 = arith.constant 0 : index
      %c0_351 = arith.constant 0 : index
      %730 = vector.load %arg24[%c0_350, %c0_351] : memref<8x128xf32, #tpu.memory_space<vmem>>, vector<8x128xf32>
      tpu.vector_store %arg24[%c0_350, %c0_351], %729 {strides = array<i32>} : memref<8x128xf32, #tpu.memory_space<vmem>>, vector<8x128xf32>,
      %c0_352 = arith.constant 0 : index
      %c0_353 = arith.constant 0 : index
      %731 = vector.load %arg5[%c0_352, %c0_353] : memref<8x1xf32, #tpu.memory_space<vmem>>, vector<8x1xf32>
      %cst_354 = arith.constant 1.000000e+00 : f32
      %732 = vector.broadcast %cst_354 : f32 to vector<8x1xf32>
      %733 = arith.subf %732, %731 : vector<8x1xf32>
      %c0_355 = arith.constant 0 : index
      %c0_356 = arith.constant 0 : index
      %734 = vector.load %arg9[%c0_355, %c0_356] : memref<1x128xf32, #tpu.memory_space<vmem>>, vector<1x128xf32>
      %735 = vector.broadcast %733 : vector<8x1xf32> to vector<8x128xf32>
      %736 = vector.broadcast %734 : vector<1x128xf32> to vector<8x128xf32>
      %737 = arith.mulf %735, %736 : vector<8x128xf32>
      %738 = vector.broadcast %731 : vector<8x1xf32> to vector<8x128xf32>
      %739 = arith.addf %738, %737 : vector<8x128xf32>
      %c0_357 = arith.constant 0 : index
      %c0_358 = arith.constant 0 : index
      %740 = vector.load %arg25[%c0_357, %c0_358] : memref<8x128xf32, #tpu.memory_space<vmem>>, vector<8x128xf32>
      tpu.vector_store %arg25[%c0_357, %c0_358], %739 {strides = array<i32>} : memref<8x128xf32, #tpu.memory_space<vmem>>, vector<8x128xf32>,
    } else {
    }
    %c0 = arith.constant 0 : index
    %c0_1 = arith.constant 0 : index
    %3 = vector.load %arg24[%c0, %c0_1] : memref<8x128xf32, #tpu.memory_space<vmem>>, vector<8x128xf32>
    %c0_2 = arith.constant 0 : index
    %c0_3 = arith.constant 0 : index
    %c0_4 = arith.constant 0 : index
    %4 = vector.load %arg2[%c0_2, %c0_3, %c0_4] : memref<6x8x128xf32, #tpu.memory_space<vmem>>, vector<1x8x128xf32>
    %5 = vector.shape_cast %4 : vector<1x8x128xf32> to vector<8x128xf32>
    %6 = arith.truncf %5 : vector<8x128xf32> to vector<8x128xbf16>
    %7 = arith.truncf %3 : vector<8x128xf32> to vector<8x128xbf16>
    %c0_5 = arith.constant 0 : index
    %c0_6 = arith.constant 0 : index
    %8 = vector.load %arg14[%c0_5, %c0_6] : memref<128x512xbf16, #tpu.memory_space<vmem>>, vector<128x512xbf16>
    %cst = arith.constant dense<0.000000e+00> : vector<8x512xf32>
    %9 = tpu.matmul %6, %8, %cst {dimension_numbers = #tpu.dot_dimension_numbers<[1], [0], [0], [1], [0, 0, 1, 1], [], []>} : vector<8x128xbf16>, vector<128x512xbf16>, vector<8x512xf32> -> vector<8x512xf32>
    %c0_7 = arith.constant 0 : index
    %c0_8 = arith.constant 0 : index
    %10 = vector.load %arg15[%c0_7, %c0_8] : memref<1x512xf32, #tpu.memory_space<vmem>>, vector<1x512xf32>
    %11 = vector.broadcast %10 : vector<1x512xf32> to vector<8x512xf32>
    %12 = arith.addf %9, %11 : vector<8x512xf32>
    %c0_9 = arith.constant 0 : index
    %c0_10 = arith.constant 0 : index
    %13 = vector.load %arg16[%c0_9, %c0_10] : memref<128x384xbf16, #tpu.memory_space<vmem>>, vector<128x384xbf16>
    %cst_11 = arith.constant dense<0.000000e+00> : vector<8x384xf32>
    %14 = tpu.matmul %7, %13, %cst_11 {dimension_numbers = #tpu.dot_dimension_numbers<[1], [0], [0], [1], [0, 0, 1, 1], [], []>} : vector<8x128xbf16>, vector<128x384xbf16>, vector<8x384xf32> -> vector<8x384xf32>
    %c0_12 = arith.constant 0 : index
    %c0_13 = arith.constant 0 : index
    %15 = vector.load %arg17[%c0_12, %c0_13] : memref<1x384xf32, #tpu.memory_space<vmem>>, vector<1x384xf32>
    %16 = vector.broadcast %15 : vector<1x384xf32> to vector<8x384xf32>
    %17 = arith.addf %14, %16 : vector<8x384xf32>
    %18 = vector.extract_strided_slice %12 {offsets = [0, 0], sizes = [8, 128], strides = [1, 1]} : vector<8x512xf32> to vector<8x128xf32>
    %19 = vector.extract_strided_slice %17 {offsets = [0, 0], sizes = [8, 128], strides = [1, 1]} : vector<8x384xf32> to vector<8x128xf32>
    %20 = arith.addf %18, %19 : vector<8x128xf32>
    %cst_14 = arith.constant 0.000000e+00 : f32
    %21 = vector.broadcast %cst_14 : f32 to vector<8x128xf32>
    %22 = arith.subf %21, %20 : vector<8x128xf32>
    %23 = math.exp %22 : vector<8x128xf32>
    %cst_15 = arith.constant 1.000000e+00 : f32
    %24 = vector.broadcast %cst_15 : f32 to vector<8x128xf32>
    %25 = arith.addf %24, %23 : vector<8x128xf32>
    %cst_16 = arith.constant 1.000000e+00 : f32
    %26 = vector.broadcast %cst_16 : f32 to vector<8x128xf32>
    %27 = arith.divf %26, %25 : vector<8x128xf32>
    %28 = vector.extract_strided_slice %12 {offsets = [0, 128], sizes = [8, 128], strides = [1, 1]} : vector<8x512xf32> to vector<8x128xf32>
    %29 = vector.extract_strided_slice %17 {offsets = [0, 128], sizes = [8, 128], strides = [1, 1]} : vector<8x384xf32> to vector<8x128xf32>
    %30 = arith.addf %28, %29 : vector<8x128xf32>
    %cst_17 = arith.constant 0.000000e+00 : f32
    %31 = vector.broadcast %cst_17 : f32 to vector<8x128xf32>
    %32 = arith.subf %31, %30 : vector<8x128xf32>
    %33 = math.exp %32 : vector<8x128xf32>
    %cst_18 = arith.constant 1.000000e+00 : f32
    %34 = vector.broadcast %cst_18 : f32 to vector<8x128xf32>
    %35 = arith.addf %34, %33 : vector<8x128xf32>
    %cst_19 = arith.constant 1.000000e+00 : f32
    %36 = vector.broadcast %cst_19 : f32 to vector<8x128xf32>
    %37 = arith.divf %36, %35 : vector<8x128xf32>
    %38 = vector.extract_strided_slice %12 {offsets = [0, 256], sizes = [8, 128], strides = [1, 1]} : vector<8x512xf32> to vector<8x128xf32>
    %39 = vector.extract_strided_slice %17 {offsets = [0, 256], sizes = [8, 128], strides = [1, 1]} : vector<8x384xf32> to vector<8x128xf32>
    %40 = arith.mulf %27, %39 : vector<8x128xf32>
    %41 = arith.addf %38, %40 : vector<8x128xf32>
    %42 = math.tanh %41 : vector<8x128xf32>
    %cst_20 = arith.constant 1.000000e+00 : f32
    %43 = vector.broadcast %cst_20 : f32 to vector<8x128xf32>
    %44 = arith.subf %43, %37 : vector<8x128xf32>
    %45 = arith.mulf %44, %42 : vector<8x128xf32>
    %46 = arith.mulf %37, %3 : vector<8x128xf32>
    %47 = arith.addf %45, %46 : vector<8x128xf32>
    %48 = arith.truncf %47 : vector<8x128xf32> to vector<8x128xbf16>
    %c0_21 = arith.constant 0 : index
    %c0_22 = arith.constant 0 : index
    %49 = vector.load %arg18[%c0_21, %c0_22] : memref<128x384xbf16, #tpu.memory_space<vmem>>, vector<128x384xbf16>
    %cst_23 = arith.constant dense<0.000000e+00> : vector<8x384xf32>
    %50 = tpu.matmul %48, %49, %cst_23 {dimension_numbers = #tpu.dot_dimension_numbers<[1], [0], [0], [1], [0, 0, 1, 1], [], []>} : vector<8x128xbf16>, vector<128x384xbf16>, vector<8x384xf32> -> vector<8x384xf32>
    %51 = vector.extract_strided_slice %50 {offsets = [0, 0], sizes = [8, 128], strides = [1, 1]} : vector<8x384xf32> to vector<8x128xf32>
    %52 = arith.truncf %51 : vector<8x128xf32> to vector<8x128xbf16>
    %c0_24 = arith.constant 0 : index
    %c0_25 = arith.constant 0 : index
    %53 = vector.load %arg7[%c0_24, %c0_25] : memref<128x8xbf16, #tpu.memory_space<vmem>>, vector<128x8xbf16>
    %cst_26 = arith.constant dense<0.000000e+00> : vector<8x8xf32>
    %54 = tpu.matmul %52, %53, %cst_26 {dimension_numbers = #tpu.dot_dimension_numbers<[1], [0], [0], [1], [0, 0, 1, 1], [], []>} : vector<8x128xbf16>, vector<128x8xbf16>, vector<8x8xf32> -> vector<8x8xf32>
    %cst_27 = arith.constant dense<0xFF800000> : vector<8xf32>
    %55 = vector.multi_reduction <maximumf>, %54, %cst_27 [1] : vector<8x8xf32> to vector<8xf32>
    %56 = vector.shape_cast %55 : vector<8xf32> to vector<8x1xf32>
    %57 = vector.broadcast %56 : vector<8x1xf32> to vector<8x8xf32>
    %58 = arith.subf %54, %57 : vector<8x8xf32>
    %59 = math.exp %58 : vector<8x8xf32>
    %cst_28 = arith.constant dense<0.000000e+00> : vector<8xf32>
    %60 = vector.multi_reduction <add>, %59, %cst_28 [1] : vector<8x8xf32> to vector<8xf32>
    %61 = vector.shape_cast %60 : vector<8xf32> to vector<8x1xf32>
    %62 = tpu.reciprocal %61 {approx = true} : vector<8x1xf32> -> vector<8x1xf32>
    %63 = vector.broadcast %62 : vector<8x1xf32> to vector<8x8xf32>
    %64 = arith.mulf %59, %63 : vector<8x8xf32>
    %65 = arith.truncf %64 : vector<8x8xf32> to vector<8x8xbf16>
    %c0_29 = arith.constant 0 : index
    %c0_30 = arith.constant 0 : index
    %66 = vector.load %arg6[%c0_29, %c0_30] : memref<8x128xbf16, #tpu.memory_space<vmem>>, vector<8x128xbf16>
    %cst_31 = arith.constant dense<0.000000e+00> : vector<8x128xf32>
    %67 = tpu.matmul %65, %66, %cst_31 {dimension_numbers = #tpu.dot_dimension_numbers<[1], [0], [0], [1], [0, 0, 1, 1], [], []>} : vector<8x8xbf16>, vector<8x128xbf16>, vector<8x128xf32> -> vector<8x128xf32>
    %68 = arith.truncf %67 : vector<8x128xf32> to vector<8x128xbf16>
    %c0_32 = arith.constant 0 : index
    %c0_33 = arith.constant 0 : index
    %69 = vector.load %arg19[%c0_32, %c0_33] : memref<128x256xbf16, #tpu.memory_space<vmem>>, vector<128x256xbf16>
    %cst_34 = arith.constant dense<0.000000e+00> : vector<8x256xf32>
    %70 = tpu.matmul %68, %69, %cst_34 {dimension_numbers = #tpu.dot_dimension_numbers<[1], [0], [0], [1], [0, 0, 1, 1], [], []>} : vector<8x128xbf16>, vector<128x256xbf16>, vector<8x256xf32> -> vector<8x256xf32>
    %71 = vector.extract_strided_slice %50 {offsets = [0, 128], sizes = [8, 128], strides = [1, 1]} : vector<8x384xf32> to vector<8x128xf32>
    %72 = vector.extract_strided_slice %70 {offsets = [0, 0], sizes = [8, 128], strides = [1, 1]} : vector<8x256xf32> to vector<8x128xf32>
    %73 = arith.addf %71, %72 : vector<8x128xf32>
    %c0_35 = arith.constant 0 : index
    %c0_36 = arith.constant 0 : index
    %74 = vector.load %arg20[%c0_35, %c0_36] : memref<1x128xf32, #tpu.memory_space<vmem>>, vector<1x128xf32>
    %75 = vector.broadcast %74 : vector<1x128xf32> to vector<8x128xf32>
    %76 = arith.addf %73, %75 : vector<8x128xf32>
    %77 = arith.truncf %76 : vector<8x128xf32> to vector<8x128xbf16>
    %c0_37 = arith.constant 0 : index
    %c0_38 = arith.constant 0 : index
    %78 = vector.load %arg21[%c0_37, %c0_38] : memref<128x128xbf16, #tpu.memory_space<vmem>>, vector<128x128xbf16>
    %cst_39 = arith.constant dense<0.000000e+00> : vector<8x128xf32>
    %79 = tpu.matmul %77, %78, %cst_39 {dimension_numbers = #tpu.dot_dimension_numbers<[1], [0], [0], [1], [0, 0, 1, 1], [], []>} : vector<8x128xbf16>, vector<128x128xbf16>, vector<8x128xf32> -> vector<8x128xf32>
    %c0_40 = arith.constant 0 : index
    %c0_41 = arith.constant 0 : index
    %80 = vector.load %arg22[%c0_40, %c0_41] : memref<1x128xf32, #tpu.memory_space<vmem>>, vector<1x128xf32>
    %81 = vector.broadcast %80 : vector<1x128xf32> to vector<8x128xf32>
    %82 = arith.addf %79, %81 : vector<8x128xf32>
    %cst_42 = arith.constant dense<0xFF800000> : vector<8xf32>
    %83 = vector.multi_reduction <maximumf>, %82, %cst_42 [1] : vector<8x128xf32> to vector<8xf32>
    %84 = vector.shape_cast %83 : vector<8xf32> to vector<8x1xf32>
    %85 = vector.broadcast %84 : vector<8x1xf32> to vector<8x128xf32>
    %86 = arith.subf %82, %85 : vector<8x128xf32>
    %87 = math.exp %86 : vector<8x128xf32>
    %cst_43 = arith.constant dense<0.000000e+00> : vector<8xf32>
    %88 = vector.multi_reduction <add>, %87, %cst_43 [1] : vector<8x128xf32> to vector<8xf32>
    %89 = vector.shape_cast %88 : vector<8xf32> to vector<8x1xf32>
    %90 = tpu.reciprocal %89 {approx = true} : vector<8x1xf32> -> vector<8x1xf32>
    %91 = vector.broadcast %90 : vector<8x1xf32> to vector<8x128xf32>
    %92 = arith.mulf %87, %91 : vector<8x128xf32>
    %93 = vector.extract_strided_slice %12 {offsets = [0, 384], sizes = [8, 128], strides = [1, 1]} : vector<8x512xf32> to vector<8x128xf32>
    %94 = vector.extract_strided_slice %50 {offsets = [0, 256], sizes = [8, 128], strides = [1, 1]} : vector<8x384xf32> to vector<8x128xf32>
    %95 = arith.addf %93, %94 : vector<8x128xf32>
    %96 = vector.extract_strided_slice %70 {offsets = [0, 128], sizes = [8, 128], strides = [1, 1]} : vector<8x256xf32> to vector<8x128xf32>
    %97 = arith.addf %95, %96 : vector<8x128xf32>
    %cst_44 = arith.constant dense<0.000000e+00> : vector<8xf32>
    %98 = vector.multi_reduction <add>, %97, %cst_44 [1] : vector<8x128xf32> to vector<8xf32>
    %99 = vector.shape_cast %98 : vector<8xf32> to vector<8x1xf32>
    %cst_45 = arith.constant 0.000000e+00 : f32
    %100 = vector.broadcast %cst_45 : f32 to vector<8x1xf32>
    %101 = arith.subf %100, %99 : vector<8x1xf32>
    %102 = math.exp %101 : vector<8x1xf32>
    %cst_46 = arith.constant 1.000000e+00 : f32
    %103 = vector.broadcast %cst_46 : f32 to vector<8x1xf32>
    %104 = arith.addf %103, %102 : vector<8x1xf32>
    %cst_47 = arith.constant 1.000000e+00 : f32
    %105 = vector.broadcast %cst_47 : f32 to vector<8x1xf32>
    %106 = arith.divf %105, %104 : vector<8x1xf32>
    %107 = vector.broadcast %106 : vector<8x1xf32> to vector<8x128xf32>
    %108 = arith.mulf %92, %107 : vector<8x128xf32>
    %c0_48 = arith.constant 0 : index
    %c0_49 = arith.constant 0 : index
    %109 = vector.load %arg25[%c0_48, %c0_49] : memref<8x128xf32, #tpu.memory_space<vmem>>, vector<8x128xf32>
    %110 = arith.mulf %108, %109 : vector<8x128xf32>
    %cst_50 = arith.constant 1.000000e+00 : f32
    %111 = vector.broadcast %cst_50 : f32 to vector<8x1xf32>
    %112 = arith.subf %111, %106 : vector<8x1xf32>
    %113 = vector.broadcast %112 : vector<8x1xf32> to vector<8x8xf32>
    %114 = arith.mulf %64, %113 : vector<8x8xf32>
    %115 = arith.truncf %114 : vector<8x8xf32> to vector<8x8xbf16>
    %c0_51 = arith.constant 0 : index
    %c0_52 = arith.constant 0 : index
    %116 = vector.load %arg8[%c0_51, %c0_52] : memref<8x128xbf16, #tpu.memory_space<vmem>>, vector<8x128xbf16>
    %cst_53 = arith.constant dense<0.000000e+00> : vector<8x128xf32>
    %117 = tpu.matmul %115, %116, %cst_53 {dimension_numbers = #tpu.dot_dimension_numbers<[1], [0], [0], [1], [0, 0, 1, 1], [], []>} : vector<8x8xbf16>, vector<8x128xbf16>, vector<8x128xf32> -> vector<8x128xf32>
    %118 = arith.addf %110, %117 : vector<8x128xf32>
    %119 = vector.shape_cast %118 : vector<8x128xf32> to vector<8x1x128xf32>
    %120 = arith.truncf %119 : vector<8x1x128xf32> to vector<8x1x128xbf16>
    %c0_54 = arith.constant 0 : index
    %c0_55 = arith.constant 0 : index
    %c0_56 = arith.constant 0 : index
    %121 = vector.load %arg23[%c0_54, %c0_55, %c0_56] : memref<8x6x128xbf16, #tpu.memory_space<vmem>>, vector<8x1x128xbf16>
    tpu.vector_store %arg23[%c0_54, %c0_55, %c0_56], %120 {strides = array<i32>} : memref<8x6x128xbf16, #tpu.memory_space<vmem>>, vector<8x1x128xbf16>,
    %c1 = arith.constant 1 : index
    %c0_57 = arith.constant 0 : index
    %c0_58 = arith.constant 0 : index
    %122 = vector.load %arg2[%c1, %c0_57, %c0_58] : memref<6x8x128xf32, #tpu.memory_space<vmem>>, vector<1x8x128xf32>
    %123 = vector.shape_cast %122 : vector<1x8x128xf32> to vector<8x128xf32>
    %124 = arith.truncf %123 : vector<8x128xf32> to vector<8x128xbf16>
    %125 = arith.truncf %47 : vector<8x128xf32> to vector<8x128xbf16>
    %c0_59 = arith.constant 0 : index
    %c0_60 = arith.constant 0 : index
    %126 = vector.load %arg14[%c0_59, %c0_60] : memref<128x512xbf16, #tpu.memory_space<vmem>>, vector<128x512xbf16>
    %cst_61 = arith.constant dense<0.000000e+00> : vector<8x512xf32>
    %127 = tpu.matmul %124, %126, %cst_61 {dimension_numbers = #tpu.dot_dimension_numbers<[1], [0], [0], [1], [0, 0, 1, 1], [], []>} : vector<8x128xbf16>, vector<128x512xbf16>, vector<8x512xf32> -> vector<8x512xf32>
    %c0_62 = arith.constant 0 : index
    %c0_63 = arith.constant 0 : index
    %128 = vector.load %arg15[%c0_62, %c0_63] : memref<1x512xf32, #tpu.memory_space<vmem>>, vector<1x512xf32>
    %129 = vector.broadcast %128 : vector<1x512xf32> to vector<8x512xf32>
    %130 = arith.addf %127, %129 : vector<8x512xf32>
    %c0_64 = arith.constant 0 : index
    %c0_65 = arith.constant 0 : index
    %131 = vector.load %arg16[%c0_64, %c0_65] : memref<128x384xbf16, #tpu.memory_space<vmem>>, vector<128x384xbf16>
    %cst_66 = arith.constant dense<0.000000e+00> : vector<8x384xf32>
    %132 = tpu.matmul %125, %131, %cst_66 {dimension_numbers = #tpu.dot_dimension_numbers<[1], [0], [0], [1], [0, 0, 1, 1], [], []>} : vector<8x128xbf16>, vector<128x384xbf16>, vector<8x384xf32> -> vector<8x384xf32>
    %c0_67 = arith.constant 0 : index
    %c0_68 = arith.constant 0 : index
    %133 = vector.load %arg17[%c0_67, %c0_68] : memref<1x384xf32, #tpu.memory_space<vmem>>, vector<1x384xf32>
    %134 = vector.broadcast %133 : vector<1x384xf32> to vector<8x384xf32>
    %135 = arith.addf %132, %134 : vector<8x384xf32>
    %136 = vector.extract_strided_slice %130 {offsets = [0, 0], sizes = [8, 128], strides = [1, 1]} : vector<8x512xf32> to vector<8x128xf32>
    %137 = vector.extract_strided_slice %135 {offsets = [0, 0], sizes = [8, 128], strides = [1, 1]} : vector<8x384xf32> to vector<8x128xf32>
    %138 = arith.addf %136, %137 : vector<8x128xf32>
    %cst_69 = arith.constant 0.000000e+00 : f32
    %139 = vector.broadcast %cst_69 : f32 to vector<8x128xf32>
    %140 = arith.subf %139, %138 : vector<8x128xf32>
    %141 = math.exp %140 : vector<8x128xf32>
    %cst_70 = arith.constant 1.000000e+00 : f32
    %142 = vector.broadcast %cst_70 : f32 to vector<8x128xf32>
    %143 = arith.addf %142, %141 : vector<8x128xf32>
    %cst_71 = arith.constant 1.000000e+00 : f32
    %144 = vector.broadcast %cst_71 : f32 to vector<8x128xf32>
    %145 = arith.divf %144, %143 : vector<8x128xf32>
    %146 = vector.extract_strided_slice %130 {offsets = [0, 128], sizes = [8, 128], strides = [1, 1]} : vector<8x512xf32> to vector<8x128xf32>
    %147 = vector.extract_strided_slice %135 {offsets = [0, 128], sizes = [8, 128], strides = [1, 1]} : vector<8x384xf32> to vector<8x128xf32>
    %148 = arith.addf %146, %147 : vector<8x128xf32>
    %cst_72 = arith.constant 0.000000e+00 : f32
    %149 = vector.broadcast %cst_72 : f32 to vector<8x128xf32>
    %150 = arith.subf %149, %148 : vector<8x128xf32>
    %151 = math.exp %150 : vector<8x128xf32>
    %cst_73 = arith.constant 1.000000e+00 : f32
    %152 = vector.broadcast %cst_73 : f32 to vector<8x128xf32>
    %153 = arith.addf %152, %151 : vector<8x128xf32>
    %cst_74 = arith.constant 1.000000e+00 : f32
    %154 = vector.broadcast %cst_74 : f32 to vector<8x128xf32>
    %155 = arith.divf %154, %153 : vector<8x128xf32>
    %156 = vector.extract_strided_slice %130 {offsets = [0, 256], sizes = [8, 128], strides = [1, 1]} : vector<8x512xf32> to vector<8x128xf32>
    %157 = vector.extract_strided_slice %135 {offsets = [0, 256], sizes = [8, 128], strides = [1, 1]} : vector<8x384xf32> to vector<8x128xf32>
    %158 = arith.mulf %145, %157 : vector<8x128xf32>
    %159 = arith.addf %156, %158 : vector<8x128xf32>
    %160 = math.tanh %159 : vector<8x128xf32>
    %cst_75 = arith.constant 1.000000e+00 : f32
    %161 = vector.broadcast %cst_75 : f32 to vector<8x128xf32>
    %162 = arith.subf %161, %155 : vector<8x128xf32>
    %163 = arith.mulf %162, %160 : vector<8x128xf32>
    %164 = arith.mulf %155, %47 : vector<8x128xf32>
    %165 = arith.addf %163, %164 : vector<8x128xf32>
    %166 = arith.truncf %165 : vector<8x128xf32> to vector<8x128xbf16>
    %c0_76 = arith.constant 0 : index
    %c0_77 = arith.constant 0 : index
    %167 = vector.load %arg18[%c0_76, %c0_77] : memref<128x384xbf16, #tpu.memory_space<vmem>>, vector<128x384xbf16>
    %cst_78 = arith.constant dense<0.000000e+00> : vector<8x384xf32>
    %168 = tpu.matmul %166, %167, %cst_78 {dimension_numbers = #tpu.dot_dimension_numbers<[1], [0], [0], [1], [0, 0, 1, 1], [], []>} : vector<8x128xbf16>, vector<128x384xbf16>, vector<8x384xf32> -> vector<8x384xf32>
    %169 = vector.extract_strided_slice %168 {offsets = [0, 0], sizes = [8, 128], strides = [1, 1]} : vector<8x384xf32> to vector<8x128xf32>
    %170 = arith.truncf %169 : vector<8x128xf32> to vector<8x128xbf16>
    %c0_79 = arith.constant 0 : index
    %c0_80 = arith.constant 0 : index
    %171 = vector.load %arg7[%c0_79, %c0_80] : memref<128x8xbf16, #tpu.memory_space<vmem>>, vector<128x8xbf16>
    %cst_81 = arith.constant dense<0.000000e+00> : vector<8x8xf32>
    %172 = tpu.matmul %170, %171, %cst_81 {dimension_numbers = #tpu.dot_dimension_numbers<[1], [0], [0], [1], [0, 0, 1, 1], [], []>} : vector<8x128xbf16>, vector<128x8xbf16>, vector<8x8xf32> -> vector<8x8xf32>
    %cst_82 = arith.constant dense<0xFF800000> : vector<8xf32>
    %173 = vector.multi_reduction <maximumf>, %172, %cst_82 [1] : vector<8x8xf32> to vector<8xf32>
    %174 = vector.shape_cast %173 : vector<8xf32> to vector<8x1xf32>
    %175 = vector.broadcast %174 : vector<8x1xf32> to vector<8x8xf32>
    %176 = arith.subf %172, %175 : vector<8x8xf32>
    %177 = math.exp %176 : vector<8x8xf32>
    %cst_83 = arith.constant dense<0.000000e+00> : vector<8xf32>
    %178 = vector.multi_reduction <add>, %177, %cst_83 [1] : vector<8x8xf32> to vector<8xf32>
    %179 = vector.shape_cast %178 : vector<8xf32> to vector<8x1xf32>
    %180 = tpu.reciprocal %179 {approx = true} : vector<8x1xf32> -> vector<8x1xf32>
    %181 = vector.broadcast %180 : vector<8x1xf32> to vector<8x8xf32>
    %182 = arith.mulf %177, %181 : vector<8x8xf32>
    %183 = arith.truncf %182 : vector<8x8xf32> to vector<8x8xbf16>
    %c0_84 = arith.constant 0 : index
    %c0_85 = arith.constant 0 : index
    %184 = vector.load %arg6[%c0_84, %c0_85] : memref<8x128xbf16, #tpu.memory_space<vmem>>, vector<8x128xbf16>
    %cst_86 = arith.constant dense<0.000000e+00> : vector<8x128xf32>
    %185 = tpu.matmul %183, %184, %cst_86 {dimension_numbers = #tpu.dot_dimension_numbers<[1], [0], [0], [1], [0, 0, 1, 1], [], []>} : vector<8x8xbf16>, vector<8x128xbf16>, vector<8x128xf32> -> vector<8x128xf32>
    %186 = arith.truncf %185 : vector<8x128xf32> to vector<8x128xbf16>
    %c0_87 = arith.constant 0 : index
    %c0_88 = arith.constant 0 : index
    %187 = vector.load %arg19[%c0_87, %c0_88] : memref<128x256xbf16, #tpu.memory_space<vmem>>, vector<128x256xbf16>
    %cst_89 = arith.constant dense<0.000000e+00> : vector<8x256xf32>
    %188 = tpu.matmul %186, %187, %cst_89 {dimension_numbers = #tpu.dot_dimension_numbers<[1], [0], [0], [1], [0, 0, 1, 1], [], []>} : vector<8x128xbf16>, vector<128x256xbf16>, vector<8x256xf32> -> vector<8x256xf32>
    %189 = vector.extract_strided_slice %168 {offsets = [0, 128], sizes = [8, 128], strides = [1, 1]} : vector<8x384xf32> to vector<8x128xf32>
    %190 = vector.extract_strided_slice %188 {offsets = [0, 0], sizes = [8, 128], strides = [1, 1]} : vector<8x256xf32> to vector<8x128xf32>
    %191 = arith.addf %189, %190 : vector<8x128xf32>
    %c0_90 = arith.constant 0 : index
    %c0_91 = arith.constant 0 : index
    %192 = vector.load %arg20[%c0_90, %c0_91] : memref<1x128xf32, #tpu.memory_space<vmem>>, vector<1x128xf32>
    %193 = vector.broadcast %192 : vector<1x128xf32> to vector<8x128xf32>
    %194 = arith.addf %191, %193 : vector<8x128xf32>
    %195 = arith.truncf %194 : vector<8x128xf32> to vector<8x128xbf16>
    %c0_92 = arith.constant 0 : index
    %c0_93 = arith.constant 0 : index
    %196 = vector.load %arg21[%c0_92, %c0_93] : memref<128x128xbf16, #tpu.memory_space<vmem>>, vector<128x128xbf16>
    %cst_94 = arith.constant dense<0.000000e+00> : vector<8x128xf32>
    %197 = tpu.matmul %195, %196, %cst_94 {dimension_numbers = #tpu.dot_dimension_numbers<[1], [0], [0], [1], [0, 0, 1, 1], [], []>} : vector<8x128xbf16>, vector<128x128xbf16>, vector<8x128xf32> -> vector<8x128xf32>
    %c0_95 = arith.constant 0 : index
    %c0_96 = arith.constant 0 : index
    %198 = vector.load %arg22[%c0_95, %c0_96] : memref<1x128xf32, #tpu.memory_space<vmem>>, vector<1x128xf32>
    %199 = vector.broadcast %198 : vector<1x128xf32> to vector<8x128xf32>
    %200 = arith.addf %197, %199 : vector<8x128xf32>
    %cst_97 = arith.constant dense<0xFF800000> : vector<8xf32>
    %201 = vector.multi_reduction <maximumf>, %200, %cst_97 [1] : vector<8x128xf32> to vector<8xf32>
    %202 = vector.shape_cast %201 : vector<8xf32> to vector<8x1xf32>
    %203 = vector.broadcast %202 : vector<8x1xf32> to vector<8x128xf32>
    %204 = arith.subf %200, %203 : vector<8x128xf32>
    %205 = math.exp %204 : vector<8x128xf32>
    %cst_98 = arith.constant dense<0.000000e+00> : vector<8xf32>
    %206 = vector.multi_reduction <add>, %205, %cst_98 [1] : vector<8x128xf32> to vector<8xf32>
    %207 = vector.shape_cast %206 : vector<8xf32> to vector<8x1xf32>
    %208 = tpu.reciprocal %207 {approx = true} : vector<8x1xf32> -> vector<8x1xf32>
    %209 = vector.broadcast %208 : vector<8x1xf32> to vector<8x128xf32>
    %210 = arith.mulf %205, %209 : vector<8x128xf32>
    %211 = vector.extract_strided_slice %130 {offsets = [0, 384], sizes = [8, 128], strides = [1, 1]} : vector<8x512xf32> to vector<8x128xf32>
    %212 = vector.extract_strided_slice %168 {offsets = [0, 256], sizes = [8, 128], strides = [1, 1]} : vector<8x384xf32> to vector<8x128xf32>
    %213 = arith.addf %211, %212 : vector<8x128xf32>
    %214 = vector.extract_strided_slice %188 {offsets = [0, 128], sizes = [8, 128], strides = [1, 1]} : vector<8x256xf32> to vector<8x128xf32>
    %215 = arith.addf %213, %214 : vector<8x128xf32>
    %cst_99 = arith.constant dense<0.000000e+00> : vector<8xf32>
    %216 = vector.multi_reduction <add>, %215, %cst_99 [1] : vector<8x128xf32> to vector<8xf32>
    %217 = vector.shape_cast %216 : vector<8xf32> to vector<8x1xf32>
    %cst_100 = arith.constant 0.000000e+00 : f32
    %218 = vector.broadcast %cst_100 : f32 to vector<8x1xf32>
    %219 = arith.subf %218, %217 : vector<8x1xf32>
    %220 = math.exp %219 : vector<8x1xf32>
    %cst_101 = arith.constant 1.000000e+00 : f32
    %221 = vector.broadcast %cst_101 : f32 to vector<8x1xf32>
    %222 = arith.addf %221, %220 : vector<8x1xf32>
    %cst_102 = arith.constant 1.000000e+00 : f32
    %223 = vector.broadcast %cst_102 : f32 to vector<8x1xf32>
    %224 = arith.divf %223, %222 : vector<8x1xf32>
    %225 = vector.broadcast %224 : vector<8x1xf32> to vector<8x128xf32>
    %226 = arith.mulf %210, %225 : vector<8x128xf32>
    %c0_103 = arith.constant 0 : index
    %c0_104 = arith.constant 0 : index
    %227 = vector.load %arg25[%c0_103, %c0_104] : memref<8x128xf32, #tpu.memory_space<vmem>>, vector<8x128xf32>
    %228 = arith.mulf %226, %227 : vector<8x128xf32>
    %cst_105 = arith.constant 1.000000e+00 : f32
    %229 = vector.broadcast %cst_105 : f32 to vector<8x1xf32>
    %230 = arith.subf %229, %224 : vector<8x1xf32>
    %231 = vector.broadcast %230 : vector<8x1xf32> to vector<8x8xf32>
    %232 = arith.mulf %182, %231 : vector<8x8xf32>
    %233 = arith.truncf %232 : vector<8x8xf32> to vector<8x8xbf16>
    %c0_106 = arith.constant 0 : index
    %c0_107 = arith.constant 0 : index
    %234 = vector.load %arg8[%c0_106, %c0_107] : memref<8x128xbf16, #tpu.memory_space<vmem>>, vector<8x128xbf16>
    %cst_108 = arith.constant dense<0.000000e+00> : vector<8x128xf32>
    %235 = tpu.matmul %233, %234, %cst_108 {dimension_numbers = #tpu.dot_dimension_numbers<[1], [0], [0], [1], [0, 0, 1, 1], [], []>} : vector<8x8xbf16>, vector<8x128xbf16>, vector<8x128xf32> -> vector<8x128xf32>
    %236 = arith.addf %228, %235 : vector<8x128xf32>
    %237 = vector.shape_cast %236 : vector<8x128xf32> to vector<8x1x128xf32>
    %238 = arith.truncf %237 : vector<8x1x128xf32> to vector<8x1x128xbf16>
    %c0_109 = arith.constant 0 : index
    %c1_110 = arith.constant 1 : index
    %c0_111 = arith.constant 0 : index
    %239 = vector.load %arg23[%c0_109, %c1_110, %c0_111] : memref<8x6x128xbf16, #tpu.memory_space<vmem>>, vector<8x1x128xbf16>
    tpu.vector_store %arg23[%c0_109, %c1_110, %c0_111], %238 {strides = array<i32>} : memref<8x6x128xbf16, #tpu.memory_space<vmem>>, vector<8x1x128xbf16>,
    %c2 = arith.constant 2 : index
    %c0_112 = arith.constant 0 : index
    %c0_113 = arith.constant 0 : index
    %240 = vector.load %arg2[%c2, %c0_112, %c0_113] : memref<6x8x128xf32, #tpu.memory_space<vmem>>, vector<1x8x128xf32>
    %241 = vector.shape_cast %240 : vector<1x8x128xf32> to vector<8x128xf32>
    %242 = arith.truncf %241 : vector<8x128xf32> to vector<8x128xbf16>
    %243 = arith.truncf %165 : vector<8x128xf32> to vector<8x128xbf16>
    %c0_114 = arith.constant 0 : index
    %c0_115 = arith.constant 0 : index
    %244 = vector.load %arg14[%c0_114, %c0_115] : memref<128x512xbf16, #tpu.memory_space<vmem>>, vector<128x512xbf16>
    %cst_116 = arith.constant dense<0.000000e+00> : vector<8x512xf32>
    %245 = tpu.matmul %242, %244, %cst_116 {dimension_numbers = #tpu.dot_dimension_numbers<[1], [0], [0], [1], [0, 0, 1, 1], [], []>} : vector<8x128xbf16>, vector<128x512xbf16>, vector<8x512xf32> -> vector<8x512xf32>
    %c0_117 = arith.constant 0 : index
    %c0_118 = arith.constant 0 : index
    %246 = vector.load %arg15[%c0_117, %c0_118] : memref<1x512xf32, #tpu.memory_space<vmem>>, vector<1x512xf32>
    %247 = vector.broadcast %246 : vector<1x512xf32> to vector<8x512xf32>
    %248 = arith.addf %245, %247 : vector<8x512xf32>
    %c0_119 = arith.constant 0 : index
    %c0_120 = arith.constant 0 : index
    %249 = vector.load %arg16[%c0_119, %c0_120] : memref<128x384xbf16, #tpu.memory_space<vmem>>, vector<128x384xbf16>
    %cst_121 = arith.constant dense<0.000000e+00> : vector<8x384xf32>
    %250 = tpu.matmul %243, %249, %cst_121 {dimension_numbers = #tpu.dot_dimension_numbers<[1], [0], [0], [1], [0, 0, 1, 1], [], []>} : vector<8x128xbf16>, vector<128x384xbf16>, vector<8x384xf32> -> vector<8x384xf32>
    %c0_122 = arith.constant 0 : index
    %c0_123 = arith.constant 0 : index
    %251 = vector.load %arg17[%c0_122, %c0_123] : memref<1x384xf32, #tpu.memory_space<vmem>>, vector<1x384xf32>
    %252 = vector.broadcast %251 : vector<1x384xf32> to vector<8x384xf32>
    %253 = arith.addf %250, %252 : vector<8x384xf32>
    %254 = vector.extract_strided_slice %248 {offsets = [0, 0], sizes = [8, 128], strides = [1, 1]} : vector<8x512xf32> to vector<8x128xf32>
    %255 = vector.extract_strided_slice %253 {offsets = [0, 0], sizes = [8, 128], strides = [1, 1]} : vector<8x384xf32> to vector<8x128xf32>
    %256 = arith.addf %254, %255 : vector<8x128xf32>
    %cst_124 = arith.constant 0.000000e+00 : f32
    %257 = vector.broadcast %cst_124 : f32 to vector<8x128xf32>
    %258 = arith.subf %257, %256 : vector<8x128xf32>
    %259 = math.exp %258 : vector<8x128xf32>
    %cst_125 = arith.constant 1.000000e+00 : f32
    %260 = vector.broadcast %cst_125 : f32 to vector<8x128xf32>
    %261 = arith.addf %260, %259 : vector<8x128xf32>
    %cst_126 = arith.constant 1.000000e+00 : f32
    %262 = vector.broadcast %cst_126 : f32 to vector<8x128xf32>
    %263 = arith.divf %262, %261 : vector<8x128xf32>
    %264 = vector.extract_strided_slice %248 {offsets = [0, 128], sizes = [8, 128], strides = [1, 1]} : vector<8x512xf32> to vector<8x128xf32>
    %265 = vector.extract_strided_slice %253 {offsets = [0, 128], sizes = [8, 128], strides = [1, 1]} : vector<8x384xf32> to vector<8x128xf32>
    %266 = arith.addf %264, %265 : vector<8x128xf32>
    %cst_127 = arith.constant 0.000000e+00 : f32
    %267 = vector.broadcast %cst_127 : f32 to vector<8x128xf32>
    %268 = arith.subf %267, %266 : vector<8x128xf32>
    %269 = math.exp %268 : vector<8x128xf32>
    %cst_128 = arith.constant 1.000000e+00 : f32
    %270 = vector.broadcast %cst_128 : f32 to vector<8x128xf32>
    %271 = arith.addf %270, %269 : vector<8x128xf32>
    %cst_129 = arith.constant 1.000000e+00 : f32
    %272 = vector.broadcast %cst_129 : f32 to vector<8x128xf32>
    %273 = arith.divf %272, %271 : vector<8x128xf32>
    %274 = vector.extract_strided_slice %248 {offsets = [0, 256], sizes = [8, 128], strides = [1, 1]} : vector<8x512xf32> to vector<8x128xf32>
    %275 = vector.extract_strided_slice %253 {offsets = [0, 256], sizes = [8, 128], strides = [1, 1]} : vector<8x384xf32> to vector<8x128xf32>
    %276 = arith.mulf %263, %275 : vector<8x128xf32>
    %277 = arith.addf %274, %276 : vector<8x128xf32>
    %278 = math.tanh %277 : vector<8x128xf32>
    %cst_130 = arith.constant 1.000000e+00 : f32
    %279 = vector.broadcast %cst_130 : f32 to vector<8x128xf32>
    %280 = arith.subf %279, %273 : vector<8x128xf32>
    %281 = arith.mulf %280, %278 : vector<8x128xf32>
    %282 = arith.mulf %273, %165 : vector<8x128xf32>
    %283 = arith.addf %281, %282 : vector<8x128xf32>
    %284 = arith.truncf %283 : vector<8x128xf32> to vector<8x128xbf16>
    %c0_131 = arith.constant 0 : index
    %c0_132 = arith.constant 0 : index
    %285 = vector.load %arg18[%c0_131, %c0_132] : memref<128x384xbf16, #tpu.memory_space<vmem>>, vector<128x384xbf16>
    %cst_133 = arith.constant dense<0.000000e+00> : vector<8x384xf32>
    %286 = tpu.matmul %284, %285, %cst_133 {dimension_numbers = #tpu.dot_dimension_numbers<[1], [0], [0], [1], [0, 0, 1, 1], [], []>} : vector<8x128xbf16>, vector<128x384xbf16>, vector<8x384xf32> -> vector<8x384xf32>
    %287 = vector.extract_strided_slice %286 {offsets = [0, 0], sizes = [8, 128], strides = [1, 1]} : vector<8x384xf32> to vector<8x128xf32>
    %288 = arith.truncf %287 : vector<8x128xf32> to vector<8x128xbf16>
    %c0_134 = arith.constant 0 : index
    %c0_135 = arith.constant 0 : index
    %289 = vector.load %arg7[%c0_134, %c0_135] : memref<128x8xbf16, #tpu.memory_space<vmem>>, vector<128x8xbf16>
    %cst_136 = arith.constant dense<0.000000e+00> : vector<8x8xf32>
    %290 = tpu.matmul %288, %289, %cst_136 {dimension_numbers = #tpu.dot_dimension_numbers<[1], [0], [0], [1], [0, 0, 1, 1], [], []>} : vector<8x128xbf16>, vector<128x8xbf16>, vector<8x8xf32> -> vector<8x8xf32>
    %cst_137 = arith.constant dense<0xFF800000> : vector<8xf32>
    %291 = vector.multi_reduction <maximumf>, %290, %cst_137 [1] : vector<8x8xf32> to vector<8xf32>
    %292 = vector.shape_cast %291 : vector<8xf32> to vector<8x1xf32>
    %293 = vector.broadcast %292 : vector<8x1xf32> to vector<8x8xf32>
    %294 = arith.subf %290, %293 : vector<8x8xf32>
    %295 = math.exp %294 : vector<8x8xf32>
    %cst_138 = arith.constant dense<0.000000e+00> : vector<8xf32>
    %296 = vector.multi_reduction <add>, %295, %cst_138 [1] : vector<8x8xf32> to vector<8xf32>
    %297 = vector.shape_cast %296 : vector<8xf32> to vector<8x1xf32>
    %298 = tpu.reciprocal %297 {approx = true} : vector<8x1xf32> -> vector<8x1xf32>
    %299 = vector.broadcast %298 : vector<8x1xf32> to vector<8x8xf32>
    %300 = arith.mulf %295, %299 : vector<8x8xf32>
    %301 = arith.truncf %300 : vector<8x8xf32> to vector<8x8xbf16>
    %c0_139 = arith.constant 0 : index
    %c0_140 = arith.constant 0 : index
    %302 = vector.load %arg6[%c0_139, %c0_140] : memref<8x128xbf16, #tpu.memory_space<vmem>>, vector<8x128xbf16>
    %cst_141 = arith.constant dense<0.000000e+00> : vector<8x128xf32>
    %303 = tpu.matmul %301, %302, %cst_141 {dimension_numbers = #tpu.dot_dimension_numbers<[1], [0], [0], [1], [0, 0, 1, 1], [], []>} : vector<8x8xbf16>, vector<8x128xbf16>, vector<8x128xf32> -> vector<8x128xf32>
    %304 = arith.truncf %303 : vector<8x128xf32> to vector<8x128xbf16>
    %c0_142 = arith.constant 0 : index
    %c0_143 = arith.constant 0 : index
    %305 = vector.load %arg19[%c0_142, %c0_143] : memref<128x256xbf16, #tpu.memory_space<vmem>>, vector<128x256xbf16>
    %cst_144 = arith.constant dense<0.000000e+00> : vector<8x256xf32>
    %306 = tpu.matmul %304, %305, %cst_144 {dimension_numbers = #tpu.dot_dimension_numbers<[1], [0], [0], [1], [0, 0, 1, 1], [], []>} : vector<8x128xbf16>, vector<128x256xbf16>, vector<8x256xf32> -> vector<8x256xf32>
    %307 = vector.extract_strided_slice %286 {offsets = [0, 128], sizes = [8, 128], strides = [1, 1]} : vector<8x384xf32> to vector<8x128xf32>
    %308 = vector.extract_strided_slice %306 {offsets = [0, 0], sizes = [8, 128], strides = [1, 1]} : vector<8x256xf32> to vector<8x128xf32>
    %309 = arith.addf %307, %308 : vector<8x128xf32>
    %c0_145 = arith.constant 0 : index
    %c0_146 = arith.constant 0 : index
    %310 = vector.load %arg20[%c0_145, %c0_146] : memref<1x128xf32, #tpu.memory_space<vmem>>, vector<1x128xf32>
    %311 = vector.broadcast %310 : vector<1x128xf32> to vector<8x128xf32>
    %312 = arith.addf %309, %311 : vector<8x128xf32>
    %313 = arith.truncf %312 : vector<8x128xf32> to vector<8x128xbf16>
    %c0_147 = arith.constant 0 : index
    %c0_148 = arith.constant 0 : index
    %314 = vector.load %arg21[%c0_147, %c0_148] : memref<128x128xbf16, #tpu.memory_space<vmem>>, vector<128x128xbf16>
    %cst_149 = arith.constant dense<0.000000e+00> : vector<8x128xf32>
    %315 = tpu.matmul %313, %314, %cst_149 {dimension_numbers = #tpu.dot_dimension_numbers<[1], [0], [0], [1], [0, 0, 1, 1], [], []>} : vector<8x128xbf16>, vector<128x128xbf16>, vector<8x128xf32> -> vector<8x128xf32>
    %c0_150 = arith.constant 0 : index
    %c0_151 = arith.constant 0 : index
    %316 = vector.load %arg22[%c0_150, %c0_151] : memref<1x128xf32, #tpu.memory_space<vmem>>, vector<1x128xf32>
    %317 = vector.broadcast %316 : vector<1x128xf32> to vector<8x128xf32>
    %318 = arith.addf %315, %317 : vector<8x128xf32>
    %cst_152 = arith.constant dense<0xFF800000> : vector<8xf32>
    %319 = vector.multi_reduction <maximumf>, %318, %cst_152 [1] : vector<8x128xf32> to vector<8xf32>
    %320 = vector.shape_cast %319 : vector<8xf32> to vector<8x1xf32>
    %321 = vector.broadcast %320 : vector<8x1xf32> to vector<8x128xf32>
    %322 = arith.subf %318, %321 : vector<8x128xf32>
    %323 = math.exp %322 : vector<8x128xf32>
    %cst_153 = arith.constant dense<0.000000e+00> : vector<8xf32>
    %324 = vector.multi_reduction <add>, %323, %cst_153 [1] : vector<8x128xf32> to vector<8xf32>
    %325 = vector.shape_cast %324 : vector<8xf32> to vector<8x1xf32>
    %326 = tpu.reciprocal %325 {approx = true} : vector<8x1xf32> -> vector<8x1xf32>
    %327 = vector.broadcast %326 : vector<8x1xf32> to vector<8x128xf32>
    %328 = arith.mulf %323, %327 : vector<8x128xf32>
    %329 = vector.extract_strided_slice %248 {offsets = [0, 384], sizes = [8, 128], strides = [1, 1]} : vector<8x512xf32> to vector<8x128xf32>
    %330 = vector.extract_strided_slice %286 {offsets = [0, 256], sizes = [8, 128], strides = [1, 1]} : vector<8x384xf32> to vector<8x128xf32>
    %331 = arith.addf %329, %330 : vector<8x128xf32>
    %332 = vector.extract_strided_slice %306 {offsets = [0, 128], sizes = [8, 128], strides = [1, 1]} : vector<8x256xf32> to vector<8x128xf32>
    %333 = arith.addf %331, %332 : vector<8x128xf32>
    %cst_154 = arith.constant dense<0.000000e+00> : vector<8xf32>
    %334 = vector.multi_reduction <add>, %333, %cst_154 [1] : vector<8x128xf32> to vector<8xf32>
    %335 = vector.shape_cast %334 : vector<8xf32> to vector<8x1xf32>
    %cst_155 = arith.constant 0.000000e+00 : f32
    %336 = vector.broadcast %cst_155 : f32 to vector<8x1xf32>
    %337 = arith.subf %336, %335 : vector<8x1xf32>
    %338 = math.exp %337 : vector<8x1xf32>
    %cst_156 = arith.constant 1.000000e+00 : f32
    %339 = vector.broadcast %cst_156 : f32 to vector<8x1xf32>
    %340 = arith.addf %339, %338 : vector<8x1xf32>
    %cst_157 = arith.constant 1.000000e+00 : f32
    %341 = vector.broadcast %cst_157 : f32 to vector<8x1xf32>
    %342 = arith.divf %341, %340 : vector<8x1xf32>
    %343 = vector.broadcast %342 : vector<8x1xf32> to vector<8x128xf32>
    %344 = arith.mulf %328, %343 : vector<8x128xf32>
    %c0_158 = arith.constant 0 : index
    %c0_159 = arith.constant 0 : index
    %345 = vector.load %arg25[%c0_158, %c0_159] : memref<8x128xf32, #tpu.memory_space<vmem>>, vector<8x128xf32>
    %346 = arith.mulf %344, %345 : vector<8x128xf32>
    %cst_160 = arith.constant 1.000000e+00 : f32
    %347 = vector.broadcast %cst_160 : f32 to vector<8x1xf32>
    %348 = arith.subf %347, %342 : vector<8x1xf32>
    %349 = vector.broadcast %348 : vector<8x1xf32> to vector<8x8xf32>
    %350 = arith.mulf %300, %349 : vector<8x8xf32>
    %351 = arith.truncf %350 : vector<8x8xf32> to vector<8x8xbf16>
    %c0_161 = arith.constant 0 : index
    %c0_162 = arith.constant 0 : index
    %352 = vector.load %arg8[%c0_161, %c0_162] : memref<8x128xbf16, #tpu.memory_space<vmem>>, vector<8x128xbf16>
    %cst_163 = arith.constant dense<0.000000e+00> : vector<8x128xf32>
    %353 = tpu.matmul %351, %352, %cst_163 {dimension_numbers = #tpu.dot_dimension_numbers<[1], [0], [0], [1], [0, 0, 1, 1], [], []>} : vector<8x8xbf16>, vector<8x128xbf16>, vector<8x128xf32> -> vector<8x128xf32>
    %354 = arith.addf %346, %353 : vector<8x128xf32>
    %355 = vector.shape_cast %354 : vector<8x128xf32> to vector<8x1x128xf32>
    %356 = arith.truncf %355 : vector<8x1x128xf32> to vector<8x1x128xbf16>
    %c0_164 = arith.constant 0 : index
    %c2_165 = arith.constant 2 : index
    %c0_166 = arith.constant 0 : index
    %357 = vector.load %arg23[%c0_164, %c2_165, %c0_166] : memref<8x6x128xbf16, #tpu.memory_space<vmem>>, vector<8x1x128xbf16>
    tpu.vector_store %arg23[%c0_164, %c2_165, %c0_166], %356 {strides = array<i32>} : memref<8x6x128xbf16, #tpu.memory_space<vmem>>, vector<8x1x128xbf16>,
    %c3 = arith.constant 3 : index
    %c0_167 = arith.constant 0 : index
    %c0_168 = arith.constant 0 : index
    %358 = vector.load %arg2[%c3, %c0_167, %c0_168] : memref<6x8x128xf32, #tpu.memory_space<vmem>>, vector<1x8x128xf32>
    %359 = vector.shape_cast %358 : vector<1x8x128xf32> to vector<8x128xf32>
    %360 = arith.truncf %359 : vector<8x128xf32> to vector<8x128xbf16>
    %361 = arith.truncf %283 : vector<8x128xf32> to vector<8x128xbf16>
    %c0_169 = arith.constant 0 : index
    %c0_170 = arith.constant 0 : index
    %362 = vector.load %arg14[%c0_169, %c0_170] : memref<128x512xbf16, #tpu.memory_space<vmem>>, vector<128x512xbf16>
    %cst_171 = arith.constant dense<0.000000e+00> : vector<8x512xf32>
    %363 = tpu.matmul %360, %362, %cst_171 {dimension_numbers = #tpu.dot_dimension_numbers<[1], [0], [0], [1], [0, 0, 1, 1], [], []>} : vector<8x128xbf16>, vector<128x512xbf16>, vector<8x512xf32> -> vector<8x512xf32>
    %c0_172 = arith.constant 0 : index
    %c0_173 = arith.constant 0 : index
    %364 = vector.load %arg15[%c0_172, %c0_173] : memref<1x512xf32, #tpu.memory_space<vmem>>, vector<1x512xf32>
    %365 = vector.broadcast %364 : vector<1x512xf32> to vector<8x512xf32>
    %366 = arith.addf %363, %365 : vector<8x512xf32>
    %c0_174 = arith.constant 0 : index
    %c0_175 = arith.constant 0 : index
    %367 = vector.load %arg16[%c0_174, %c0_175] : memref<128x384xbf16, #tpu.memory_space<vmem>>, vector<128x384xbf16>
    %cst_176 = arith.constant dense<0.000000e+00> : vector<8x384xf32>
    %368 = tpu.matmul %361, %367, %cst_176 {dimension_numbers = #tpu.dot_dimension_numbers<[1], [0], [0], [1], [0, 0, 1, 1], [], []>} : vector<8x128xbf16>, vector<128x384xbf16>, vector<8x384xf32> -> vector<8x384xf32>
    %c0_177 = arith.constant 0 : index
    %c0_178 = arith.constant 0 : index
    %369 = vector.load %arg17[%c0_177, %c0_178] : memref<1x384xf32, #tpu.memory_space<vmem>>, vector<1x384xf32>
    %370 = vector.broadcast %369 : vector<1x384xf32> to vector<8x384xf32>
    %371 = arith.addf %368, %370 : vector<8x384xf32>
    %372 = vector.extract_strided_slice %366 {offsets = [0, 0], sizes = [8, 128], strides = [1, 1]} : vector<8x512xf32> to vector<8x128xf32>
    %373 = vector.extract_strided_slice %371 {offsets = [0, 0], sizes = [8, 128], strides = [1, 1]} : vector<8x384xf32> to vector<8x128xf32>
    %374 = arith.addf %372, %373 : vector<8x128xf32>
    %cst_179 = arith.constant 0.000000e+00 : f32
    %375 = vector.broadcast %cst_179 : f32 to vector<8x128xf32>
    %376 = arith.subf %375, %374 : vector<8x128xf32>
    %377 = math.exp %376 : vector<8x128xf32>
    %cst_180 = arith.constant 1.000000e+00 : f32
    %378 = vector.broadcast %cst_180 : f32 to vector<8x128xf32>
    %379 = arith.addf %378, %377 : vector<8x128xf32>
    %cst_181 = arith.constant 1.000000e+00 : f32
    %380 = vector.broadcast %cst_181 : f32 to vector<8x128xf32>
    %381 = arith.divf %380, %379 : vector<8x128xf32>
    %382 = vector.extract_strided_slice %366 {offsets = [0, 128], sizes = [8, 128], strides = [1, 1]} : vector<8x512xf32> to vector<8x128xf32>
    %383 = vector.extract_strided_slice %371 {offsets = [0, 128], sizes = [8, 128], strides = [1, 1]} : vector<8x384xf32> to vector<8x128xf32>
    %384 = arith.addf %382, %383 : vector<8x128xf32>
    %cst_182 = arith.constant 0.000000e+00 : f32
    %385 = vector.broadcast %cst_182 : f32 to vector<8x128xf32>
    %386 = arith.subf %385, %384 : vector<8x128xf32>
    %387 = math.exp %386 : vector<8x128xf32>
    %cst_183 = arith.constant 1.000000e+00 : f32
    %388 = vector.broadcast %cst_183 : f32 to vector<8x128xf32>
    %389 = arith.addf %388, %387 : vector<8x128xf32>
    %cst_184 = arith.constant 1.000000e+00 : f32
    %390 = vector.broadcast %cst_184 : f32 to vector<8x128xf32>
    %391 = arith.divf %390, %389 : vector<8x128xf32>
    %392 = vector.extract_strided_slice %366 {offsets = [0, 256], sizes = [8, 128], strides = [1, 1]} : vector<8x512xf32> to vector<8x128xf32>
    %393 = vector.extract_strided_slice %371 {offsets = [0, 256], sizes = [8, 128], strides = [1, 1]} : vector<8x384xf32> to vector<8x128xf32>
    %394 = arith.mulf %381, %393 : vector<8x128xf32>
    %395 = arith.addf %392, %394 : vector<8x128xf32>
    %396 = math.tanh %395 : vector<8x128xf32>
    %cst_185 = arith.constant 1.000000e+00 : f32
    %397 = vector.broadcast %cst_185 : f32 to vector<8x128xf32>
    %398 = arith.subf %397, %391 : vector<8x128xf32>
    %399 = arith.mulf %398, %396 : vector<8x128xf32>
    %400 = arith.mulf %391, %283 : vector<8x128xf32>
    %401 = arith.addf %399, %400 : vector<8x128xf32>
    %402 = arith.truncf %401 : vector<8x128xf32> to vector<8x128xbf16>
    %c0_186 = arith.constant 0 : index
    %c0_187 = arith.constant 0 : index
    %403 = vector.load %arg18[%c0_186, %c0_187] : memref<128x384xbf16, #tpu.memory_space<vmem>>, vector<128x384xbf16>
    %cst_188 = arith.constant dense<0.000000e+00> : vector<8x384xf32>
    %404 = tpu.matmul %402, %403, %cst_188 {dimension_numbers = #tpu.dot_dimension_numbers<[1], [0], [0], [1], [0, 0, 1, 1], [], []>} : vector<8x128xbf16>, vector<128x384xbf16>, vector<8x384xf32> -> vector<8x384xf32>
    %405 = vector.extract_strided_slice %404 {offsets = [0, 0], sizes = [8, 128], strides = [1, 1]} : vector<8x384xf32> to vector<8x128xf32>
    %406 = arith.truncf %405 : vector<8x128xf32> to vector<8x128xbf16>
    %c0_189 = arith.constant 0 : index
    %c0_190 = arith.constant 0 : index
    %407 = vector.load %arg7[%c0_189, %c0_190] : memref<128x8xbf16, #tpu.memory_space<vmem>>, vector<128x8xbf16>
    %cst_191 = arith.constant dense<0.000000e+00> : vector<8x8xf32>
    %408 = tpu.matmul %406, %407, %cst_191 {dimension_numbers = #tpu.dot_dimension_numbers<[1], [0], [0], [1], [0, 0, 1, 1], [], []>} : vector<8x128xbf16>, vector<128x8xbf16>, vector<8x8xf32> -> vector<8x8xf32>
    %cst_192 = arith.constant dense<0xFF800000> : vector<8xf32>
    %409 = vector.multi_reduction <maximumf>, %408, %cst_192 [1] : vector<8x8xf32> to vector<8xf32>
    %410 = vector.shape_cast %409 : vector<8xf32> to vector<8x1xf32>
    %411 = vector.broadcast %410 : vector<8x1xf32> to vector<8x8xf32>
    %412 = arith.subf %408, %411 : vector<8x8xf32>
    %413 = math.exp %412 : vector<8x8xf32>
    %cst_193 = arith.constant dense<0.000000e+00> : vector<8xf32>
    %414 = vector.multi_reduction <add>, %413, %cst_193 [1] : vector<8x8xf32> to vector<8xf32>
    %415 = vector.shape_cast %414 : vector<8xf32> to vector<8x1xf32>
    %416 = tpu.reciprocal %415 {approx = true} : vector<8x1xf32> -> vector<8x1xf32>
    %417 = vector.broadcast %416 : vector<8x1xf32> to vector<8x8xf32>
    %418 = arith.mulf %413, %417 : vector<8x8xf32>
    %419 = arith.truncf %418 : vector<8x8xf32> to vector<8x8xbf16>
    %c0_194 = arith.constant 0 : index
    %c0_195 = arith.constant 0 : index
    %420 = vector.load %arg6[%c0_194, %c0_195] : memref<8x128xbf16, #tpu.memory_space<vmem>>, vector<8x128xbf16>
    %cst_196 = arith.constant dense<0.000000e+00> : vector<8x128xf32>
    %421 = tpu.matmul %419, %420, %cst_196 {dimension_numbers = #tpu.dot_dimension_numbers<[1], [0], [0], [1], [0, 0, 1, 1], [], []>} : vector<8x8xbf16>, vector<8x128xbf16>, vector<8x128xf32> -> vector<8x128xf32>
    %422 = arith.truncf %421 : vector<8x128xf32> to vector<8x128xbf16>
    %c0_197 = arith.constant 0 : index
    %c0_198 = arith.constant 0 : index
    %423 = vector.load %arg19[%c0_197, %c0_198] : memref<128x256xbf16, #tpu.memory_space<vmem>>, vector<128x256xbf16>
    %cst_199 = arith.constant dense<0.000000e+00> : vector<8x256xf32>
    %424 = tpu.matmul %422, %423, %cst_199 {dimension_numbers = #tpu.dot_dimension_numbers<[1], [0], [0], [1], [0, 0, 1, 1], [], []>} : vector<8x128xbf16>, vector<128x256xbf16>, vector<8x256xf32> -> vector<8x256xf32>
    %425 = vector.extract_strided_slice %404 {offsets = [0, 128], sizes = [8, 128], strides = [1, 1]} : vector<8x384xf32> to vector<8x128xf32>
    %426 = vector.extract_strided_slice %424 {offsets = [0, 0], sizes = [8, 128], strides = [1, 1]} : vector<8x256xf32> to vector<8x128xf32>
    %427 = arith.addf %425, %426 : vector<8x128xf32>
    %c0_200 = arith.constant 0 : index
    %c0_201 = arith.constant 0 : index
    %428 = vector.load %arg20[%c0_200, %c0_201] : memref<1x128xf32, #tpu.memory_space<vmem>>, vector<1x128xf32>
    %429 = vector.broadcast %428 : vector<1x128xf32> to vector<8x128xf32>
    %430 = arith.addf %427, %429 : vector<8x128xf32>
    %431 = arith.truncf %430 : vector<8x128xf32> to vector<8x128xbf16>
    %c0_202 = arith.constant 0 : index
    %c0_203 = arith.constant 0 : index
    %432 = vector.load %arg21[%c0_202, %c0_203] : memref<128x128xbf16, #tpu.memory_space<vmem>>, vector<128x128xbf16>
    %cst_204 = arith.constant dense<0.000000e+00> : vector<8x128xf32>
    %433 = tpu.matmul %431, %432, %cst_204 {dimension_numbers = #tpu.dot_dimension_numbers<[1], [0], [0], [1], [0, 0, 1, 1], [], []>} : vector<8x128xbf16>, vector<128x128xbf16>, vector<8x128xf32> -> vector<8x128xf32>
    %c0_205 = arith.constant 0 : index
    %c0_206 = arith.constant 0 : index
    %434 = vector.load %arg22[%c0_205, %c0_206] : memref<1x128xf32, #tpu.memory_space<vmem>>, vector<1x128xf32>
    %435 = vector.broadcast %434 : vector<1x128xf32> to vector<8x128xf32>
    %436 = arith.addf %433, %435 : vector<8x128xf32>
    %cst_207 = arith.constant dense<0xFF800000> : vector<8xf32>
    %437 = vector.multi_reduction <maximumf>, %436, %cst_207 [1] : vector<8x128xf32> to vector<8xf32>
    %438 = vector.shape_cast %437 : vector<8xf32> to vector<8x1xf32>
    %439 = vector.broadcast %438 : vector<8x1xf32> to vector<8x128xf32>
    %440 = arith.subf %436, %439 : vector<8x128xf32>
    %441 = math.exp %440 : vector<8x128xf32>
    %cst_208 = arith.constant dense<0.000000e+00> : vector<8xf32>
    %442 = vector.multi_reduction <add>, %441, %cst_208 [1] : vector<8x128xf32> to vector<8xf32>
    %443 = vector.shape_cast %442 : vector<8xf32> to vector<8x1xf32>
    %444 = tpu.reciprocal %443 {approx = true} : vector<8x1xf32> -> vector<8x1xf32>
    %445 = vector.broadcast %444 : vector<8x1xf32> to vector<8x128xf32>
    %446 = arith.mulf %441, %445 : vector<8x128xf32>
    %447 = vector.extract_strided_slice %366 {offsets = [0, 384], sizes = [8, 128], strides = [1, 1]} : vector<8x512xf32> to vector<8x128xf32>
    %448 = vector.extract_strided_slice %404 {offsets = [0, 256], sizes = [8, 128], strides = [1, 1]} : vector<8x384xf32> to vector<8x128xf32>
    %449 = arith.addf %447, %448 : vector<8x128xf32>
    %450 = vector.extract_strided_slice %424 {offsets = [0, 128], sizes = [8, 128], strides = [1, 1]} : vector<8x256xf32> to vector<8x128xf32>
    %451 = arith.addf %449, %450 : vector<8x128xf32>
    %cst_209 = arith.constant dense<0.000000e+00> : vector<8xf32>
    %452 = vector.multi_reduction <add>, %451, %cst_209 [1] : vector<8x128xf32> to vector<8xf32>
    %453 = vector.shape_cast %452 : vector<8xf32> to vector<8x1xf32>
    %cst_210 = arith.constant 0.000000e+00 : f32
    %454 = vector.broadcast %cst_210 : f32 to vector<8x1xf32>
    %455 = arith.subf %454, %453 : vector<8x1xf32>
    %456 = math.exp %455 : vector<8x1xf32>
    %cst_211 = arith.constant 1.000000e+00 : f32
    %457 = vector.broadcast %cst_211 : f32 to vector<8x1xf32>
    %458 = arith.addf %457, %456 : vector<8x1xf32>
    %cst_212 = arith.constant 1.000000e+00 : f32
    %459 = vector.broadcast %cst_212 : f32 to vector<8x1xf32>
    %460 = arith.divf %459, %458 : vector<8x1xf32>
    %461 = vector.broadcast %460 : vector<8x1xf32> to vector<8x128xf32>
    %462 = arith.mulf %446, %461 : vector<8x128xf32>
    %c0_213 = arith.constant 0 : index
    %c0_214 = arith.constant 0 : index
    %463 = vector.load %arg25[%c0_213, %c0_214] : memref<8x128xf32, #tpu.memory_space<vmem>>, vector<8x128xf32>
    %464 = arith.mulf %462, %463 : vector<8x128xf32>
    %cst_215 = arith.constant 1.000000e+00 : f32
    %465 = vector.broadcast %cst_215 : f32 to vector<8x1xf32>
    %466 = arith.subf %465, %460 : vector<8x1xf32>
    %467 = vector.broadcast %466 : vector<8x1xf32> to vector<8x8xf32>
    %468 = arith.mulf %418, %467 : vector<8x8xf32>
    %469 = arith.truncf %468 : vector<8x8xf32> to vector<8x8xbf16>
    %c0_216 = arith.constant 0 : index
    %c0_217 = arith.constant 0 : index
    %470 = vector.load %arg8[%c0_216, %c0_217] : memref<8x128xbf16, #tpu.memory_space<vmem>>, vector<8x128xbf16>
    %cst_218 = arith.constant dense<0.000000e+00> : vector<8x128xf32>
    %471 = tpu.matmul %469, %470, %cst_218 {dimension_numbers = #tpu.dot_dimension_numbers<[1], [0], [0], [1], [0, 0, 1, 1], [], []>} : vector<8x8xbf16>, vector<8x128xbf16>, vector<8x128xf32> -> vector<8x128xf32>
    %472 = arith.addf %464, %471 : vector<8x128xf32>
    %473 = vector.shape_cast %472 : vector<8x128xf32> to vector<8x1x128xf32>
    %474 = arith.truncf %473 : vector<8x1x128xf32> to vector<8x1x128xbf16>
    %c0_219 = arith.constant 0 : index
    %c3_220 = arith.constant 3 : index
    %c0_221 = arith.constant 0 : index
    %475 = vector.load %arg23[%c0_219, %c3_220, %c0_221] : memref<8x6x128xbf16, #tpu.memory_space<vmem>>, vector<8x1x128xbf16>
    tpu.vector_store %arg23[%c0_219, %c3_220, %c0_221], %474 {strides = array<i32>} : memref<8x6x128xbf16, #tpu.memory_space<vmem>>, vector<8x1x128xbf16>,
    %c4 = arith.constant 4 : index
    %c0_222 = arith.constant 0 : index
    %c0_223 = arith.constant 0 : index
    %476 = vector.load %arg2[%c4, %c0_222, %c0_223] : memref<6x8x128xf32, #tpu.memory_space<vmem>>, vector<1x8x128xf32>
    %477 = vector.shape_cast %476 : vector<1x8x128xf32> to vector<8x128xf32>
    %478 = arith.truncf %477 : vector<8x128xf32> to vector<8x128xbf16>
    %479 = arith.truncf %401 : vector<8x128xf32> to vector<8x128xbf16>
    %c0_224 = arith.constant 0 : index
    %c0_225 = arith.constant 0 : index
    %480 = vector.load %arg14[%c0_224, %c0_225] : memref<128x512xbf16, #tpu.memory_space<vmem>>, vector<128x512xbf16>
    %cst_226 = arith.constant dense<0.000000e+00> : vector<8x512xf32>
    %481 = tpu.matmul %478, %480, %cst_226 {dimension_numbers = #tpu.dot_dimension_numbers<[1], [0], [0], [1], [0, 0, 1, 1], [], []>} : vector<8x128xbf16>, vector<128x512xbf16>, vector<8x512xf32> -> vector<8x512xf32>
    %c0_227 = arith.constant 0 : index
    %c0_228 = arith.constant 0 : index
    %482 = vector.load %arg15[%c0_227, %c0_228] : memref<1x512xf32, #tpu.memory_space<vmem>>, vector<1x512xf32>
    %483 = vector.broadcast %482 : vector<1x512xf32> to vector<8x512xf32>
    %484 = arith.addf %481, %483 : vector<8x512xf32>
    %c0_229 = arith.constant 0 : index
    %c0_230 = arith.constant 0 : index
    %485 = vector.load %arg16[%c0_229, %c0_230] : memref<128x384xbf16, #tpu.memory_space<vmem>>, vector<128x384xbf16>
    %cst_231 = arith.constant dense<0.000000e+00> : vector<8x384xf32>
    %486 = tpu.matmul %479, %485, %cst_231 {dimension_numbers = #tpu.dot_dimension_numbers<[1], [0], [0], [1], [0, 0, 1, 1], [], []>} : vector<8x128xbf16>, vector<128x384xbf16>, vector<8x384xf32> -> vector<8x384xf32>
    %c0_232 = arith.constant 0 : index
    %c0_233 = arith.constant 0 : index
    %487 = vector.load %arg17[%c0_232, %c0_233] : memref<1x384xf32, #tpu.memory_space<vmem>>, vector<1x384xf32>
    %488 = vector.broadcast %487 : vector<1x384xf32> to vector<8x384xf32>
    %489 = arith.addf %486, %488 : vector<8x384xf32>
    %490 = vector.extract_strided_slice %484 {offsets = [0, 0], sizes = [8, 128], strides = [1, 1]} : vector<8x512xf32> to vector<8x128xf32>
    %491 = vector.extract_strided_slice %489 {offsets = [0, 0], sizes = [8, 128], strides = [1, 1]} : vector<8x384xf32> to vector<8x128xf32>
    %492 = arith.addf %490, %491 : vector<8x128xf32>
    %cst_234 = arith.constant 0.000000e+00 : f32
    %493 = vector.broadcast %cst_234 : f32 to vector<8x128xf32>
    %494 = arith.subf %493, %492 : vector<8x128xf32>
    %495 = math.exp %494 : vector<8x128xf32>
    %cst_235 = arith.constant 1.000000e+00 : f32
    %496 = vector.broadcast %cst_235 : f32 to vector<8x128xf32>
    %497 = arith.addf %496, %495 : vector<8x128xf32>
    %cst_236 = arith.constant 1.000000e+00 : f32
    %498 = vector.broadcast %cst_236 : f32 to vector<8x128xf32>
    %499 = arith.divf %498, %497 : vector<8x128xf32>
    %500 = vector.extract_strided_slice %484 {offsets = [0, 128], sizes = [8, 128], strides = [1, 1]} : vector<8x512xf32> to vector<8x128xf32>
    %501 = vector.extract_strided_slice %489 {offsets = [0, 128], sizes = [8, 128], strides = [1, 1]} : vector<8x384xf32> to vector<8x128xf32>
    %502 = arith.addf %500, %501 : vector<8x128xf32>
    %cst_237 = arith.constant 0.000000e+00 : f32
    %503 = vector.broadcast %cst_237 : f32 to vector<8x128xf32>
    %504 = arith.subf %503, %502 : vector<8x128xf32>
    %505 = math.exp %504 : vector<8x128xf32>
    %cst_238 = arith.constant 1.000000e+00 : f32
    %506 = vector.broadcast %cst_238 : f32 to vector<8x128xf32>
    %507 = arith.addf %506, %505 : vector<8x128xf32>
    %cst_239 = arith.constant 1.000000e+00 : f32
    %508 = vector.broadcast %cst_239 : f32 to vector<8x128xf32>
    %509 = arith.divf %508, %507 : vector<8x128xf32>
    %510 = vector.extract_strided_slice %484 {offsets = [0, 256], sizes = [8, 128], strides = [1, 1]} : vector<8x512xf32> to vector<8x128xf32>
    %511 = vector.extract_strided_slice %489 {offsets = [0, 256], sizes = [8, 128], strides = [1, 1]} : vector<8x384xf32> to vector<8x128xf32>
    %512 = arith.mulf %499, %511 : vector<8x128xf32>
    %513 = arith.addf %510, %512 : vector<8x128xf32>
    %514 = math.tanh %513 : vector<8x128xf32>
    %cst_240 = arith.constant 1.000000e+00 : f32
    %515 = vector.broadcast %cst_240 : f32 to vector<8x128xf32>
    %516 = arith.subf %515, %509 : vector<8x128xf32>
    %517 = arith.mulf %516, %514 : vector<8x128xf32>
    %518 = arith.mulf %509, %401 : vector<8x128xf32>
    %519 = arith.addf %517, %518 : vector<8x128xf32>
    %520 = arith.truncf %519 : vector<8x128xf32> to vector<8x128xbf16>
    %c0_241 = arith.constant 0 : index
    %c0_242 = arith.constant 0 : index
    %521 = vector.load %arg18[%c0_241, %c0_242] : memref<128x384xbf16, #tpu.memory_space<vmem>>, vector<128x384xbf16>
    %cst_243 = arith.constant dense<0.000000e+00> : vector<8x384xf32>
    %522 = tpu.matmul %520, %521, %cst_243 {dimension_numbers = #tpu.dot_dimension_numbers<[1], [0], [0], [1], [0, 0, 1, 1], [], []>} : vector<8x128xbf16>, vector<128x384xbf16>, vector<8x384xf32> -> vector<8x384xf32>
    %523 = vector.extract_strided_slice %522 {offsets = [0, 0], sizes = [8, 128], strides = [1, 1]} : vector<8x384xf32> to vector<8x128xf32>
    %524 = arith.truncf %523 : vector<8x128xf32> to vector<8x128xbf16>
    %c0_244 = arith.constant 0 : index
    %c0_245 = arith.constant 0 : index
    %525 = vector.load %arg7[%c0_244, %c0_245] : memref<128x8xbf16, #tpu.memory_space<vmem>>, vector<128x8xbf16>
    %cst_246 = arith.constant dense<0.000000e+00> : vector<8x8xf32>
    %526 = tpu.matmul %524, %525, %cst_246 {dimension_numbers = #tpu.dot_dimension_numbers<[1], [0], [0], [1], [0, 0, 1, 1], [], []>} : vector<8x128xbf16>, vector<128x8xbf16>, vector<8x8xf32> -> vector<8x8xf32>
    %cst_247 = arith.constant dense<0xFF800000> : vector<8xf32>
    %527 = vector.multi_reduction <maximumf>, %526, %cst_247 [1] : vector<8x8xf32> to vector<8xf32>
    %528 = vector.shape_cast %527 : vector<8xf32> to vector<8x1xf32>
    %529 = vector.broadcast %528 : vector<8x1xf32> to vector<8x8xf32>
    %530 = arith.subf %526, %529 : vector<8x8xf32>
    %531 = math.exp %530 : vector<8x8xf32>
    %cst_248 = arith.constant dense<0.000000e+00> : vector<8xf32>
    %532 = vector.multi_reduction <add>, %531, %cst_248 [1] : vector<8x8xf32> to vector<8xf32>
    %533 = vector.shape_cast %532 : vector<8xf32> to vector<8x1xf32>
    %534 = tpu.reciprocal %533 {approx = true} : vector<8x1xf32> -> vector<8x1xf32>
    %535 = vector.broadcast %534 : vector<8x1xf32> to vector<8x8xf32>
    %536 = arith.mulf %531, %535 : vector<8x8xf32>
    %537 = arith.truncf %536 : vector<8x8xf32> to vector<8x8xbf16>
    %c0_249 = arith.constant 0 : index
    %c0_250 = arith.constant 0 : index
    %538 = vector.load %arg6[%c0_249, %c0_250] : memref<8x128xbf16, #tpu.memory_space<vmem>>, vector<8x128xbf16>
    %cst_251 = arith.constant dense<0.000000e+00> : vector<8x128xf32>
    %539 = tpu.matmul %537, %538, %cst_251 {dimension_numbers = #tpu.dot_dimension_numbers<[1], [0], [0], [1], [0, 0, 1, 1], [], []>} : vector<8x8xbf16>, vector<8x128xbf16>, vector<8x128xf32> -> vector<8x128xf32>
    %540 = arith.truncf %539 : vector<8x128xf32> to vector<8x128xbf16>
    %c0_252 = arith.constant 0 : index
    %c0_253 = arith.constant 0 : index
    %541 = vector.load %arg19[%c0_252, %c0_253] : memref<128x256xbf16, #tpu.memory_space<vmem>>, vector<128x256xbf16>
    %cst_254 = arith.constant dense<0.000000e+00> : vector<8x256xf32>
    %542 = tpu.matmul %540, %541, %cst_254 {dimension_numbers = #tpu.dot_dimension_numbers<[1], [0], [0], [1], [0, 0, 1, 1], [], []>} : vector<8x128xbf16>, vector<128x256xbf16>, vector<8x256xf32> -> vector<8x256xf32>
    %543 = vector.extract_strided_slice %522 {offsets = [0, 128], sizes = [8, 128], strides = [1, 1]} : vector<8x384xf32> to vector<8x128xf32>
    %544 = vector.extract_strided_slice %542 {offsets = [0, 0], sizes = [8, 128], strides = [1, 1]} : vector<8x256xf32> to vector<8x128xf32>
    %545 = arith.addf %543, %544 : vector<8x128xf32>
    %c0_255 = arith.constant 0 : index
    %c0_256 = arith.constant 0 : index
    %546 = vector.load %arg20[%c0_255, %c0_256] : memref<1x128xf32, #tpu.memory_space<vmem>>, vector<1x128xf32>
    %547 = vector.broadcast %546 : vector<1x128xf32> to vector<8x128xf32>
    %548 = arith.addf %545, %547 : vector<8x128xf32>
    %549 = arith.truncf %548 : vector<8x128xf32> to vector<8x128xbf16>
    %c0_257 = arith.constant 0 : index
    %c0_258 = arith.constant 0 : index
    %550 = vector.load %arg21[%c0_257, %c0_258] : memref<128x128xbf16, #tpu.memory_space<vmem>>, vector<128x128xbf16>
    %cst_259 = arith.constant dense<0.000000e+00> : vector<8x128xf32>
    %551 = tpu.matmul %549, %550, %cst_259 {dimension_numbers = #tpu.dot_dimension_numbers<[1], [0], [0], [1], [0, 0, 1, 1], [], []>} : vector<8x128xbf16>, vector<128x128xbf16>, vector<8x128xf32> -> vector<8x128xf32>
    %c0_260 = arith.constant 0 : index
    %c0_261 = arith.constant 0 : index
    %552 = vector.load %arg22[%c0_260, %c0_261] : memref<1x128xf32, #tpu.memory_space<vmem>>, vector<1x128xf32>
    %553 = vector.broadcast %552 : vector<1x128xf32> to vector<8x128xf32>
    %554 = arith.addf %551, %553 : vector<8x128xf32>
    %cst_262 = arith.constant dense<0xFF800000> : vector<8xf32>
    %555 = vector.multi_reduction <maximumf>, %554, %cst_262 [1] : vector<8x128xf32> to vector<8xf32>
    %556 = vector.shape_cast %555 : vector<8xf32> to vector<8x1xf32>
    %557 = vector.broadcast %556 : vector<8x1xf32> to vector<8x128xf32>
    %558 = arith.subf %554, %557 : vector<8x128xf32>
    %559 = math.exp %558 : vector<8x128xf32>
    %cst_263 = arith.constant dense<0.000000e+00> : vector<8xf32>
    %560 = vector.multi_reduction <add>, %559, %cst_263 [1] : vector<8x128xf32> to vector<8xf32>
    %561 = vector.shape_cast %560 : vector<8xf32> to vector<8x1xf32>
    %562 = tpu.reciprocal %561 {approx = true} : vector<8x1xf32> -> vector<8x1xf32>
    %563 = vector.broadcast %562 : vector<8x1xf32> to vector<8x128xf32>
    %564 = arith.mulf %559, %563 : vector<8x128xf32>
    %565 = vector.extract_strided_slice %484 {offsets = [0, 384], sizes = [8, 128], strides = [1, 1]} : vector<8x512xf32> to vector<8x128xf32>
    %566 = vector.extract_strided_slice %522 {offsets = [0, 256], sizes = [8, 128], strides = [1, 1]} : vector<8x384xf32> to vector<8x128xf32>
    %567 = arith.addf %565, %566 : vector<8x128xf32>
    %568 = vector.extract_strided_slice %542 {offsets = [0, 128], sizes = [8, 128], strides = [1, 1]} : vector<8x256xf32> to vector<8x128xf32>
    %569 = arith.addf %567, %568 : vector<8x128xf32>
    %cst_264 = arith.constant dense<0.000000e+00> : vector<8xf32>
    %570 = vector.multi_reduction <add>, %569, %cst_264 [1] : vector<8x128xf32> to vector<8xf32>
    %571 = vector.shape_cast %570 : vector<8xf32> to vector<8x1xf32>
    %cst_265 = arith.constant 0.000000e+00 : f32
    %572 = vector.broadcast %cst_265 : f32 to vector<8x1xf32>
    %573 = arith.subf %572, %571 : vector<8x1xf32>
    %574 = math.exp %573 : vector<8x1xf32>
    %cst_266 = arith.constant 1.000000e+00 : f32
    %575 = vector.broadcast %cst_266 : f32 to vector<8x1xf32>
    %576 = arith.addf %575, %574 : vector<8x1xf32>
    %cst_267 = arith.constant 1.000000e+00 : f32
    %577 = vector.broadcast %cst_267 : f32 to vector<8x1xf32>
    %578 = arith.divf %577, %576 : vector<8x1xf32>
    %579 = vector.broadcast %578 : vector<8x1xf32> to vector<8x128xf32>
    %580 = arith.mulf %564, %579 : vector<8x128xf32>
    %c0_268 = arith.constant 0 : index
    %c0_269 = arith.constant 0 : index
    %581 = vector.load %arg25[%c0_268, %c0_269] : memref<8x128xf32, #tpu.memory_space<vmem>>, vector<8x128xf32>
    %582 = arith.mulf %580, %581 : vector<8x128xf32>
    %cst_270 = arith.constant 1.000000e+00 : f32
    %583 = vector.broadcast %cst_270 : f32 to vector<8x1xf32>
    %584 = arith.subf %583, %578 : vector<8x1xf32>
    %585 = vector.broadcast %584 : vector<8x1xf32> to vector<8x8xf32>
    %586 = arith.mulf %536, %585 : vector<8x8xf32>
    %587 = arith.truncf %586 : vector<8x8xf32> to vector<8x8xbf16>
    %c0_271 = arith.constant 0 : index
    %c0_272 = arith.constant 0 : index
    %588 = vector.load %arg8[%c0_271, %c0_272] : memref<8x128xbf16, #tpu.memory_space<vmem>>, vector<8x128xbf16>
    %cst_273 = arith.constant dense<0.000000e+00> : vector<8x128xf32>
    %589 = tpu.matmul %587, %588, %cst_273 {dimension_numbers = #tpu.dot_dimension_numbers<[1], [0], [0], [1], [0, 0, 1, 1], [], []>} : vector<8x8xbf16>, vector<8x128xbf16>, vector<8x128xf32> -> vector<8x128xf32>
    %590 = arith.addf %582, %589 : vector<8x128xf32>
    %591 = vector.shape_cast %590 : vector<8x128xf32> to vector<8x1x128xf32>
    %592 = arith.truncf %591 : vector<8x1x128xf32> to vector<8x1x128xbf16>
    %c0_274 = arith.constant 0 : index
    %c4_275 = arith.constant 4 : index
    %c0_276 = arith.constant 0 : index
    %593 = vector.load %arg23[%c0_274, %c4_275, %c0_276] : memref<8x6x128xbf16, #tpu.memory_space<vmem>>, vector<8x1x128xbf16>
    tpu.vector_store %arg23[%c0_274, %c4_275, %c0_276], %592 {strides = array<i32>} : memref<8x6x128xbf16, #tpu.memory_space<vmem>>, vector<8x1x128xbf16>,
    %c5 = arith.constant 5 : index
    %c0_277 = arith.constant 0 : index
    %c0_278 = arith.constant 0 : index
    %594 = vector.load %arg2[%c5, %c0_277, %c0_278] : memref<6x8x128xf32, #tpu.memory_space<vmem>>, vector<1x8x128xf32>
    %595 = vector.shape_cast %594 : vector<1x8x128xf32> to vector<8x128xf32>
    %596 = arith.truncf %595 : vector<8x128xf32> to vector<8x128xbf16>
    %597 = arith.truncf %519 : vector<8x128xf32> to vector<8x128xbf16>
    %c0_279 = arith.constant 0 : index
    %c0_280 = arith.constant 0 : index
    %598 = vector.load %arg14[%c0_279, %c0_280] : memref<128x512xbf16, #tpu.memory_space<vmem>>, vector<128x512xbf16>
    %cst_281 = arith.constant dense<0.000000e+00> : vector<8x512xf32>
    %599 = tpu.matmul %596, %598, %cst_281 {dimension_numbers = #tpu.dot_dimension_numbers<[1], [0], [0], [1], [0, 0, 1, 1], [], []>} : vector<8x128xbf16>, vector<128x512xbf16>, vector<8x512xf32> -> vector<8x512xf32>
    %c0_282 = arith.constant 0 : index
    %c0_283 = arith.constant 0 : index
    %600 = vector.load %arg15[%c0_282, %c0_283] : memref<1x512xf32, #tpu.memory_space<vmem>>, vector<1x512xf32>
    %601 = vector.broadcast %600 : vector<1x512xf32> to vector<8x512xf32>
    %602 = arith.addf %599, %601 : vector<8x512xf32>
    %c0_284 = arith.constant 0 : index
    %c0_285 = arith.constant 0 : index
    %603 = vector.load %arg16[%c0_284, %c0_285] : memref<128x384xbf16, #tpu.memory_space<vmem>>, vector<128x384xbf16>
    %cst_286 = arith.constant dense<0.000000e+00> : vector<8x384xf32>
    %604 = tpu.matmul %597, %603, %cst_286 {dimension_numbers = #tpu.dot_dimension_numbers<[1], [0], [0], [1], [0, 0, 1, 1], [], []>} : vector<8x128xbf16>, vector<128x384xbf16>, vector<8x384xf32> -> vector<8x384xf32>
    %c0_287 = arith.constant 0 : index
    %c0_288 = arith.constant 0 : index
    %605 = vector.load %arg17[%c0_287, %c0_288] : memref<1x384xf32, #tpu.memory_space<vmem>>, vector<1x384xf32>
    %606 = vector.broadcast %605 : vector<1x384xf32> to vector<8x384xf32>
    %607 = arith.addf %604, %606 : vector<8x384xf32>
    %608 = vector.extract_strided_slice %602 {offsets = [0, 0], sizes = [8, 128], strides = [1, 1]} : vector<8x512xf32> to vector<8x128xf32>
    %609 = vector.extract_strided_slice %607 {offsets = [0, 0], sizes = [8, 128], strides = [1, 1]} : vector<8x384xf32> to vector<8x128xf32>
    %610 = arith.addf %608, %609 : vector<8x128xf32>
    %cst_289 = arith.constant 0.000000e+00 : f32
    %611 = vector.broadcast %cst_289 : f32 to vector<8x128xf32>
    %612 = arith.subf %611, %610 : vector<8x128xf32>
    %613 = math.exp %612 : vector<8x128xf32>
    %cst_290 = arith.constant 1.000000e+00 : f32
    %614 = vector.broadcast %cst_290 : f32 to vector<8x128xf32>
    %615 = arith.addf %614, %613 : vector<8x128xf32>
    %cst_291 = arith.constant 1.000000e+00 : f32
    %616 = vector.broadcast %cst_291 : f32 to vector<8x128xf32>
    %617 = arith.divf %616, %615 : vector<8x128xf32>
    %618 = vector.extract_strided_slice %602 {offsets = [0, 128], sizes = [8, 128], strides = [1, 1]} : vector<8x512xf32> to vector<8x128xf32>
    %619 = vector.extract_strided_slice %607 {offsets = [0, 128], sizes = [8, 128], strides = [1, 1]} : vector<8x384xf32> to vector<8x128xf32>
    %620 = arith.addf %618, %619 : vector<8x128xf32>
    %cst_292 = arith.constant 0.000000e+00 : f32
    %621 = vector.broadcast %cst_292 : f32 to vector<8x128xf32>
    %622 = arith.subf %621, %620 : vector<8x128xf32>
    %623 = math.exp %622 : vector<8x128xf32>
    %cst_293 = arith.constant 1.000000e+00 : f32
    %624 = vector.broadcast %cst_293 : f32 to vector<8x128xf32>
    %625 = arith.addf %624, %623 : vector<8x128xf32>
    %cst_294 = arith.constant 1.000000e+00 : f32
    %626 = vector.broadcast %cst_294 : f32 to vector<8x128xf32>
    %627 = arith.divf %626, %625 : vector<8x128xf32>
    %628 = vector.extract_strided_slice %602 {offsets = [0, 256], sizes = [8, 128], strides = [1, 1]} : vector<8x512xf32> to vector<8x128xf32>
    %629 = vector.extract_strided_slice %607 {offsets = [0, 256], sizes = [8, 128], strides = [1, 1]} : vector<8x384xf32> to vector<8x128xf32>
    %630 = arith.mulf %617, %629 : vector<8x128xf32>
    %631 = arith.addf %628, %630 : vector<8x128xf32>
    %632 = math.tanh %631 : vector<8x128xf32>
    %cst_295 = arith.constant 1.000000e+00 : f32
    %633 = vector.broadcast %cst_295 : f32 to vector<8x128xf32>
    %634 = arith.subf %633, %627 : vector<8x128xf32>
    %635 = arith.mulf %634, %632 : vector<8x128xf32>
    %636 = arith.mulf %627, %519 : vector<8x128xf32>
    %637 = arith.addf %635, %636 : vector<8x128xf32>
    %638 = arith.truncf %637 : vector<8x128xf32> to vector<8x128xbf16>
    %c0_296 = arith.constant 0 : index
    %c0_297 = arith.constant 0 : index
    %639 = vector.load %arg18[%c0_296, %c0_297] : memref<128x384xbf16, #tpu.memory_space<vmem>>, vector<128x384xbf16>
    %cst_298 = arith.constant dense<0.000000e+00> : vector<8x384xf32>
    %640 = tpu.matmul %638, %639, %cst_298 {dimension_numbers = #tpu.dot_dimension_numbers<[1], [0], [0], [1], [0, 0, 1, 1], [], []>} : vector<8x128xbf16>, vector<128x384xbf16>, vector<8x384xf32> -> vector<8x384xf32>
    %641 = vector.extract_strided_slice %640 {offsets = [0, 0], sizes = [8, 128], strides = [1, 1]} : vector<8x384xf32> to vector<8x128xf32>
    %642 = arith.truncf %641 : vector<8x128xf32> to vector<8x128xbf16>
    %c0_299 = arith.constant 0 : index
    %c0_300 = arith.constant 0 : index
    %643 = vector.load %arg7[%c0_299, %c0_300] : memref<128x8xbf16, #tpu.memory_space<vmem>>, vector<128x8xbf16>
    %cst_301 = arith.constant dense<0.000000e+00> : vector<8x8xf32>
    %644 = tpu.matmul %642, %643, %cst_301 {dimension_numbers = #tpu.dot_dimension_numbers<[1], [0], [0], [1], [0, 0, 1, 1], [], []>} : vector<8x128xbf16>, vector<128x8xbf16>, vector<8x8xf32> -> vector<8x8xf32>
    %cst_302 = arith.constant dense<0xFF800000> : vector<8xf32>
    %645 = vector.multi_reduction <maximumf>, %644, %cst_302 [1] : vector<8x8xf32> to vector<8xf32>
    %646 = vector.shape_cast %645 : vector<8xf32> to vector<8x1xf32>
    %647 = vector.broadcast %646 : vector<8x1xf32> to vector<8x8xf32>
    %648 = arith.subf %644, %647 : vector<8x8xf32>
    %649 = math.exp %648 : vector<8x8xf32>
    %cst_303 = arith.constant dense<0.000000e+00> : vector<8xf32>
    %650 = vector.multi_reduction <add>, %649, %cst_303 [1] : vector<8x8xf32> to vector<8xf32>
    %651 = vector.shape_cast %650 : vector<8xf32> to vector<8x1xf32>
    %652 = tpu.reciprocal %651 {approx = true} : vector<8x1xf32> -> vector<8x1xf32>
    %653 = vector.broadcast %652 : vector<8x1xf32> to vector<8x8xf32>
    %654 = arith.mulf %649, %653 : vector<8x8xf32>
    %655 = arith.truncf %654 : vector<8x8xf32> to vector<8x8xbf16>
    %c0_304 = arith.constant 0 : index
    %c0_305 = arith.constant 0 : index
    %656 = vector.load %arg6[%c0_304, %c0_305] : memref<8x128xbf16, #tpu.memory_space<vmem>>, vector<8x128xbf16>
    %cst_306 = arith.constant dense<0.000000e+00> : vector<8x128xf32>
    %657 = tpu.matmul %655, %656, %cst_306 {dimension_numbers = #tpu.dot_dimension_numbers<[1], [0], [0], [1], [0, 0, 1, 1], [], []>} : vector<8x8xbf16>, vector<8x128xbf16>, vector<8x128xf32> -> vector<8x128xf32>
    %658 = arith.truncf %657 : vector<8x128xf32> to vector<8x128xbf16>
    %c0_307 = arith.constant 0 : index
    %c0_308 = arith.constant 0 : index
    %659 = vector.load %arg19[%c0_307, %c0_308] : memref<128x256xbf16, #tpu.memory_space<vmem>>, vector<128x256xbf16>
    %cst_309 = arith.constant dense<0.000000e+00> : vector<8x256xf32>
    %660 = tpu.matmul %658, %659, %cst_309 {dimension_numbers = #tpu.dot_dimension_numbers<[1], [0], [0], [1], [0, 0, 1, 1], [], []>} : vector<8x128xbf16>, vector<128x256xbf16>, vector<8x256xf32> -> vector<8x256xf32>
    %661 = vector.extract_strided_slice %640 {offsets = [0, 128], sizes = [8, 128], strides = [1, 1]} : vector<8x384xf32> to vector<8x128xf32>
    %662 = vector.extract_strided_slice %660 {offsets = [0, 0], sizes = [8, 128], strides = [1, 1]} : vector<8x256xf32> to vector<8x128xf32>
    %663 = arith.addf %661, %662 : vector<8x128xf32>
    %c0_310 = arith.constant 0 : index
    %c0_311 = arith.constant 0 : index
    %664 = vector.load %arg20[%c0_310, %c0_311] : memref<1x128xf32, #tpu.memory_space<vmem>>, vector<1x128xf32>
    %665 = vector.broadcast %664 : vector<1x128xf32> to vector<8x128xf32>
    %666 = arith.addf %663, %665 : vector<8x128xf32>
    %667 = arith.truncf %666 : vector<8x128xf32> to vector<8x128xbf16>
    %c0_312 = arith.constant 0 : index
    %c0_313 = arith.constant 0 : index
    %668 = vector.load %arg21[%c0_312, %c0_313] : memref<128x128xbf16, #tpu.memory_space<vmem>>, vector<128x128xbf16>
    %cst_314 = arith.constant dense<0.000000e+00> : vector<8x128xf32>
    %669 = tpu.matmul %667, %668, %cst_314 {dimension_numbers = #tpu.dot_dimension_numbers<[1], [0], [0], [1], [0, 0, 1, 1], [], []>} : vector<8x128xbf16>, vector<128x128xbf16>, vector<8x128xf32> -> vector<8x128xf32>
    %c0_315 = arith.constant 0 : index
    %c0_316 = arith.constant 0 : index
    %670 = vector.load %arg22[%c0_315, %c0_316] : memref<1x128xf32, #tpu.memory_space<vmem>>, vector<1x128xf32>
    %671 = vector.broadcast %670 : vector<1x128xf32> to vector<8x128xf32>
    %672 = arith.addf %669, %671 : vector<8x128xf32>
    %cst_317 = arith.constant dense<0xFF800000> : vector<8xf32>
    %673 = vector.multi_reduction <maximumf>, %672, %cst_317 [1] : vector<8x128xf32> to vector<8xf32>
    %674 = vector.shape_cast %673 : vector<8xf32> to vector<8x1xf32>
    %675 = vector.broadcast %674 : vector<8x1xf32> to vector<8x128xf32>
    %676 = arith.subf %672, %675 : vector<8x128xf32>
    %677 = math.exp %676 : vector<8x128xf32>
    %cst_318 = arith.constant dense<0.000000e+00> : vector<8xf32>
    %678 = vector.multi_reduction <add>, %677, %cst_318 [1] : vector<8x128xf32> to vector<8xf32>
    %679 = vector.shape_cast %678 : vector<8xf32> to vector<8x1xf32>
    %680 = tpu.reciprocal %679 {approx = true} : vector<8x1xf32> -> vector<8x1xf32>
    %681 = vector.broadcast %680 : vector<8x1xf32> to vector<8x128xf32>
    %682 = arith.mulf %677, %681 : vector<8x128xf32>
    %683 = vector.extract_strided_slice %602 {offsets = [0, 384], sizes = [8, 128], strides = [1, 1]} : vector<8x512xf32> to vector<8x128xf32>
    %684 = vector.extract_strided_slice %640 {offsets = [0, 256], sizes = [8, 128], strides = [1, 1]} : vector<8x384xf32> to vector<8x128xf32>
    %685 = arith.addf %683, %684 : vector<8x128xf32>
    %686 = vector.extract_strided_slice %660 {offsets = [0, 128], sizes = [8, 128], strides = [1, 1]} : vector<8x256xf32> to vector<8x128xf32>
    %687 = arith.addf %685, %686 : vector<8x128xf32>
    %cst_319 = arith.constant dense<0.000000e+00> : vector<8xf32>
    %688 = vector.multi_reduction <add>, %687, %cst_319 [1] : vector<8x128xf32> to vector<8xf32>
    %689 = vector.shape_cast %688 : vector<8xf32> to vector<8x1xf32>
    %cst_320 = arith.constant 0.000000e+00 : f32
    %690 = vector.broadcast %cst_320 : f32 to vector<8x1xf32>
    %691 = arith.subf %690, %689 : vector<8x1xf32>
    %692 = math.exp %691 : vector<8x1xf32>
    %cst_321 = arith.constant 1.000000e+00 : f32
    %693 = vector.broadcast %cst_321 : f32 to vector<8x1xf32>
    %694 = arith.addf %693, %692 : vector<8x1xf32>
    %cst_322 = arith.constant 1.000000e+00 : f32
    %695 = vector.broadcast %cst_322 : f32 to vector<8x1xf32>
    %696 = arith.divf %695, %694 : vector<8x1xf32>
    %697 = vector.broadcast %696 : vector<8x1xf32> to vector<8x128xf32>
    %698 = arith.mulf %682, %697 : vector<8x128xf32>
    %c0_323 = arith.constant 0 : index
    %c0_324 = arith.constant 0 : index
    %699 = vector.load %arg25[%c0_323, %c0_324] : memref<8x128xf32, #tpu.memory_space<vmem>>, vector<8x128xf32>
    %700 = arith.mulf %698, %699 : vector<8x128xf32>
    %cst_325 = arith.constant 1.000000e+00 : f32
    %701 = vector.broadcast %cst_325 : f32 to vector<8x1xf32>
    %702 = arith.subf %701, %696 : vector<8x1xf32>
    %703 = vector.broadcast %702 : vector<8x1xf32> to vector<8x8xf32>
    %704 = arith.mulf %654, %703 : vector<8x8xf32>
    %705 = arith.truncf %704 : vector<8x8xf32> to vector<8x8xbf16>
    %c0_326 = arith.constant 0 : index
    %c0_327 = arith.constant 0 : index
    %706 = vector.load %arg8[%c0_326, %c0_327] : memref<8x128xbf16, #tpu.memory_space<vmem>>, vector<8x128xbf16>
    %cst_328 = arith.constant dense<0.000000e+00> : vector<8x128xf32>
    %707 = tpu.matmul %705, %706, %cst_328 {dimension_numbers = #tpu.dot_dimension_numbers<[1], [0], [0], [1], [0, 0, 1, 1], [], []>} : vector<8x8xbf16>, vector<8x128xbf16>, vector<8x128xf32> -> vector<8x128xf32>
    %708 = arith.addf %700, %707 : vector<8x128xf32>
    %709 = vector.shape_cast %708 : vector<8x128xf32> to vector<8x1x128xf32>
    %710 = arith.truncf %709 : vector<8x1x128xf32> to vector<8x1x128xbf16>
    %c0_329 = arith.constant 0 : index
    %c5_330 = arith.constant 5 : index
    %c0_331 = arith.constant 0 : index
    %711 = vector.load %arg23[%c0_329, %c5_330, %c0_331] : memref<8x6x128xbf16, #tpu.memory_space<vmem>>, vector<8x1x128xbf16>
    tpu.vector_store %arg23[%c0_329, %c5_330, %c0_331], %710 {strides = array<i32>} : memref<8x6x128xbf16, #tpu.memory_space<vmem>>, vector<8x1x128xbf16>,
    %c0_332 = arith.constant 0 : index
    %c0_333 = arith.constant 0 : index
    %712 = vector.load %arg24[%c0_332, %c0_333] : memref<8x128xf32, #tpu.memory_space<vmem>>, vector<8x128xf32>
    tpu.vector_store %arg24[%c0_332, %c0_333], %637 {strides = array<i32>} : memref<8x128xf32, #tpu.memory_space<vmem>>, vector<8x128xf32>,
    return
  }
  func.func @transform_0(%arg0: i32, %arg1: i32) -> (i32, i32, i32) {
    %c0_i32 = arith.constant 0 : i32
    %c0_i32_0 = arith.constant 0 : i32
    return %arg1, %arg0, %c0_i32 : i32, i32, i32
  }
  func.func @transform_1(%arg0: i32, %arg1: i32) -> (i32, i32) {
    %c0_i32 = arith.constant 0 : i32
    %c0_i32_0 = arith.constant 0 : i32
    return %arg0, %c0_i32 : i32, i32
  }
  func.func @transform_2(%arg0: i32, %arg1: i32) -> (i32, i32) {
    %c0_i32 = arith.constant 0 : i32
    %c0_i32_0 = arith.constant 0 : i32
    return %arg0, %c0_i32 : i32, i32
  }
  func.func @transform_3(%arg0: i32, %arg1: i32) -> (i32, i32) {
    %c0_i32 = arith.constant 0 : i32
    %c0_i32_0 = arith.constant 0 : i32
    return %arg0, %c0_i32 : i32, i32
  }
  func.func @transform_4(%arg0: i32, %arg1: i32) -> (i32, i32) {
    %c0_i32 = arith.constant 0 : i32
    %c0_i32_0 = arith.constant 0 : i32
    %c0_i32_1 = arith.constant 0 : i32
    return %c0_i32, %c0_i32_0 : i32, i32
  }
  func.func @transform_5(%arg0: i32, %arg1: i32) -> (i32, i32) {
    %c0_i32 = arith.constant 0 : i32
    %c0_i32_0 = arith.constant 0 : i32
    %c0_i32_1 = arith.constant 0 : i32
    return %c0_i32, %c0_i32_0 : i32, i32
  }
  func.func @transform_6(%arg0: i32, %arg1: i32) -> (i32, i32) {
    %c0_i32 = arith.constant 0 : i32
    %c0_i32_0 = arith.constant 0 : i32
    %c0_i32_1 = arith.constant 0 : i32
    return %c0_i32, %c0_i32_0 : i32, i32
  }
  func.func @transform_7(%arg0: i32, %arg1: i32) -> (i32, i32) {
    %c0_i32 = arith.constant 0 : i32
    %c0_i32_0 = arith.constant 0 : i32
    %c0_i32_1 = arith.constant 0 : i32
    return %c0_i32, %c0_i32_0 : i32, i32
  }
  func.func @transform_8(%arg0: i32, %arg1: i32) -> (i32, i32) {
    %c0_i32 = arith.constant 0 : i32
    %c0_i32_0 = arith.constant 0 : i32
    %c0_i32_1 = arith.constant 0 : i32
    return %c0_i32, %c0_i32_0 : i32, i32
  }
  func.func @transform_9(%arg0: i32, %arg1: i32) -> (i32, i32) {
    %c0_i32 = arith.constant 0 : i32
    %c0_i32_0 = arith.constant 0 : i32
    %c0_i32_1 = arith.constant 0 : i32
    return %c0_i32, %c0_i32_0 : i32, i32
  }
  func.func @transform_10(%arg0: i32, %arg1: i32) -> (i32, i32) {
    %c0_i32 = arith.constant 0 : i32
    %c0_i32_0 = arith.constant 0 : i32
    %c0_i32_1 = arith.constant 0 : i32
    return %c0_i32, %c0_i32_0 : i32, i32
  }
  func.func @transform_11(%arg0: i32, %arg1: i32) -> (i32, i32) {
    %c0_i32 = arith.constant 0 : i32
    %c0_i32_0 = arith.constant 0 : i32
    %c0_i32_1 = arith.constant 0 : i32
    return %c0_i32, %c0_i32_0 : i32, i32
  }
  func.func @transform_12(%arg0: i32, %arg1: i32) -> (i32, i32) {
    %c0_i32 = arith.constant 0 : i32
    %c0_i32_0 = arith.constant 0 : i32
    %c0_i32_1 = arith.constant 0 : i32
    return %c0_i32, %c0_i32_0 : i32, i32
  }
  func.func @transform_13(%arg0: i32, %arg1: i32) -> (i32, i32) {
    %c0_i32 = arith.constant 0 : i32
    %c0_i32_0 = arith.constant 0 : i32
    %c0_i32_1 = arith.constant 0 : i32
    return %c0_i32, %c0_i32_0 : i32, i32
  }
  func.func @transform_14(%arg0: i32, %arg1: i32) -> (i32, i32) {
    %c0_i32 = arith.constant 0 : i32
    %c0_i32_0 = arith.constant 0 : i32
    %c0_i32_1 = arith.constant 0 : i32
    return %c0_i32, %c0_i32_0 : i32, i32
  }
  func.func @transform_15(%arg0: i32, %arg1: i32) -> (i32, i32) {
    %c0_i32 = arith.constant 0 : i32
    %c0_i32_0 = arith.constant 0 : i32
    %c0_i32_1 = arith.constant 0 : i32
    return %c0_i32, %c0_i32_0 : i32, i32
  }
  func.func @transform_16(%arg0: i32, %arg1: i32) -> (i32, i32) {
    %c0_i32 = arith.constant 0 : i32
    %c0_i32_0 = arith.constant 0 : i32
    %c0_i32_1 = arith.constant 0 : i32
    return %c0_i32, %c0_i32_0 : i32, i32
  }
  func.func @transform_17(%arg0: i32, %arg1: i32) -> (i32, i32) {
    %c0_i32 = arith.constant 0 : i32
    %c0_i32_0 = arith.constant 0 : i32
    %c0_i32_1 = arith.constant 0 : i32
    return %c0_i32, %c0_i32_0 : i32, i32
  }
  func.func @transform_18(%arg0: i32, %arg1: i32) -> (i32, i32) {
    %c0_i32 = arith.constant 0 : i32
    %c0_i32_0 = arith.constant 0 : i32
    %c0_i32_1 = arith.constant 0 : i32
    return %c0_i32, %c0_i32_0 : i32, i32
  }
  func.func @transform_19(%arg0: i32, %arg1: i32) -> (i32, i32) {
    %c0_i32 = arith.constant 0 : i32
    %c0_i32_0 = arith.constant 0 : i32
    %c0_i32_1 = arith.constant 0 : i32
    return %c0_i32, %c0_i32_0 : i32, i32
  }
  func.func @transform_20(%arg0: i32, %arg1: i32) -> (i32, i32) {
    %c0_i32 = arith.constant 0 : i32
    %c0_i32_0 = arith.constant 0 : i32
    %c0_i32_1 = arith.constant 0 : i32
    return %c0_i32, %c0_i32_0 : i32, i32
  }
  func.func @transform_21(%arg0: i32, %arg1: i32) -> (i32, i32, i32) {
    %c0_i32 = arith.constant 0 : i32
    %c0_i32_0 = arith.constant 0 : i32
    return %arg0, %arg1, %c0_i32 : i32, i32, i32
  }
}

</mosaic_0001>

<llo_original>
// kernel: tpu_custom_call.1
$region0: #{tpu_custom_call.1}
  #allocation0 [shape = 'u32[]', space=smem, size = 0x4, offset = 0x4, fixed_abs, tag = 'smem constant byte address 0x4 - core index']
  #allocation1 [shape = 'u32[72,128]{1,0:T(1,128)}', space=vmem, size = 0x9000, scoped, tag = 'internal scratch']
  #allocation2 [shape = 'f32[8,128]{1,0:T(8,128)}', space=vmem, size = 0x1000, scoped, tag = 'scratch operand']
  #allocation3 [shape = 'f32[8,128]{1,0:T(8,128)}', space=vmem, size = 0x1000, scoped, tag = 'scratch operand']
  %s0 = inlined_call_operand.hbm [shape: f32[6,8,128], index: 0, kind: input, shape index: {}]
  %s1 = inlined_call_operand.vmem [shape: bf16[8,128], index: 1, kind: input, shape index: {}]
  %s2 = inlined_call_operand.vmem [shape: bf16[8,128], index: 2, kind: input, shape index: {}]
  %s3 = inlined_call_operand.vmem [shape: f32[8,1], index: 3, kind: input, shape index: {}]
  %s4 = inlined_call_operand.hbm [shape: bf16[8,128], index: 4, kind: input, shape index: {}]
  %s5 = inlined_call_operand.vmem [shape: bf16[128,8], index: 5, kind: input, shape index: {}]
  %s6 = inlined_call_operand.vmem [shape: bf16[8,128], index: 6, kind: input, shape index: {}]
  %s7 = inlined_call_operand.vmem [shape: f32[1,128], index: 7, kind: input, shape index: {}]
  %s8 = inlined_call_operand.vmem [shape: bf16[128,128], index: 8, kind: input, shape index: {}]
  %s9 = inlined_call_operand.hbm [shape: f32[1,128], index: 9, kind: input, shape index: {}]
  %s10 = inlined_call_operand.hbm [shape: bf16[128,128], index: 10, kind: input, shape index: {}]
  %s11 = inlined_call_operand.hbm [shape: f32[1,128], index: 11, kind: input, shape index: {}]
  %s12 = inlined_call_operand.hbm [shape: bf16[128,512], index: 12, kind: input, shape index: {}]
  %s13 = inlined_call_operand.vmem [shape: f32[1,512], index: 13, kind: input, shape index: {}]
  %s14 = inlined_call_operand.hbm [shape: bf16[128,384], index: 14, kind: input, shape index: {}]
  %s15 = inlined_call_operand.vmem [shape: f32[1,384], index: 15, kind: input, shape index: {}]
  %s16 = inlined_call_operand.hbm [shape: bf16[128,384], index: 16, kind: input, shape index: {}]
  %s17 = inlined_call_operand.hbm [shape: bf16[128,256], index: 17, kind: input, shape index: {}]
  %s18 = inlined_call_operand.vmem [shape: f32[1,128], index: 18, kind: input, shape index: {}]
  %s19 = inlined_call_operand.hbm [shape: bf16[128,128], index: 19, kind: input, shape index: {}]
  %s20 = inlined_call_operand.vmem [shape: f32[1,128], index: 20, kind: input, shape index: {}]
  %s21 = inlined_call_operand.vmem [shape: bf16[8,6,128], index: 21, kind: output, shape index: {}]
  %s22 = sld [smem:[#allocation0]]
  $region138: #{tpu_custom_call.1} parent=0
    _
  %s24 = ssub.s32 1, %s22
  %s25 = scalar_select 0, %s24, %s22
  $region1: #{tpu_custom_call.1} parent=0
    #allocation4 [shape = 'u8[24576]{0}', space=vmem, size = 0x6000, scoped, tag = 'input window, operand 0, single buffered']
    #allocation5 [shape = 's32[1]{0}', space=sflag, size = 0x4, scoped, tag = 'scoped memory for tpu_custom_call.1']
    #allocation6 [shape = 'u8[2048]{0}', space=vmem, size = 0x800, scoped, tag = 'input window, operand 4, single buffered']
    #allocation7 [shape = 's32[1]{0}', space=sflag, size = 0x4, scoped, tag = 'scoped memory for tpu_custom_call.1']
    #allocation8 [shape = 'u8[512]{0}', space=vmem, size = 0x400, scoped, tag = 'input window, operand 9, single buffered']
    #allocation9 [shape = 'u8[32768]{0}', space=vmem, size = 0x8000, scoped, tag = 'input window, operand 10, single buffered']
    #allocation10 [shape = 's32[1]{0}', space=sflag, size = 0x4, scoped, tag = 'scoped memory for tpu_custom_call.1']
    #allocation11 [shape = 'u8[512]{0}', space=vmem, size = 0x400, scoped, tag = 'input window, operand 11, single buffered']
    #allocation12 [shape = 'u8[131072]{0}', space=vmem, size = 0x20000, scoped, tag = 'input window, operand 12, single buffered']
    #allocation13 [shape = 's32[1]{0}', space=sflag, size = 0x4, scoped, tag = 'scoped memory for tpu_custom_call.1']
    #allocation14 [shape = 'u8[98304]{0}', space=vmem, size = 0x18000, scoped, tag = 'input window, operand 14, single buffered']
    #allocation15 [shape = 'u8[98304]{0}', space=vmem, size = 0x18000, scoped, tag = 'input window, operand 16, single buffered']
    #allocation16 [shape = 's32[1]{0}', space=sflag, size = 0x4, scoped, tag = 'scoped memory for tpu_custom_call.1']
    #allocation17 [shape = 'u8[65536]{0}', space=vmem, size = 0x10000, scoped, tag = 'input window, operand 17, single buffered']
    #allocation18 [shape = 'u8[32768]{0}', space=vmem, size = 0x8000, scoped, tag = 'input window, operand 19, single buffered']
    #allocation19 [shape = 's32[1]{0}', space=sflag, size = 0x4, scoped, tag = 'scoped memory for tpu_custom_call.1']
    %26 = vsyncpa [#allocation5], 0
    %27 = vsyncpa [#allocation7], 0
    %28 = vsyncpa [#allocation10], 0
    %29 = vsyncpa [#allocation13], 0
    %30 = vsyncpa [#allocation16], 0
    %31 = vsyncpa [#allocation19], 0
    // Predicated region
    $region2: #{tpu_custom_call.1} parent=1 // pred_check
      _
    $region3: #{tpu_custom_call.1} parent=1 // pred_check_branch
      %33 = sbr.rel (0) target = $region5
    $region4: #{tpu_custom_call.1} parent=1 // pred_region
      %35 = vsyncadd [#allocation5], 0
      %s36 = sshll.u32 %s0, 4
      %s37 = int_to_ptr.hbm [resolvable:$true] %s36
      %s38 = sshll.u32 [#allocation4], 4
      %s39 = int_to_ptr.vmem [resolvable:$true] %s38
      %44 = dma.hbm_to_vmem [thread:$0]  %s37, 768, %s39, [#allocation5], 128, 128, 8
    $region5: #{tpu_custom_call.1} parent=1 // pred_fallthru
      _
    // Predicated region
    $region6: #{tpu_custom_call.1} parent=1 // pred_check
      _
    $region7: #{tpu_custom_call.1} parent=1 // pred_check_branch
      %46 = sbr.rel (0) target = $region9
    $region8: #{tpu_custom_call.1} parent=1 // pred_region
      _
    $region9: #{tpu_custom_call.1} parent=1 // pred_fallthru
      _
    // Predicated region
    $region10: #{tpu_custom_call.1} parent=1 // pred_check
      _
    $region11: #{tpu_custom_call.1} parent=1 // pred_check_branch
      %48 = sbr.rel (0) target = $region13
    $region12: #{tpu_custom_call.1} parent=1 // pred_region
      _
    $region13: #{tpu_custom_call.1} parent=1 // pred_fallthru
      _
    // Predicated region
    $region14: #{tpu_custom_call.1} parent=1 // pred_check
      _
    $region15: #{tpu_custom_call.1} parent=1 // pred_check_branch
      %50 = sbr.rel (0) target = $region17
    $region16: #{tpu_custom_call.1} parent=1 // pred_region
      _
    $region17: #{tpu_custom_call.1} parent=1 // pred_fallthru
      _
    // Predicated region
    $region18: #{tpu_custom_call.1} parent=1 // pred_check
      _
    $region19: #{tpu_custom_call.1} parent=1 // pred_check_branch
      %52 = sbr.rel (0) target = $region21
    $region20: #{tpu_custom_call.1} parent=1 // pred_region
      %54 = vsyncadd [#allocation7], 0
      %s56 = sshll.u32 %s4, 4
      %s57 = int_to_ptr.hbm [resolvable:$true] %s56
      %s58 = sshll.u32 [#allocation6], 4
      %s59 = int_to_ptr.vmem [resolvable:$true] %s58
      %61 = dma.hbm_to_vmem [thread:$0]  %s57, 64, %s59, [#allocation7]
    $region21: #{tpu_custom_call.1} parent=1 // pred_fallthru
      _
    // Predicated region
    $region22: #{tpu_custom_call.1} parent=1 // pred_check
      _
    $region23: #{tpu_custom_call.1} parent=1 // pred_check_branch
      %63 = sbr.rel (0) target = $region25
    $region24: #{tpu_custom_call.1} parent=1 // pred_region
      _
    $region25: #{tpu_custom_call.1} parent=1 // pred_fallthru
      _
    // Predicated region
    $region26: #{tpu_custom_call.1} parent=1 // pred_check
      _
    $region27: #{tpu_custom_call.1} parent=1 // pred_check_branch
      %65 = sbr.rel (0) target = $region29
    $region28: #{tpu_custom_call.1} parent=1 // pred_region
      _
    $region29: #{tpu_custom_call.1} parent=1 // pred_fallthru
      _
    // Predicated region
    $region30: #{tpu_custom_call.1} parent=1 // pred_check
      _
    $region31: #{tpu_custom_call.1} parent=1 // pred_check_branch
      %67 = sbr.rel (0) target = $region33
    $region32: #{tpu_custom_call.1} parent=1 // pred_region
      _
    $region33: #{tpu_custom_call.1} parent=1 // pred_fallthru
      _
    // Predicated region
    $region34: #{tpu_custom_call.1} parent=1 // pred_check
      _
    $region35: #{tpu_custom_call.1} parent=1 // pred_check_branch
      %69 = sbr.rel (0) target = $region37
    $region36: #{tpu_custom_call.1} parent=1 // pred_region
      _
    $region37: #{tpu_custom_call.1} parent=1 // pred_fallthru
      _
    // Predicated region
    $region38: #{tpu_custom_call.1} parent=1 // pred_check
      _
    $region39: #{tpu_custom_call.1} parent=1 // pred_check_branch
      %71 = sbr.rel (0) target = $region41
    $region40: #{tpu_custom_call.1} parent=1 // pred_region
      %73 = vsyncadd [#allocation7], 0
      %s75 = sshll.u32 %s9, 4
      %s76 = int_to_ptr.hbm [resolvable:$true] %s75
      %s77 = sshll.u32 [#allocation8], 4
      %s78 = int_to_ptr.vmem [resolvable:$true] %s77
      %80 = dma.hbm_to_vmem [thread:$0]  %s76, 16, %s78, [#allocation7]
    $region41: #{tpu_custom_call.1} parent=1 // pred_fallthru
      _
    // Predicated region
    $region42: #{tpu_custom_call.1} parent=1 // pred_check
      _
    $region43: #{tpu_custom_call.1} parent=1 // pred_check_branch
      %82 = sbr.rel (0) target = $region45
    $region44: #{tpu_custom_call.1} parent=1 // pred_region
      %84 = vsyncadd [#allocation10], 0
      %s85 = sshll.u32 %s10, 4
      %s86 = int_to_ptr.hbm [resolvable:$true] %s85
      %s87 = sshll.u32 [#allocation9], 4
      %s88 = int_to_ptr.vmem [resolvable:$true] %s87
      %93 = dma.hbm_to_vmem [thread:$0]  %s86, 1024, %s88, [#allocation10], 64, 64, 4
    $region45: #{tpu_custom_call.1} parent=1 // pred_fallthru
      _
    // Predicated region
    $region46: #{tpu_custom_call.1} parent=1 // pred_check
      _
    $region47: #{tpu_custom_call.1} parent=1 // pred_check_branch
      %95 = sbr.rel (0) target = $region49
    $region48: #{tpu_custom_call.1} parent=1 // pred_region
      %97 = vsyncadd [#allocation10], 0
      %s99 = sshll.u32 %s11, 4
      %s100 = int_to_ptr.hbm [resolvable:$true] %s99
      %s101 = sshll.u32 [#allocation11], 4
      %s102 = int_to_ptr.vmem [resolvable:$true] %s101
      %104 = dma.hbm_to_vmem [thread:$0]  %s100, 16, %s102, [#allocation10]
    $region49: #{tpu_custom_call.1} parent=1 // pred_fallthru
      _
    // Predicated region
    $region50: #{tpu_custom_call.1} parent=1 // pred_check
      _
    $region51: #{tpu_custom_call.1} parent=1 // pred_check_branch
      %106 = sbr.rel (0) target = $region53
    $region52: #{tpu_custom_call.1} parent=1 // pred_region
      %108 = vsyncadd [#allocation13], 0
      %s109 = sshll.u32 %s12, 4
      %s110 = int_to_ptr.hbm [resolvable:$true] %s109
      %s111 = sshll.u32 [#allocation12], 4
      %s112 = int_to_ptr.vmem [resolvable:$true] %s111
      %117 = dma.hbm_to_vmem [thread:$0]  %s110, 4096, %s112, [#allocation13], 256, 256, 16
    $region53: #{tpu_custom_call.1} parent=1 // pred_fallthru
      _
    // Predicated region
    $region54: #{tpu_custom_call.1} parent=1 // pred_check
      _
    $region55: #{tpu_custom_call.1} parent=1 // pred_check_branch
      %119 = sbr.rel (0) target = $region57
    $region56: #{tpu_custom_call.1} parent=1 // pred_region
      _
    $region57: #{tpu_custom_call.1} parent=1 // pred_fallthru
      _
    // Predicated region
    $region58: #{tpu_custom_call.1} parent=1 // pred_check
      _
    $region59: #{tpu_custom_call.1} parent=1 // pred_check_branch
      %121 = sbr.rel (0) target = $region61
    $region60: #{tpu_custom_call.1} parent=1 // pred_region
      %123 = vsyncadd [#allocation13], 0
      %s124 = sshll.u32 %s14, 4
      %s125 = int_to_ptr.hbm [resolvable:$true] %s124
      %s126 = sshll.u32 [#allocation14], 4
      %s127 = int_to_ptr.vmem [resolvable:$true] %s126
      %132 = dma.hbm_to_vmem [thread:$0]  %s125, 3072, %s127, [#allocation13], 192, 192, 12
    $region61: #{tpu_custom_call.1} parent=1 // pred_fallthru
      _
    // Predicated region
    $region62: #{tpu_custom_call.1} parent=1 // pred_check
      _
    $region63: #{tpu_custom_call.1} parent=1 // pred_check_branch
      %134 = sbr.rel (0) target = $region65
    $region64: #{tpu_custom_call.1} parent=1 // pred_region
      _
    $region65: #{tpu_custom_call.1} parent=1 // pred_fallthru
      _
    // Predicated region
    $region66: #{tpu_custom_call.1} parent=1 // pred_check
      _
    $region67: #{tpu_custom_call.1} parent=1 // pred_check_branch
      %136 = sbr.rel (0) target = $region69
    $region68: #{tpu_custom_call.1} parent=1 // pred_region
      %138 = vsyncadd [#allocation16], 0
      %s139 = sshll.u32 %s16, 4
      %s140 = int_to_ptr.hbm [resolvable:$true] %s139
      %s141 = sshll.u32 [#allocation15], 4
      %s142 = int_to_ptr.vmem [resolvable:$true] %s141
      %147 = dma.hbm_to_vmem [thread:$0]  %s140, 3072, %s142, [#allocation16], 192, 192, 12
    $region69: #{tpu_custom_call.1} parent=1 // pred_fallthru
      _
    // Predicated region
    $region70: #{tpu_custom_call.1} parent=1 // pred_check
      _
    $region71: #{tpu_custom_call.1} parent=1 // pred_check_branch
      %149 = sbr.rel (0) target = $region73
    $region72: #{tpu_custom_call.1} parent=1 // pred_region
      %151 = vsyncadd [#allocation16], 0
      %s152 = sshll.u32 %s17, 4
      %s153 = int_to_ptr.hbm [resolvable:$true] %s152
      %s154 = sshll.u32 [#allocation17], 4
      %s155 = int_to_ptr.vmem [resolvable:$true] %s154
      %160 = dma.hbm_to_vmem [thread:$0]  %s153, 2048, %s155, [#allocation16], 128, 128, 8
    $region73: #{tpu_custom_call.1} parent=1 // pred_fallthru
      _
    // Predicated region
    $region74: #{tpu_custom_call.1} parent=1 // pred_check
      _
    $region75: #{tpu_custom_call.1} parent=1 // pred_check_branch
      %162 = sbr.rel (0) target = $region77
    $region76: #{tpu_custom_call.1} parent=1 // pred_region
      _
    $region77: #{tpu_custom_call.1} parent=1 // pred_fallthru
      _
    // Predicated region
    $region78: #{tpu_custom_call.1} parent=1 // pred_check
      _
    $region79: #{tpu_custom_call.1} parent=1 // pred_check_branch
      %164 = sbr.rel (0) target = $region81
    $region80: #{tpu_custom_call.1} parent=1 // pred_region
      %166 = vsyncadd [#allocation19], 0
      %s167 = sshll.u32 %s19, 4
      %s168 = int_to_ptr.hbm [resolvable:$true] %s167
      %s169 = sshll.u32 [#allocation18], 4
      %s170 = int_to_ptr.vmem [resolvable:$true] %s169
      %175 = dma.hbm_to_vmem [thread:$0]  %s168, 1024, %s170, [#allocation19], 64, 64, 4
    $region81: #{tpu_custom_call.1} parent=1 // pred_fallthru
      _
    // Predicated region
    $region82: #{tpu_custom_call.1} parent=1 // pred_check
      _
    $region83: #{tpu_custom_call.1} parent=1 // pred_check_branch
      %177 = sbr.rel (0) target = $region85
    $region84: #{tpu_custom_call.1} parent=1 // pred_region
      _
    $region85: #{tpu_custom_call.1} parent=1 // pred_fallthru
      _
    // Predicated region
    $region86: #{tpu_custom_call.1} parent=1 // pred_check
      _
    $region87: #{tpu_custom_call.1} parent=1 // pred_check_branch
      %179 = sbr.rel (0) target = $region89
    $region88: #{tpu_custom_call.1} parent=1 // pred_region
      %181 = dma.done [#allocation5], 768
    $region89: #{tpu_custom_call.1} parent=1 // pred_fallthru
      _
    // Predicated region
    $region90: #{tpu_custom_call.1} parent=1 // pred_check
      _
    $region91: #{tpu_custom_call.1} parent=1 // pred_check_branch
      %183 = sbr.rel (0) target = $region93
    $region92: #{tpu_custom_call.1} parent=1 // pred_region
      %185 = dma.done [#allocation7], 64
    $region93: #{tpu_custom_call.1} parent=1 // pred_fallthru
      _
    // Predicated region
    $region94: #{tpu_custom_call.1} parent=1 // pred_check
      _
    $region95: #{tpu_custom_call.1} parent=1 // pred_check_branch
      %187 = sbr.rel (0) target = $region97
    $region96: #{tpu_custom_call.1} parent=1 // pred_region
      %189 = dma.done [#allocation7], 16
    $region97: #{tpu_custom_call.1} parent=1 // pred_fallthru
      _
    // Predicated region
    $region98: #{tpu_custom_call.1} parent=1 // pred_check
      _
    $region99: #{tpu_custom_call.1} parent=1 // pred_check_branch
      %191 = sbr.rel (0) target = $region101
    $region100: #{tpu_custom_call.1} parent=1 // pred_region
      %193 = dma.done [#allocation10], 1024
    $region101: #{tpu_custom_call.1} parent=1 // pred_fallthru
      _
    // Predicated region
    $region102: #{tpu_custom_call.1} parent=1 // pred_check
      _
    $region103: #{tpu_custom_call.1} parent=1 // pred_check_branch
      %195 = sbr.rel (0) target = $region105
    $region104: #{tpu_custom_call.1} parent=1 // pred_region
      %197 = dma.done [#allocation10], 16
    $region105: #{tpu_custom_call.1} parent=1 // pred_fallthru
      _
    // Predicated region
    $region106: #{tpu_custom_call.1} parent=1 // pred_check
      _
    $region107: #{tpu_custom_call.1} parent=1 // pred_check_branch
      %199 = sbr.rel (0) target = $region109
    $region108: #{tpu_custom_call.1} parent=1 // pred_region
      %201 = dma.done [#allocation13], 4096
    $region109: #{tpu_custom_call.1} parent=1 // pred_fallthru
      _
    // Predicated region
    $region110: #{tpu_custom_call.1} parent=1 // pred_check
      _
    $region111: #{tpu_custom_call.1} parent=1 // pred_check_branch
      %203 = sbr.rel (0) target = $region113
    $region112: #{tpu_custom_call.1} parent=1 // pred_region
      %205 = dma.done [#allocation13], 3072
    $region113: #{tpu_custom_call.1} parent=1 // pred_fallthru
      _
    // Predicated region
    $region114: #{tpu_custom_call.1} parent=1 // pred_check
      _
    $region115: #{tpu_custom_call.1} parent=1 // pred_check_branch
      %207 = sbr.rel (0) target = $region117
    $region116: #{tpu_custom_call.1} parent=1 // pred_region
      %209 = dma.done [#allocation16], 3072
    $region117: #{tpu_custom_call.1} parent=1 // pred_fallthru
      _
    // Predicated region
    $region118: #{tpu_custom_call.1} parent=1 // pred_check
      _
    $region119: #{tpu_custom_call.1} parent=1 // pred_check_branch
      %211 = sbr.rel (0) target = $region121
    $region120: #{tpu_custom_call.1} parent=1 // pred_region
      %213 = dma.done [#allocation16], 2048
    $region121: #{tpu_custom_call.1} parent=1 // pred_fallthru
      _
    // Predicated region
    $region122: #{tpu_custom_call.1} parent=1 // pred_check
      _
    $region123: #{tpu_custom_call.1} parent=1 // pred_check_branch
      %215 = sbr.rel (0) target = $region125
    $region124: #{tpu_custom_call.1} parent=1 // pred_region
      %217 = dma.done [#allocation19], 1024
    $region125: #{tpu_custom_call.1} parent=1 // pred_fallthru
      _
    %p219 = scmp.eq.s32.totalorder 0, 0
    // Predicated region
    $region126: #{tpu_custom_call.1} parent=1 // pred_check
      %p220 = pneg %p219
    $region127: #{tpu_custom_call.1} parent=1 // pred_check_branch
      %222 = sbr.rel (%p220) target = $region129
    $region128: #{tpu_custom_call.1} parent=1 // pred_region
      %v223 = vld [vmem:[%s1] sm:$0xf]
      %v224 = vld [vmem:[%s8] sm:$0xf]
      %v225 = vld [vmem:[%s8 + $0x4] sm:$0xf]
      %v226 = vld [vmem:[%s8 + $0x8] sm:$0xf]
      %v227 = vld [vmem:[%s8 + $0xc] sm:$0xf]
      %v228 = vld [vmem:[%s8 + $0x10] sm:$0xf]
      %v229 = vld [vmem:[%s8 + $0x14] sm:$0xf]
      %v230 = vld [vmem:[%s8 + $0x18] sm:$0xf]
      %v231 = vld [vmem:[%s8 + $0x1c] sm:$0xf]
      %v232 = vld [vmem:[%s8 + $0x20] sm:$0xf]
      %v233 = vld [vmem:[%s8 + $0x24] sm:$0xf]
      %v234 = vld [vmem:[%s8 + $0x28] sm:$0xf]
      %v235 = vld [vmem:[%s8 + $0x2c] sm:$0xf]
      %v236 = vld [vmem:[%s8 + $0x30] sm:$0xf]
      %v237 = vld [vmem:[%s8 + $0x34] sm:$0xf]
      %v238 = vld [vmem:[%s8 + $0x38] sm:$0xf]
      %v239 = vld [vmem:[%s8 + $0x3c] sm:$0xf]
      %v240 = vld [vmem:[#allocation8] sm:$0x1]
      %v242 = vperm.slane %v240, 0
      %v260 = vunpack.c.l.b16 %v224
      %v261 = vunpack.c.l.b16 %v225
      %v262 = vunpack.c.l.b16 %v226
      %v263 = vunpack.c.l.b16 %v227
      %v264 = vunpack.c.l.b16 %v228
      %v265 = vunpack.c.l.b16 %v229
      %v266 = vunpack.c.l.b16 %v230
      %v267 = vunpack.c.l.b16 %v231
      %v268 = vunpack.c.l.b16 %v232
      %v269 = vunpack.c.l.b16 %v233
      %v270 = vunpack.c.l.b16 %v234
      %v271 = vunpack.c.l.b16 %v235
      %v272 = vunpack.c.l.b16 %v236
      %v273 = vunpack.c.l.b16 %v237
      %v274 = vunpack.c.l.b16 %v238
      %v275 = vunpack.c.l.b16 %v239
      %v276 = vpack.c.b16 %v261, %v260
      %v277 = vpack.c.b16 %v263, %v262
      %v278 = vpack.c.b16 %v265, %v264
      %v279 = vpack.c.b16 %v267, %v266
      %v280 = vpack.c.b16 %v269, %v268
      %v281 = vpack.c.b16 %v271, %v270
      %v282 = vpack.c.b16 %v273, %v272
      %v283 = vpack.c.b16 %v275, %v274
      %292 = vmatpush.bf16.msra.mxu0 %v283
      %293 = vmatpush.bf16.msra.mxu0 %v282
      %294 = vmatpush.bf16.msra.mxu0 %v281
      %295 = vmatpush.bf16.msra.mxu0 %v280
      %296 = vmatpush.bf16.msra.mxu0 %v279
      %297 = vmatpush.bf16.msra.mxu0 %v278
      %298 = vmatpush.bf16.msra.mxu0 %v277
      %299 = vmatpush.bf16.msra.mxu0 %v276
      %300 = vmatmul.bf16.gmra.mxu0 %v223
      %v301 = vpop.f32.mrf.mxu0
      %v302 = vadd.f32 %v242, %v301
      %v303 = vpop.f32.mrf.mxu0
      %304 = vdwg.mxu0
      %v305 = vld [vmem:[%s2] sm:$0xf]
      %v306 = vld [vmem:[#allocation9] sm:$0xf]
      %v307 = vld [vmem:[#allocation9 + $0x4] sm:$0xf]
      %v308 = vld [vmem:[#allocation9 + $0x8] sm:$0xf]
      %v309 = vld [vmem:[#allocation9 + $0xc] sm:$0xf]
      %v310 = vld [vmem:[#allocation9 + $0x10] sm:$0xf]
      %v311 = vld [vmem:[#allocation9 + $0x14] sm:$0xf]
      %v312 = vld [vmem:[#allocation9 + $0x18] sm:$0xf]
      %v313 = vld [vmem:[#allocation9 + $0x1c] sm:$0xf]
      %v314 = vld [vmem:[#allocation9 + $0x20] sm:$0xf]
      %v315 = vld [vmem:[#allocation9 + $0x24] sm:$0xf]
      %v316 = vld [vmem:[#allocation9 + $0x28] sm:$0xf]
      %v317 = vld [vmem:[#allocation9 + $0x2c] sm:$0xf]
      %v318 = vld [vmem:[#allocation9 + $0x30] sm:$0xf]
      %v319 = vld [vmem:[#allocation9 + $0x34] sm:$0xf]
      %v320 = vld [vmem:[#allocation9 + $0x38] sm:$0xf]
      %v321 = vld [vmem:[#allocation9 + $0x3c] sm:$0xf]
      %v322 = vld [vmem:[#allocation11] sm:$0x1]
      %v324 = vperm.slane %v322, 0
      %v342 = vunpack.c.l.b16 %v306
      %v343 = vunpack.c.l.b16 %v307
      %v344 = vunpack.c.l.b16 %v308
      %v345 = vunpack.c.l.b16 %v309
      %v346 = vunpack.c.l.b16 %v310
      %v347 = vunpack.c.l.b16 %v311
      %v348 = vunpack.c.l.b16 %v312
      %v349 = vunpack.c.l.b16 %v313
      %v350 = vunpack.c.l.b16 %v314
      %v351 = vunpack.c.l.b16 %v315
      %v352 = vunpack.c.l.b16 %v316
      %v353 = vunpack.c.l.b16 %v317
      %v354 = vunpack.c.l.b16 %v318
      %v355 = vunpack.c.l.b16 %v319
      %v356 = vunpack.c.l.b16 %v320
      %v357 = vunpack.c.l.b16 %v321
      %v358 = vpack.c.b16 %v343, %v342
      %v359 = vpack.c.b16 %v345, %v344
      %v360 = vpack.c.b16 %v347, %v346
      %v361 = vpack.c.b16 %v349, %v348
      %v362 = vpack.c.b16 %v351, %v350
      %v363 = vpack.c.b16 %v353, %v352
      %v364 = vpack.c.b16 %v355, %v354
      %v365 = vpack.c.b16 %v357, %v356
      %374 = vmatpush.bf16.msra.mxu0 %v365
      %375 = vmatpush.bf16.msra.mxu0 %v364
      %376 = vmatpush.bf16.msra.mxu0 %v363
      %377 = vmatpush.bf16.msra.mxu0 %v362
      %378 = vmatpush.bf16.msra.mxu0 %v361
      %379 = vmatpush.bf16.msra.mxu0 %v360
      %380 = vmatpush.bf16.msra.mxu0 %v359
      %381 = vmatpush.bf16.msra.mxu0 %v358
      %382 = vmatmul.bf16.gmra.mxu0 %v305
      %v383 = vpop.f32.mrf.mxu0
      %v384 = vadd.f32 %v324, %v383
      %v385 = vpop.f32.mrf.mxu0
      %386 = vdwg.mxu0
      %v387 = vmax.f32 %v302, 0.0
      %v388 = vmax.f32 %v384, 0.0
      %v389 = vadd.f32 %v387, %v388
      %390 = vst [vmem:[#allocation2] sm:$0xff] %v389
      %v391 = vld [vmem:[%s3] sm:$0xff]
      %v392 = vsub.f32 1.0, %v391
      %v393 = vld [vmem:[%s7] sm:$0x1]
      %395 = vset.pattern.permute.xlu0 0
      %396 = vperm.xlu0 %395, %v392
      %v397 = vpop.permute.xlu0 %396
      %v400 = vperm.slane %v393, 0
      %v402 = vmul.f32 %v397, %v400
      %404 = vset.pattern.permute.xlu0 0
      %405 = vperm.xlu0 %404, %v391
      %v406 = vpop.permute.xlu0 %405
      %v408 = vadd.f32 %v406, %v402
      %409 = vst [vmem:[#allocation3] sm:$0xff] %v408
    $region129: #{tpu_custom_call.1} parent=1 // pred_fallthru
      _
    %v410 = vld [vmem:[#allocation2] sm:$0xff]
    %v411 = vld [vmem:[#allocation4] sm:$0xff]
    %v412 = vpack.c.bf16 %v411, %v411
    %v413 = vpack.c.bf16 %v410, %v410
    %v414 = vld [vmem:[#allocation12] sm:$0xff]
    %v415 = vld [vmem:[#allocation12 + $0x8] sm:$0xff]
    %v416 = vld [vmem:[#allocation12 + $0x10] sm:$0xff]
    %v417 = vld [vmem:[#allocation12 + $0x18] sm:$0xff]
    %v418 = vld [vmem:[#allocation12 + $0x20] sm:$0xff]
    %v419 = vld [vmem:[#allocation12 + $0x28] sm:$0xff]
    %v420 = vld [vmem:[#allocation12 + $0x30] sm:$0xff]
    %v421 = vld [vmem:[#allocation12 + $0x38] sm:$0xff]
    %v422 = vld [vmem:[#allocation12 + $0x40] sm:$0xff]
    %v423 = vld [vmem:[#allocation12 + $0x48] sm:$0xff]
    %v424 = vld [vmem:[#allocation12 + $0x50] sm:$0xff]
    %v425 = vld [vmem:[#allocation12 + $0x58] sm:$0xff]
    %v426 = vld [vmem:[#allocation12 + $0x60] sm:$0xff]
    %v427 = vld [vmem:[#allocation12 + $0x68] sm:$0xff]
    %v428 = vld [vmem:[#allocation12 + $0x70] sm:$0xff]
    %v429 = vld [vmem:[#allocation12 + $0x78] sm:$0xff]
    %v430 = vld [vmem:[#allocation12 + $0x80] sm:$0xff]
    %v431 = vld [vmem:[#allocation12 + $0x88] sm:$0xff]
    %v432 = vld [vmem:[#allocation12 + $0x90] sm:$0xff]
    %v433 = vld [vmem:[#allocation12 + $0x98] sm:$0xff]
    %v434 = vld [vmem:[#allocation12 + $0xa0] sm:$0xff]
    %v435 = vld [vmem:[#allocation12 + $0xa8] sm:$0xff]
    %v436 = vld [vmem:[#allocation12 + $0xb0] sm:$0xff]
    %v437 = vld [vmem:[#allocation12 + $0xb8] sm:$0xff]
    %v438 = vld [vmem:[#allocation12 + $0xc0] sm:$0xff]
    %v439 = vld [vmem:[#allocation12 + $0xc8] sm:$0xff]
    %v440 = vld [vmem:[#allocation12 + $0xd0] sm:$0xff]
    %v441 = vld [vmem:[#allocation12 + $0xd8] sm:$0xff]
    %v442 = vld [vmem:[#allocation12 + $0xe0] sm:$0xff]
    %v443 = vld [vmem:[#allocation12 + $0xe8] sm:$0xff]
    %v444 = vld [vmem:[#allocation12 + $0xf0] sm:$0xff]
    %v445 = vld [vmem:[#allocation12 + $0xf8] sm:$0xff]
    %v446 = vld [vmem:[%s13] sm:$0xf]
    %v448 = vperm.slane %v446, 0
    %v449 = vperm.slane %v446, 1
    %v450 = vperm.slane %v446, 2
    %v451 = vperm.slane %v446, 3
    %v488 = vunpack.c.l.b16 %v414
    %v489 = vunpack.c.h.b16 %v414
    %v490 = vunpack.c.l.b16 %v415
    %v491 = vunpack.c.h.b16 %v415
    %v492 = vunpack.c.l.b16 %v416
    %v493 = vunpack.c.h.b16 %v416
    %v494 = vunpack.c.l.b16 %v417
    %v495 = vunpack.c.h.b16 %v417
    %v496 = vunpack.c.l.b16 %v418
    %v497 = vunpack.c.h.b16 %v418
    %v498 = vunpack.c.l.b16 %v419
    %v499 = vunpack.c.h.b16 %v419
    %v500 = vunpack.c.l.b16 %v420
    %v501 = vunpack.c.h.b16 %v420
    %v502 = vunpack.c.l.b16 %v421
    %v503 = vunpack.c.h.b16 %v421
    %v504 = vunpack.c.l.b16 %v422
    %v505 = vunpack.c.h.b16 %v422
    %v506 = vunpack.c.l.b16 %v423
    %v507 = vunpack.c.h.b16 %v423
    %v508 = vunpack.c.l.b16 %v424
    %v509 = vunpack.c.h.b16 %v424
    %v510 = vunpack.c.l.b16 %v425
    %v511 = vunpack.c.h.b16 %v425
    %v512 = vunpack.c.l.b16 %v426
    %v513 = vunpack.c.h.b16 %v426
    %v514 = vunpack.c.l.b16 %v427
    %v515 = vunpack.c.h.b16 %v427
    %v516 = vunpack.c.l.b16 %v428
    %v517 = vunpack.c.h.b16 %v428
    %v518 = vunpack.c.l.b16 %v429
    %v519 = vunpack.c.h.b16 %v429
    %v520 = vunpack.c.l.b16 %v430
    %v521 = vunpack.c.h.b16 %v430
    %v522 = vunpack.c.l.b16 %v431
    %v523 = vunpack.c.h.b16 %v431
    %v524 = vunpack.c.l.b16 %v432
    %v525 = vunpack.c.h.b16 %v432
    %v526 = vunpack.c.l.b16 %v433
    %v527 = vunpack.c.h.b16 %v433
    %v528 = vunpack.c.l.b16 %v434
    %v529 = vunpack.c.h.b16 %v434
    %v530 = vunpack.c.l.b16 %v435
    %v531 = vunpack.c.h.b16 %v435
    %v532 = vunpack.c.l.b16 %v436
    %v533 = vunpack.c.h.b16 %v436
    %v534 = vunpack.c.l.b16 %v437
    %v535 = vunpack.c.h.b16 %v437
    %v536 = vunpack.c.l.b16 %v438
    %v537 = vunpack.c.h.b16 %v438
    %v538 = vunpack.c.l.b16 %v439
    %v539 = vunpack.c.h.b16 %v439
    %v540 = vunpack.c.l.b16 %v440
    %v541 = vunpack.c.h.b16 %v440
    %v542 = vunpack.c.l.b16 %v441
    %v543 = vunpack.c.h.b16 %v441
    %v544 = vunpack.c.l.b16 %v442
    %v545 = vunpack.c.h.b16 %v442
    %v546 = vunpack.c.l.b16 %v443
    %v547 = vunpack.c.h.b16 %v443
    %v548 = vunpack.c.l.b16 %v444
    %v549 = vunpack.c.h.b16 %v444
    %v550 = vunpack.c.l.b16 %v445
    %v551 = vunpack.c.h.b16 %v445
    %v552 = vpack.c.b16 %v492, %v488
    %v553 = vpack.c.b16 %v493, %v489
    %v554 = vpack.c.b16 %v494, %v490
    %v555 = vpack.c.b16 %v495, %v491
    %v556 = vpack.c.b16 %v500, %v496
    %v557 = vpack.c.b16 %v501, %v497
    %v558 = vpack.c.b16 %v502, %v498
    %v559 = vpack.c.b16 %v503, %v499
    %v560 = vpack.c.b16 %v508, %v504
    %v561 = vpack.c.b16 %v509, %v505
    %v562 = vpack.c.b16 %v510, %v506
    %v563 = vpack.c.b16 %v511, %v507
    %v564 = vpack.c.b16 %v516, %v512
    %v565 = vpack.c.b16 %v517, %v513
    %v566 = vpack.c.b16 %v518, %v514
    %v567 = vpack.c.b16 %v519, %v515
    %v568 = vpack.c.b16 %v524, %v520
    %v569 = vpack.c.b16 %v525, %v521
    %v570 = vpack.c.b16 %v526, %v522
    %v571 = vpack.c.b16 %v527, %v523
    %v572 = vpack.c.b16 %v532, %v528
    %v573 = vpack.c.b16 %v533, %v529
    %v574 = vpack.c.b16 %v534, %v530
    %v575 = vpack.c.b16 %v535, %v531
    %v576 = vpack.c.b16 %v540, %v536
    %v577 = vpack.c.b16 %v541, %v537
    %v578 = vpack.c.b16 %v542, %v538
    %v579 = vpack.c.b16 %v543, %v539
    %v580 = vpack.c.b16 %v548, %v544
    %v581 = vpack.c.b16 %v549, %v545
    %v582 = vpack.c.b16 %v550, %v546
    %v583 = vpack.c.b16 %v551, %v547
    %616 = vmatpush.bf16.msra.mxu0 %v580
    %617 = vmatpush.bf16.msra.mxu0 %v576
    %618 = vmatpush.bf16.msra.mxu0 %v572
    %619 = vmatpush.bf16.msra.mxu0 %v568
    %620 = vmatpush.bf16.msra.mxu0 %v564
    %621 = vmatpush.bf16.msra.mxu0 %v560
    %622 = vmatpush.bf16.msra.mxu0 %v556
    %623 = vmatpush.bf16.msra.mxu0 %v552
    %624 = vmatmul.bf16.gmra.mxu0 %v412
    %v625 = vpop.f32.mrf.mxu0
    %v626 = vadd.f32 %v448, %v625
    %v627 = vpop.f32.mrf.mxu0
    %628 = vdwg.mxu0
    %629 = vmatpush.bf16.msra.mxu0 %v581
    %630 = vmatpush.bf16.msra.mxu0 %v577
    %631 = vmatpush.bf16.msra.mxu0 %v573
    %632 = vmatpush.bf16.msra.mxu0 %v569
    %633 = vmatpush.bf16.msra.mxu0 %v565
    %634 = vmatpush.bf16.msra.mxu0 %v561
    %635 = vmatpush.bf16.msra.mxu0 %v557
    %636 = vmatpush.bf16.msra.mxu0 %v553
    %637 = vmatmul.bf16.gmra.mxu0 %v412
    %v638 = vpop.f32.mrf.mxu0
    %v639 = vadd.f32 %v449, %v638
    %v640 = vpop.f32.mrf.mxu0
    %641 = vdwg.mxu0
    %642 = vmatpush.bf16.msra.mxu0 %v582
    %643 = vmatpush.bf16.msra.mxu0 %v578
    %644 = vmatpush.bf16.msra.mxu0 %v574
    %645 = vmatpush.bf16.msra.mxu0 %v570
    %646 = vmatpush.bf16.msra.mxu0 %v566
    %647 = vmatpush.bf16.msra.mxu0 %v562
    %648 = vmatpush.bf16.msra.mxu0 %v558
    %649 = vmatpush.bf16.msra.mxu0 %v554
    %650 = vmatmul.bf16.gmra.mxu0 %v412
    %v651 = vpop.f32.mrf.mxu0
    %v652 = vadd.f32 %v450, %v651
    %v653 = vpop.f32.mrf.mxu0
    %654 = vdwg.mxu0
    %655 = vmatpush.bf16.msra.mxu0 %v583
    %656 = vmatpush.bf16.msra.mxu0 %v579
    %657 = vmatpush.bf16.msra.mxu0 %v575
    %658 = vmatpush.bf16.msra.mxu0 %v571
    %659 = vmatpush.bf16.msra.mxu0 %v567
    %660 = vmatpush.bf16.msra.mxu0 %v563
    %661 = vmatpush.bf16.msra.mxu0 %v559
    %662 = vmatpush.bf16.msra.mxu0 %v555
    %663 = vmatmul.bf16.gmra.mxu0 %v412
    %v664 = vpop.f32.mrf.mxu0
    %v665 = vadd.f32 %v451, %v664
    %v666 = vpop.f32.mrf.mxu0
    %667 = vdwg.mxu0
    %v668 = vld [vmem:[#allocation14] sm:$0xff]
    %v669 = vld [vmem:[#allocation14 + $0x8] sm:$0xf]
    %v670 = vld [vmem:[#allocation14 + $0xc] sm:$0xff]
    %v671 = vld [vmem:[#allocation14 + $0x14] sm:$0xf]
    %v672 = vld [vmem:[#allocation14 + $0x18] sm:$0xff]
    %v673 = vld [vmem:[#allocation14 + $0x20] sm:$0xf]
    %v674 = vld [vmem:[#allocation14 + $0x24] sm:$0xff]
    %v675 = vld [vmem:[#allocation14 + $0x2c] sm:$0xf]
    %v676 = vld [vmem:[#allocation14 + $0x30] sm:$0xff]
    %v677 = vld [vmem:[#allocation14 + $0x38] sm:$0xf]
    %v678 = vld [vmem:[#allocation14 + $0x3c] sm:$0xff]
    %v679 = vld [vmem:[#allocation14 + $0x44] sm:$0xf]
    %v680 = vld [vmem:[#allocation14 + $0x48] sm:$0xff]
    %v681 = vld [vmem:[#allocation14 + $0x50] sm:$0xf]
    %v682 = vld [vmem:[#allocation14 + $0x54] sm:$0xff]
    %v683 = vld [vmem:[#allocation14 + $0x5c] sm:$0xf]
    %v684 = vld [vmem:[#allocation14 + $0x60] sm:$0xff]
    %v685 = vld [vmem:[#allocation14 + $0x68] sm:$0xf]
    %v686 = vld [vmem:[#allocation14 + $0x6c] sm:$0xff]
    %v687 = vld [vmem:[#allocation14 + $0x74] sm:$0xf]
    %v688 = vld [vmem:[#allocation14 + $0x78] sm:$0xff]
    %v689 = vld [vmem:[#allocation14 + $0x80] sm:$0xf]
    %v690 = vld [vmem:[#allocation14 + $0x84] sm:$0xff]
    %v691 = vld [vmem:[#allocation14 + $0x8c] sm:$0xf]
    %v692 = vld [vmem:[#allocation14 + $0x90] sm:$0xff]
    %v693 = vld [vmem:[#allocation14 + $0x98] sm:$0xf]
    %v694 = vld [vmem:[#allocation14 + $0x9c] sm:$0xff]
    %v695 = vld [vmem:[#allocation14 + $0xa4] sm:$0xf]
    %v696 = vld [vmem:[#allocation14 + $0xa8] sm:$0xff]
    %v697 = vld [vmem:[#allocation14 + $0xb0] sm:$0xf]
    %v698 = vld [vmem:[#allocation14 + $0xb4] sm:$0xff]
    %v699 = vld [vmem:[#allocation14 + $0xbc] sm:$0xf]
    %v700 = vld [vmem:[%s15] sm:$0x7]
    %v702 = vperm.slane %v700, 0
    %v703 = vperm.slane %v700, 1
    %v704 = vperm.slane %v700, 2
    %v740 = vunpack.c.l.b16 %v668
    %v741 = vunpack.c.h.b16 %v668
    %v742 = vunpack.c.l.b16 %v669
    %v743 = vunpack.c.l.b16 %v670
    %v744 = vunpack.c.h.b16 %v670
    %v745 = vunpack.c.l.b16 %v671
    %v746 = vunpack.c.l.b16 %v672
    %v747 = vunpack.c.h.b16 %v672
    %v748 = vunpack.c.l.b16 %v673
    %v749 = vunpack.c.l.b16 %v674
    %v750 = vunpack.c.h.b16 %v674
    %v751 = vunpack.c.l.b16 %v675
    %v752 = vunpack.c.l.b16 %v676
    %v753 = vunpack.c.h.b16 %v676
    %v754 = vunpack.c.l.b16 %v677
    %v755 = vunpack.c.l.b16 %v678
    %v756 = vunpack.c.h.b16 %v678
    %v757 = vunpack.c.l.b16 %v679
    %v758 = vunpack.c.l.b16 %v680
    %v759 = vunpack.c.h.b16 %v680
    %v760 = vunpack.c.l.b16 %v681
    %v761 = vunpack.c.l.b16 %v682
    %v762 = vunpack.c.h.b16 %v682
    %v763 = vunpack.c.l.b16 %v683
    %v764 = vunpack.c.l.b16 %v684
    %v765 = vunpack.c.h.b16 %v684
    %v766 = vunpack.c.l.b16 %v685
    %v767 = vunpack.c.l.b16 %v686
    %v768 = vunpack.c.h.b16 %v686
    %v769 = vunpack.c.l.b16 %v687
    %v770 = vunpack.c.l.b16 %v688
    %v771 = vunpack.c.h.b16 %v688
    %v772 = vunpack.c.l.b16 %v689
    %v773 = vunpack.c.l.b16 %v690
    %v774 = vunpack.c.h.b16 %v690
    %v775 = vunpack.c.l.b16 %v691
    %v776 = vunpack.c.l.b16 %v692
    %v777 = vunpack.c.h.b16 %v692
    %v778 = vunpack.c.l.b16 %v693
    %v779 = vunpack.c.l.b16 %v694
    %v780 = vunpack.c.h.b16 %v694
    %v781 = vunpack.c.l.b16 %v695
    %v782 = vunpack.c.l.b16 %v696
    %v783 = vunpack.c.h.b16 %v696
    %v784 = vunpack.c.l.b16 %v697
    %v785 = vunpack.c.l.b16 %v698
    %v786 = vunpack.c.h.b16 %v698
    %v787 = vunpack.c.l.b16 %v699
    %v788 = vpack.c.b16 %v743, %v740
    %v789 = vpack.c.b16 %v744, %v741
    %v790 = vpack.c.b16 %v745, %v742
    %v791 = vpack.c.b16 %v749, %v746
    %v792 = vpack.c.b16 %v750, %v747
    %v793 = vpack.c.b16 %v751, %v748
    %v794 = vpack.c.b16 %v755, %v752
    %v795 = vpack.c.b16 %v756, %v753
    %v796 = vpack.c.b16 %v757, %v754
    %v797 = vpack.c.b16 %v761, %v758
    %v798 = vpack.c.b16 %v762, %v759
    %v799 = vpack.c.b16 %v763, %v760
    %v800 = vpack.c.b16 %v767, %v764
    %v801 = vpack.c.b16 %v768, %v765
    %v802 = vpack.c.b16 %v769, %v766
    %v803 = vpack.c.b16 %v773, %v770
    %v804 = vpack.c.b16 %v774, %v771
    %v805 = vpack.c.b16 %v775, %v772
    %v806 = vpack.c.b16 %v779, %v776
    %v807 = vpack.c.b16 %v780, %v777
    %v808 = vpack.c.b16 %v781, %v778
    %v809 = vpack.c.b16 %v785, %v782
    %v810 = vpack.c.b16 %v786, %v783
    %v811 = vpack.c.b16 %v787, %v784
    %836 = vmatpush.bf16.msra.mxu0 %v809
    %837 = vmatpush.bf16.msra.mxu0 %v806
    %838 = vmatpush.bf16.msra.mxu0 %v803
    %839 = vmatpush.bf16.msra.mxu0 %v800
    %840 = vmatpush.bf16.msra.mxu0 %v797
    %841 = vmatpush.bf16.msra.mxu0 %v794
    %842 = vmatpush.bf16.msra.mxu0 %v791
    %843 = vmatpush.bf16.msra.mxu0 %v788
    %844 = vmatmul.bf16.gmra.mxu0 %v413
    %v845 = vpop.f32.mrf.mxu0
    %v846 = vadd.f32 %v702, %v845
    %v847 = vpop.f32.mrf.mxu0
    %848 = vdwg.mxu0
    %849 = vmatpush.bf16.msra.mxu0 %v810
    %850 = vmatpush.bf16.msra.mxu0 %v807
    %851 = vmatpush.bf16.msra.mxu0 %v804
    %852 = vmatpush.bf16.msra.mxu0 %v801
    %853 = vmatpush.bf16.msra.mxu0 %v798
    %854 = vmatpush.bf16.msra.mxu0 %v795
    %855 = vmatpush.bf16.msra.mxu0 %v792
    %856 = vmatpush.bf16.msra.mxu0 %v789
    %857 = vmatmul.bf16.gmra.mxu0 %v413
    %v858 = vpop.f32.mrf.mxu0
    %v859 = vadd.f32 %v703, %v858
    %v860 = vpop.f32.mrf.mxu0
    %861 = vdwg.mxu0
    %862 = vmatpush.bf16.msra.mxu0 %v811
    %863 = vmatpush.bf16.msra.mxu0 %v808
    %864 = vmatpush.bf16.msra.mxu0 %v805
    %865 = vmatpush.bf16.msra.mxu0 %v802
    %866 = vmatpush.bf16.msra.mxu0 %v799
    %867 = vmatpush.bf16.msra.mxu0 %v796
    %868 = vmatpush.bf16.msra.mxu0 %v793
    %869 = vmatpush.bf16.msra.mxu0 %v790
    %870 = vmatmul.bf16.gmra.mxu0 %v413
    %v871 = vpop.f32.mrf.mxu0
    %v872 = vadd.f32 %v704, %v871
    %v873 = vpop.f32.mrf.mxu0
    %874 = vdwg.mxu0
    %v875 = vadd.f32 %v626, %v846
    %v876 = vsub.f32 0.0, %v875
    %v877 = vmul.f32 %v876, 1.442695
    %v878 = vpow.pop %v877
    %v879 = vadd.f32 %v878, 1.0
    %v880 = vrcp.pop %v879
    %v881 = vmul.f32 %v879, %v880
    %v882 = vsub.f32 1.0, %v881
    %v883 = vmul.f32 %v880, %v882
    %v884 = vadd.f32 %v880, %v883
    %vm885 = vweird.f32 %v879
    %vm886 = vweird.f32 %v880
    %vm887 = vmor %vm885, %vm886
    %v888 = vsel %vm887, %v880, %v884
    %v889 = vand.u32 2147483647, %v879
    %vm890 = vcmp.eq.f32.partialorder %v889, 8.507059e+37
    %v891 = vand.u32 %v879, 2147483648
    %v892 = vor.u32 1.1754944e-38, %v891
    %v893 = vsel %vm890, %v892, %v888
    %v894 = vmul.f32 1.0, %v893
    %v895 = vadd.f32 %v639, %v859
    %v896 = vsub.f32 0.0, %v895
    %v897 = vmul.f32 %v896, 1.442695
    %v898 = vpow.pop %v897
    %v899 = vadd.f32 %v898, 1.0
    %v900 = vrcp.pop %v899
    %v901 = vmul.f32 %v899, %v900
    %v902 = vsub.f32 1.0, %v901
    %v903 = vmul.f32 %v900, %v902
    %v904 = vadd.f32 %v900, %v903
    %vm905 = vweird.f32 %v899
    %vm906 = vweird.f32 %v900
    %vm907 = vmor %vm905, %vm906
    %v908 = vsel %vm907, %v900, %v904
    %v909 = vand.u32 2147483647, %v899
    %vm910 = vcmp.eq.f32.partialorder %v909, 8.507059e+37
    %v911 = vand.u32 %v899, 2147483648
    %v912 = vor.u32 1.1754944e-38, %v911
    %v913 = vsel %vm910, %v912, %v908
    %v914 = vmul.f32 1.0, %v913
    %v915 = vmul.f32 %v894, %v872
    %v916 = vadd.f32 %v652, %v915
    %v917 = vtanh.pop %v916
    %v918 = vsub.f32 1.0, %v914
    %v919 = vmul.f32 %v918, %v917
    %v920 = vmul.f32 %v914, %v410
    %v921 = vadd.f32 %v919, %v920
    %v922 = vpack.c.bf16 %v921, %v921
    %v923 = vld [vmem:[#allocation15] sm:$0xff]
    %v924 = vld [vmem:[#allocation15 + $0x8] sm:$0xf]
    %v925 = vld [vmem:[#allocation15 + $0xc] sm:$0xff]
    %v926 = vld [vmem:[#allocation15 + $0x14] sm:$0xf]
    %v927 = vld [vmem:[#allocation15 + $0x18] sm:$0xff]
    %v928 = vld [vmem:[#allocation15 + $0x20] sm:$0xf]
    %v929 = vld [vmem:[#allocation15 + $0x24] sm:$0xff]
    %v930 = vld [vmem:[#allocation15 + $0x2c] sm:$0xf]
    %v931 = vld [vmem:[#allocation15 + $0x30] sm:$0xff]
    %v932 = vld [vmem:[#allocation15 + $0x38] sm:$0xf]
    %v933 = vld [vmem:[#allocation15 + $0x3c] sm:$0xff]
    %v934 = vld [vmem:[#allocation15 + $0x44] sm:$0xf]
    %v935 = vld [vmem:[#allocation15 + $0x48] sm:$0xff]
    %v936 = vld [vmem:[#allocation15 + $0x50] sm:$0xf]
    %v937 = vld [vmem:[#allocation15 + $0x54] sm:$0xff]
    %v938 = vld [vmem:[#allocation15 + $0x5c] sm:$0xf]
    %v939 = vld [vmem:[#allocation15 + $0x60] sm:$0xff]
    %v940 = vld [vmem:[#allocation15 + $0x68] sm:$0xf]
    %v941 = vld [vmem:[#allocation15 + $0x6c] sm:$0xff]
    %v942 = vld [vmem:[#allocation15 + $0x74] sm:$0xf]
    %v943 = vld [vmem:[#allocation15 + $0x78] sm:$0xff]
    %v944 = vld [vmem:[#allocation15 + $0x80] sm:$0xf]
    %v945 = vld [vmem:[#allocation15 + $0x84] sm:$0xff]
    %v946 = vld [vmem:[#allocation15 + $0x8c] sm:$0xf]
    %v947 = vld [vmem:[#allocation15 + $0x90] sm:$0xff]
    %v948 = vld [vmem:[#allocation15 + $0x98] sm:$0xf]
    %v949 = vld [vmem:[#allocation15 + $0x9c] sm:$0xff]
    %v950 = vld [vmem:[#allocation15 + $0xa4] sm:$0xf]
    %v951 = vld [vmem:[#allocation15 + $0xa8] sm:$0xff]
    %v952 = vld [vmem:[#allocation15 + $0xb0] sm:$0xf]
    %v953 = vld [vmem:[#allocation15 + $0xb4] sm:$0xff]
    %v954 = vld [vmem:[#allocation15 + $0xbc] sm:$0xf]
    %v987 = vunpack.c.l.b16 %v923
    %v988 = vunpack.c.h.b16 %v923
    %v989 = vunpack.c.l.b16 %v924
    %v990 = vunpack.c.l.b16 %v925
    %v991 = vunpack.c.h.b16 %v925
    %v992 = vunpack.c.l.b16 %v926
    %v993 = vunpack.c.l.b16 %v927
    %v994 = vunpack.c.h.b16 %v927
    %v995 = vunpack.c.l.b16 %v928
    %v996 = vunpack.c.l.b16 %v929
    %v997 = vunpack.c.h.b16 %v929
    %v998 = vunpack.c.l.b16 %v930
    %v999 = vunpack.c.l.b16 %v931
    %v1000 = vunpack.c.h.b16 %v931
    %v1001 = vunpack.c.l.b16 %v932
    %v1002 = vunpack.c.l.b16 %v933
    %v1003 = vunpack.c.h.b16 %v933
    %v1004 = vunpack.c.l.b16 %v934
    %v1005 = vunpack.c.l.b16 %v935
    %v1006 = vunpack.c.h.b16 %v935
    %v1007 = vunpack.c.l.b16 %v936
    %v1008 = vunpack.c.l.b16 %v937
    %v1009 = vunpack.c.h.b16 %v937
    %v1010 = vunpack.c.l.b16 %v938
    %v1011 = vunpack.c.l.b16 %v939
    %v1012 = vunpack.c.h.b16 %v939
    %v1013 = vunpack.c.l.b16 %v940
    %v1014 = vunpack.c.l.b16 %v941
    %v1015 = vunpack.c.h.b16 %v941
    %v1016 = vunpack.c.l.b16 %v942
    %v1017 = vunpack.c.l.b16 %v943
    %v1018 = vunpack.c.h.b16 %v943
    %v1019 = vunpack.c.l.b16 %v944
    %v1020 = vunpack.c.l.b16 %v945
    %v1021 = vunpack.c.h.b16 %v945
    %v1022 = vunpack.c.l.b16 %v946
    %v1023 = vunpack.c.l.b16 %v947
    %v1024 = vunpack.c.h.b16 %v947
    %v1025 = vunpack.c.l.b16 %v948
    %v1026 = vunpack.c.l.b16 %v949
    %v1027 = vunpack.c.h.b16 %v949
    %v1028 = vunpack.c.l.b16 %v950
    %v1029 = vunpack.c.l.b16 %v951
    %v1030 = vunpack.c.h.b16 %v951
    %v1031 = vunpack.c.l.b16 %v952
    %v1032 = vunpack.c.l.b16 %v953
    %v1033 = vunpack.c.h.b16 %v953
    %v1034 = vunpack.c.l.b16 %v954
    %v1035 = vpack.c.b16 %v990, %v987
    %v1036 = vpack.c.b16 %v991, %v988
    %v1037 = vpack.c.b16 %v992, %v989
    %v1038 = vpack.c.b16 %v996, %v993
    %v1039 = vpack.c.b16 %v997, %v994
    %v1040 = vpack.c.b16 %v998, %v995
    %v1041 = vpack.c.b16 %v1002, %v999
    %v1042 = vpack.c.b16 %v1003, %v1000
    %v1043 = vpack.c.b16 %v1004, %v1001
    %v1044 = vpack.c.b16 %v1008, %v1005
    %v1045 = vpack.c.b16 %v1009, %v1006
    %v1046 = vpack.c.b16 %v1010, %v1007
    %v1047 = vpack.c.b16 %v1014, %v1011
    %v1048 = vpack.c.b16 %v1015, %v1012
    %v1049 = vpack.c.b16 %v1016, %v1013
    %v1050 = vpack.c.b16 %v1020, %v1017
    %v1051 = vpack.c.b16 %v1021, %v1018
    %v1052 = vpack.c.b16 %v1022, %v1019
    %v1053 = vpack.c.b16 %v1026, %v1023
    %v1054 = vpack.c.b16 %v1027, %v1024
    %v1055 = vpack.c.b16 %v1028, %v1025
    %v1056 = vpack.c.b16 %v1032, %v1029
    %v1057 = vpack.c.b16 %v1033, %v1030
    %v1058 = vpack.c.b16 %v1034, %v1031
    %1083 = vmatpush.bf16.msra.mxu0 %v1056
    %1084 = vmatpush.bf16.msra.mxu0 %v1053
    %1085 = vmatpush.bf16.msra.mxu0 %v1050
    %1086 = vmatpush.bf16.msra.mxu0 %v1047
    %1087 = vmatpush.bf16.msra.mxu0 %v1044
    %1088 = vmatpush.bf16.msra.mxu0 %v1041
    %1089 = vmatpush.bf16.msra.mxu0 %v1038
    %1090 = vmatpush.bf16.msra.mxu0 %v1035
    %1091 = vmatmul.bf16.gmra.mxu0 %v922
    %v1092 = vpop.f32.mrf.mxu0
    %v1093 = vadd.f32 0.0, %v1092
    %v1094 = vpop.f32.mrf.mxu0
    %1095 = vdwg.mxu0
    %1096 = vmatpush.bf16.msra.mxu0 %v1057
    %1097 = vmatpush.bf16.msra.mxu0 %v1054
    %1098 = vmatpush.bf16.msra.mxu0 %v1051
    %1099 = vmatpush.bf16.msra.mxu0 %v1048
    %1100 = vmatpush.bf16.msra.mxu0 %v1045
    %1101 = vmatpush.bf16.msra.mxu0 %v1042
    %1102 = vmatpush.bf16.msra.mxu0 %v1039
    %1103 = vmatpush.bf16.msra.mxu0 %v1036
    %1104 = vmatmul.bf16.gmra.mxu0 %v922
    %v1105 = vpop.f32.mrf.mxu0
    %v1106 = vadd.f32 0.0, %v1105
    %v1107 = vpop.f32.mrf.mxu0
    %1108 = vdwg.mxu0
    %1109 = vmatpush.bf16.msra.mxu0 %v1058
    %1110 = vmatpush.bf16.msra.mxu0 %v1055
    %1111 = vmatpush.bf16.msra.mxu0 %v1052
    %1112 = vmatpush.bf16.msra.mxu0 %v1049
    %1113 = vmatpush.bf16.msra.mxu0 %v1046
    %1114 = vmatpush.bf16.msra.mxu0 %v1043
    %1115 = vmatpush.bf16.msra.mxu0 %v1040
    %1116 = vmatpush.bf16.msra.mxu0 %v1037
    %1117 = vmatmul.bf16.gmra.mxu0 %v922
    %v1118 = vpop.f32.mrf.mxu0
    %v1119 = vadd.f32 0.0, %v1118
    %v1120 = vpop.f32.mrf.mxu0
    %1121 = vdwg.mxu0
    %v1122 = vpack.c.bf16 %v1093, %v1093
    %v1123 = vld [vmem:[%s5] sm:$0xf]
    %v1124 = vld [vmem:[%s5 + $0x4] sm:$0xf]
    %v1125 = vld [vmem:[%s5 + $0x8] sm:$0xf]
    %v1126 = vld [vmem:[%s5 + $0xc] sm:$0xf]
    %v1127 = vld [vmem:[%s5 + $0x10] sm:$0xf]
    %v1128 = vld [vmem:[%s5 + $0x14] sm:$0xf]
    %v1129 = vld [vmem:[%s5 + $0x18] sm:$0xf]
    %v1130 = vld [vmem:[%s5 + $0x1c] sm:$0xf]
    %v1131 = vld [vmem:[%s5 + $0x20] sm:$0xf]
    %v1132 = vld [vmem:[%s5 + $0x24] sm:$0xf]
    %v1133 = vld [vmem:[%s5 + $0x28] sm:$0xf]
    %v1134 = vld [vmem:[%s5 + $0x2c] sm:$0xf]
    %v1135 = vld [vmem:[%s5 + $0x30] sm:$0xf]
    %v1136 = vld [vmem:[%s5 + $0x34] sm:$0xf]
    %v1137 = vld [vmem:[%s5 + $0x38] sm:$0xf]
    %v1138 = vld [vmem:[%s5 + $0x3c] sm:$0xf]
    %v1155 = vunpack.c.l.b16 %v1123
    %v1156 = vunpack.c.l.b16 %v1124
    %v1157 = vunpack.c.l.b16 %v1125
    %v1158 = vunpack.c.l.b16 %v1126
    %v1159 = vunpack.c.l.b16 %v1127
    %v1160 = vunpack.c.l.b16 %v1128
    %v1161 = vunpack.c.l.b16 %v1129
    %v1162 = vunpack.c.l.b16 %v1130
    %v1163 = vunpack.c.l.b16 %v1131
    %v1164 = vunpack.c.l.b16 %v1132
    %v1165 = vunpack.c.l.b16 %v1133
    %v1166 = vunpack.c.l.b16 %v1134
    %v1167 = vunpack.c.l.b16 %v1135
    %v1168 = vunpack.c.l.b16 %v1136
    %v1169 = vunpack.c.l.b16 %v1137
    %v1170 = vunpack.c.l.b16 %v1138
    %v1171 = vpack.c.b16 %v1156, %v1155
    %v1172 = vpack.c.b16 %v1158, %v1157
    %v1173 = vpack.c.b16 %v1160, %v1159
    %v1174 = vpack.c.b16 %v1162, %v1161
    %v1175 = vpack.c.b16 %v1164, %v1163
    %v1176 = vpack.c.b16 %v1166, %v1165
    %v1177 = vpack.c.b16 %v1168, %v1167
    %v1178 = vpack.c.b16 %v1170, %v1169
    %1187 = vmatpush.bf16.msra.mxu0 %v1178
    %1188 = vmatpush.bf16.msra.mxu0 %v1177
    %1189 = vmatpush.bf16.msra.mxu0 %v1176
    %1190 = vmatpush.bf16.msra.mxu0 %v1175
    %1191 = vmatpush.bf16.msra.mxu0 %v1174
    %1192 = vmatpush.bf16.msra.mxu0 %v1173
    %1193 = vmatpush.bf16.msra.mxu0 %v1172
    %1194 = vmatpush.bf16.msra.mxu0 %v1171
    %1195 = vmatmul.bf16.gmra.mxu0 %v1122
    %v1196 = vpop.f32.mrf.mxu0
    %v1197 = vadd.f32 0.0, %v1196
    %v1198 = vpop.f32.mrf.mxu0
    %1199 = vdwg.mxu0
    %vm1200 = vcmask 64512
    %v1201 = vsel %vm1200, %v1197, -inf
    %1202 = vmax.xlane.f32.xlu0 %v1201
    %v1203 = vpop.xlane.xlu0 %1202
    %v1204 = vsub.f32 %v1197, %v1203
    %v1205 = vmul.f32 %v1204, 1.442695
    %v1206 = vpow.pop %v1205
    %v1207 = vsel %vm1200, %v1206, 0.0
    %1208 = vadd.xlane.f32.xlu0 %v1207
    %v1209 = vpop.xlane.xlu0 %1208
    %v1210 = vrcp.pop %v1209
    %v1211 = vmul.f32 %v1206, %v1210
    %v1212 = vpack.c.bf16 %v1211, %v1211
    %v1213 = vld [vmem:[#allocation6] sm:$0xf]
    %v1215 = vsel %vm1200, %v1212, 0
    %vm1217 = vcmask 1043456
    %v1219 = vsel %vm1217, %v1213, 0
    %1221 = vmatpush.bf16.msra.mxu0 0
    %1222 = vmatpush.bf16.msra.mxu0 0
    %1223 = vmatpush.bf16.msra.mxu0 0
    %1224 = vmatpush.bf16.msra.mxu0 0
    %1225 = vmatpush.bf16.msra.mxu0 0
    %1226 = vmatpush.bf16.msra.mxu0 0
    %1227 = vmatpush.bf16.msra.mxu0 0
    %1228 = vmatpush.bf16.msra.mxu0 %v1219
    %1229 = vmatmul.bf16.gmra.mxu0 %v1215
    %v1230 = vpop.f32.mrf.mxu0
    %v1231 = vadd.f32 0.0, %v1230
    %v1232 = vpop.f32.mrf.mxu0
    %1233 = vdwg.mxu0
    %v1234 = vpack.c.bf16 %v1231, %v1231
    %v1235 = vld [vmem:[#allocation17] sm:$0xff]
    %v1236 = vld [vmem:[#allocation17 + $0x8] sm:$0xff]
    %v1237 = vld [vmem:[#allocation17 + $0x10] sm:$0xff]
    %v1238 = vld [vmem:[#allocation17 + $0x18] sm:$0xff]
    %v1239 = vld [vmem:[#allocation17 + $0x20] sm:$0xff]
    %v1240 = vld [vmem:[#allocation17 + $0x28] sm:$0xff]
    %v1241 = vld [vmem:[#allocation17 + $0x30] sm:$0xff]
    %v1242 = vld [vmem:[#allocation17 + $0x38] sm:$0xff]
    %v1243 = vld [vmem:[#allocation17 + $0x40] sm:$0xff]
    %v1244 = vld [vmem:[#allocation17 + $0x48] sm:$0xff]
    %v1245 = vld [vmem:[#allocation17 + $0x50] sm:$0xff]
    %v1246 = vld [vmem:[#allocation17 + $0x58] sm:$0xff]
    %v1247 = vld [vmem:[#allocation17 + $0x60] sm:$0xff]
    %v1248 = vld [vmem:[#allocation17 + $0x68] sm:$0xff]
    %v1249 = vld [vmem:[#allocation17 + $0x70] sm:$0xff]
    %v1250 = vld [vmem:[#allocation17 + $0x78] sm:$0xff]
    %v1267 = vunpack.c.l.b16 %v1235
    %v1268 = vunpack.c.h.b16 %v1235
    %v1269 = vunpack.c.l.b16 %v1236
    %v1270 = vunpack.c.h.b16 %v1236
    %v1271 = vunpack.c.l.b16 %v1237
    %v1272 = vunpack.c.h.b16 %v1237
    %v1273 = vunpack.c.l.b16 %v1238
    %v1274 = vunpack.c.h.b16 %v1238
    %v1275 = vunpack.c.l.b16 %v1239
    %v1276 = vunpack.c.h.b16 %v1239
    %v1277 = vunpack.c.l.b16 %v1240
    %v1278 = vunpack.c.h.b16 %v1240
    %v1279 = vunpack.c.l.b16 %v1241
    %v1280 = vunpack.c.h.b16 %v1241
    %v1281 = vunpack.c.l.b16 %v1242
    %v1282 = vunpack.c.h.b16 %v1242
    %v1283 = vunpack.c.l.b16 %v1243
    %v1284 = vunpack.c.h.b16 %v1243
    %v1285 = vunpack.c.l.b16 %v1244
    %v1286 = vunpack.c.h.b16 %v1244
    %v1287 = vunpack.c.l.b16 %v1245
    %v1288 = vunpack.c.h.b16 %v1245
    %v1289 = vunpack.c.l.b16 %v1246
    %v1290 = vunpack.c.h.b16 %v1246
    %v1291 = vunpack.c.l.b16 %v1247
    %v1292 = vunpack.c.h.b16 %v1247
    %v1293 = vunpack.c.l.b16 %v1248
    %v1294 = vunpack.c.h.b16 %v1248
    %v1295 = vunpack.c.l.b16 %v1249
    %v1296 = vunpack.c.h.b16 %v1249
    %v1297 = vunpack.c.l.b16 %v1250
    %v1298 = vunpack.c.h.b16 %v1250
    %v1299 = vpack.c.b16 %v1269, %v1267
    %v1300 = vpack.c.b16 %v1270, %v1268
    %v1301 = vpack.c.b16 %v1273, %v1271
    %v1302 = vpack.c.b16 %v1274, %v1272
    %v1303 = vpack.c.b16 %v1277, %v1275
    %v1304 = vpack.c.b16 %v1278, %v1276
    %v1305 = vpack.c.b16 %v1281, %v1279
    %v1306 = vpack.c.b16 %v1282, %v1280
    %v1307 = vpack.c.b16 %v1285, %v1283
    %v1308 = vpack.c.b16 %v1286, %v1284
    %v1309 = vpack.c.b16 %v1289, %v1287
    %v1310 = vpack.c.b16 %v1290, %v1288
    %v1311 = vpack.c.b16 %v1293, %v1291
    %v1312 = vpack.c.b16 %v1294, %v1292
    %v1313 = vpack.c.b16 %v1297, %v1295
    %v1314 = vpack.c.b16 %v1298, %v1296
    %1331 = vmatpush.bf16.msra.mxu0 %v1313
    %1332 = vmatpush.bf16.msra.mxu0 %v1311
    %1333 = vmatpush.bf16.msra.mxu0 %v1309
    %1334 = vmatpush.bf16.msra.mxu0 %v1307
    %1335 = vmatpush.bf16.msra.mxu0 %v1305
    %1336 = vmatpush.bf16.msra.mxu0 %v1303
    %1337 = vmatpush.bf16.msra.mxu0 %v1301
    %1338 = vmatpush.bf16.msra.mxu0 %v1299
    %1339 = vmatmul.bf16.gmra.mxu0 %v1234
    %v1340 = vpop.f32.mrf.mxu0
    %v1341 = vadd.f32 0.0, %v1340
    %v1342 = vpop.f32.mrf.mxu0
    %1343 = vdwg.mxu0
    %1344 = vmatpush.bf16.msra.mxu0 %v1314
    %1345 = vmatpush.bf16.msra.mxu0 %v1312
    %1346 = vmatpush.bf16.msra.mxu0 %v1310
    %1347 = vmatpush.bf16.msra.mxu0 %v1308
    %1348 = vmatpush.bf16.msra.mxu0 %v1306
    %1349 = vmatpush.bf16.msra.mxu0 %v1304
    %1350 = vmatpush.bf16.msra.mxu0 %v1302
    %1351 = vmatpush.bf16.msra.mxu0 %v1300
    %1352 = vmatmul.bf16.gmra.mxu0 %v1234
    %v1353 = vpop.f32.mrf.mxu0
    %v1354 = vadd.f32 0.0, %v1353
    %v1355 = vpop.f32.mrf.mxu0
    %1356 = vdwg.mxu0
    %v1357 = vadd.f32 %v1106, %v1341
    %v1358 = vld [vmem:[%s18] sm:$0x1]
    %v1360 = vperm.slane %v1358, 0
    %v1362 = vadd.f32 %v1357, %v1360
    %v1363 = vpack.c.bf16 %v1362, %v1362
    %v1364 = vld [vmem:[#allocation18] sm:$0xf]
    %v1365 = vld [vmem:[#allocation18 + $0x4] sm:$0xf]
    %v1366 = vld [vmem:[#allocation18 + $0x8] sm:$0xf]
    %v1367 = vld [vmem:[#allocation18 + $0xc] sm:$0xf]
    %v1368 = vld [vmem:[#allocation18 + $0x10] sm:$0xf]
    %v1369 = vld [vmem:[#allocation18 + $0x14] sm:$0xf]
    %v1370 = vld [vmem:[#allocation18 + $0x18] sm:$0xf]
    %v1371 = vld [vmem:[#allocation18 + $0x1c] sm:$0xf]
    %v1372 = vld [vmem:[#allocation18 + $0x20] sm:$0xf]
    %v1373 = vld [vmem:[#allocation18 + $0x24] sm:$0xf]
    %v1374 = vld [vmem:[#allocation18 + $0x28] sm:$0xf]
    %v1375 = vld [vmem:[#allocation18 + $0x2c] sm:$0xf]
    %v1376 = vld [vmem:[#allocation18 + $0x30] sm:$0xf]
    %v1377 = vld [vmem:[#allocation18 + $0x34] sm:$0xf]
    %v1378 = vld [vmem:[#allocation18 + $0x38] sm:$0xf]
    %v1379 = vld [vmem:[#allocation18 + $0x3c] sm:$0xf]
    %v1380 = vld [vmem:[%s20] sm:$0x1]
    %v1382 = vperm.slane %v1380, 0
    %v1400 = vunpack.c.l.b16 %v1364
    %v1401 = vunpack.c.l.b16 %v1365
    %v1402 = vunpack.c.l.b16 %v1366
    %v1403 = vunpack.c.l.b16 %v1367
    %v1404 = vunpack.c.l.b16 %v1368
    %v1405 = vunpack.c.l.b16 %v1369
    %v1406 = vunpack.c.l.b16 %v1370
    %v1407 = vunpack.c.l.b16 %v1371
    %v1408 = vunpack.c.l.b16 %v1372
    %v1409 = vunpack.c.l.b16 %v1373
    %v1410 = vunpack.c.l.b16 %v1374
    %v1411 = vunpack.c.l.b16 %v1375
    %v1412 = vunpack.c.l.b16 %v1376
    %v1413 = vunpack.c.l.b16 %v1377
    %v1414 = vunpack.c.l.b16 %v1378
    %v1415 = vunpack.c.l.b16 %v1379
    %v1416 = vpack.c.b16 %v1401, %v1400
    %v1417 = vpack.c.b16 %v1403, %v1402
    %v1418 = vpack.c.b16 %v1405, %v1404
    %v1419 = vpack.c.b16 %v1407, %v1406
    %v1420 = vpack.c.b16 %v1409, %v1408
    %v1421 = vpack.c.b16 %v1411, %v1410
    %v1422 = vpack.c.b16 %v1413, %v1412
    %v1423 = vpack.c.b16 %v1415, %v1414
    %1432 = vmatpush.bf16.msra.mxu0 %v1423
    %1433 = vmatpush.bf16.msra.mxu0 %v1422
    %1434 = vmatpush.bf16.msra.mxu0 %v1421
    %1435 = vmatpush.bf16.msra.mxu0 %v1420
    %1436 = vmatpush.bf16.msra.mxu0 %v1419
    %1437 = vmatpush.bf16.msra.mxu0 %v1418
    %1438 = vmatpush.bf16.msra.mxu0 %v1417
    %1439 = vmatpush.bf16.msra.mxu0 %v1416
    %1440 = vmatmul.bf16.gmra.mxu0 %v1363
    %v1441 = vpop.f32.mrf.mxu0
    %v1442 = vadd.f32 %v1382, %v1441
    %v1443 = vpop.f32.mrf.mxu0
    %1444 = vdwg.mxu0
    %1445 = vmax.xlane.f32.xlu0 %v1442
    %v1446 = vpop.xlane.xlu0 %1445
    %v1447 = vsub.f32 %v1442, %v1446
    %v1448 = vmul.f32 %v1447, 1.442695
    %v1449 = vpow.pop %v1448
    %1450 = vadd.xlane.f32.xlu0 %v1449
    %v1451 = vpop.xlane.xlu0 %1450
    %v1452 = vrcp.pop %v1451
    %v1453 = vmul.f32 %v1449, %v1452
    %v1454 = vadd.f32 %v665, %v1119
    %v1455 = vadd.f32 %v1454, %v1354
    %1456 = vadd.xlane.f32.xlu0 %v1455
    %v1457 = vpop.xlane.xlu0 %1456
    %v1458 = vsub.f32 0.0, %v1457
    %v1459 = vmul.f32 %v1458, 1.442695
    %v1460 = vpow.pop %v1459
    %v1461 = vadd.f32 %v1460, 1.0
    %v1462 = vrcp.pop %v1461
    %v1463 = vmul.f32 %v1461, %v1462
    %v1464 = vsub.f32 1.0, %v1463
    %v1465 = vmul.f32 %v1462, %v1464
    %v1466 = vadd.f32 %v1462, %v1465
    %vm1467 = vweird.f32 %v1461
    %vm1468 = vweird.f32 %v1462
    %vm1469 = vmor %vm1467, %vm1468
    %v1470 = vsel %vm1469, %v1462, %v1466
    %v1471 = vand.u32 2147483647, %v1461
    %vm1472 = vcmp.eq.f32.partialorder %v1471, 8.507059e+37
    %v1473 = vand.u32 %v1461, 2147483648
    %v1474 = vor.u32 1.1754944e-38, %v1473
    %v1475 = vsel %vm1472, %v1474, %v1470
    %v1476 = vmul.f32 1.0, %v1475
    %v1477 = vmul.f32 %v1453, %v1476
    %v1478 = vld [vmem:[#allocation3] sm:$0xff]
    %v1479 = vmul.f32 %v1477, %v1478
    %v1480 = vsub.f32 1.0, %v1476
    %v1481 = vmul.f32 %v1211, %v1480
    %v1482 = vpack.c.bf16 %v1481, %v1481
    %v1483 = vld [vmem:[%s6] sm:$0xf]
    %v1485 = vsel %vm1200, %v1482, 0
    %v1488 = vsel %vm1217, %v1483, 0
    %1490 = vmatpush.bf16.msra.mxu0 0
    %1491 = vmatpush.bf16.msra.mxu0 0
    %1492 = vmatpush.bf16.msra.mxu0 0
    %1493 = vmatpush.bf16.msra.mxu0 0
    %1494 = vmatpush.bf16.msra.mxu0 0
    %1495 = vmatpush.bf16.msra.mxu0 0
    %1496 = vmatpush.bf16.msra.mxu0 0
    %1497 = vmatpush.bf16.msra.mxu0 %v1488
    %1498 = vmatmul.bf16.gmra.mxu0 %v1485
    %v1499 = vpop.f32.mrf.mxu0
    %v1500 = vadd.f32 0.0, %v1499
    %v1501 = vpop.f32.mrf.mxu0
    %1502 = vdwg.mxu0
    %v1503 = vadd.f32 %v1479, %v1500
    %v1505 = vrot.slane %v1503, 1
    %v1506 = vrot.slane %v1503, 2
    %v1507 = vrot.slane %v1503, 3
    %v1508 = vrot.slane %v1503, 4
    %v1509 = vrot.slane %v1503, 5
    %v1510 = vrot.slane %v1503, 6
    %v1511 = vrot.slane %v1503, 7
    %v1519 = vpack.c.bf16 %v1503, %v1503
    %v1520 = vpack.c.bf16 %v1505, %v1505
    %v1521 = vpack.c.bf16 %v1506, %v1506
    %v1522 = vpack.c.bf16 %v1507, %v1507
    %v1523 = vpack.c.bf16 %v1508, %v1508
    %v1524 = vpack.c.bf16 %v1509, %v1509
    %v1525 = vpack.c.bf16 %v1510, %v1510
    %v1526 = vpack.c.bf16 %v1511, %v1511
    %vm1527 = vcmask 1040384
    %vm1528 = vsmask.f32 256
    %vm1529 = vmand %vm1527, %vm1528
    %v1530 = vld [vmem:[%s21] sm:$0x1]
    %v1531 = vsel %vm1529, %v1519, %v1530
    %1532 = vst [vmem:[%s21] sm:$0x1] %v1531
    %v1533 = vld [vmem:[%s21 + $0x4] sm:$0x1]
    %v1534 = vsel %vm1529, %v1520, %v1533
    %1535 = vst [vmem:[%s21 + $0x4] sm:$0x1] %v1534
    %v1536 = vld [vmem:[%s21 + $0x8] sm:$0x1]
    %v1537 = vsel %vm1529, %v1521, %v1536
    %1538 = vst [vmem:[%s21 + $0x8] sm:$0x1] %v1537
    %v1539 = vld [vmem:[%s21 + $0xc] sm:$0x1]
    %v1540 = vsel %vm1529, %v1522, %v1539
    %1541 = vst [vmem:[%s21 + $0xc] sm:$0x1] %v1540
    %v1542 = vld [vmem:[%s21 + $0x10] sm:$0x1]
    %v1543 = vsel %vm1529, %v1523, %v1542
    %1544 = vst [vmem:[%s21 + $0x10] sm:$0x1] %v1543
    %v1545 = vld [vmem:[%s21 + $0x14] sm:$0x1]
    %v1546 = vsel %vm1529, %v1524, %v1545
    %1547 = vst [vmem:[%s21 + $0x14] sm:$0x1] %v1546
    %v1548 = vld [vmem:[%s21 + $0x18] sm:$0x1]
    %v1549 = vsel %vm1529, %v1525, %v1548
    %1550 = vst [vmem:[%s21 + $0x18] sm:$0x1] %v1549
    %v1551 = vld [vmem:[%s21 + $0x1c] sm:$0x1]
    %v1552 = vsel %vm1529, %v1526, %v1551
    %1553 = vst [vmem:[%s21 + $0x1c] sm:$0x1] %v1552
    %s1554 = scalar_lea.vmem [#allocation4], 8
    %v1555 = vld [vmem:[%s1554] sm:$0xff]
    %v1556 = vpack.c.bf16 %v1555, %v1555
    %v1557 = vld [vmem:[#allocation12] sm:$0xff]
    %v1558 = vld [vmem:[#allocation12 + $0x8] sm:$0xff]
    %v1559 = vld [vmem:[#allocation12 + $0x10] sm:$0xff]
    %v1560 = vld [vmem:[#allocation12 + $0x18] sm:$0xff]
    %v1561 = vld [vmem:[#allocation12 + $0x20] sm:$0xff]
    %v1562 = vld [vmem:[#allocation12 + $0x28] sm:$0xff]
    %v1563 = vld [vmem:[#allocation12 + $0x30] sm:$0xff]
    %v1564 = vld [vmem:[#allocation12 + $0x38] sm:$0xff]
    %v1565 = vld [vmem:[#allocation12 + $0x40] sm:$0xff]
    %v1566 = vld [vmem:[#allocation12 + $0x48] sm:$0xff]
    %v1567 = vld [vmem:[#allocation12 + $0x50] sm:$0xff]
    %v1568 = vld [vmem:[#allocation12 + $0x58] sm:$0xff]
    %v1569 = vld [vmem:[#allocation12 + $0x60] sm:$0xff]
    %v1570 = vld [vmem:[#allocation12 + $0x68] sm:$0xff]
    %v1571 = vld [vmem:[#allocation12 + $0x70] sm:$0xff]
    %v1572 = vld [vmem:[#allocation12 + $0x78] sm:$0xff]
    %v1573 = vld [vmem:[#allocation12 + $0x80] sm:$0xff]
    %v1574 = vld [vmem:[#allocation12 + $0x88] sm:$0xff]
    %v1575 = vld [vmem:[#allocation12 + $0x90] sm:$0xff]
    %v1576 = vld [vmem:[#allocation12 + $0x98] sm:$0xff]
    %v1577 = vld [vmem:[#allocation12 + $0xa0] sm:$0xff]
    %v1578 = vld [vmem:[#allocation12 + $0xa8] sm:$0xff]
    %v1579 = vld [vmem:[#allocation12 + $0xb0] sm:$0xff]
    %v1580 = vld [vmem:[#allocation12 + $0xb8] sm:$0xff]
    %v1581 = vld [vmem:[#allocation12 + $0xc0] sm:$0xff]
    %v1582 = vld [vmem:[#allocation12 + $0xc8] sm:$0xff]
    %v1583 = vld [vmem:[#allocation12 + $0xd0] sm:$0xff]
    %v1584 = vld [vmem:[#allocation12 + $0xd8] sm:$0xff]
    %v1585 = vld [vmem:[#allocation12 + $0xe0] sm:$0xff]
    %v1586 = vld [vmem:[#allocation12 + $0xe8] sm:$0xff]
    %v1587 = vld [vmem:[#allocation12 + $0xf0] sm:$0xff]
    %v1588 = vld [vmem:[#allocation12 + $0xf8] sm:$0xff]
    %v1589 = vld [vmem:[%s13] sm:$0xf]
    %v1591 = vperm.slane %v1589, 0
    %v1592 = vperm.slane %v1589, 1
    %v1593 = vperm.slane %v1589, 2
    %v1594 = vperm.slane %v1589, 3
    %v1631 = vunpack.c.l.b16 %v1557
    %v1632 = vunpack.c.h.b16 %v1557
    %v1633 = vunpack.c.l.b16 %v1558
    %v1634 = vunpack.c.h.b16 %v1558
    %v1635 = vunpack.c.l.b16 %v1559
    %v1636 = vunpack.c.h.b16 %v1559
    %v1637 = vunpack.c.l.b16 %v1560
    %v1638 = vunpack.c.h.b16 %v1560
    %v1639 = vunpack.c.l.b16 %v1561
    %v1640 = vunpack.c.h.b16 %v1561
    %v1641 = vunpack.c.l.b16 %v1562
    %v1642 = vunpack.c.h.b16 %v1562
    %v1643 = vunpack.c.l.b16 %v1563
    %v1644 = vunpack.c.h.b16 %v1563
    %v1645 = vunpack.c.l.b16 %v1564
    %v1646 = vunpack.c.h.b16 %v1564
    %v1647 = vunpack.c.l.b16 %v1565
    %v1648 = vunpack.c.h.b16 %v1565
    %v1649 = vunpack.c.l.b16 %v1566
    %v1650 = vunpack.c.h.b16 %v1566
    %v1651 = vunpack.c.l.b16 %v1567
    %v1652 = vunpack.c.h.b16 %v1567
    %v1653 = vunpack.c.l.b16 %v1568
    %v1654 = vunpack.c.h.b16 %v1568
    %v1655 = vunpack.c.l.b16 %v1569
    %v1656 = vunpack.c.h.b16 %v1569
    %v1657 = vunpack.c.l.b16 %v1570
    %v1658 = vunpack.c.h.b16 %v1570
    %v1659 = vunpack.c.l.b16 %v1571
    %v1660 = vunpack.c.h.b16 %v1571
    %v1661 = vunpack.c.l.b16 %v1572
    %v1662 = vunpack.c.h.b16 %v1572
    %v1663 = vunpack.c.l.b16 %v1573
    %v1664 = vunpack.c.h.b16 %v1573
    %v1665 = vunpack.c.l.b16 %v1574
    %v1666 = vunpack.c.h.b16 %v1574
    %v1667 = vunpack.c.l.b16 %v1575
    %v1668 = vunpack.c.h.b16 %v1575
    %v1669 = vunpack.c.l.b16 %v1576
    %v1670 = vunpack.c.h.b16 %v1576
    %v1671 = vunpack.c.l.b16 %v1577
    %v1672 = vunpack.c.h.b16 %v1577
    %v1673 = vunpack.c.l.b16 %v1578
    %v1674 = vunpack.c.h.b16 %v1578
    %v1675 = vunpack.c.l.b16 %v1579
    %v1676 = vunpack.c.h.b16 %v1579
    %v1677 = vunpack.c.l.b16 %v1580
    %v1678 = vunpack.c.h.b16 %v1580
    %v1679 = vunpack.c.l.b16 %v1581
    %v1680 = vunpack.c.h.b16 %v1581
    %v1681 = vunpack.c.l.b16 %v1582
    %v1682 = vunpack.c.h.b16 %v1582
    %v1683 = vunpack.c.l.b16 %v1583
    %v1684 = vunpack.c.h.b16 %v1583
    %v1685 = vunpack.c.l.b16 %v1584
    %v1686 = vunpack.c.h.b16 %v1584
    %v1687 = vunpack.c.l.b16 %v1585
    %v1688 = vunpack.c.h.b16 %v1585
    %v1689 = vunpack.c.l.b16 %v1586
    %v1690 = vunpack.c.h.b16 %v1586
    %v1691 = vunpack.c.l.b16 %v1587
    %v1692 = vunpack.c.h.b16 %v1587
    %v1693 = vunpack.c.l.b16 %v1588
    %v1694 = vunpack.c.h.b16 %v1588
    %v1695 = vpack.c.b16 %v1635, %v1631
    %v1696 = vpack.c.b16 %v1636, %v1632
    %v1697 = vpack.c.b16 %v1637, %v1633
    %v1698 = vpack.c.b16 %v1638, %v1634
    %v1699 = vpack.c.b16 %v1643, %v1639
    %v1700 = vpack.c.b16 %v1644, %v1640
    %v1701 = vpack.c.b16 %v1645, %v1641
    %v1702 = vpack.c.b16 %v1646, %v1642
    %v1703 = vpack.c.b16 %v1651, %v1647
    %v1704 = vpack.c.b16 %v1652, %v1648
    %v1705 = vpack.c.b16 %v1653, %v1649
    %v1706 = vpack.c.b16 %v1654, %v1650
    %v1707 = vpack.c.b16 %v1659, %v1655
    %v1708 = vpack.c.b16 %v1660, %v1656
    %v1709 = vpack.c.b16 %v1661, %v1657
    %v1710 = vpack.c.b16 %v1662, %v1658
    %v1711 = vpack.c.b16 %v1667, %v1663
    %v1712 = vpack.c.b16 %v1668, %v1664
    %v1713 = vpack.c.b16 %v1669, %v1665
    %v1714 = vpack.c.b16 %v1670, %v1666
    %v1715 = vpack.c.b16 %v1675, %v1671
    %v1716 = vpack.c.b16 %v1676, %v1672
    %v1717 = vpack.c.b16 %v1677, %v1673
    %v1718 = vpack.c.b16 %v1678, %v1674
    %v1719 = vpack.c.b16 %v1683, %v1679
    %v1720 = vpack.c.b16 %v1684, %v1680
    %v1721 = vpack.c.b16 %v1685, %v1681
    %v1722 = vpack.c.b16 %v1686, %v1682
    %v1723 = vpack.c.b16 %v1691, %v1687
    %v1724 = vpack.c.b16 %v1692, %v1688
    %v1725 = vpack.c.b16 %v1693, %v1689
    %v1726 = vpack.c.b16 %v1694, %v1690
    %1759 = vmatpush.bf16.msra.mxu0 %v1723
    %1760 = vmatpush.bf16.msra.mxu0 %v1719
    %1761 = vmatpush.bf16.msra.mxu0 %v1715
    %1762 = vmatpush.bf16.msra.mxu0 %v1711
    %1763 = vmatpush.bf16.msra.mxu0 %v1707
    %1764 = vmatpush.bf16.msra.mxu0 %v1703
    %1765 = vmatpush.bf16.msra.mxu0 %v1699
    %1766 = vmatpush.bf16.msra.mxu0 %v1695
    %1767 = vmatmul.bf16.gmra.mxu0 %v1556
    %v1768 = vpop.f32.mrf.mxu0
    %v1769 = vadd.f32 %v1591, %v1768
    %v1770 = vpop.f32.mrf.mxu0
    %1771 = vdwg.mxu0
    %1772 = vmatpush.bf16.msra.mxu0 %v1724
    %1773 = vmatpush.bf16.msra.mxu0 %v1720
    %1774 = vmatpush.bf16.msra.mxu0 %v1716
    %1775 = vmatpush.bf16.msra.mxu0 %v1712
    %1776 = vmatpush.bf16.msra.mxu0 %v1708
    %1777 = vmatpush.bf16.msra.mxu0 %v1704
    %1778 = vmatpush.bf16.msra.mxu0 %v1700
    %1779 = vmatpush.bf16.msra.mxu0 %v1696
    %1780 = vmatmul.bf16.gmra.mxu0 %v1556
    %v1781 = vpop.f32.mrf.mxu0
    %v1782 = vadd.f32 %v1592, %v1781
    %v1783 = vpop.f32.mrf.mxu0
    %1784 = vdwg.mxu0
    %1785 = vmatpush.bf16.msra.mxu0 %v1725
    %1786 = vmatpush.bf16.msra.mxu0 %v1721
    %1787 = vmatpush.bf16.msra.mxu0 %v1717
    %1788 = vmatpush.bf16.msra.mxu0 %v1713
    %1789 = vmatpush.bf16.msra.mxu0 %v1709
    %1790 = vmatpush.bf16.msra.mxu0 %v1705
    %1791 = vmatpush.bf16.msra.mxu0 %v1701
    %1792 = vmatpush.bf16.msra.mxu0 %v1697
    %1793 = vmatmul.bf16.gmra.mxu0 %v1556
    %v1794 = vpop.f32.mrf.mxu0
    %v1795 = vadd.f32 %v1593, %v1794
    %v1796 = vpop.f32.mrf.mxu0
    %1797 = vdwg.mxu0
    %1798 = vmatpush.bf16.msra.mxu0 %v1726
    %1799 = vmatpush.bf16.msra.mxu0 %v1722
    %1800 = vmatpush.bf16.msra.mxu0 %v1718
    %1801 = vmatpush.bf16.msra.mxu0 %v1714
    %1802 = vmatpush.bf16.msra.mxu0 %v1710
    %1803 = vmatpush.bf16.msra.mxu0 %v1706
    %1804 = vmatpush.bf16.msra.mxu0 %v1702
    %1805 = vmatpush.bf16.msra.mxu0 %v1698
    %1806 = vmatmul.bf16.gmra.mxu0 %v1556
    %v1807 = vpop.f32.mrf.mxu0
    %v1808 = vadd.f32 %v1594, %v1807
    %v1809 = vpop.f32.mrf.mxu0
    %1810 = vdwg.mxu0
    %v1811 = vld [vmem:[#allocation14] sm:$0xff]
    %v1812 = vld [vmem:[#allocation14 + $0x8] sm:$0xf]
    %v1813 = vld [vmem:[#allocation14 + $0xc] sm:$0xff]
    %v1814 = vld [vmem:[#allocation14 + $0x14] sm:$0xf]
    %v1815 = vld [vmem:[#allocation14 + $0x18] sm:$0xff]
    %v1816 = vld [vmem:[#allocation14 + $0x20] sm:$0xf]
    %v1817 = vld [vmem:[#allocation14 + $0x24] sm:$0xff]
    %v1818 = vld [vmem:[#allocation14 + $0x2c] sm:$0xf]
    %v1819 = vld [vmem:[#allocation14 + $0x30] sm:$0xff]
    %v1820 = vld [vmem:[#allocation14 + $0x38] sm:$0xf]
    %v1821 = vld [vmem:[#allocation14 + $0x3c] sm:$0xff]
    %v1822 = vld [vmem:[#allocation14 + $0x44] sm:$0xf]
    %v1823 = vld [vmem:[#allocation14 + $0x48] sm:$0xff]
    %v1824 = vld [vmem:[#allocation14 + $0x50] sm:$0xf]
    %v1825 = vld [vmem:[#allocation14 + $0x54] sm:$0xff]
    %v1826 = vld [vmem:[#allocation14 + $0x5c] sm:$0xf]
    %v1827 = vld [vmem:[#allocation14 + $0x60] sm:$0xff]
    %v1828 = vld [vmem:[#allocation14 + $0x68] sm:$0xf]
    %v1829 = vld [vmem:[#allocation14 + $0x6c] sm:$0xff]
    %v1830 = vld [vmem:[#allocation14 + $0x74] sm:$0xf]
    %v1831 = vld [vmem:[#allocation14 + $0x78] sm:$0xff]
    %v1832 = vld [vmem:[#allocation14 + $0x80] sm:$0xf]
    %v1833 = vld [vmem:[#allocation14 + $0x84] sm:$0xff]
    %v1834 = vld [vmem:[#allocation14 + $0x8c] sm:$0xf]
    %v1835 = vld [vmem:[#allocation14 + $0x90] sm:$0xff]
    %v1836 = vld [vmem:[#allocation14 + $0x98] sm:$0xf]
    %v1837 = vld [vmem:[#allocation14 + $0x9c] sm:$0xff]
    %v1838 = vld [vmem:[#allocation14 + $0xa4] sm:$0xf]
    %v1839 = vld [vmem:[#allocation14 + $0xa8] sm:$0xff]
    %v1840 = vld [vmem:[#allocation14 + $0xb0] sm:$0xf]
    %v1841 = vld [vmem:[#allocation14 + $0xb4] sm:$0xff]
    %v1842 = vld [vmem:[#allocation14 + $0xbc] sm:$0xf]
    %v1843 = vld [vmem:[%s15] sm:$0x7]
    %v1845 = vperm.slane %v1843, 0
    %v1846 = vperm.slane %v1843, 1
    %v1847 = vperm.slane %v1843, 2
    %v1883 = vunpack.c.l.b16 %v1811
    %v1884 = vunpack.c.h.b16 %v1811
    %v1885 = vunpack.c.l.b16 %v1812
    %v1886 = vunpack.c.l.b16 %v1813
    %v1887 = vunpack.c.h.b16 %v1813
    %v1888 = vunpack.c.l.b16 %v1814
    %v1889 = vunpack.c.l.b16 %v1815
    %v1890 = vunpack.c.h.b16 %v1815
    %v1891 = vunpack.c.l.b16 %v1816
    %v1892 = vunpack.c.l.b16 %v1817
    %v1893 = vunpack.c.h.b16 %v1817
    %v1894 = vunpack.c.l.b16 %v1818
    %v1895 = vunpack.c.l.b16 %v1819
    %v1896 = vunpack.c.h.b16 %v1819
    %v1897 = vunpack.c.l.b16 %v1820
    %v1898 = vunpack.c.l.b16 %v1821
    %v1899 = vunpack.c.h.b16 %v1821
    %v1900 = vunpack.c.l.b16 %v1822
    %v1901 = vunpack.c.l.b16 %v1823
    %v1902 = vunpack.c.h.b16 %v1823
    %v1903 = vunpack.c.l.b16 %v1824
    %v1904 = vunpack.c.l.b16 %v1825
    %v1905 = vunpack.c.h.b16 %v1825
    %v1906 = vunpack.c.l.b16 %v1826
    %v1907 = vunpack.c.l.b16 %v1827
    %v1908 = vunpack.c.h.b16 %v1827
    %v1909 = vunpack.c.l.b16 %v1828
    %v1910 = vunpack.c.l.b16 %v1829
    %v1911 = vunpack.c.h.b16 %v1829
    %v1912 = vunpack.c.l.b16 %v1830
    %v1913 = vunpack.c.l.b16 %v1831
    %v1914 = vunpack.c.h.b16 %v1831
    %v1915 = vunpack.c.l.b16 %v1832
    %v1916 = vunpack.c.l.b16 %v1833
    %v1917 = vunpack.c.h.b16 %v1833
    %v1918 = vunpack.c.l.b16 %v1834
    %v1919 = vunpack.c.l.b16 %v1835
    %v1920 = vunpack.c.h.b16 %v1835
    %v1921 = vunpack.c.l.b16 %v1836
    %v1922 = vunpack.c.l.b16 %v1837
    %v1923 = vunpack.c.h.b16 %v1837
    %v1924 = vunpack.c.l.b16 %v1838
    %v1925 = vunpack.c.l.b16 %v1839
    %v1926 = vunpack.c.h.b16 %v1839
    %v1927 = vunpack.c.l.b16 %v1840
    %v1928 = vunpack.c.l.b16 %v1841
    %v1929 = vunpack.c.h.b16 %v1841
    %v1930 = vunpack.c.l.b16 %v1842
    %v1931 = vpack.c.b16 %v1886, %v1883
    %v1932 = vpack.c.b16 %v1887, %v1884
    %v1933 = vpack.c.b16 %v1888, %v1885
    %v1934 = vpack.c.b16 %v1892, %v1889
    %v1935 = vpack.c.b16 %v1893, %v1890
    %v1936 = vpack.c.b16 %v1894, %v1891
    %v1937 = vpack.c.b16 %v1898, %v1895
    %v1938 = vpack.c.b16 %v1899, %v1896
    %v1939 = vpack.c.b16 %v1900, %v1897
    %v1940 = vpack.c.b16 %v1904, %v1901
    %v1941 = vpack.c.b16 %v1905, %v1902
    %v1942 = vpack.c.b16 %v1906, %v1903
    %v1943 = vpack.c.b16 %v1910, %v1907
    %v1944 = vpack.c.b16 %v1911, %v1908
    %v1945 = vpack.c.b16 %v1912, %v1909
    %v1946 = vpack.c.b16 %v1916, %v1913
    %v1947 = vpack.c.b16 %v1917, %v1914
    %v1948 = vpack.c.b16 %v1918, %v1915
    %v1949 = vpack.c.b16 %v1922, %v1919
    %v1950 = vpack.c.b16 %v1923, %v1920
    %v1951 = vpack.c.b16 %v1924, %v1921
    %v1952 = vpack.c.b16 %v1928, %v1925
    %v1953 = vpack.c.b16 %v1929, %v1926
    %v1954 = vpack.c.b16 %v1930, %v1927
    %1979 = vmatpush.bf16.msra.mxu0 %v1952
    %1980 = vmatpush.bf16.msra.mxu0 %v1949
    %1981 = vmatpush.bf16.msra.mxu0 %v1946
    %1982 = vmatpush.bf16.msra.mxu0 %v1943
    %1983 = vmatpush.bf16.msra.mxu0 %v1940
    %1984 = vmatpush.bf16.msra.mxu0 %v1937
    %1985 = vmatpush.bf16.msra.mxu0 %v1934
    %1986 = vmatpush.bf16.msra.mxu0 %v1931
    %1987 = vmatmul.bf16.gmra.mxu0 %v922
    %v1988 = vpop.f32.mrf.mxu0
    %v1989 = vadd.f32 %v1845, %v1988
    %v1990 = vpop.f32.mrf.mxu0
    %1991 = vdwg.mxu0
    %1992 = vmatpush.bf16.msra.mxu0 %v1953
    %1993 = vmatpush.bf16.msra.mxu0 %v1950
    %1994 = vmatpush.bf16.msra.mxu0 %v1947
    %1995 = vmatpush.bf16.msra.mxu0 %v1944
    %1996 = vmatpush.bf16.msra.mxu0 %v1941
    %1997 = vmatpush.bf16.msra.mxu0 %v1938
    %1998 = vmatpush.bf16.msra.mxu0 %v1935
    %1999 = vmatpush.bf16.msra.mxu0 %v1932
    %2000 = vmatmul.bf16.gmra.mxu0 %v922
    %v2001 = vpop.f32.mrf.mxu0
    %v2002 = vadd.f32 %v1846, %v2001
    %v2003 = vpop.f32.mrf.mxu0
    %2004 = vdwg.mxu0
    %2005 = vmatpush.bf16.msra.mxu0 %v1954
    %2006 = vmatpush.bf16.msra.mxu0 %v1951
    %2007 = vmatpush.bf16.msra.mxu0 %v1948
    %2008 = vmatpush.bf16.msra.mxu0 %v1945
    %2009 = vmatpush.bf16.msra.mxu0 %v1942
    %2010 = vmatpush.bf16.msra.mxu0 %v1939
    %2011 = vmatpush.bf16.msra.mxu0 %v1936
    %2012 = vmatpush.bf16.msra.mxu0 %v1933
    %2013 = vmatmul.bf16.gmra.mxu0 %v922
    %v2014 = vpop.f32.mrf.mxu0
    %v2015 = vadd.f32 %v1847, %v2014
    %v2016 = vpop.f32.mrf.mxu0
    %2017 = vdwg.mxu0
    %v2018 = vadd.f32 %v1769, %v1989
    %v2019 = vsub.f32 0.0, %v2018
    %v2020 = vmul.f32 %v2019, 1.442695
    %v2021 = vpow.pop %v2020
    %v2022 = vadd.f32 %v2021, 1.0
    %v2023 = vrcp.pop %v2022
    %v2024 = vmul.f32 %v2022, %v2023
    %v2025 = vsub.f32 1.0, %v2024
    %v2026 = vmul.f32 %v2023, %v2025
    %v2027 = vadd.f32 %v2023, %v2026
    %vm2028 = vweird.f32 %v2022
    %vm2029 = vweird.f32 %v2023
    %vm2030 = vmor %vm2028, %vm2029
    %v2031 = vsel %vm2030, %v2023, %v2027
    %v2032 = vand.u32 2147483647, %v2022
    %vm2033 = vcmp.eq.f32.partialorder %v2032, 8.507059e+37
    %v2034 = vand.u32 %v2022, 2147483648
    %v2035 = vor.u32 1.1754944e-38, %v2034
    %v2036 = vsel %vm2033, %v2035, %v2031
    %v2037 = vmul.f32 1.0, %v2036
    %v2038 = vadd.f32 %v1782, %v2002
    %v2039 = vsub.f32 0.0, %v2038
    %v2040 = vmul.f32 %v2039, 1.442695
    %v2041 = vpow.pop %v2040
    %v2042 = vadd.f32 %v2041, 1.0
    %v2043 = vrcp.pop %v2042
    %v2044 = vmul.f32 %v2042, %v2043
    %v2045 = vsub.f32 1.0, %v2044
    %v2046 = vmul.f32 %v2043, %v2045
    %v2047 = vadd.f32 %v2043, %v2046
    %vm2048 = vweird.f32 %v2042
    %vm2049 = vweird.f32 %v2043
    %vm2050 = vmor %vm2048, %vm2049
    %v2051 = vsel %vm2050, %v2043, %v2047
    %v2052 = vand.u32 2147483647, %v2042
    %vm2053 = vcmp.eq.f32.partialorder %v2052, 8.507059e+37
    %v2054 = vand.u32 %v2042, 2147483648
    %v2055 = vor.u32 1.1754944e-38, %v2054
    %v2056 = vsel %vm2053, %v2055, %v2051
    %v2057 = vmul.f32 1.0, %v2056
    %v2058 = vmul.f32 %v2037, %v2015
    %v2059 = vadd.f32 %v1795, %v2058
    %v2060 = vtanh.pop %v2059
    %v2061 = vsub.f32 1.0, %v2057
    %v2062 = vmul.f32 %v2061, %v2060
    %v2063 = vmul.f32 %v2057, %v921
    %v2064 = vadd.f32 %v2062, %v2063
    %v2065 = vpack.c.bf16 %v2064, %v2064
    %v2066 = vld [vmem:[#allocation15] sm:$0xff]
    %v2067 = vld [vmem:[#allocation15 + $0x8] sm:$0xf]
    %v2068 = vld [vmem:[#allocation15 + $0xc] sm:$0xff]
    %v2069 = vld [vmem:[#allocation15 + $0x14] sm:$0xf]
    %v2070 = vld [vmem:[#allocation15 + $0x18] sm:$0xff]
    %v2071 = vld [vmem:[#allocation15 + $0x20] sm:$0xf]
    %v2072 = vld [vmem:[#allocation15 + $0x24] sm:$0xff]
    %v2073 = vld [vmem:[#allocation15 + $0x2c] sm:$0xf]
    %v2074 = vld [vmem:[#allocation15 + $0x30] sm:$0xff]
    %v2075 = vld [vmem:[#allocation15 + $0x38] sm:$0xf]
    %v2076 = vld [vmem:[#allocation15 + $0x3c] sm:$0xff]
    %v2077 = vld [vmem:[#allocation15 + $0x44] sm:$0xf]
    %v2078 = vld [vmem:[#allocation15 + $0x48] sm:$0xff]
    %v2079 = vld [vmem:[#allocation15 + $0x50] sm:$0xf]
    %v2080 = vld [vmem:[#allocation15 + $0x54] sm:$0xff]
    %v2081 = vld [vmem:[#allocation15 + $0x5c] sm:$0xf]
    %v2082 = vld [vmem:[#allocation15 + $0x60] sm:$0xff]
    %v2083 = vld [vmem:[#allocation15 + $0x68] sm:$0xf]
    %v2084 = vld [vmem:[#allocation15 + $0x6c] sm:$0xff]
    %v2085 = vld [vmem:[#allocation15 + $0x74] sm:$0xf]
    %v2086 = vld [vmem:[#allocation15 + $0x78] sm:$0xff]
    %v2087 = vld [vmem:[#allocation15 + $0x80] sm:$0xf]
    %v2088 = vld [vmem:[#allocation15 + $0x84] sm:$0xff]
    %v2089 = vld [vmem:[#allocation15 + $0x8c] sm:$0xf]
    %v2090 = vld [vmem:[#allocation15 + $0x90] sm:$0xff]
    %v2091 = vld [vmem:[#allocation15 + $0x98] sm:$0xf]
    %v2092 = vld [vmem:[#allocation15 + $0x9c] sm:$0xff]
    %v2093 = vld [vmem:[#allocation15 + $0xa4] sm:$0xf]
    %v2094 = vld [vmem:[#allocation15 + $0xa8] sm:$0xff]
    %v2095 = vld [vmem:[#allocation15 + $0xb0] sm:$0xf]
    %v2096 = vld [vmem:[#allocation15 + $0xb4] sm:$0xff]
    %v2097 = vld [vmem:[#allocation15 + $0xbc] sm:$0xf]
    %v2130 = vunpack.c.l.b16 %v2066
    %v2131 = vunpack.c.h.b16 %v2066
    %v2132 = vunpack.c.l.b16 %v2067
    %v2133 = vunpack.c.l.b16 %v2068
    %v2134 = vunpack.c.h.b16 %v2068
    %v2135 = vunpack.c.l.b16 %v2069
    %v2136 = vunpack.c.l.b16 %v2070
    %v2137 = vunpack.c.h.b16 %v2070
    %v2138 = vunpack.c.l.b16 %v2071
    %v2139 = vunpack.c.l.b16 %v2072
    %v2140 = vunpack.c.h.b16 %v2072
    %v2141 = vunpack.c.l.b16 %v2073
    %v2142 = vunpack.c.l.b16 %v2074
    %v2143 = vunpack.c.h.b16 %v2074
    %v2144 = vunpack.c.l.b16 %v2075
    %v2145 = vunpack.c.l.b16 %v2076
    %v2146 = vunpack.c.h.b16 %v2076
    %v2147 = vunpack.c.l.b16 %v2077
    %v2148 = vunpack.c.l.b16 %v2078
    %v2149 = vunpack.c.h.b16 %v2078
    %v2150 = vunpack.c.l.b16 %v2079
    %v2151 = vunpack.c.l.b16 %v2080
    %v2152 = vunpack.c.h.b16 %v2080
    %v2153 = vunpack.c.l.b16 %v2081
    %v2154 = vunpack.c.l.b16 %v2082
    %v2155 = vunpack.c.h.b16 %v2082
    %v2156 = vunpack.c.l.b16 %v2083
    %v2157 = vunpack.c.l.b16 %v2084
    %v2158 = vunpack.c.h.b16 %v2084
    %v2159 = vunpack.c.l.b16 %v2085
    %v2160 = vunpack.c.l.b16 %v2086
    %v2161 = vunpack.c.h.b16 %v2086
    %v2162 = vunpack.c.l.b16 %v2087
    %v2163 = vunpack.c.l.b16 %v2088
    %v2164 = vunpack.c.h.b16 %v2088
    %v2165 = vunpack.c.l.b16 %v2089
    %v2166 = vunpack.c.l.b16 %v2090
    %v2167 = vunpack.c.h.b16 %v2090
    %v2168 = vunpack.c.l.b16 %v2091
    %v2169 = vunpack.c.l.b16 %v2092
    %v2170 = vunpack.c.h.b16 %v2092
    %v2171 = vunpack.c.l.b16 %v2093
    %v2172 = vunpack.c.l.b16 %v2094
    %v2173 = vunpack.c.h.b16 %v2094
    %v2174 = vunpack.c.l.b16 %v2095
    %v2175 = vunpack.c.l.b16 %v2096
    %v2176 = vunpack.c.h.b16 %v2096
    %v2177 = vunpack.c.l.b16 %v2097
    %v2178 = vpack.c.b16 %v2133, %v2130
    %v2179 = vpack.c.b16 %v2134, %v2131
    %v2180 = vpack.c.b16 %v2135, %v2132
    %v2181 = vpack.c.b16 %v2139, %v2136
    %v2182 = vpack.c.b16 %v2140, %v2137
    %v2183 = vpack.c.b16 %v2141, %v2138
    %v2184 = vpack.c.b16 %v2145, %v2142
    %v2185 = vpack.c.b16 %v2146, %v2143
    %v2186 = vpack.c.b16 %v2147, %v2144
    %v2187 = vpack.c.b16 %v2151, %v2148
    %v2188 = vpack.c.b16 %v2152, %v2149
    %v2189 = vpack.c.b16 %v2153, %v2150
    %v2190 = vpack.c.b16 %v2157, %v2154
    %v2191 = vpack.c.b16 %v2158, %v2155
    %v2192 = vpack.c.b16 %v2159, %v2156
    %v2193 = vpack.c.b16 %v2163, %v2160
    %v2194 = vpack.c.b16 %v2164, %v2161
    %v2195 = vpack.c.b16 %v2165, %v2162
    %v2196 = vpack.c.b16 %v2169, %v2166
    %v2197 = vpack.c.b16 %v2170, %v2167
    %v2198 = vpack.c.b16 %v2171, %v2168
    %v2199 = vpack.c.b16 %v2175, %v2172
    %v2200 = vpack.c.b16 %v2176, %v2173
    %v2201 = vpack.c.b16 %v2177, %v2174
    %2226 = vmatpush.bf16.msra.mxu0 %v2199
    %2227 = vmatpush.bf16.msra.mxu0 %v2196
    %2228 = vmatpush.bf16.msra.mxu0 %v2193
    %2229 = vmatpush.bf16.msra.mxu0 %v2190
    %2230 = vmatpush.bf16.msra.mxu0 %v2187
    %2231 = vmatpush.bf16.msra.mxu0 %v2184
    %2232 = vmatpush.bf16.msra.mxu0 %v2181
    %2233 = vmatpush.bf16.msra.mxu0 %v2178
    %2234 = vmatmul.bf16.gmra.mxu0 %v2065
    %v2235 = vpop.f32.mrf.mxu0
    %v2236 = vadd.f32 0.0, %v2235
    %v2237 = vpop.f32.mrf.mxu0
    %2238 = vdwg.mxu0
    %2239 = vmatpush.bf16.msra.mxu0 %v2200
    %2240 = vmatpush.bf16.msra.mxu0 %v2197
    %2241 = vmatpush.bf16.msra.mxu0 %v2194
    %2242 = vmatpush.bf16.msra.mxu0 %v2191
    %2243 = vmatpush.bf16.msra.mxu0 %v2188
    %2244 = vmatpush.bf16.msra.mxu0 %v2185
    %2245 = vmatpush.bf16.msra.mxu0 %v2182
    %2246 = vmatpush.bf16.msra.mxu0 %v2179
    %2247 = vmatmul.bf16.gmra.mxu0 %v2065
    %v2248 = vpop.f32.mrf.mxu0
    %v2249 = vadd.f32 0.0, %v2248
    %v2250 = vpop.f32.mrf.mxu0
    %2251 = vdwg.mxu0
    %2252 = vmatpush.bf16.msra.mxu0 %v2201
    %2253 = vmatpush.bf16.msra.mxu0 %v2198
    %2254 = vmatpush.bf16.msra.mxu0 %v2195
    %2255 = vmatpush.bf16.msra.mxu0 %v2192
    %2256 = vmatpush.bf16.msra.mxu0 %v2189
    %2257 = vmatpush.bf16.msra.mxu0 %v2186
    %2258 = vmatpush.bf16.msra.mxu0 %v2183
    %2259 = vmatpush.bf16.msra.mxu0 %v2180
    %2260 = vmatmul.bf16.gmra.mxu0 %v2065
    %v2261 = vpop.f32.mrf.mxu0
    %v2262 = vadd.f32 0.0, %v2261
    %v2263 = vpop.f32.mrf.mxu0
    %2264 = vdwg.mxu0
    %v2265 = vpack.c.bf16 %v2236, %v2236
    %v2266 = vld [vmem:[%s5] sm:$0xf]
    %v2267 = vld [vmem:[%s5 + $0x4] sm:$0xf]
    %v2268 = vld [vmem:[%s5 + $0x8] sm:$0xf]
    %v2269 = vld [vmem:[%s5 + $0xc] sm:$0xf]
    %v2270 = vld [vmem:[%s5 + $0x10] sm:$0xf]
    %v2271 = vld [vmem:[%s5 + $0x14] sm:$0xf]
    %v2272 = vld [vmem:[%s5 + $0x18] sm:$0xf]
    %v2273 = vld [vmem:[%s5 + $0x1c] sm:$0xf]
    %v2274 = vld [vmem:[%s5 + $0x20] sm:$0xf]
    %v2275 = vld [vmem:[%s5 + $0x24] sm:$0xf]
    %v2276 = vld [vmem:[%s5 + $0x28] sm:$0xf]
    %v2277 = vld [vmem:[%s5 + $0x2c] sm:$0xf]
    %v2278 = vld [vmem:[%s5 + $0x30] sm:$0xf]
    %v2279 = vld [vmem:[%s5 + $0x34] sm:$0xf]
    %v2280 = vld [vmem:[%s5 + $0x38] sm:$0xf]
    %v2281 = vld [vmem:[%s5 + $0x3c] sm:$0xf]
    %v2298 = vunpack.c.l.b16 %v2266
    %v2299 = vunpack.c.l.b16 %v2267
    %v2300 = vunpack.c.l.b16 %v2268
    %v2301 = vunpack.c.l.b16 %v2269
    %v2302 = vunpack.c.l.b16 %v2270
    %v2303 = vunpack.c.l.b16 %v2271
    %v2304 = vunpack.c.l.b16 %v2272
    %v2305 = vunpack.c.l.b16 %v2273
    %v2306 = vunpack.c.l.b16 %v2274
    %v2307 = vunpack.c.l.b16 %v2275
    %v2308 = vunpack.c.l.b16 %v2276
    %v2309 = vunpack.c.l.b16 %v2277
    %v2310 = vunpack.c.l.b16 %v2278
    %v2311 = vunpack.c.l.b16 %v2279
    %v2312 = vunpack.c.l.b16 %v2280
    %v2313 = vunpack.c.l.b16 %v2281
    %v2314 = vpack.c.b16 %v2299, %v2298
    %v2315 = vpack.c.b16 %v2301, %v2300
    %v2316 = vpack.c.b16 %v2303, %v2302
    %v2317 = vpack.c.b16 %v2305, %v2304
    %v2318 = vpack.c.b16 %v2307, %v2306
    %v2319 = vpack.c.b16 %v2309, %v2308
    %v2320 = vpack.c.b16 %v2311, %v2310
    %v2321 = vpack.c.b16 %v2313, %v2312
    %2330 = vmatpush.bf16.msra.mxu0 %v2321
    %2331 = vmatpush.bf16.msra.mxu0 %v2320
    %2332 = vmatpush.bf16.msra.mxu0 %v2319
    %2333 = vmatpush.bf16.msra.mxu0 %v2318
    %2334 = vmatpush.bf16.msra.mxu0 %v2317
    %2335 = vmatpush.bf16.msra.mxu0 %v2316
    %2336 = vmatpush.bf16.msra.mxu0 %v2315
    %2337 = vmatpush.bf16.msra.mxu0 %v2314
    %2338 = vmatmul.bf16.gmra.mxu0 %v2265
    %v2339 = vpop.f32.mrf.mxu0
    %v2340 = vadd.f32 0.0, %v2339
    %v2341 = vpop.f32.mrf.mxu0
    %2342 = vdwg.mxu0
    %v2343 = vsel %vm1200, %v2340, -inf
    %2344 = vmax.xlane.f32.xlu0 %v2343
    %v2345 = vpop.xlane.xlu0 %2344
    %v2346 = vsub.f32 %v2340, %v2345
    %v2347 = vmul.f32 %v2346, 1.442695
    %v2348 = vpow.pop %v2347
    %v2349 = vsel %vm1200, %v2348, 0.0
    %2350 = vadd.xlane.f32.xlu0 %v2349
    %v2351 = vpop.xlane.xlu0 %2350
    %v2352 = vrcp.pop %v2351
    %v2353 = vmul.f32 %v2348, %v2352
    %v2354 = vpack.c.bf16 %v2353, %v2353
    %v2355 = vld [vmem:[#allocation6] sm:$0xf]
    %v2357 = vsel %vm1200, %v2354, 0
    %v2360 = vsel %vm1217, %v2355, 0
    %2362 = vmatpush.bf16.msra.mxu0 0
    %2363 = vmatpush.bf16.msra.mxu0 0
    %2364 = vmatpush.bf16.msra.mxu0 0
    %2365 = vmatpush.bf16.msra.mxu0 0
    %2366 = vmatpush.bf16.msra.mxu0 0
    %2367 = vmatpush.bf16.msra.mxu0 0
    %2368 = vmatpush.bf16.msra.mxu0 0
    %2369 = vmatpush.bf16.msra.mxu0 %v2360
    %2370 = vmatmul.bf16.gmra.mxu0 %v2357
    %v2371 = vpop.f32.mrf.mxu0
    %v2372 = vadd.f32 0.0, %v2371
    %v2373 = vpop.f32.mrf.mxu0
    %2374 = vdwg.mxu0
    %v2375 = vpack.c.bf16 %v2372, %v2372
    %v2376 = vld [vmem:[#allocation17] sm:$0xff]
    %v2377 = vld [vmem:[#allocation17 + $0x8] sm:$0xff]
    %v2378 = vld [vmem:[#allocation17 + $0x10] sm:$0xff]
    %v2379 = vld [vmem:[#allocation17 + $0x18] sm:$0xff]
    %v2380 = vld [vmem:[#allocation17 + $0x20] sm:$0xff]
    %v2381 = vld [vmem:[#allocation17 + $0x28] sm:$0xff]
    %v2382 = vld [vmem:[#allocation17 + $0x30] sm:$0xff]
    %v2383 = vld [vmem:[#allocation17 + $0x38] sm:$0xff]
    %v2384 = vld [vmem:[#allocation17 + $0x40] sm:$0xff]
    %v2385 = vld [vmem:[#allocation17 + $0x48] sm:$0xff]
    %v2386 = vld [vmem:[#allocation17 + $0x50] sm:$0xff]
    %v2387 = vld [vmem:[#allocation17 + $0x58] sm:$0xff]
    %v2388 = vld [vmem:[#allocation17 + $0x60] sm:$0xff]
    %v2389 = vld [vmem:[#allocation17 + $0x68] sm:$0xff]
    %v2390 = vld [vmem:[#allocation17 + $0x70] sm:$0xff]
    %v2391 = vld [vmem:[#allocation17 + $0x78] sm:$0xff]
    %v2408 = vunpack.c.l.b16 %v2376
    %v2409 = vunpack.c.h.b16 %v2376
    %v2410 = vunpack.c.l.b16 %v2377
    %v2411 = vunpack.c.h.b16 %v2377
    %v2412 = vunpack.c.l.b16 %v2378
    %v2413 = vunpack.c.h.b16 %v2378
    %v2414 = vunpack.c.l.b16 %v2379
    %v2415 = vunpack.c.h.b16 %v2379
    %v2416 = vunpack.c.l.b16 %v2380
    %v2417 = vunpack.c.h.b16 %v2380
    %v2418 = vunpack.c.l.b16 %v2381
    %v2419 = vunpack.c.h.b16 %v2381
    %v2420 = vunpack.c.l.b16 %v2382
    %v2421 = vunpack.c.h.b16 %v2382
    %v2422 = vunpack.c.l.b16 %v2383
    %v2423 = vunpack.c.h.b16 %v2383
    %v2424 = vunpack.c.l.b16 %v2384
    %v2425 = vunpack.c.h.b16 %v2384
    %v2426 = vunpack.c.l.b16 %v2385
    %v2427 = vunpack.c.h.b16 %v2385
    %v2428 = vunpack.c.l.b16 %v2386
    %v2429 = vunpack.c.h.b16 %v2386
    %v2430 = vunpack.c.l.b16 %v2387
    %v2431 = vunpack.c.h.b16 %v2387
    %v2432 = vunpack.c.l.b16 %v2388
    %v2433 = vunpack.c.h.b16 %v2388
    %v2434 = vunpack.c.l.b16 %v2389
    %v2435 = vunpack.c.h.b16 %v2389
    %v2436 = vunpack.c.l.b16 %v2390
    %v2437 = vunpack.c.h.b16 %v2390
    %v2438 = vunpack.c.l.b16 %v2391
    %v2439 = vunpack.c.h.b16 %v2391
    %v2440 = vpack.c.b16 %v2410, %v2408
    %v2441 = vpack.c.b16 %v2411, %v2409
    %v2442 = vpack.c.b16 %v2414, %v2412
    %v2443 = vpack.c.b16 %v2415, %v2413
    %v2444 = vpack.c.b16 %v2418, %v2416
    %v2445 = vpack.c.b16 %v2419, %v2417
    %v2446 = vpack.c.b16 %v2422, %v2420
    %v2447 = vpack.c.b16 %v2423, %v2421
    %v2448 = vpack.c.b16 %v2426, %v2424
    %v2449 = vpack.c.b16 %v2427, %v2425
    %v2450 = vpack.c.b16 %v2430, %v2428
    %v2451 = vpack.c.b16 %v2431, %v2429
    %v2452 = vpack.c.b16 %v2434, %v2432
    %v2453 = vpack.c.b16 %v2435, %v2433
    %v2454 = vpack.c.b16 %v2438, %v2436
    %v2455 = vpack.c.b16 %v2439, %v2437
    %2472 = vmatpush.bf16.msra.mxu0 %v2454
    %2473 = vmatpush.bf16.msra.mxu0 %v2452
    %2474 = vmatpush.bf16.msra.mxu0 %v2450
    %2475 = vmatpush.bf16.msra.mxu0 %v2448
    %2476 = vmatpush.bf16.msra.mxu0 %v2446
    %2477 = vmatpush.bf16.msra.mxu0 %v2444
    %2478 = vmatpush.bf16.msra.mxu0 %v2442
    %2479 = vmatpush.bf16.msra.mxu0 %v2440
    %2480 = vmatmul.bf16.gmra.mxu0 %v2375
    %v2481 = vpop.f32.mrf.mxu0
    %v2482 = vadd.f32 0.0, %v2481
    %v2483 = vpop.f32.mrf.mxu0
    %2484 = vdwg.mxu0
    %2485 = vmatpush.bf16.msra.mxu0 %v2455
    %2486 = vmatpush.bf16.msra.mxu0 %v2453
    %2487 = vmatpush.bf16.msra.mxu0 %v2451
    %2488 = vmatpush.bf16.msra.mxu0 %v2449
    %2489 = vmatpush.bf16.msra.mxu0 %v2447
    %2490 = vmatpush.bf16.msra.mxu0 %v2445
    %2491 = vmatpush.bf16.msra.mxu0 %v2443
    %2492 = vmatpush.bf16.msra.mxu0 %v2441
    %2493 = vmatmul.bf16.gmra.mxu0 %v2375
    %v2494 = vpop.f32.mrf.mxu0
    %v2495 = vadd.f32 0.0, %v2494
    %v2496 = vpop.f32.mrf.mxu0
    %2497 = vdwg.mxu0
    %v2498 = vadd.f32 %v2249, %v2482
    %v2499 = vld [vmem:[%s18] sm:$0x1]
    %v2501 = vperm.slane %v2499, 0
    %v2503 = vadd.f32 %v2498, %v2501
    %v2504 = vpack.c.bf16 %v2503, %v2503
    %v2505 = vld [vmem:[#allocation18] sm:$0xf]
    %v2506 = vld [vmem:[#allocation18 + $0x4] sm:$0xf]
    %v2507 = vld [vmem:[#allocation18 + $0x8] sm:$0xf]
    %v2508 = vld [vmem:[#allocation18 + $0xc] sm:$0xf]
    %v2509 = vld [vmem:[#allocation18 + $0x10] sm:$0xf]
    %v2510 = vld [vmem:[#allocation18 + $0x14] sm:$0xf]
    %v2511 = vld [vmem:[#allocation18 + $0x18] sm:$0xf]
    %v2512 = vld [vmem:[#allocation18 + $0x1c] sm:$0xf]
    %v2513 = vld [vmem:[#allocation18 + $0x20] sm:$0xf]
    %v2514 = vld [vmem:[#allocation18 + $0x24] sm:$0xf]
    %v2515 = vld [vmem:[#allocation18 + $0x28] sm:$0xf]
    %v2516 = vld [vmem:[#allocation18 + $0x2c] sm:$0xf]
    %v2517 = vld [vmem:[#allocation18 + $0x30] sm:$0xf]
    %v2518 = vld [vmem:[#allocation18 + $0x34] sm:$0xf]
    %v2519 = vld [vmem:[#allocation18 + $0x38] sm:$0xf]
    %v2520 = vld [vmem:[#allocation18 + $0x3c] sm:$0xf]
    %v2521 = vld [vmem:[%s20] sm:$0x1]
    %v2523 = vperm.slane %v2521, 0
    %v2541 = vunpack.c.l.b16 %v2505
    %v2542 = vunpack.c.l.b16 %v2506
    %v2543 = vunpack.c.l.b16 %v2507
    %v2544 = vunpack.c.l.b16 %v2508
    %v2545 = vunpack.c.l.b16 %v2509
    %v2546 = vunpack.c.l.b16 %v2510
    %v2547 = vunpack.c.l.b16 %v2511
    %v2548 = vunpack.c.l.b16 %v2512
    %v2549 = vunpack.c.l.b16 %v2513
    %v2550 = vunpack.c.l.b16 %v2514
    %v2551 = vunpack.c.l.b16 %v2515
    %v2552 = vunpack.c.l.b16 %v2516
    %v2553 = vunpack.c.l.b16 %v2517
    %v2554 = vunpack.c.l.b16 %v2518
    %v2555 = vunpack.c.l.b16 %v2519
    %v2556 = vunpack.c.l.b16 %v2520
    %v2557 = vpack.c.b16 %v2542, %v2541
    %v2558 = vpack.c.b16 %v2544, %v2543
    %v2559 = vpack.c.b16 %v2546, %v2545
    %v2560 = vpack.c.b16 %v2548, %v2547
    %v2561 = vpack.c.b16 %v2550, %v2549
    %v2562 = vpack.c.b16 %v2552, %v2551
    %v2563 = vpack.c.b16 %v2554, %v2553
    %v2564 = vpack.c.b16 %v2556, %v2555
    %2573 = vmatpush.bf16.msra.mxu0 %v2564
    %2574 = vmatpush.bf16.msra.mxu0 %v2563
    %2575 = vmatpush.bf16.msra.mxu0 %v2562
    %2576 = vmatpush.bf16.msra.mxu0 %v2561
    %2577 = vmatpush.bf16.msra.mxu0 %v2560
    %2578 = vmatpush.bf16.msra.mxu0 %v2559
    %2579 = vmatpush.bf16.msra.mxu0 %v2558
    %2580 = vmatpush.bf16.msra.mxu0 %v2557
    %2581 = vmatmul.bf16.gmra.mxu0 %v2504
    %v2582 = vpop.f32.mrf.mxu0
    %v2583 = vadd.f32 %v2523, %v2582
    %v2584 = vpop.f32.mrf.mxu0
    %2585 = vdwg.mxu0
    %2586 = vmax.xlane.f32.xlu0 %v2583
    %v2587 = vpop.xlane.xlu0 %2586
    %v2588 = vsub.f32 %v2583, %v2587
    %v2589 = vmul.f32 %v2588, 1.442695
    %v2590 = vpow.pop %v2589
    %2591 = vadd.xlane.f32.xlu0 %v2590
    %v2592 = vpop.xlane.xlu0 %2591
    %v2593 = vrcp.pop %v2592
    %v2594 = vmul.f32 %v2590, %v2593
    %v2595 = vadd.f32 %v1808, %v2262
    %v2596 = vadd.f32 %v2595, %v2495
    %2597 = vadd.xlane.f32.xlu0 %v2596
    %v2598 = vpop.xlane.xlu0 %2597
    %v2599 = vsub.f32 0.0, %v2598
    %v2600 = vmul.f32 %v2599, 1.442695
    %v2601 = vpow.pop %v2600
    %v2602 = vadd.f32 %v2601, 1.0
    %v2603 = vrcp.pop %v2602
    %v2604 = vmul.f32 %v2602, %v2603
    %v2605 = vsub.f32 1.0, %v2604
    %v2606 = vmul.f32 %v2603, %v2605
    %v2607 = vadd.f32 %v2603, %v2606
    %vm2608 = vweird.f32 %v2602
    %vm2609 = vweird.f32 %v2603
    %vm2610 = vmor %vm2608, %vm2609
    %v2611 = vsel %vm2610, %v2603, %v2607
    %v2612 = vand.u32 2147483647, %v2602
    %vm2613 = vcmp.eq.f32.partialorder %v2612, 8.507059e+37
    %v2614 = vand.u32 %v2602, 2147483648
    %v2615 = vor.u32 1.1754944e-38, %v2614
    %v2616 = vsel %vm2613, %v2615, %v2611
    %v2617 = vmul.f32 1.0, %v2616
    %v2618 = vmul.f32 %v2594, %v2617
    %v2619 = vld [vmem:[#allocation3] sm:$0xff]
    %v2620 = vmul.f32 %v2618, %v2619
    %v2621 = vsub.f32 1.0, %v2617
    %v2622 = vmul.f32 %v2353, %v2621
    %v2623 = vpack.c.bf16 %v2622, %v2622
    %v2624 = vld [vmem:[%s6] sm:$0xf]
    %v2626 = vsel %vm1200, %v2623, 0
    %v2629 = vsel %vm1217, %v2624, 0
    %2631 = vmatpush.bf16.msra.mxu0 0
    %2632 = vmatpush.bf16.msra.mxu0 0
    %2633 = vmatpush.bf16.msra.mxu0 0
    %2634 = vmatpush.bf16.msra.mxu0 0
    %2635 = vmatpush.bf16.msra.mxu0 0
    %2636 = vmatpush.bf16.msra.mxu0 0
    %2637 = vmatpush.bf16.msra.mxu0 0
    %2638 = vmatpush.bf16.msra.mxu0 %v2629
    %2639 = vmatmul.bf16.gmra.mxu0 %v2626
    %v2640 = vpop.f32.mrf.mxu0
    %v2641 = vadd.f32 0.0, %v2640
    %v2642 = vpop.f32.mrf.mxu0
    %2643 = vdwg.mxu0
    %v2644 = vadd.f32 %v2620, %v2641
    %v2646 = vrot.slane %v2644, 1
    %v2647 = vrot.slane %v2644, 2
    %v2648 = vrot.slane %v2644, 3
    %v2649 = vrot.slane %v2644, 4
    %v2650 = vrot.slane %v2644, 5
    %v2651 = vrot.slane %v2644, 6
    %v2652 = vrot.slane %v2644, 7
    %v2660 = vpack.c.bf16 %v2644, %v2644
    %v2661 = vpack.c.bf16 %v2646, %v2646
    %v2662 = vpack.c.bf16 %v2647, %v2647
    %v2663 = vpack.c.bf16 %v2648, %v2648
    %v2664 = vpack.c.bf16 %v2649, %v2649
    %v2665 = vpack.c.bf16 %v2650, %v2650
    %v2666 = vpack.c.bf16 %v2651, %v2651
    %v2667 = vpack.c.bf16 %v2652, %v2652
    %v2669 = vshll.u32 %v2660, 16
    %v2672 = vshll.u32 %v2661, 16
    %v2675 = vshll.u32 %v2662, 16
    %v2678 = vshll.u32 %v2663, 16
    %v2681 = vshll.u32 %v2664, 16
    %v2684 = vshll.u32 %v2665, 16
    %v2687 = vshll.u32 %v2666, 16
    %v2690 = vshll.u32 %v2667, 16
    %vm2700 = vsmask.f32 7938
    %vm2701 = vmand %vm1527, %vm2700
    %v2702 = vld [vmem:[%s21] sm:$0x1]
    %v2703 = vsel %vm2701, %v2669, %v2702
    %2704 = vst [vmem:[%s21] sm:$0x1] %v2703
    %v2705 = vld [vmem:[%s21 + $0x4] sm:$0x1]
    %v2706 = vsel %vm2701, %v2672, %v2705
    %2707 = vst [vmem:[%s21 + $0x4] sm:$0x1] %v2706
    %v2708 = vld [vmem:[%s21 + $0x8] sm:$0x1]
    %v2709 = vsel %vm2701, %v2675, %v2708
    %2710 = vst [vmem:[%s21 + $0x8] sm:$0x1] %v2709
    %v2711 = vld [vmem:[%s21 + $0xc] sm:$0x1]
    %v2712 = vsel %vm2701, %v2678, %v2711
    %2713 = vst [vmem:[%s21 + $0xc] sm:$0x1] %v2712
    %v2714 = vld [vmem:[%s21 + $0x10] sm:$0x1]
    %v2715 = vsel %vm2701, %v2681, %v2714
    %2716 = vst [vmem:[%s21 + $0x10] sm:$0x1] %v2715
    %v2717 = vld [vmem:[%s21 + $0x14] sm:$0x1]
    %v2718 = vsel %vm2701, %v2684, %v2717
    %2719 = vst [vmem:[%s21 + $0x14] sm:$0x1] %v2718
    %v2720 = vld [vmem:[%s21 + $0x18] sm:$0x1]
    %v2721 = vsel %vm2701, %v2687, %v2720
    %2722 = vst [vmem:[%s21 + $0x18] sm:$0x1] %v2721
    %v2723 = vld [vmem:[%s21 + $0x1c] sm:$0x1]
    %v2724 = vsel %vm2701, %v2690, %v2723
    %2725 = vst [vmem:[%s21 + $0x1c] sm:$0x1] %v2724
    %s2726 = scalar_lea.vmem [#allocation4], 16
    %v2727 = vld [vmem:[%s2726] sm:$0xff]
    %v2728 = vpack.c.bf16 %v2727, %v2727
    %v2729 = vld [vmem:[#allocation12] sm:$0xff]
    %v2730 = vld [vmem:[#allocation12 + $0x8] sm:$0xff]
    %v2731 = vld [vmem:[#allocation12 + $0x10] sm:$0xff]
    %v2732 = vld [vmem:[#allocation12 + $0x18] sm:$0xff]
    %v2733 = vld [vmem:[#allocation12 + $0x20] sm:$0xff]
    %v2734 = vld [vmem:[#allocation12 + $0x28] sm:$0xff]
    %v2735 = vld [vmem:[#allocation12 + $0x30] sm:$0xff]
    %v2736 = vld [vmem:[#allocation12 + $0x38] sm:$0xff]
    %v2737 = vld [vmem:[#allocation12 + $0x40] sm:$0xff]
    %v2738 = vld [vmem:[#allocation12 + $0x48] sm:$0xff]
    %v2739 = vld [vmem:[#allocation12 + $0x50] sm:$0xff]
    %v2740 = vld [vmem:[#allocation12 + $0x58] sm:$0xff]
    %v2741 = vld [vmem:[#allocation12 + $0x60] sm:$0xff]
    %v2742 = vld [vmem:[#allocation12 + $0x68] sm:$0xff]
    %v2743 = vld [vmem:[#allocation12 + $0x70] sm:$0xff]
    %v2744 = vld [vmem:[#allocation12 + $0x78] sm:$0xff]
    %v2745 = vld [vmem:[#allocation12 + $0x80] sm:$0xff]
    %v2746 = vld [vmem:[#allocation12 + $0x88] sm:$0xff]
    %v2747 = vld [vmem:[#allocation12 + $0x90] sm:$0xff]
    %v2748 = vld [vmem:[#allocation12 + $0x98] sm:$0xff]
    %v2749 = vld [vmem:[#allocation12 + $0xa0] sm:$0xff]
    %v2750 = vld [vmem:[#allocation12 + $0xa8] sm:$0xff]
    %v2751 = vld [vmem:[#allocation12 + $0xb0] sm:$0xff]
    %v2752 = vld [vmem:[#allocation12 + $0xb8] sm:$0xff]
    %v2753 = vld [vmem:[#allocation12 + $0xc0] sm:$0xff]
    %v2754 = vld [vmem:[#allocation12 + $0xc8] sm:$0xff]
    %v2755 = vld [vmem:[#allocation12 + $0xd0] sm:$0xff]
    %v2756 = vld [vmem:[#allocation12 + $0xd8] sm:$0xff]
    %v2757 = vld [vmem:[#allocation12 + $0xe0] sm:$0xff]
    %v2758 = vld [vmem:[#allocation12 + $0xe8] sm:$0xff]
    %v2759 = vld [vmem:[#allocation12 + $0xf0] sm:$0xff]
    %v2760 = vld [vmem:[#allocation12 + $0xf8] sm:$0xff]
    %v2761 = vld [vmem:[%s13] sm:$0xf]
    %v2763 = vperm.slane %v2761, 0
    %v2764 = vperm.slane %v2761, 1
    %v2765 = vperm.slane %v2761, 2
    %v2766 = vperm.slane %v2761, 3
    %v2803 = vunpack.c.l.b16 %v2729
    %v2804 = vunpack.c.h.b16 %v2729
    %v2805 = vunpack.c.l.b16 %v2730
    %v2806 = vunpack.c.h.b16 %v2730
    %v2807 = vunpack.c.l.b16 %v2731
    %v2808 = vunpack.c.h.b16 %v2731
    %v2809 = vunpack.c.l.b16 %v2732
    %v2810 = vunpack.c.h.b16 %v2732
    %v2811 = vunpack.c.l.b16 %v2733
    %v2812 = vunpack.c.h.b16 %v2733
    %v2813 = vunpack.c.l.b16 %v2734
    %v2814 = vunpack.c.h.b16 %v2734
    %v2815 = vunpack.c.l.b16 %v2735
    %v2816 = vunpack.c.h.b16 %v2735
    %v2817 = vunpack.c.l.b16 %v2736
    %v2818 = vunpack.c.h.b16 %v2736
    %v2819 = vunpack.c.l.b16 %v2737
    %v2820 = vunpack.c.h.b16 %v2737
    %v2821 = vunpack.c.l.b16 %v2738
    %v2822 = vunpack.c.h.b16 %v2738
    %v2823 = vunpack.c.l.b16 %v2739
    %v2824 = vunpack.c.h.b16 %v2739
    %v2825 = vunpack.c.l.b16 %v2740
    %v2826 = vunpack.c.h.b16 %v2740
    %v2827 = vunpack.c.l.b16 %v2741
    %v2828 = vunpack.c.h.b16 %v2741
    %v2829 = vunpack.c.l.b16 %v2742
    %v2830 = vunpack.c.h.b16 %v2742
    %v2831 = vunpack.c.l.b16 %v2743
    %v2832 = vunpack.c.h.b16 %v2743
    %v2833 = vunpack.c.l.b16 %v2744
    %v2834 = vunpack.c.h.b16 %v2744
    %v2835 = vunpack.c.l.b16 %v2745
    %v2836 = vunpack.c.h.b16 %v2745
    %v2837 = vunpack.c.l.b16 %v2746
    %v2838 = vunpack.c.h.b16 %v2746
    %v2839 = vunpack.c.l.b16 %v2747
    %v2840 = vunpack.c.h.b16 %v2747
    %v2841 = vunpack.c.l.b16 %v2748
    %v2842 = vunpack.c.h.b16 %v2748
    %v2843 = vunpack.c.l.b16 %v2749
    %v2844 = vunpack.c.h.b16 %v2749
    %v2845 = vunpack.c.l.b16 %v2750
    %v2846 = vunpack.c.h.b16 %v2750
    %v2847 = vunpack.c.l.b16 %v2751
    %v2848 = vunpack.c.h.b16 %v2751
    %v2849 = vunpack.c.l.b16 %v2752
    %v2850 = vunpack.c.h.b16 %v2752
    %v2851 = vunpack.c.l.b16 %v2753
    %v2852 = vunpack.c.h.b16 %v2753
    %v2853 = vunpack.c.l.b16 %v2754
    %v2854 = vunpack.c.h.b16 %v2754
    %v2855 = vunpack.c.l.b16 %v2755
    %v2856 = vunpack.c.h.b16 %v2755
    %v2857 = vunpack.c.l.b16 %v2756
    %v2858 = vunpack.c.h.b16 %v2756
    %v2859 = vunpack.c.l.b16 %v2757
    %v2860 = vunpack.c.h.b16 %v2757
    %v2861 = vunpack.c.l.b16 %v2758
    %v2862 = vunpack.c.h.b16 %v2758
    %v2863 = vunpack.c.l.b16 %v2759
    %v2864 = vunpack.c.h.b16 %v2759
    %v2865 = vunpack.c.l.b16 %v2760
    %v2866 = vunpack.c.h.b16 %v2760
    %v2867 = vpack.c.b16 %v2807, %v2803
    %v2868 = vpack.c.b16 %v2808, %v2804
    %v2869 = vpack.c.b16 %v2809, %v2805
    %v2870 = vpack.c.b16 %v2810, %v2806
    %v2871 = vpack.c.b16 %v2815, %v2811
    %v2872 = vpack.c.b16 %v2816, %v2812
    %v2873 = vpack.c.b16 %v2817, %v2813
    %v2874 = vpack.c.b16 %v2818, %v2814
    %v2875 = vpack.c.b16 %v2823, %v2819
    %v2876 = vpack.c.b16 %v2824, %v2820
    %v2877 = vpack.c.b16 %v2825, %v2821
    %v2878 = vpack.c.b16 %v2826, %v2822
    %v2879 = vpack.c.b16 %v2831, %v2827
    %v2880 = vpack.c.b16 %v2832, %v2828
    %v2881 = vpack.c.b16 %v2833, %v2829
    %v2882 = vpack.c.b16 %v2834, %v2830
    %v2883 = vpack.c.b16 %v2839, %v2835
    %v2884 = vpack.c.b16 %v2840, %v2836
    %v2885 = vpack.c.b16 %v2841, %v2837
    %v2886 = vpack.c.b16 %v2842, %v2838
    %v2887 = vpack.c.b16 %v2847, %v2843
    %v2888 = vpack.c.b16 %v2848, %v2844
    %v2889 = vpack.c.b16 %v2849, %v2845
    %v2890 = vpack.c.b16 %v2850, %v2846
    %v2891 = vpack.c.b16 %v2855, %v2851
    %v2892 = vpack.c.b16 %v2856, %v2852
    %v2893 = vpack.c.b16 %v2857, %v2853
    %v2894 = vpack.c.b16 %v2858, %v2854
    %v2895 = vpack.c.b16 %v2863, %v2859
    %v2896 = vpack.c.b16 %v2864, %v2860
    %v2897 = vpack.c.b16 %v2865, %v2861
    %v2898 = vpack.c.b16 %v2866, %v2862
    %2931 = vmatpush.bf16.msra.mxu0 %v2895
    %2932 = vmatpush.bf16.msra.mxu0 %v2891
    %2933 = vmatpush.bf16.msra.mxu0 %v2887
    %2934 = vmatpush.bf16.msra.mxu0 %v2883
    %2935 = vmatpush.bf16.msra.mxu0 %v2879
    %2936 = vmatpush.bf16.msra.mxu0 %v2875
    %2937 = vmatpush.bf16.msra.mxu0 %v2871
    %2938 = vmatpush.bf16.msra.mxu0 %v2867
    %2939 = vmatmul.bf16.gmra.mxu0 %v2728
    %v2940 = vpop.f32.mrf.mxu0
    %v2941 = vadd.f32 %v2763, %v2940
    %v2942 = vpop.f32.mrf.mxu0
    %2943 = vdwg.mxu0
    %2944 = vmatpush.bf16.msra.mxu0 %v2896
    %2945 = vmatpush.bf16.msra.mxu0 %v2892
    %2946 = vmatpush.bf16.msra.mxu0 %v2888
    %2947 = vmatpush.bf16.msra.mxu0 %v2884
    %2948 = vmatpush.bf16.msra.mxu0 %v2880
    %2949 = vmatpush.bf16.msra.mxu0 %v2876
    %2950 = vmatpush.bf16.msra.mxu0 %v2872
    %2951 = vmatpush.bf16.msra.mxu0 %v2868
    %2952 = vmatmul.bf16.gmra.mxu0 %v2728
    %v2953 = vpop.f32.mrf.mxu0
    %v2954 = vadd.f32 %v2764, %v2953
    %v2955 = vpop.f32.mrf.mxu0
    %2956 = vdwg.mxu0
    %2957 = vmatpush.bf16.msra.mxu0 %v2897
    %2958 = vmatpush.bf16.msra.mxu0 %v2893
    %2959 = vmatpush.bf16.msra.mxu0 %v2889
    %2960 = vmatpush.bf16.msra.mxu0 %v2885
    %2961 = vmatpush.bf16.msra.mxu0 %v2881
    %2962 = vmatpush.bf16.msra.mxu0 %v2877
    %2963 = vmatpush.bf16.msra.mxu0 %v2873
    %2964 = vmatpush.bf16.msra.mxu0 %v2869
    %2965 = vmatmul.bf16.gmra.mxu0 %v2728
    %v2966 = vpop.f32.mrf.mxu0
    %v2967 = vadd.f32 %v2765, %v2966
    %v2968 = vpop.f32.mrf.mxu0
    %2969 = vdwg.mxu0
    %2970 = vmatpush.bf16.msra.mxu0 %v2898
    %2971 = vmatpush.bf16.msra.mxu0 %v2894
    %2972 = vmatpush.bf16.msra.mxu0 %v2890
    %2973 = vmatpush.bf16.msra.mxu0 %v2886
    %2974 = vmatpush.bf16.msra.mxu0 %v2882
    %2975 = vmatpush.bf16.msra.mxu0 %v2878
    %2976 = vmatpush.bf16.msra.mxu0 %v2874
    %2977 = vmatpush.bf16.msra.mxu0 %v2870
    %2978 = vmatmul.bf16.gmra.mxu0 %v2728
    %v2979 = vpop.f32.mrf.mxu0
    %v2980 = vadd.f32 %v2766, %v2979
    %v2981 = vpop.f32.mrf.mxu0
    %2982 = vdwg.mxu0
    %v2983 = vld [vmem:[#allocation14] sm:$0xff]
    %v2984 = vld [vmem:[#allocation14 + $0x8] sm:$0xf]
    %v2985 = vld [vmem:[#allocation14 + $0xc] sm:$0xff]
    %v2986 = vld [vmem:[#allocation14 + $0x14] sm:$0xf]
    %v2987 = vld [vmem:[#allocation14 + $0x18] sm:$0xff]
    %v2988 = vld [vmem:[#allocation14 + $0x20] sm:$0xf]
    %v2989 = vld [vmem:[#allocation14 + $0x24] sm:$0xff]
    %v2990 = vld [vmem:[#allocation14 + $0x2c] sm:$0xf]
    %v2991 = vld [vmem:[#allocation14 + $0x30] sm:$0xff]
    %v2992 = vld [vmem:[#allocation14 + $0x38] sm:$0xf]
    %v2993 = vld [vmem:[#allocation14 + $0x3c] sm:$0xff]
    %v2994 = vld [vmem:[#allocation14 + $0x44] sm:$0xf]
    %v2995 = vld [vmem:[#allocation14 + $0x48] sm:$0xff]
    %v2996 = vld [vmem:[#allocation14 + $0x50] sm:$0xf]
    %v2997 = vld [vmem:[#allocation14 + $0x54] sm:$0xff]
    %v2998 = vld [vmem:[#allocation14 + $0x5c] sm:$0xf]
    %v2999 = vld [vmem:[#allocation14 + $0x60] sm:$0xff]
    %v3000 = vld [vmem:[#allocation14 + $0x68] sm:$0xf]
    %v3001 = vld [vmem:[#allocation14 + $0x6c] sm:$0xff]
    %v3002 = vld [vmem:[#allocation14 + $0x74] sm:$0xf]
    %v3003 = vld [vmem:[#allocation14 + $0x78] sm:$0xff]
    %v3004 = vld [vmem:[#allocation14 + $0x80] sm:$0xf]
    %v3005 = vld [vmem:[#allocation14 + $0x84] sm:$0xff]
    %v3006 = vld [vmem:[#allocation14 + $0x8c] sm:$0xf]
    %v3007 = vld [vmem:[#allocation14 + $0x90] sm:$0xff]
    %v3008 = vld [vmem:[#allocation14 + $0x98] sm:$0xf]
    %v3009 = vld [vmem:[#allocation14 + $0x9c] sm:$0xff]
    %v3010 = vld [vmem:[#allocation14 + $0xa4] sm:$0xf]
    %v3011 = vld [vmem:[#allocation14 + $0xa8] sm:$0xff]
    %v3012 = vld [vmem:[#allocation14 + $0xb0] sm:$0xf]
    %v3013 = vld [vmem:[#allocation14 + $0xb4] sm:$0xff]
    %v3014 = vld [vmem:[#allocation14 + $0xbc] sm:$0xf]
    %v3015 = vld [vmem:[%s15] sm:$0x7]
    %v3017 = vperm.slane %v3015, 0
    %v3018 = vperm.slane %v3015, 1
    %v3019 = vperm.slane %v3015, 2
    %v3055 = vunpack.c.l.b16 %v2983
    %v3056 = vunpack.c.h.b16 %v2983
    %v3057 = vunpack.c.l.b16 %v2984
    %v3058 = vunpack.c.l.b16 %v2985
    %v3059 = vunpack.c.h.b16 %v2985
    %v3060 = vunpack.c.l.b16 %v2986
    %v3061 = vunpack.c.l.b16 %v2987
    %v3062 = vunpack.c.h.b16 %v2987
    %v3063 = vunpack.c.l.b16 %v2988
    %v3064 = vunpack.c.l.b16 %v2989
    %v3065 = vunpack.c.h.b16 %v2989
    %v3066 = vunpack.c.l.b16 %v2990
    %v3067 = vunpack.c.l.b16 %v2991
    %v3068 = vunpack.c.h.b16 %v2991
    %v3069 = vunpack.c.l.b16 %v2992
    %v3070 = vunpack.c.l.b16 %v2993
    %v3071 = vunpack.c.h.b16 %v2993
    %v3072 = vunpack.c.l.b16 %v2994
    %v3073 = vunpack.c.l.b16 %v2995
    %v3074 = vunpack.c.h.b16 %v2995
    %v3075 = vunpack.c.l.b16 %v2996
    %v3076 = vunpack.c.l.b16 %v2997
    %v3077 = vunpack.c.h.b16 %v2997
    %v3078 = vunpack.c.l.b16 %v2998
    %v3079 = vunpack.c.l.b16 %v2999
    %v3080 = vunpack.c.h.b16 %v2999
    %v3081 = vunpack.c.l.b16 %v3000
    %v3082 = vunpack.c.l.b16 %v3001
    %v3083 = vunpack.c.h.b16 %v3001
    %v3084 = vunpack.c.l.b16 %v3002
    %v3085 = vunpack.c.l.b16 %v3003
    %v3086 = vunpack.c.h.b16 %v3003
    %v3087 = vunpack.c.l.b16 %v3004
    %v3088 = vunpack.c.l.b16 %v3005
    %v3089 = vunpack.c.h.b16 %v3005
    %v3090 = vunpack.c.l.b16 %v3006
    %v3091 = vunpack.c.l.b16 %v3007
    %v3092 = vunpack.c.h.b16 %v3007
    %v3093 = vunpack.c.l.b16 %v3008
    %v3094 = vunpack.c.l.b16 %v3009
    %v3095 = vunpack.c.h.b16 %v3009
    %v3096 = vunpack.c.l.b16 %v3010
    %v3097 = vunpack.c.l.b16 %v3011
    %v3098 = vunpack.c.h.b16 %v3011
    %v3099 = vunpack.c.l.b16 %v3012
    %v3100 = vunpack.c.l.b16 %v3013
    %v3101 = vunpack.c.h.b16 %v3013
    %v3102 = vunpack.c.l.b16 %v3014
    %v3103 = vpack.c.b16 %v3058, %v3055
    %v3104 = vpack.c.b16 %v3059, %v3056
    %v3105 = vpack.c.b16 %v3060, %v3057
    %v3106 = vpack.c.b16 %v3064, %v3061
    %v3107 = vpack.c.b16 %v3065, %v3062
    %v3108 = vpack.c.b16 %v3066, %v3063
    %v3109 = vpack.c.b16 %v3070, %v3067
    %v3110 = vpack.c.b16 %v3071, %v3068
    %v3111 = vpack.c.b16 %v3072, %v3069
    %v3112 = vpack.c.b16 %v3076, %v3073
    %v3113 = vpack.c.b16 %v3077, %v3074
    %v3114 = vpack.c.b16 %v3078, %v3075
    %v3115 = vpack.c.b16 %v3082, %v3079
    %v3116 = vpack.c.b16 %v3083, %v3080
    %v3117 = vpack.c.b16 %v3084, %v3081
    %v3118 = vpack.c.b16 %v3088, %v3085
    %v3119 = vpack.c.b16 %v3089, %v3086
    %v3120 = vpack.c.b16 %v3090, %v3087
    %v3121 = vpack.c.b16 %v3094, %v3091
    %v3122 = vpack.c.b16 %v3095, %v3092
    %v3123 = vpack.c.b16 %v3096, %v3093
    %v3124 = vpack.c.b16 %v3100, %v3097
    %v3125 = vpack.c.b16 %v3101, %v3098
    %v3126 = vpack.c.b16 %v3102, %v3099
    %3151 = vmatpush.bf16.msra.mxu0 %v3124
    %3152 = vmatpush.bf16.msra.mxu0 %v3121
    %3153 = vmatpush.bf16.msra.mxu0 %v3118
    %3154 = vmatpush.bf16.msra.mxu0 %v3115
    %3155 = vmatpush.bf16.msra.mxu0 %v3112
    %3156 = vmatpush.bf16.msra.mxu0 %v3109
    %3157 = vmatpush.bf16.msra.mxu0 %v3106
    %3158 = vmatpush.bf16.msra.mxu0 %v3103
    %3159 = vmatmul.bf16.gmra.mxu0 %v2065
    %v3160 = vpop.f32.mrf.mxu0
    %v3161 = vadd.f32 %v3017, %v3160
    %v3162 = vpop.f32.mrf.mxu0
    %3163 = vdwg.mxu0
    %3164 = vmatpush.bf16.msra.mxu0 %v3125
    %3165 = vmatpush.bf16.msra.mxu0 %v3122
    %3166 = vmatpush.bf16.msra.mxu0 %v3119
    %3167 = vmatpush.bf16.msra.mxu0 %v3116
    %3168 = vmatpush.bf16.msra.mxu0 %v3113
    %3169 = vmatpush.bf16.msra.mxu0 %v3110
    %3170 = vmatpush.bf16.msra.mxu0 %v3107
    %3171 = vmatpush.bf16.msra.mxu0 %v3104
    %3172 = vmatmul.bf16.gmra.mxu0 %v2065
    %v3173 = vpop.f32.mrf.mxu0
    %v3174 = vadd.f32 %v3018, %v3173
    %v3175 = vpop.f32.mrf.mxu0
    %3176 = vdwg.mxu0
    %3177 = vmatpush.bf16.msra.mxu0 %v3126
    %3178 = vmatpush.bf16.msra.mxu0 %v3123
    %3179 = vmatpush.bf16.msra.mxu0 %v3120
    %3180 = vmatpush.bf16.msra.mxu0 %v3117
    %3181 = vmatpush.bf16.msra.mxu0 %v3114
    %3182 = vmatpush.bf16.msra.mxu0 %v3111
    %3183 = vmatpush.bf16.msra.mxu0 %v3108
    %3184 = vmatpush.bf16.msra.mxu0 %v3105
    %3185 = vmatmul.bf16.gmra.mxu0 %v2065
    %v3186 = vpop.f32.mrf.mxu0
    %v3187 = vadd.f32 %v3019, %v3186
    %v3188 = vpop.f32.mrf.mxu0
    %3189 = vdwg.mxu0
    %v3190 = vadd.f32 %v2941, %v3161
    %v3191 = vsub.f32 0.0, %v3190
    %v3192 = vmul.f32 %v3191, 1.442695
    %v3193 = vpow.pop %v3192
    %v3194 = vadd.f32 %v3193, 1.0
    %v3195 = vrcp.pop %v3194
    %v3196 = vmul.f32 %v3194, %v3195
    %v3197 = vsub.f32 1.0, %v3196
    %v3198 = vmul.f32 %v3195, %v3197
    %v3199 = vadd.f32 %v3195, %v3198
    %vm3200 = vweird.f32 %v3194
    %vm3201 = vweird.f32 %v3195
    %vm3202 = vmor %vm3200, %vm3201
    %v3203 = vsel %vm3202, %v3195, %v3199
    %v3204 = vand.u32 2147483647, %v3194
    %vm3205 = vcmp.eq.f32.partialorder %v3204, 8.507059e+37
    %v3206 = vand.u32 %v3194, 2147483648
    %v3207 = vor.u32 1.1754944e-38, %v3206
    %v3208 = vsel %vm3205, %v3207, %v3203
    %v3209 = vmul.f32 1.0, %v3208
    %v3210 = vadd.f32 %v2954, %v3174
    %v3211 = vsub.f32 0.0, %v3210
    %v3212 = vmul.f32 %v3211, 1.442695
    %v3213 = vpow.pop %v3212
    %v3214 = vadd.f32 %v3213, 1.0
    %v3215 = vrcp.pop %v3214
    %v3216 = vmul.f32 %v3214, %v3215
    %v3217 = vsub.f32 1.0, %v3216
    %v3218 = vmul.f32 %v3215, %v3217
    %v3219 = vadd.f32 %v3215, %v3218
    %vm3220 = vweird.f32 %v3214
    %vm3221 = vweird.f32 %v3215
    %vm3222 = vmor %vm3220, %vm3221
    %v3223 = vsel %vm3222, %v3215, %v3219
    %v3224 = vand.u32 2147483647, %v3214
    %vm3225 = vcmp.eq.f32.partialorder %v3224, 8.507059e+37
    %v3226 = vand.u32 %v3214, 2147483648
    %v3227 = vor.u32 1.1754944e-38, %v3226
    %v3228 = vsel %vm3225, %v3227, %v3223
    %v3229 = vmul.f32 1.0, %v3228
    %v3230 = vmul.f32 %v3209, %v3187
    %v3231 = vadd.f32 %v2967, %v3230
    %v3232 = vtanh.pop %v3231
    %v3233 = vsub.f32 1.0, %v3229
    %v3234 = vmul.f32 %v3233, %v3232
    %v3235 = vmul.f32 %v3229, %v2064
    %v3236 = vadd.f32 %v3234, %v3235
    %v3237 = vpack.c.bf16 %v3236, %v3236
    %v3238 = vld [vmem:[#allocation15] sm:$0xff]
    %v3239 = vld [vmem:[#allocation15 + $0x8] sm:$0xf]
    %v3240 = vld [vmem:[#allocation15 + $0xc] sm:$0xff]
    %v3241 = vld [vmem:[#allocation15 + $0x14] sm:$0xf]
    %v3242 = vld [vmem:[#allocation15 + $0x18] sm:$0xff]
    %v3243 = vld [vmem:[#allocation15 + $0x20] sm:$0xf]
    %v3244 = vld [vmem:[#allocation15 + $0x24] sm:$0xff]
    %v3245 = vld [vmem:[#allocation15 + $0x2c] sm:$0xf]
    %v3246 = vld [vmem:[#allocation15 + $0x30] sm:$0xff]
    %v3247 = vld [vmem:[#allocation15 + $0x38] sm:$0xf]
    %v3248 = vld [vmem:[#allocation15 + $0x3c] sm:$0xff]
    %v3249 = vld [vmem:[#allocation15 + $0x44] sm:$0xf]
    %v3250 = vld [vmem:[#allocation15 + $0x48] sm:$0xff]
    %v3251 = vld [vmem:[#allocation15 + $0x50] sm:$0xf]
    %v3252 = vld [vmem:[#allocation15 + $0x54] sm:$0xff]
    %v3253 = vld [vmem:[#allocation15 + $0x5c] sm:$0xf]
    %v3254 = vld [vmem:[#allocation15 + $0x60] sm:$0xff]
    %v3255 = vld [vmem:[#allocation15 + $0x68] sm:$0xf]
    %v3256 = vld [vmem:[#allocation15 + $0x6c] sm:$0xff]
    %v3257 = vld [vmem:[#allocation15 + $0x74] sm:$0xf]
    %v3258 = vld [vmem:[#allocation15 + $0x78] sm:$0xff]
    %v3259 = vld [vmem:[#allocation15 + $0x80] sm:$0xf]
    %v3260 = vld [vmem:[#allocation15 + $0x84] sm:$0xff]
    %v3261 = vld [vmem:[#allocation15 + $0x8c] sm:$0xf]
    %v3262 = vld [vmem:[#allocation15 + $0x90] sm:$0xff]
    %v3263 = vld [vmem:[#allocation15 + $0x98] sm:$0xf]
    %v3264 = vld [vmem:[#allocation15 + $0x9c] sm:$0xff]
    %v3265 = vld [vmem:[#allocation15 + $0xa4] sm:$0xf]
    %v3266 = vld [vmem:[#allocation15 + $0xa8] sm:$0xff]
    %v3267 = vld [vmem:[#allocation15 + $0xb0] sm:$0xf]
    %v3268 = vld [vmem:[#allocation15 + $0xb4] sm:$0xff]
    %v3269 = vld [vmem:[#allocation15 + $0xbc] sm:$0xf]
    %v3302 = vunpack.c.l.b16 %v3238
    %v3303 = vunpack.c.h.b16 %v3238
    %v3304 = vunpack.c.l.b16 %v3239
    %v3305 = vunpack.c.l.b16 %v3240
    %v3306 = vunpack.c.h.b16 %v3240
    %v3307 = vunpack.c.l.b16 %v3241
    %v3308 = vunpack.c.l.b16 %v3242
    %v3309 = vunpack.c.h.b16 %v3242
    %v3310 = vunpack.c.l.b16 %v3243
    %v3311 = vunpack.c.l.b16 %v3244
    %v3312 = vunpack.c.h.b16 %v3244
    %v3313 = vunpack.c.l.b16 %v3245
    %v3314 = vunpack.c.l.b16 %v3246
    %v3315 = vunpack.c.h.b16 %v3246
    %v3316 = vunpack.c.l.b16 %v3247
    %v3317 = vunpack.c.l.b16 %v3248
    %v3318 = vunpack.c.h.b16 %v3248
    %v3319 = vunpack.c.l.b16 %v3249
    %v3320 = vunpack.c.l.b16 %v3250
    %v3321 = vunpack.c.h.b16 %v3250
    %v3322 = vunpack.c.l.b16 %v3251
    %v3323 = vunpack.c.l.b16 %v3252
    %v3324 = vunpack.c.h.b16 %v3252
    %v3325 = vunpack.c.l.b16 %v3253
    %v3326 = vunpack.c.l.b16 %v3254
    %v3327 = vunpack.c.h.b16 %v3254
    %v3328 = vunpack.c.l.b16 %v3255
    %v3329 = vunpack.c.l.b16 %v3256
    %v3330 = vunpack.c.h.b16 %v3256
    %v3331 = vunpack.c.l.b16 %v3257
    %v3332 = vunpack.c.l.b16 %v3258
    %v3333 = vunpack.c.h.b16 %v3258
    %v3334 = vunpack.c.l.b16 %v3259
    %v3335 = vunpack.c.l.b16 %v3260
    %v3336 = vunpack.c.h.b16 %v3260
    %v3337 = vunpack.c.l.b16 %v3261
    %v3338 = vunpack.c.l.b16 %v3262
    %v3339 = vunpack.c.h.b16 %v3262
    %v3340 = vunpack.c.l.b16 %v3263
    %v3341 = vunpack.c.l.b16 %v3264
    %v3342 = vunpack.c.h.b16 %v3264
    %v3343 = vunpack.c.l.b16 %v3265
    %v3344 = vunpack.c.l.b16 %v3266
    %v3345 = vunpack.c.h.b16 %v3266
    %v3346 = vunpack.c.l.b16 %v3267
    %v3347 = vunpack.c.l.b16 %v3268
    %v3348 = vunpack.c.h.b16 %v3268
    %v3349 = vunpack.c.l.b16 %v3269
    %v3350 = vpack.c.b16 %v3305, %v3302
    %v3351 = vpack.c.b16 %v3306, %v3303
    %v3352 = vpack.c.b16 %v3307, %v3304
    %v3353 = vpack.c.b16 %v3311, %v3308
    %v3354 = vpack.c.b16 %v3312, %v3309
    %v3355 = vpack.c.b16 %v3313, %v3310
    %v3356 = vpack.c.b16 %v3317, %v3314
    %v3357 = vpack.c.b16 %v3318, %v3315
    %v3358 = vpack.c.b16 %v3319, %v3316
    %v3359 = vpack.c.b16 %v3323, %v3320
    %v3360 = vpack.c.b16 %v3324, %v3321
    %v3361 = vpack.c.b16 %v3325, %v3322
    %v3362 = vpack.c.b16 %v3329, %v3326
    %v3363 = vpack.c.b16 %v3330, %v3327
    %v3364 = vpack.c.b16 %v3331, %v3328
    %v3365 = vpack.c.b16 %v3335, %v3332
    %v3366 = vpack.c.b16 %v3336, %v3333
    %v3367 = vpack.c.b16 %v3337, %v3334
    %v3368 = vpack.c.b16 %v3341, %v3338
    %v3369 = vpack.c.b16 %v3342, %v3339
    %v3370 = vpack.c.b16 %v3343, %v3340
    %v3371 = vpack.c.b16 %v3347, %v3344
    %v3372 = vpack.c.b16 %v3348, %v3345
    %v3373 = vpack.c.b16 %v3349, %v3346
    %3398 = vmatpush.bf16.msra.mxu0 %v3371
    %3399 = vmatpush.bf16.msra.mxu0 %v3368
    %3400 = vmatpush.bf16.msra.mxu0 %v3365
    %3401 = vmatpush.bf16.msra.mxu0 %v3362
    %3402 = vmatpush.bf16.msra.mxu0 %v3359
    %3403 = vmatpush.bf16.msra.mxu0 %v3356
    %3404 = vmatpush.bf16.msra.mxu0 %v3353
    %3405 = vmatpush.bf16.msra.mxu0 %v3350
    %3406 = vmatmul.bf16.gmra.mxu0 %v3237
    %v3407 = vpop.f32.mrf.mxu0
    %v3408 = vadd.f32 0.0, %v3407
    %v3409 = vpop.f32.mrf.mxu0
    %3410 = vdwg.mxu0
    %3411 = vmatpush.bf16.msra.mxu0 %v3372
    %3412 = vmatpush.bf16.msra.mxu0 %v3369
    %3413 = vmatpush.bf16.msra.mxu0 %v3366
    %3414 = vmatpush.bf16.msra.mxu0 %v3363
    %3415 = vmatpush.bf16.msra.mxu0 %v3360
    %3416 = vmatpush.bf16.msra.mxu0 %v3357
    %3417 = vmatpush.bf16.msra.mxu0 %v3354
    %3418 = vmatpush.bf16.msra.mxu0 %v3351
    %3419 = vmatmul.bf16.gmra.mxu0 %v3237
    %v3420 = vpop.f32.mrf.mxu0
    %v3421 = vadd.f32 0.0, %v3420
    %v3422 = vpop.f32.mrf.mxu0
    %3423 = vdwg.mxu0
    %3424 = vmatpush.bf16.msra.mxu0 %v3373
    %3425 = vmatpush.bf16.msra.mxu0 %v3370
    %3426 = vmatpush.bf16.msra.mxu0 %v3367
    %3427 = vmatpush.bf16.msra.mxu0 %v3364
    %3428 = vmatpush.bf16.msra.mxu0 %v3361
    %3429 = vmatpush.bf16.msra.mxu0 %v3358
    %3430 = vmatpush.bf16.msra.mxu0 %v3355
    %3431 = vmatpush.bf16.msra.mxu0 %v3352
    %3432 = vmatmul.bf16.gmra.mxu0 %v3237
    %v3433 = vpop.f32.mrf.mxu0
    %v3434 = vadd.f32 0.0, %v3433
    %v3435 = vpop.f32.mrf.mxu0
    %3436 = vdwg.mxu0
    %v3437 = vpack.c.bf16 %v3408, %v3408
    %v3438 = vld [vmem:[%s5] sm:$0xf]
    %v3439 = vld [vmem:[%s5 + $0x4] sm:$0xf]
    %v3440 = vld [vmem:[%s5 + $0x8] sm:$0xf]
    %v3441 = vld [vmem:[%s5 + $0xc] sm:$0xf]
    %v3442 = vld [vmem:[%s5 + $0x10] sm:$0xf]
    %v3443 = vld [vmem:[%s5 + $0x14] sm:$0xf]
    %v3444 = vld [vmem:[%s5 + $0x18] sm:$0xf]
    %v3445 = vld [vmem:[%s5 + $0x1c] sm:$0xf]
    %v3446 = vld [vmem:[%s5 + $0x20] sm:$0xf]
    %v3447 = vld [vmem:[%s5 + $0x24] sm:$0xf]
    %v3448 = vld [vmem:[%s5 + $0x28] sm:$0xf]
    %v3449 = vld [vmem:[%s5 + $0x2c] sm:$0xf]
    %v3450 = vld [vmem:[%s5 + $0x30] sm:$0xf]
    %v3451 = vld [vmem:[%s5 + $0x34] sm:$0xf]
    %v3452 = vld [vmem:[%s5 + $0x38] sm:$0xf]
    %v3453 = vld [vmem:[%s5 + $0x3c] sm:$0xf]
    %v3470 = vunpack.c.l.b16 %v3438
    %v3471 = vunpack.c.l.b16 %v3439
    %v3472 = vunpack.c.l.b16 %v3440
    %v3473 = vunpack.c.l.b16 %v3441
    %v3474 = vunpack.c.l.b16 %v3442
    %v3475 = vunpack.c.l.b16 %v3443
    %v3476 = vunpack.c.l.b16 %v3444
    %v3477 = vunpack.c.l.b16 %v3445
    %v3478 = vunpack.c.l.b16 %v3446
    %v3479 = vunpack.c.l.b16 %v3447
    %v3480 = vunpack.c.l.b16 %v3448
    %v3481 = vunpack.c.l.b16 %v3449
    %v3482 = vunpack.c.l.b16 %v3450
    %v3483 = vunpack.c.l.b16 %v3451
    %v3484 = vunpack.c.l.b16 %v3452
    %v3485 = vunpack.c.l.b16 %v3453
    %v3486 = vpack.c.b16 %v3471, %v3470
    %v3487 = vpack.c.b16 %v3473, %v3472
    %v3488 = vpack.c.b16 %v3475, %v3474
    %v3489 = vpack.c.b16 %v3477, %v3476
    %v3490 = vpack.c.b16 %v3479, %v3478
    %v3491 = vpack.c.b16 %v3481, %v3480
    %v3492 = vpack.c.b16 %v3483, %v3482
    %v3493 = vpack.c.b16 %v3485, %v3484
    %3502 = vmatpush.bf16.msra.mxu0 %v3493
    %3503 = vmatpush.bf16.msra.mxu0 %v3492
    %3504 = vmatpush.bf16.msra.mxu0 %v3491
    %3505 = vmatpush.bf16.msra.mxu0 %v3490
    %3506 = vmatpush.bf16.msra.mxu0 %v3489
    %3507 = vmatpush.bf16.msra.mxu0 %v3488
    %3508 = vmatpush.bf16.msra.mxu0 %v3487
    %3509 = vmatpush.bf16.msra.mxu0 %v3486
    %3510 = vmatmul.bf16.gmra.mxu0 %v3437
    %v3511 = vpop.f32.mrf.mxu0
    %v3512 = vadd.f32 0.0, %v3511
    %v3513 = vpop.f32.mrf.mxu0
    %3514 = vdwg.mxu0
    %v3515 = vsel %vm1200, %v3512, -inf
    %3516 = vmax.xlane.f32.xlu0 %v3515
    %v3517 = vpop.xlane.xlu0 %3516
    %v3518 = vsub.f32 %v3512, %v3517
    %v3519 = vmul.f32 %v3518, 1.442695
    %v3520 = vpow.pop %v3519
    %v3521 = vsel %vm1200, %v3520, 0.0
    %3522 = vadd.xlane.f32.xlu0 %v3521
    %v3523 = vpop.xlane.xlu0 %3522
    %v3524 = vrcp.pop %v3523
    %v3525 = vmul.f32 %v3520, %v3524
    %v3526 = vpack.c.bf16 %v3525, %v3525
    %v3527 = vld [vmem:[#allocation6] sm:$0xf]
    %v3529 = vsel %vm1200, %v3526, 0
    %v3532 = vsel %vm1217, %v3527, 0
    %3534 = vmatpush.bf16.msra.mxu0 0
    %3535 = vmatpush.bf16.msra.mxu0 0
    %3536 = vmatpush.bf16.msra.mxu0 0
    %3537 = vmatpush.bf16.msra.mxu0 0
    %3538 = vmatpush.bf16.msra.mxu0 0
    %3539 = vmatpush.bf16.msra.mxu0 0
    %3540 = vmatpush.bf16.msra.mxu0 0
    %3541 = vmatpush.bf16.msra.mxu0 %v3532
    %3542 = vmatmul.bf16.gmra.mxu0 %v3529
    %v3543 = vpop.f32.mrf.mxu0
    %v3544 = vadd.f32 0.0, %v3543
    %v3545 = vpop.f32.mrf.mxu0
    %3546 = vdwg.mxu0
    %v3547 = vpack.c.bf16 %v3544, %v3544
    %v3548 = vld [vmem:[#allocation17] sm:$0xff]
    %v3549 = vld [vmem:[#allocation17 + $0x8] sm:$0xff]
    %v3550 = vld [vmem:[#allocation17 + $0x10] sm:$0xff]
    %v3551 = vld [vmem:[#allocation17 + $0x18] sm:$0xff]
    %v3552 = vld [vmem:[#allocation17 + $0x20] sm:$0xff]
    %v3553 = vld [vmem:[#allocation17 + $0x28] sm:$0xff]
    %v3554 = vld [vmem:[#allocation17 + $0x30] sm:$0xff]
    %v3555 = vld [vmem:[#allocation17 + $0x38] sm:$0xff]
    %v3556 = vld [vmem:[#allocation17 + $0x40] sm:$0xff]
    %v3557 = vld [vmem:[#allocation17 + $0x48] sm:$0xff]
    %v3558 = vld [vmem:[#allocation17 + $0x50] sm:$0xff]
    %v3559 = vld [vmem:[#allocation17 + $0x58] sm:$0xff]
    %v3560 = vld [vmem:[#allocation17 + $0x60] sm:$0xff]
    %v3561 = vld [vmem:[#allocation17 + $0x68] sm:$0xff]
    %v3562 = vld [vmem:[#allocation17 + $0x70] sm:$0xff]
    %v3563 = vld [vmem:[#allocation17 + $0x78] sm:$0xff]
    %v3580 = vunpack.c.l.b16 %v3548
    %v3581 = vunpack.c.h.b16 %v3548
    %v3582 = vunpack.c.l.b16 %v3549
    %v3583 = vunpack.c.h.b16 %v3549
    %v3584 = vunpack.c.l.b16 %v3550
    %v3585 = vunpack.c.h.b16 %v3550
    %v3586 = vunpack.c.l.b16 %v3551
    %v3587 = vunpack.c.h.b16 %v3551
    %v3588 = vunpack.c.l.b16 %v3552
    %v3589 = vunpack.c.h.b16 %v3552
    %v3590 = vunpack.c.l.b16 %v3553
    %v3591 = vunpack.c.h.b16 %v3553
    %v3592 = vunpack.c.l.b16 %v3554
    %v3593 = vunpack.c.h.b16 %v3554
    %v3594 = vunpack.c.l.b16 %v3555
    %v3595 = vunpack.c.h.b16 %v3555
    %v3596 = vunpack.c.l.b16 %v3556
    %v3597 = vunpack.c.h.b16 %v3556
    %v3598 = vunpack.c.l.b16 %v3557
    %v3599 = vunpack.c.h.b16 %v3557
    %v3600 = vunpack.c.l.b16 %v3558
    %v3601 = vunpack.c.h.b16 %v3558
    %v3602 = vunpack.c.l.b16 %v3559
    %v3603 = vunpack.c.h.b16 %v3559
    %v3604 = vunpack.c.l.b16 %v3560
    %v3605 = vunpack.c.h.b16 %v3560
    %v3606 = vunpack.c.l.b16 %v3561
    %v3607 = vunpack.c.h.b16 %v3561
    %v3608 = vunpack.c.l.b16 %v3562
    %v3609 = vunpack.c.h.b16 %v3562
    %v3610 = vunpack.c.l.b16 %v3563
    %v3611 = vunpack.c.h.b16 %v3563
    %v3612 = vpack.c.b16 %v3582, %v3580
    %v3613 = vpack.c.b16 %v3583, %v3581
    %v3614 = vpack.c.b16 %v3586, %v3584
    %v3615 = vpack.c.b16 %v3587, %v3585
    %v3616 = vpack.c.b16 %v3590, %v3588
    %v3617 = vpack.c.b16 %v3591, %v3589
    %v3618 = vpack.c.b16 %v3594, %v3592
    %v3619 = vpack.c.b16 %v3595, %v3593
    %v3620 = vpack.c.b16 %v3598, %v3596
    %v3621 = vpack.c.b16 %v3599, %v3597
    %v3622 = vpack.c.b16 %v3602, %v3600
    %v3623 = vpack.c.b16 %v3603, %v3601
    %v3624 = vpack.c.b16 %v3606, %v3604
    %v3625 = vpack.c.b16 %v3607, %v3605
    %v3626 = vpack.c.b16 %v3610, %v3608
    %v3627 = vpack.c.b16 %v3611, %v3609
    %3644 = vmatpush.bf16.msra.mxu0 %v3626
    %3645 = vmatpush.bf16.msra.mxu0 %v3624
    %3646 = vmatpush.bf16.msra.mxu0 %v3622
    %3647 = vmatpush.bf16.msra.mxu0 %v3620
    %3648 = vmatpush.bf16.msra.mxu0 %v3618
    %3649 = vmatpush.bf16.msra.mxu0 %v3616
    %3650 = vmatpush.bf16.msra.mxu0 %v3614
    %3651 = vmatpush.bf16.msra.mxu0 %v3612
    %3652 = vmatmul.bf16.gmra.mxu0 %v3547
    %v3653 = vpop.f32.mrf.mxu0
    %v3654 = vadd.f32 0.0, %v3653
    %v3655 = vpop.f32.mrf.mxu0
    %3656 = vdwg.mxu0
    %3657 = vmatpush.bf16.msra.mxu0 %v3627
    %3658 = vmatpush.bf16.msra.mxu0 %v3625
    %3659 = vmatpush.bf16.msra.mxu0 %v3623
    %3660 = vmatpush.bf16.msra.mxu0 %v3621
    %3661 = vmatpush.bf16.msra.mxu0 %v3619
    %3662 = vmatpush.bf16.msra.mxu0 %v3617
    %3663 = vmatpush.bf16.msra.mxu0 %v3615
    %3664 = vmatpush.bf16.msra.mxu0 %v3613
    %3665 = vmatmul.bf16.gmra.mxu0 %v3547
    %v3666 = vpop.f32.mrf.mxu0
    %v3667 = vadd.f32 0.0, %v3666
    %v3668 = vpop.f32.mrf.mxu0
    %3669 = vdwg.mxu0
    %v3670 = vadd.f32 %v3421, %v3654
    %v3671 = vld [vmem:[%s18] sm:$0x1]
    %v3673 = vperm.slane %v3671, 0
    %v3675 = vadd.f32 %v3670, %v3673
    %v3676 = vpack.c.bf16 %v3675, %v3675
    %v3677 = vld [vmem:[#allocation18] sm:$0xf]
    %v3678 = vld [vmem:[#allocation18 + $0x4] sm:$0xf]
    %v3679 = vld [vmem:[#allocation18 + $0x8] sm:$0xf]
    %v3680 = vld [vmem:[#allocation18 + $0xc] sm:$0xf]
    %v3681 = vld [vmem:[#allocation18 + $0x10] sm:$0xf]
    %v3682 = vld [vmem:[#allocation18 + $0x14] sm:$0xf]
    %v3683 = vld [vmem:[#allocation18 + $0x18] sm:$0xf]
    %v3684 = vld [vmem:[#allocation18 + $0x1c] sm:$0xf]
    %v3685 = vld [vmem:[#allocation18 + $0x20] sm:$0xf]
    %v3686 = vld [vmem:[#allocation18 + $0x24] sm:$0xf]
    %v3687 = vld [vmem:[#allocation18 + $0x28] sm:$0xf]
    %v3688 = vld [vmem:[#allocation18 + $0x2c] sm:$0xf]
    %v3689 = vld [vmem:[#allocation18 + $0x30] sm:$0xf]
    %v3690 = vld [vmem:[#allocation18 + $0x34] sm:$0xf]
    %v3691 = vld [vmem:[#allocation18 + $0x38] sm:$0xf]
    %v3692 = vld [vmem:[#allocation18 + $0x3c] sm:$0xf]
    %v3693 = vld [vmem:[%s20] sm:$0x1]
    %v3695 = vperm.slane %v3693, 0
    %v3713 = vunpack.c.l.b16 %v3677
    %v3714 = vunpack.c.l.b16 %v3678
    %v3715 = vunpack.c.l.b16 %v3679
    %v3716 = vunpack.c.l.b16 %v3680
    %v3717 = vunpack.c.l.b16 %v3681
    %v3718 = vunpack.c.l.b16 %v3682
    %v3719 = vunpack.c.l.b16 %v3683
    %v3720 = vunpack.c.l.b16 %v3684
    %v3721 = vunpack.c.l.b16 %v3685
    %v3722 = vunpack.c.l.b16 %v3686
    %v3723 = vunpack.c.l.b16 %v3687
    %v3724 = vunpack.c.l.b16 %v3688
    %v3725 = vunpack.c.l.b16 %v3689
    %v3726 = vunpack.c.l.b16 %v3690
    %v3727 = vunpack.c.l.b16 %v3691
    %v3728 = vunpack.c.l.b16 %v3692
    %v3729 = vpack.c.b16 %v3714, %v3713
    %v3730 = vpack.c.b16 %v3716, %v3715
    %v3731 = vpack.c.b16 %v3718, %v3717
    %v3732 = vpack.c.b16 %v3720, %v3719
    %v3733 = vpack.c.b16 %v3722, %v3721
    %v3734 = vpack.c.b16 %v3724, %v3723
    %v3735 = vpack.c.b16 %v3726, %v3725
    %v3736 = vpack.c.b16 %v3728, %v3727
    %3745 = vmatpush.bf16.msra.mxu0 %v3736
    %3746 = vmatpush.bf16.msra.mxu0 %v3735
    %3747 = vmatpush.bf16.msra.mxu0 %v3734
    %3748 = vmatpush.bf16.msra.mxu0 %v3733
    %3749 = vmatpush.bf16.msra.mxu0 %v3732
    %3750 = vmatpush.bf16.msra.mxu0 %v3731
    %3751 = vmatpush.bf16.msra.mxu0 %v3730
    %3752 = vmatpush.bf16.msra.mxu0 %v3729
    %3753 = vmatmul.bf16.gmra.mxu0 %v3676
    %v3754 = vpop.f32.mrf.mxu0
    %v3755 = vadd.f32 %v3695, %v3754
    %v3756 = vpop.f32.mrf.mxu0
    %3757 = vdwg.mxu0
    %3758 = vmax.xlane.f32.xlu0 %v3755
    %v3759 = vpop.xlane.xlu0 %3758
    %v3760 = vsub.f32 %v3755, %v3759
    %v3761 = vmul.f32 %v3760, 1.442695
    %v3762 = vpow.pop %v3761
    %3763 = vadd.xlane.f32.xlu0 %v3762
    %v3764 = vpop.xlane.xlu0 %3763
    %v3765 = vrcp.pop %v3764
    %v3766 = vmul.f32 %v3762, %v3765
    %v3767 = vadd.f32 %v2980, %v3434
    %v3768 = vadd.f32 %v3767, %v3667
    %3769 = vadd.xlane.f32.xlu0 %v3768
    %v3770 = vpop.xlane.xlu0 %3769
    %v3771 = vsub.f32 0.0, %v3770
    %v3772 = vmul.f32 %v3771, 1.442695
    %v3773 = vpow.pop %v3772
    %v3774 = vadd.f32 %v3773, 1.0
    %v3775 = vrcp.pop %v3774
    %v3776 = vmul.f32 %v3774, %v3775
    %v3777 = vsub.f32 1.0, %v3776
    %v3778 = vmul.f32 %v3775, %v3777
    %v3779 = vadd.f32 %v3775, %v3778
    %vm3780 = vweird.f32 %v3774
    %vm3781 = vweird.f32 %v3775
    %vm3782 = vmor %vm3780, %vm3781
    %v3783 = vsel %vm3782, %v3775, %v3779
    %v3784 = vand.u32 2147483647, %v3774
    %vm3785 = vcmp.eq.f32.partialorder %v3784, 8.507059e+37
    %v3786 = vand.u32 %v3774, 2147483648
    %v3787 = vor.u32 1.1754944e-38, %v3786
    %v3788 = vsel %vm3785, %v3787, %v3783
    %v3789 = vmul.f32 1.0, %v3788
    %v3790 = vmul.f32 %v3766, %v3789
    %v3791 = vld [vmem:[#allocation3] sm:$0xff]
    %v3792 = vmul.f32 %v3790, %v3791
    %v3793 = vsub.f32 1.0, %v3789
    %v3794 = vmul.f32 %v3525, %v3793
    %v3795 = vpack.c.bf16 %v3794, %v3794
    %v3796 = vld [vmem:[%s6] sm:$0xf]
    %v3798 = vsel %vm1200, %v3795, 0
    %v3801 = vsel %vm1217, %v3796, 0
    %3803 = vmatpush.bf16.msra.mxu0 0
    %3804 = vmatpush.bf16.msra.mxu0 0
    %3805 = vmatpush.bf16.msra.mxu0 0
    %3806 = vmatpush.bf16.msra.mxu0 0
    %3807 = vmatpush.bf16.msra.mxu0 0
    %3808 = vmatpush.bf16.msra.mxu0 0
    %3809 = vmatpush.bf16.msra.mxu0 0
    %3810 = vmatpush.bf16.msra.mxu0 %v3801
    %3811 = vmatmul.bf16.gmra.mxu0 %v3798
    %v3812 = vpop.f32.mrf.mxu0
    %v3813 = vadd.f32 0.0, %v3812
    %v3814 = vpop.f32.mrf.mxu0
    %3815 = vdwg.mxu0
    %v3816 = vadd.f32 %v3792, %v3813
    %v3818 = vrot.slane %v3816, 1
    %v3819 = vrot.slane %v3816, 2
    %v3820 = vrot.slane %v3816, 3
    %v3821 = vrot.slane %v3816, 4
    %v3822 = vrot.slane %v3816, 5
    %v3823 = vrot.slane %v3816, 6
    %v3824 = vrot.slane %v3816, 7
    %v3832 = vpack.c.bf16 %v3816, %v3816
    %v3833 = vpack.c.bf16 %v3818, %v3818
    %v3834 = vpack.c.bf16 %v3819, %v3819
    %v3835 = vpack.c.bf16 %v3820, %v3820
    %v3836 = vpack.c.bf16 %v3821, %v3821
    %v3837 = vpack.c.bf16 %v3822, %v3822
    %v3838 = vpack.c.bf16 %v3823, %v3823
    %v3839 = vpack.c.bf16 %v3824, %v3824
    %v3848 = vrot.slane %v3832, 7
    %v3849 = vrot.slane %v3833, 7
    %v3850 = vrot.slane %v3834, 7
    %v3851 = vrot.slane %v3835, 7
    %v3852 = vrot.slane %v3836, 7
    %v3853 = vrot.slane %v3837, 7
    %v3854 = vrot.slane %v3838, 7
    %v3855 = vrot.slane %v3839, 7
    %vm3864 = vcmask 1041409
    %vm3865 = vsmask.f32 1280
    %vm3866 = vmand %vm3864, %vm3865
    %v3867 = vld [vmem:[%s21] sm:$0x2]
    %v3868 = vsel %vm3866, %v3848, %v3867
    %3869 = vst [vmem:[%s21] sm:$0x2] %v3868
    %v3870 = vld [vmem:[%s21 + $0x4] sm:$0x2]
    %v3871 = vsel %vm3866, %v3849, %v3870
    %3872 = vst [vmem:[%s21 + $0x4] sm:$0x2] %v3871
    %v3873 = vld [vmem:[%s21 + $0x8] sm:$0x2]
    %v3874 = vsel %vm3866, %v3850, %v3873
    %3875 = vst [vmem:[%s21 + $0x8] sm:$0x2] %v3874
    %v3876 = vld [vmem:[%s21 + $0xc] sm:$0x2]
    %v3877 = vsel %vm3866, %v3851, %v3876
    %3878 = vst [vmem:[%s21 + $0xc] sm:$0x2] %v3877
    %v3879 = vld [vmem:[%s21 + $0x10] sm:$0x2]
    %v3880 = vsel %vm3866, %v3852, %v3879
    %3881 = vst [vmem:[%s21 + $0x10] sm:$0x2] %v3880
    %v3882 = vld [vmem:[%s21 + $0x14] sm:$0x2]
    %v3883 = vsel %vm3866, %v3853, %v3882
    %3884 = vst [vmem:[%s21 + $0x14] sm:$0x2] %v3883
    %v3885 = vld [vmem:[%s21 + $0x18] sm:$0x2]
    %v3886 = vsel %vm3866, %v3854, %v3885
    %3887 = vst [vmem:[%s21 + $0x18] sm:$0x2] %v3886
    %v3888 = vld [vmem:[%s21 + $0x1c] sm:$0x2]
    %v3889 = vsel %vm3866, %v3855, %v3888
    %3890 = vst [vmem:[%s21 + $0x1c] sm:$0x2] %v3889
    %s3891 = scalar_lea.vmem [#allocation4], 24
    %v3892 = vld [vmem:[%s3891] sm:$0xff]
    %v3893 = vpack.c.bf16 %v3892, %v3892
    %v3894 = vld [vmem:[#allocation12] sm:$0xff]
    %v3895 = vld [vmem:[#allocation12 + $0x8] sm:$0xff]
    %v3896 = vld [vmem:[#allocation12 + $0x10] sm:$0xff]
    %v3897 = vld [vmem:[#allocation12 + $0x18] sm:$0xff]
    %v3898 = vld [vmem:[#allocation12 + $0x20] sm:$0xff]
    %v3899 = vld [vmem:[#allocation12 + $0x28] sm:$0xff]
    %v3900 = vld [vmem:[#allocation12 + $0x30] sm:$0xff]
    %v3901 = vld [vmem:[#allocation12 + $0x38] sm:$0xff]
    %v3902 = vld [vmem:[#allocation12 + $0x40] sm:$0xff]
    %v3903 = vld [vmem:[#allocation12 + $0x48] sm:$0xff]
    %v3904 = vld [vmem:[#allocation12 + $0x50] sm:$0xff]
    %v3905 = vld [vmem:[#allocation12 + $0x58] sm:$0xff]
    %v3906 = vld [vmem:[#allocation12 + $0x60] sm:$0xff]
    %v3907 = vld [vmem:[#allocation12 + $0x68] sm:$0xff]
    %v3908 = vld [vmem:[#allocation12 + $0x70] sm:$0xff]
    %v3909 = vld [vmem:[#allocation12 + $0x78] sm:$0xff]
    %v3910 = vld [vmem:[#allocation12 + $0x80] sm:$0xff]
    %v3911 = vld [vmem:[#allocation12 + $0x88] sm:$0xff]
    %v3912 = vld [vmem:[#allocation12 + $0x90] sm:$0xff]
    %v3913 = vld [vmem:[#allocation12 + $0x98] sm:$0xff]
    %v3914 = vld [vmem:[#allocation12 + $0xa0] sm:$0xff]
    %v3915 = vld [vmem:[#allocation12 + $0xa8] sm:$0xff]
    %v3916 = vld [vmem:[#allocation12 + $0xb0] sm:$0xff]
    %v3917 = vld [vmem:[#allocation12 + $0xb8] sm:$0xff]
    %v3918 = vld [vmem:[#allocation12 + $0xc0] sm:$0xff]
    %v3919 = vld [vmem:[#allocation12 + $0xc8] sm:$0xff]
    %v3920 = vld [vmem:[#allocation12 + $0xd0] sm:$0xff]
    %v3921 = vld [vmem:[#allocation12 + $0xd8] sm:$0xff]
    %v3922 = vld [vmem:[#allocation12 + $0xe0] sm:$0xff]
    %v3923 = vld [vmem:[#allocation12 + $0xe8] sm:$0xff]
    %v3924 = vld [vmem:[#allocation12 + $0xf0] sm:$0xff]
    %v3925 = vld [vmem:[#allocation12 + $0xf8] sm:$0xff]
    %v3926 = vld [vmem:[%s13] sm:$0xf]
    %v3928 = vperm.slane %v3926, 0
    %v3929 = vperm.slane %v3926, 1
    %v3930 = vperm.slane %v3926, 2
    %v3931 = vperm.slane %v3926, 3
    %v3968 = vunpack.c.l.b16 %v3894
    %v3969 = vunpack.c.h.b16 %v3894
    %v3970 = vunpack.c.l.b16 %v3895
    %v3971 = vunpack.c.h.b16 %v3895
    %v3972 = vunpack.c.l.b16 %v3896
    %v3973 = vunpack.c.h.b16 %v3896
    %v3974 = vunpack.c.l.b16 %v3897
    %v3975 = vunpack.c.h.b16 %v3897
    %v3976 = vunpack.c.l.b16 %v3898
    %v3977 = vunpack.c.h.b16 %v3898
    %v3978 = vunpack.c.l.b16 %v3899
    %v3979 = vunpack.c.h.b16 %v3899
    %v3980 = vunpack.c.l.b16 %v3900
    %v3981 = vunpack.c.h.b16 %v3900
    %v3982 = vunpack.c.l.b16 %v3901
    %v3983 = vunpack.c.h.b16 %v3901
    %v3984 = vunpack.c.l.b16 %v3902
    %v3985 = vunpack.c.h.b16 %v3902
    %v3986 = vunpack.c.l.b16 %v3903
    %v3987 = vunpack.c.h.b16 %v3903
    %v3988 = vunpack.c.l.b16 %v3904
    %v3989 = vunpack.c.h.b16 %v3904
    %v3990 = vunpack.c.l.b16 %v3905
    %v3991 = vunpack.c.h.b16 %v3905
    %v3992 = vunpack.c.l.b16 %v3906
    %v3993 = vunpack.c.h.b16 %v3906
    %v3994 = vunpack.c.l.b16 %v3907
    %v3995 = vunpack.c.h.b16 %v3907
    %v3996 = vunpack.c.l.b16 %v3908
    %v3997 = vunpack.c.h.b16 %v3908
    %v3998 = vunpack.c.l.b16 %v3909
    %v3999 = vunpack.c.h.b16 %v3909
    %v4000 = vunpack.c.l.b16 %v3910
    %v4001 = vunpack.c.h.b16 %v3910
    %v4002 = vunpack.c.l.b16 %v3911
    %v4003 = vunpack.c.h.b16 %v3911
    %v4004 = vunpack.c.l.b16 %v3912
    %v4005 = vunpack.c.h.b16 %v3912
    %v4006 = vunpack.c.l.b16 %v3913
    %v4007 = vunpack.c.h.b16 %v3913
    %v4008 = vunpack.c.l.b16 %v3914
    %v4009 = vunpack.c.h.b16 %v3914
    %v4010 = vunpack.c.l.b16 %v3915
    %v4011 = vunpack.c.h.b16 %v3915
    %v4012 = vunpack.c.l.b16 %v3916
    %v4013 = vunpack.c.h.b16 %v3916
    %v4014 = vunpack.c.l.b16 %v3917
    %v4015 = vunpack.c.h.b16 %v3917
    %v4016 = vunpack.c.l.b16 %v3918
    %v4017 = vunpack.c.h.b16 %v3918
    %v4018 = vunpack.c.l.b16 %v3919
    %v4019 = vunpack.c.h.b16 %v3919
    %v4020 = vunpack.c.l.b16 %v3920
    %v4021 = vunpack.c.h.b16 %v3920
    %v4022 = vunpack.c.l.b16 %v3921
    %v4023 = vunpack.c.h.b16 %v3921
    %v4024 = vunpack.c.l.b16 %v3922
    %v4025 = vunpack.c.h.b16 %v3922
    %v4026 = vunpack.c.l.b16 %v3923
    %v4027 = vunpack.c.h.b16 %v3923
    %v4028 = vunpack.c.l.b16 %v3924
    %v4029 = vunpack.c.h.b16 %v3924
    %v4030 = vunpack.c.l.b16 %v3925
    %v4031 = vunpack.c.h.b16 %v3925
    %v4032 = vpack.c.b16 %v3972, %v3968
    %v4033 = vpack.c.b16 %v3973, %v3969
    %v4034 = vpack.c.b16 %v3974, %v3970
    %v4035 = vpack.c.b16 %v3975, %v3971
    %v4036 = vpack.c.b16 %v3980, %v3976
    %v4037 = vpack.c.b16 %v3981, %v3977
    %v4038 = vpack.c.b16 %v3982, %v3978
    %v4039 = vpack.c.b16 %v3983, %v3979
    %v4040 = vpack.c.b16 %v3988, %v3984
    %v4041 = vpack.c.b16 %v3989, %v3985
    %v4042 = vpack.c.b16 %v3990, %v3986
    %v4043 = vpack.c.b16 %v3991, %v3987
    %v4044 = vpack.c.b16 %v3996, %v3992
    %v4045 = vpack.c.b16 %v3997, %v3993
    %v4046 = vpack.c.b16 %v3998, %v3994
    %v4047 = vpack.c.b16 %v3999, %v3995
    %v4048 = vpack.c.b16 %v4004, %v4000
    %v4049 = vpack.c.b16 %v4005, %v4001
    %v4050 = vpack.c.b16 %v4006, %v4002
    %v4051 = vpack.c.b16 %v4007, %v4003
    %v4052 = vpack.c.b16 %v4012, %v4008
    %v4053 = vpack.c.b16 %v4013, %v4009
    %v4054 = vpack.c.b16 %v4014, %v4010
    %v4055 = vpack.c.b16 %v4015, %v4011
    %v4056 = vpack.c.b16 %v4020, %v4016
    %v4057 = vpack.c.b16 %v4021, %v4017
    %v4058 = vpack.c.b16 %v4022, %v4018
    %v4059 = vpack.c.b16 %v4023, %v4019
    %v4060 = vpack.c.b16 %v4028, %v4024
    %v4061 = vpack.c.b16 %v4029, %v4025
    %v4062 = vpack.c.b16 %v4030, %v4026
    %v4063 = vpack.c.b16 %v4031, %v4027
    %4096 = vmatpush.bf16.msra.mxu0 %v4060
    %4097 = vmatpush.bf16.msra.mxu0 %v4056
    %4098 = vmatpush.bf16.msra.mxu0 %v4052
    %4099 = vmatpush.bf16.msra.mxu0 %v4048
    %4100 = vmatpush.bf16.msra.mxu0 %v4044
    %4101 = vmatpush.bf16.msra.mxu0 %v4040
    %4102 = vmatpush.bf16.msra.mxu0 %v4036
    %4103 = vmatpush.bf16.msra.mxu0 %v4032
    %4104 = vmatmul.bf16.gmra.mxu0 %v3893
    %v4105 = vpop.f32.mrf.mxu0
    %v4106 = vadd.f32 %v3928, %v4105
    %v4107 = vpop.f32.mrf.mxu0
    %4108 = vdwg.mxu0
    %4109 = vmatpush.bf16.msra.mxu0 %v4061
    %4110 = vmatpush.bf16.msra.mxu0 %v4057
    %4111 = vmatpush.bf16.msra.mxu0 %v4053
    %4112 = vmatpush.bf16.msra.mxu0 %v4049
    %4113 = vmatpush.bf16.msra.mxu0 %v4045
    %4114 = vmatpush.bf16.msra.mxu0 %v4041
    %4115 = vmatpush.bf16.msra.mxu0 %v4037
    %4116 = vmatpush.bf16.msra.mxu0 %v4033
    %4117 = vmatmul.bf16.gmra.mxu0 %v3893
    %v4118 = vpop.f32.mrf.mxu0
    %v4119 = vadd.f32 %v3929, %v4118
    %v4120 = vpop.f32.mrf.mxu0
    %4121 = vdwg.mxu0
    %4122 = vmatpush.bf16.msra.mxu0 %v4062
    %4123 = vmatpush.bf16.msra.mxu0 %v4058
    %4124 = vmatpush.bf16.msra.mxu0 %v4054
    %4125 = vmatpush.bf16.msra.mxu0 %v4050
    %4126 = vmatpush.bf16.msra.mxu0 %v4046
    %4127 = vmatpush.bf16.msra.mxu0 %v4042
    %4128 = vmatpush.bf16.msra.mxu0 %v4038
    %4129 = vmatpush.bf16.msra.mxu0 %v4034
    %4130 = vmatmul.bf16.gmra.mxu0 %v3893
    %v4131 = vpop.f32.mrf.mxu0
    %v4132 = vadd.f32 %v3930, %v4131
    %v4133 = vpop.f32.mrf.mxu0
    %4134 = vdwg.mxu0
    %4135 = vmatpush.bf16.msra.mxu0 %v4063
    %4136 = vmatpush.bf16.msra.mxu0 %v4059
    %4137 = vmatpush.bf16.msra.mxu0 %v4055
    %4138 = vmatpush.bf16.msra.mxu0 %v4051
    %4139 = vmatpush.bf16.msra.mxu0 %v4047
    %4140 = vmatpush.bf16.msra.mxu0 %v4043
    %4141 = vmatpush.bf16.msra.mxu0 %v4039
    %4142 = vmatpush.bf16.msra.mxu0 %v4035
    %4143 = vmatmul.bf16.gmra.mxu0 %v3893
    %v4144 = vpop.f32.mrf.mxu0
    %v4145 = vadd.f32 %v3931, %v4144
    %v4146 = vpop.f32.mrf.mxu0
    %4147 = vdwg.mxu0
    %v4148 = vld [vmem:[#allocation14] sm:$0xff]
    %v4149 = vld [vmem:[#allocation14 + $0x8] sm:$0xf]
    %v4150 = vld [vmem:[#allocation14 + $0xc] sm:$0xff]
    %v4151 = vld [vmem:[#allocation14 + $0x14] sm:$0xf]
    %v4152 = vld [vmem:[#allocation14 + $0x18] sm:$0xff]
    %v4153 = vld [vmem:[#allocation14 + $0x20] sm:$0xf]
    %v4154 = vld [vmem:[#allocation14 + $0x24] sm:$0xff]
    %v4155 = vld [vmem:[#allocation14 + $0x2c] sm:$0xf]
    %v4156 = vld [vmem:[#allocation14 + $0x30] sm:$0xff]
    %v4157 = vld [vmem:[#allocation14 + $0x38] sm:$0xf]
    %v4158 = vld [vmem:[#allocation14 + $0x3c] sm:$0xff]
    %v4159 = vld [vmem:[#allocation14 + $0x44] sm:$0xf]
    %v4160 = vld [vmem:[#allocation14 + $0x48] sm:$0xff]
    %v4161 = vld [vmem:[#allocation14 + $0x50] sm:$0xf]
    %v4162 = vld [vmem:[#allocation14 + $0x54] sm:$0xff]
    %v4163 = vld [vmem:[#allocation14 + $0x5c] sm:$0xf]
    %v4164 = vld [vmem:[#allocation14 + $0x60] sm:$0xff]
    %v4165 = vld [vmem:[#allocation14 + $0x68] sm:$0xf]
    %v4166 = vld [vmem:[#allocation14 + $0x6c] sm:$0xff]
    %v4167 = vld [vmem:[#allocation14 + $0x74] sm:$0xf]
    %v4168 = vld [vmem:[#allocation14 + $0x78] sm:$0xff]
    %v4169 = vld [vmem:[#allocation14 + $0x80] sm:$0xf]
    %v4170 = vld [vmem:[#allocation14 + $0x84] sm:$0xff]
    %v4171 = vld [vmem:[#allocation14 + $0x8c] sm:$0xf]
    %v4172 = vld [vmem:[#allocation14 + $0x90] sm:$0xff]
    %v4173 = vld [vmem:[#allocation14 + $0x98] sm:$0xf]
    %v4174 = vld [vmem:[#allocation14 + $0x9c] sm:$0xff]
    %v4175 = vld [vmem:[#allocation14 + $0xa4] sm:$0xf]
    %v4176 = vld [vmem:[#allocation14 + $0xa8] sm:$0xff]
    %v4177 = vld [vmem:[#allocation14 + $0xb0] sm:$0xf]
    %v4178 = vld [vmem:[#allocation14 + $0xb4] sm:$0xff]
    %v4179 = vld [vmem:[#allocation14 + $0xbc] sm:$0xf]
    %v4180 = vld [vmem:[%s15] sm:$0x7]
    %v4182 = vperm.slane %v4180, 0
    %v4183 = vperm.slane %v4180, 1
    %v4184 = vperm.slane %v4180, 2
    %v4220 = vunpack.c.l.b16 %v4148
    %v4221 = vunpack.c.h.b16 %v4148
    %v4222 = vunpack.c.l.b16 %v4149
    %v4223 = vunpack.c.l.b16 %v4150
    %v4224 = vunpack.c.h.b16 %v4150
    %v4225 = vunpack.c.l.b16 %v4151
    %v4226 = vunpack.c.l.b16 %v4152
    %v4227 = vunpack.c.h.b16 %v4152
    %v4228 = vunpack.c.l.b16 %v4153
    %v4229 = vunpack.c.l.b16 %v4154
    %v4230 = vunpack.c.h.b16 %v4154
    %v4231 = vunpack.c.l.b16 %v4155
    %v4232 = vunpack.c.l.b16 %v4156
    %v4233 = vunpack.c.h.b16 %v4156
    %v4234 = vunpack.c.l.b16 %v4157
    %v4235 = vunpack.c.l.b16 %v4158
    %v4236 = vunpack.c.h.b16 %v4158
    %v4237 = vunpack.c.l.b16 %v4159
    %v4238 = vunpack.c.l.b16 %v4160
    %v4239 = vunpack.c.h.b16 %v4160
    %v4240 = vunpack.c.l.b16 %v4161
    %v4241 = vunpack.c.l.b16 %v4162
    %v4242 = vunpack.c.h.b16 %v4162
    %v4243 = vunpack.c.l.b16 %v4163
    %v4244 = vunpack.c.l.b16 %v4164
    %v4245 = vunpack.c.h.b16 %v4164
    %v4246 = vunpack.c.l.b16 %v4165
    %v4247 = vunpack.c.l.b16 %v4166
    %v4248 = vunpack.c.h.b16 %v4166
    %v4249 = vunpack.c.l.b16 %v4167
    %v4250 = vunpack.c.l.b16 %v4168
    %v4251 = vunpack.c.h.b16 %v4168
    %v4252 = vunpack.c.l.b16 %v4169
    %v4253 = vunpack.c.l.b16 %v4170
    %v4254 = vunpack.c.h.b16 %v4170
    %v4255 = vunpack.c.l.b16 %v4171
    %v4256 = vunpack.c.l.b16 %v4172
    %v4257 = vunpack.c.h.b16 %v4172
    %v4258 = vunpack.c.l.b16 %v4173
    %v4259 = vunpack.c.l.b16 %v4174
    %v4260 = vunpack.c.h.b16 %v4174
    %v4261 = vunpack.c.l.b16 %v4175
    %v4262 = vunpack.c.l.b16 %v4176
    %v4263 = vunpack.c.h.b16 %v4176
    %v4264 = vunpack.c.l.b16 %v4177
    %v4265 = vunpack.c.l.b16 %v4178
    %v4266 = vunpack.c.h.b16 %v4178
    %v4267 = vunpack.c.l.b16 %v4179
    %v4268 = vpack.c.b16 %v4223, %v4220
    %v4269 = vpack.c.b16 %v4224, %v4221
    %v4270 = vpack.c.b16 %v4225, %v4222
    %v4271 = vpack.c.b16 %v4229, %v4226
    %v4272 = vpack.c.b16 %v4230, %v4227
    %v4273 = vpack.c.b16 %v4231, %v4228
    %v4274 = vpack.c.b16 %v4235, %v4232
    %v4275 = vpack.c.b16 %v4236, %v4233
    %v4276 = vpack.c.b16 %v4237, %v4234
    %v4277 = vpack.c.b16 %v4241, %v4238
    %v4278 = vpack.c.b16 %v4242, %v4239
    %v4279 = vpack.c.b16 %v4243, %v4240
    %v4280 = vpack.c.b16 %v4247, %v4244
    %v4281 = vpack.c.b16 %v4248, %v4245
    %v4282 = vpack.c.b16 %v4249, %v4246
    %v4283 = vpack.c.b16 %v4253, %v4250
    %v4284 = vpack.c.b16 %v4254, %v4251
    %v4285 = vpack.c.b16 %v4255, %v4252
    %v4286 = vpack.c.b16 %v4259, %v4256
    %v4287 = vpack.c.b16 %v4260, %v4257
    %v4288 = vpack.c.b16 %v4261, %v4258
    %v4289 = vpack.c.b16 %v4265, %v4262
    %v4290 = vpack.c.b16 %v4266, %v4263
    %v4291 = vpack.c.b16 %v4267, %v4264
    %4316 = vmatpush.bf16.msra.mxu0 %v4289
    %4317 = vmatpush.bf16.msra.mxu0 %v4286
    %4318 = vmatpush.bf16.msra.mxu0 %v4283
    %4319 = vmatpush.bf16.msra.mxu0 %v4280
    %4320 = vmatpush.bf16.msra.mxu0 %v4277
    %4321 = vmatpush.bf16.msra.mxu0 %v4274
    %4322 = vmatpush.bf16.msra.mxu0 %v4271
    %4323 = vmatpush.bf16.msra.mxu0 %v4268
    %4324 = vmatmul.bf16.gmra.mxu0 %v3237
    %v4325 = vpop.f32.mrf.mxu0
    %v4326 = vadd.f32 %v4182, %v4325
    %v4327 = vpop.f32.mrf.mxu0
    %4328 = vdwg.mxu0
    %4329 = vmatpush.bf16.msra.mxu0 %v4290
    %4330 = vmatpush.bf16.msra.mxu0 %v4287
    %4331 = vmatpush.bf16.msra.mxu0 %v4284
    %4332 = vmatpush.bf16.msra.mxu0 %v4281
    %4333 = vmatpush.bf16.msra.mxu0 %v4278
    %4334 = vmatpush.bf16.msra.mxu0 %v4275
    %4335 = vmatpush.bf16.msra.mxu0 %v4272
    %4336 = vmatpush.bf16.msra.mxu0 %v4269
    %4337 = vmatmul.bf16.gmra.mxu0 %v3237
    %v4338 = vpop.f32.mrf.mxu0
    %v4339 = vadd.f32 %v4183, %v4338
    %v4340 = vpop.f32.mrf.mxu0
    %4341 = vdwg.mxu0
    %4342 = vmatpush.bf16.msra.mxu0 %v4291
    %4343 = vmatpush.bf16.msra.mxu0 %v4288
    %4344 = vmatpush.bf16.msra.mxu0 %v4285
    %4345 = vmatpush.bf16.msra.mxu0 %v4282
    %4346 = vmatpush.bf16.msra.mxu0 %v4279
    %4347 = vmatpush.bf16.msra.mxu0 %v4276
    %4348 = vmatpush.bf16.msra.mxu0 %v4273
    %4349 = vmatpush.bf16.msra.mxu0 %v4270
    %4350 = vmatmul.bf16.gmra.mxu0 %v3237
    %v4351 = vpop.f32.mrf.mxu0
    %v4352 = vadd.f32 %v4184, %v4351
    %v4353 = vpop.f32.mrf.mxu0
    %4354 = vdwg.mxu0
    %v4355 = vadd.f32 %v4106, %v4326
    %v4356 = vsub.f32 0.0, %v4355
    %v4357 = vmul.f32 %v4356, 1.442695
    %v4358 = vpow.pop %v4357
    %v4359 = vadd.f32 %v4358, 1.0
    %v4360 = vrcp.pop %v4359
    %v4361 = vmul.f32 %v4359, %v4360
    %v4362 = vsub.f32 1.0, %v4361
    %v4363 = vmul.f32 %v4360, %v4362
    %v4364 = vadd.f32 %v4360, %v4363
    %vm4365 = vweird.f32 %v4359
    %vm4366 = vweird.f32 %v4360
    %vm4367 = vmor %vm4365, %vm4366
    %v4368 = vsel %vm4367, %v4360, %v4364
    %v4369 = vand.u32 2147483647, %v4359
    %vm4370 = vcmp.eq.f32.partialorder %v4369, 8.507059e+37
    %v4371 = vand.u32 %v4359, 2147483648
    %v4372 = vor.u32 1.1754944e-38, %v4371
    %v4373 = vsel %vm4370, %v4372, %v4368
    %v4374 = vmul.f32 1.0, %v4373
    %v4375 = vadd.f32 %v4119, %v4339
    %v4376 = vsub.f32 0.0, %v4375
    %v4377 = vmul.f32 %v4376, 1.442695
    %v4378 = vpow.pop %v4377
    %v4379 = vadd.f32 %v4378, 1.0
    %v4380 = vrcp.pop %v4379
    %v4381 = vmul.f32 %v4379, %v4380
    %v4382 = vsub.f32 1.0, %v4381
    %v4383 = vmul.f32 %v4380, %v4382
    %v4384 = vadd.f32 %v4380, %v4383
    %vm4385 = vweird.f32 %v4379
    %vm4386 = vweird.f32 %v4380
    %vm4387 = vmor %vm4385, %vm4386
    %v4388 = vsel %vm4387, %v4380, %v4384
    %v4389 = vand.u32 2147483647, %v4379
    %vm4390 = vcmp.eq.f32.partialorder %v4389, 8.507059e+37
    %v4391 = vand.u32 %v4379, 2147483648
    %v4392 = vor.u32 1.1754944e-38, %v4391
    %v4393 = vsel %vm4390, %v4392, %v4388
    %v4394 = vmul.f32 1.0, %v4393
    %v4395 = vmul.f32 %v4374, %v4352
    %v4396 = vadd.f32 %v4132, %v4395
    %v4397 = vtanh.pop %v4396
    %v4398 = vsub.f32 1.0, %v4394
    %v4399 = vmul.f32 %v4398, %v4397
    %v4400 = vmul.f32 %v4394, %v3236
    %v4401 = vadd.f32 %v4399, %v4400
    %v4402 = vpack.c.bf16 %v4401, %v4401
    %v4403 = vld [vmem:[#allocation15] sm:$0xff]
    %v4404 = vld [vmem:[#allocation15 + $0x8] sm:$0xf]
    %v4405 = vld [vmem:[#allocation15 + $0xc] sm:$0xff]
    %v4406 = vld [vmem:[#allocation15 + $0x14] sm:$0xf]
    %v4407 = vld [vmem:[#allocation15 + $0x18] sm:$0xff]
    %v4408 = vld [vmem:[#allocation15 + $0x20] sm:$0xf]
    %v4409 = vld [vmem:[#allocation15 + $0x24] sm:$0xff]
    %v4410 = vld [vmem:[#allocation15 + $0x2c] sm:$0xf]
    %v4411 = vld [vmem:[#allocation15 + $0x30] sm:$0xff]
    %v4412 = vld [vmem:[#allocation15 + $0x38] sm:$0xf]
    %v4413 = vld [vmem:[#allocation15 + $0x3c] sm:$0xff]
    %v4414 = vld [vmem:[#allocation15 + $0x44] sm:$0xf]
    %v4415 = vld [vmem:[#allocation15 + $0x48] sm:$0xff]
    %v4416 = vld [vmem:[#allocation15 + $0x50] sm:$0xf]
    %v4417 = vld [vmem:[#allocation15 + $0x54] sm:$0xff]
    %v4418 = vld [vmem:[#allocation15 + $0x5c] sm:$0xf]
    %v4419 = vld [vmem:[#allocation15 + $0x60] sm:$0xff]
    %v4420 = vld [vmem:[#allocation15 + $0x68] sm:$0xf]
    %v4421 = vld [vmem:[#allocation15 + $0x6c] sm:$0xff]
    %v4422 = vld [vmem:[#allocation15 + $0x74] sm:$0xf]
    %v4423 = vld [vmem:[#allocation15 + $0x78] sm:$0xff]
    %v4424 = vld [vmem:[#allocation15 + $0x80] sm:$0xf]
    %v4425 = vld [vmem:[#allocation15 + $0x84] sm:$0xff]
    %v4426 = vld [vmem:[#allocation15 + $0x8c] sm:$0xf]
    %v4427 = vld [vmem:[#allocation15 + $0x90] sm:$0xff]
    %v4428 = vld [vmem:[#allocation15 + $0x98] sm:$0xf]
    %v4429 = vld [vmem:[#allocation15 + $0x9c] sm:$0xff]
    %v4430 = vld [vmem:[#allocation15 + $0xa4] sm:$0xf]
    %v4431 = vld [vmem:[#allocation15 + $0xa8] sm:$0xff]
    %v4432 = vld [vmem:[#allocation15 + $0xb0] sm:$0xf]
    %v4433 = vld [vmem:[#allocation15 + $0xb4] sm:$0xff]
    %v4434 = vld [vmem:[#allocation15 + $0xbc] sm:$0xf]
    %v4467 = vunpack.c.l.b16 %v4403
    %v4468 = vunpack.c.h.b16 %v4403
    %v4469 = vunpack.c.l.b16 %v4404
    %v4470 = vunpack.c.l.b16 %v4405
    %v4471 = vunpack.c.h.b16 %v4405
    %v4472 = vunpack.c.l.b16 %v4406
    %v4473 = vunpack.c.l.b16 %v4407
    %v4474 = vunpack.c.h.b16 %v4407
    %v4475 = vunpack.c.l.b16 %v4408
    %v4476 = vunpack.c.l.b16 %v4409
    %v4477 = vunpack.c.h.b16 %v4409
    %v4478 = vunpack.c.l.b16 %v4410
    %v4479 = vunpack.c.l.b16 %v4411
    %v4480 = vunpack.c.h.b16 %v4411
    %v4481 = vunpack.c.l.b16 %v4412
    %v4482 = vunpack.c.l.b16 %v4413
    %v4483 = vunpack.c.h.b16 %v4413
    %v4484 = vunpack.c.l.b16 %v4414
    %v4485 = vunpack.c.l.b16 %v4415
    %v4486 = vunpack.c.h.b16 %v4415
    %v4487 = vunpack.c.l.b16 %v4416
    %v4488 = vunpack.c.l.b16 %v4417
    %v4489 = vunpack.c.h.b16 %v4417
    %v4490 = vunpack.c.l.b16 %v4418
    %v4491 = vunpack.c.l.b16 %v4419
    %v4492 = vunpack.c.h.b16 %v4419
    %v4493 = vunpack.c.l.b16 %v4420
    %v4494 = vunpack.c.l.b16 %v4421
    %v4495 = vunpack.c.h.b16 %v4421
    %v4496 = vunpack.c.l.b16 %v4422
    %v4497 = vunpack.c.l.b16 %v4423
    %v4498 = vunpack.c.h.b16 %v4423
    %v4499 = vunpack.c.l.b16 %v4424
    %v4500 = vunpack.c.l.b16 %v4425
    %v4501 = vunpack.c.h.b16 %v4425
    %v4502 = vunpack.c.l.b16 %v4426
    %v4503 = vunpack.c.l.b16 %v4427
    %v4504 = vunpack.c.h.b16 %v4427
    %v4505 = vunpack.c.l.b16 %v4428
    %v4506 = vunpack.c.l.b16 %v4429
    %v4507 = vunpack.c.h.b16 %v4429
    %v4508 = vunpack.c.l.b16 %v4430
    %v4509 = vunpack.c.l.b16 %v4431
    %v4510 = vunpack.c.h.b16 %v4431
    %v4511 = vunpack.c.l.b16 %v4432
    %v4512 = vunpack.c.l.b16 %v4433
    %v4513 = vunpack.c.h.b16 %v4433
    %v4514 = vunpack.c.l.b16 %v4434
    %v4515 = vpack.c.b16 %v4470, %v4467
    %v4516 = vpack.c.b16 %v4471, %v4468
    %v4517 = vpack.c.b16 %v4472, %v4469
    %v4518 = vpack.c.b16 %v4476, %v4473
    %v4519 = vpack.c.b16 %v4477, %v4474
    %v4520 = vpack.c.b16 %v4478, %v4475
    %v4521 = vpack.c.b16 %v4482, %v4479
    %v4522 = vpack.c.b16 %v4483, %v4480
    %v4523 = vpack.c.b16 %v4484, %v4481
    %v4524 = vpack.c.b16 %v4488, %v4485
    %v4525 = vpack.c.b16 %v4489, %v4486
    %v4526 = vpack.c.b16 %v4490, %v4487
    %v4527 = vpack.c.b16 %v4494, %v4491
    %v4528 = vpack.c.b16 %v4495, %v4492
    %v4529 = vpack.c.b16 %v4496, %v4493
    %v4530 = vpack.c.b16 %v4500, %v4497
    %v4531 = vpack.c.b16 %v4501, %v4498
    %v4532 = vpack.c.b16 %v4502, %v4499
    %v4533 = vpack.c.b16 %v4506, %v4503
    %v4534 = vpack.c.b16 %v4507, %v4504
    %v4535 = vpack.c.b16 %v4508, %v4505
    %v4536 = vpack.c.b16 %v4512, %v4509
    %v4537 = vpack.c.b16 %v4513, %v4510
    %v4538 = vpack.c.b16 %v4514, %v4511
    %4563 = vmatpush.bf16.msra.mxu0 %v4536
    %4564 = vmatpush.bf16.msra.mxu0 %v4533
    %4565 = vmatpush.bf16.msra.mxu0 %v4530
    %4566 = vmatpush.bf16.msra.mxu0 %v4527
    %4567 = vmatpush.bf16.msra.mxu0 %v4524
    %4568 = vmatpush.bf16.msra.mxu0 %v4521
    %4569 = vmatpush.bf16.msra.mxu0 %v4518
    %4570 = vmatpush.bf16.msra.mxu0 %v4515
    %4571 = vmatmul.bf16.gmra.mxu0 %v4402
    %v4572 = vpop.f32.mrf.mxu0
    %v4573 = vadd.f32 0.0, %v4572
    %v4574 = vpop.f32.mrf.mxu0
    %4575 = vdwg.mxu0
    %4576 = vmatpush.bf16.msra.mxu0 %v4537
    %4577 = vmatpush.bf16.msra.mxu0 %v4534
    %4578 = vmatpush.bf16.msra.mxu0 %v4531
    %4579 = vmatpush.bf16.msra.mxu0 %v4528
    %4580 = vmatpush.bf16.msra.mxu0 %v4525
    %4581 = vmatpush.bf16.msra.mxu0 %v4522
    %4582 = vmatpush.bf16.msra.mxu0 %v4519
    %4583 = vmatpush.bf16.msra.mxu0 %v4516
    %4584 = vmatmul.bf16.gmra.mxu0 %v4402
    %v4585 = vpop.f32.mrf.mxu0
    %v4586 = vadd.f32 0.0, %v4585
    %v4587 = vpop.f32.mrf.mxu0
    %4588 = vdwg.mxu0
    %4589 = vmatpush.bf16.msra.mxu0 %v4538
    %4590 = vmatpush.bf16.msra.mxu0 %v4535
    %4591 = vmatpush.bf16.msra.mxu0 %v4532
    %4592 = vmatpush.bf16.msra.mxu0 %v4529
    %4593 = vmatpush.bf16.msra.mxu0 %v4526
    %4594 = vmatpush.bf16.msra.mxu0 %v4523
    %4595 = vmatpush.bf16.msra.mxu0 %v4520
    %4596 = vmatpush.bf16.msra.mxu0 %v4517
    %4597 = vmatmul.bf16.gmra.mxu0 %v4402
    %v4598 = vpop.f32.mrf.mxu0
    %v4599 = vadd.f32 0.0, %v4598
    %v4600 = vpop.f32.mrf.mxu0
    %4601 = vdwg.mxu0
    %v4602 = vpack.c.bf16 %v4573, %v4573
    %v4603 = vld [vmem:[%s5] sm:$0xf]
    %v4604 = vld [vmem:[%s5 + $0x4] sm:$0xf]
    %v4605 = vld [vmem:[%s5 + $0x8] sm:$0xf]
    %v4606 = vld [vmem:[%s5 + $0xc] sm:$0xf]
    %v4607 = vld [vmem:[%s5 + $0x10] sm:$0xf]
    %v4608 = vld [vmem:[%s5 + $0x14] sm:$0xf]
    %v4609 = vld [vmem:[%s5 + $0x18] sm:$0xf]
    %v4610 = vld [vmem:[%s5 + $0x1c] sm:$0xf]
    %v4611 = vld [vmem:[%s5 + $0x20] sm:$0xf]
    %v4612 = vld [vmem:[%s5 + $0x24] sm:$0xf]
    %v4613 = vld [vmem:[%s5 + $0x28] sm:$0xf]
    %v4614 = vld [vmem:[%s5 + $0x2c] sm:$0xf]
    %v4615 = vld [vmem:[%s5 + $0x30] sm:$0xf]
    %v4616 = vld [vmem:[%s5 + $0x34] sm:$0xf]
    %v4617 = vld [vmem:[%s5 + $0x38] sm:$0xf]
    %v4618 = vld [vmem:[%s5 + $0x3c] sm:$0xf]
    %v4635 = vunpack.c.l.b16 %v4603
    %v4636 = vunpack.c.l.b16 %v4604
    %v4637 = vunpack.c.l.b16 %v4605
    %v4638 = vunpack.c.l.b16 %v4606
    %v4639 = vunpack.c.l.b16 %v4607
    %v4640 = vunpack.c.l.b16 %v4608
    %v4641 = vunpack.c.l.b16 %v4609
    %v4642 = vunpack.c.l.b16 %v4610
    %v4643 = vunpack.c.l.b16 %v4611
    %v4644 = vunpack.c.l.b16 %v4612
    %v4645 = vunpack.c.l.b16 %v4613
    %v4646 = vunpack.c.l.b16 %v4614
    %v4647 = vunpack.c.l.b16 %v4615
    %v4648 = vunpack.c.l.b16 %v4616
    %v4649 = vunpack.c.l.b16 %v4617
    %v4650 = vunpack.c.l.b16 %v4618
    %v4651 = vpack.c.b16 %v4636, %v4635
    %v4652 = vpack.c.b16 %v4638, %v4637
    %v4653 = vpack.c.b16 %v4640, %v4639
    %v4654 = vpack.c.b16 %v4642, %v4641
    %v4655 = vpack.c.b16 %v4644, %v4643
    %v4656 = vpack.c.b16 %v4646, %v4645
    %v4657 = vpack.c.b16 %v4648, %v4647
    %v4658 = vpack.c.b16 %v4650, %v4649
    %4667 = vmatpush.bf16.msra.mxu0 %v4658
    %4668 = vmatpush.bf16.msra.mxu0 %v4657
    %4669 = vmatpush.bf16.msra.mxu0 %v4656
    %4670 = vmatpush.bf16.msra.mxu0 %v4655
    %4671 = vmatpush.bf16.msra.mxu0 %v4654
    %4672 = vmatpush.bf16.msra.mxu0 %v4653
    %4673 = vmatpush.bf16.msra.mxu0 %v4652
    %4674 = vmatpush.bf16.msra.mxu0 %v4651
    %4675 = vmatmul.bf16.gmra.mxu0 %v4602
    %v4676 = vpop.f32.mrf.mxu0
    %v4677 = vadd.f32 0.0, %v4676
    %v4678 = vpop.f32.mrf.mxu0
    %4679 = vdwg.mxu0
    %v4680 = vsel %vm1200, %v4677, -inf
    %4681 = vmax.xlane.f32.xlu0 %v4680
    %v4682 = vpop.xlane.xlu0 %4681
    %v4683 = vsub.f32 %v4677, %v4682
    %v4684 = vmul.f32 %v4683, 1.442695
    %v4685 = vpow.pop %v4684
    %v4686 = vsel %vm1200, %v4685, 0.0
    %4687 = vadd.xlane.f32.xlu0 %v4686
    %v4688 = vpop.xlane.xlu0 %4687
    %v4689 = vrcp.pop %v4688
    %v4690 = vmul.f32 %v4685, %v4689
    %v4691 = vpack.c.bf16 %v4690, %v4690
    %v4692 = vld [vmem:[#allocation6] sm:$0xf]
    %v4694 = vsel %vm1200, %v4691, 0
    %v4697 = vsel %vm1217, %v4692, 0
    %4699 = vmatpush.bf16.msra.mxu0 0
    %4700 = vmatpush.bf16.msra.mxu0 0
    %4701 = vmatpush.bf16.msra.mxu0 0
    %4702 = vmatpush.bf16.msra.mxu0 0
    %4703 = vmatpush.bf16.msra.mxu0 0
    %4704 = vmatpush.bf16.msra.mxu0 0
    %4705 = vmatpush.bf16.msra.mxu0 0
    %4706 = vmatpush.bf16.msra.mxu0 %v4697
    %4707 = vmatmul.bf16.gmra.mxu0 %v4694
    %v4708 = vpop.f32.mrf.mxu0
    %v4709 = vadd.f32 0.0, %v4708
    %v4710 = vpop.f32.mrf.mxu0
    %4711 = vdwg.mxu0
    %v4712 = vpack.c.bf16 %v4709, %v4709
    %v4713 = vld [vmem:[#allocation17] sm:$0xff]
    %v4714 = vld [vmem:[#allocation17 + $0x8] sm:$0xff]
    %v4715 = vld [vmem:[#allocation17 + $0x10] sm:$0xff]
    %v4716 = vld [vmem:[#allocation17 + $0x18] sm:$0xff]
    %v4717 = vld [vmem:[#allocation17 + $0x20] sm:$0xff]
    %v4718 = vld [vmem:[#allocation17 + $0x28] sm:$0xff]
    %v4719 = vld [vmem:[#allocation17 + $0x30] sm:$0xff]
    %v4720 = vld [vmem:[#allocation17 + $0x38] sm:$0xff]
    %v4721 = vld [vmem:[#allocation17 + $0x40] sm:$0xff]
    %v4722 = vld [vmem:[#allocation17 + $0x48] sm:$0xff]
    %v4723 = vld [vmem:[#allocation17 + $0x50] sm:$0xff]
    %v4724 = vld [vmem:[#allocation17 + $0x58] sm:$0xff]
    %v4725 = vld [vmem:[#allocation17 + $0x60] sm:$0xff]
    %v4726 = vld [vmem:[#allocation17 + $0x68] sm:$0xff]
    %v4727 = vld [vmem:[#allocation17 + $0x70] sm:$0xff]
    %v4728 = vld [vmem:[#allocation17 + $0x78] sm:$0xff]
    %v4745 = vunpack.c.l.b16 %v4713
    %v4746 = vunpack.c.h.b16 %v4713
    %v4747 = vunpack.c.l.b16 %v4714
    %v4748 = vunpack.c.h.b16 %v4714
    %v4749 = vunpack.c.l.b16 %v4715
    %v4750 = vunpack.c.h.b16 %v4715
    %v4751 = vunpack.c.l.b16 %v4716
    %v4752 = vunpack.c.h.b16 %v4716
    %v4753 = vunpack.c.l.b16 %v4717
    %v4754 = vunpack.c.h.b16 %v4717
    %v4755 = vunpack.c.l.b16 %v4718
    %v4756 = vunpack.c.h.b16 %v4718
    %v4757 = vunpack.c.l.b16 %v4719
    %v4758 = vunpack.c.h.b16 %v4719
    %v4759 = vunpack.c.l.b16 %v4720
    %v4760 = vunpack.c.h.b16 %v4720
    %v4761 = vunpack.c.l.b16 %v4721
    %v4762 = vunpack.c.h.b16 %v4721
    %v4763 = vunpack.c.l.b16 %v4722
    %v4764 = vunpack.c.h.b16 %v4722
    %v4765 = vunpack.c.l.b16 %v4723
    %v4766 = vunpack.c.h.b16 %v4723
    %v4767 = vunpack.c.l.b16 %v4724
    %v4768 = vunpack.c.h.b16 %v4724
    %v4769 = vunpack.c.l.b16 %v4725
    %v4770 = vunpack.c.h.b16 %v4725
    %v4771 = vunpack.c.l.b16 %v4726
    %v4772 = vunpack.c.h.b16 %v4726
    %v4773 = vunpack.c.l.b16 %v4727
    %v4774 = vunpack.c.h.b16 %v4727
    %v4775 = vunpack.c.l.b16 %v4728
    %v4776 = vunpack.c.h.b16 %v4728
    %v4777 = vpack.c.b16 %v4747, %v4745
    %v4778 = vpack.c.b16 %v4748, %v4746
    %v4779 = vpack.c.b16 %v4751, %v4749
    %v4780 = vpack.c.b16 %v4752, %v4750
    %v4781 = vpack.c.b16 %v4755, %v4753
    %v4782 = vpack.c.b16 %v4756, %v4754
    %v4783 = vpack.c.b16 %v4759, %v4757
    %v4784 = vpack.c.b16 %v4760, %v4758
    %v4785 = vpack.c.b16 %v4763, %v4761
    %v4786 = vpack.c.b16 %v4764, %v4762
    %v4787 = vpack.c.b16 %v4767, %v4765
    %v4788 = vpack.c.b16 %v4768, %v4766
    %v4789 = vpack.c.b16 %v4771, %v4769
    %v4790 = vpack.c.b16 %v4772, %v4770
    %v4791 = vpack.c.b16 %v4775, %v4773
    %v4792 = vpack.c.b16 %v4776, %v4774
    %4809 = vmatpush.bf16.msra.mxu0 %v4791
    %4810 = vmatpush.bf16.msra.mxu0 %v4789
    %4811 = vmatpush.bf16.msra.mxu0 %v4787
    %4812 = vmatpush.bf16.msra.mxu0 %v4785
    %4813 = vmatpush.bf16.msra.mxu0 %v4783
    %4814 = vmatpush.bf16.msra.mxu0 %v4781
    %4815 = vmatpush.bf16.msra.mxu0 %v4779
    %4816 = vmatpush.bf16.msra.mxu0 %v4777
    %4817 = vmatmul.bf16.gmra.mxu0 %v4712
    %v4818 = vpop.f32.mrf.mxu0
    %v4819 = vadd.f32 0.0, %v4818
    %v4820 = vpop.f32.mrf.mxu0
    %4821 = vdwg.mxu0
    %4822 = vmatpush.bf16.msra.mxu0 %v4792
    %4823 = vmatpush.bf16.msra.mxu0 %v4790
    %4824 = vmatpush.bf16.msra.mxu0 %v4788
    %4825 = vmatpush.bf16.msra.mxu0 %v4786
    %4826 = vmatpush.bf16.msra.mxu0 %v4784
    %4827 = vmatpush.bf16.msra.mxu0 %v4782
    %4828 = vmatpush.bf16.msra.mxu0 %v4780
    %4829 = vmatpush.bf16.msra.mxu0 %v4778
    %4830 = vmatmul.bf16.gmra.mxu0 %v4712
    %v4831 = vpop.f32.mrf.mxu0
    %v4832 = vadd.f32 0.0, %v4831
    %v4833 = vpop.f32.mrf.mxu0
    %4834 = vdwg.mxu0
    %v4835 = vadd.f32 %v4586, %v4819
    %v4836 = vld [vmem:[%s18] sm:$0x1]
    %v4838 = vperm.slane %v4836, 0
    %v4840 = vadd.f32 %v4835, %v4838
    %v4841 = vpack.c.bf16 %v4840, %v4840
    %v4842 = vld [vmem:[#allocation18] sm:$0xf]
    %v4843 = vld [vmem:[#allocation18 + $0x4] sm:$0xf]
    %v4844 = vld [vmem:[#allocation18 + $0x8] sm:$0xf]
    %v4845 = vld [vmem:[#allocation18 + $0xc] sm:$0xf]
    %v4846 = vld [vmem:[#allocation18 + $0x10] sm:$0xf]
    %v4847 = vld [vmem:[#allocation18 + $0x14] sm:$0xf]
    %v4848 = vld [vmem:[#allocation18 + $0x18] sm:$0xf]
    %v4849 = vld [vmem:[#allocation18 + $0x1c] sm:$0xf]
    %v4850 = vld [vmem:[#allocation18 + $0x20] sm:$0xf]
    %v4851 = vld [vmem:[#allocation18 + $0x24] sm:$0xf]
    %v4852 = vld [vmem:[#allocation18 + $0x28] sm:$0xf]
    %v4853 = vld [vmem:[#allocation18 + $0x2c] sm:$0xf]
    %v4854 = vld [vmem:[#allocation18 + $0x30] sm:$0xf]
    %v4855 = vld [vmem:[#allocation18 + $0x34] sm:$0xf]
    %v4856 = vld [vmem:[#allocation18 + $0x38] sm:$0xf]
    %v4857 = vld [vmem:[#allocation18 + $0x3c] sm:$0xf]
    %v4858 = vld [vmem:[%s20] sm:$0x1]
    %v4860 = vperm.slane %v4858, 0
    %v4878 = vunpack.c.l.b16 %v4842
    %v4879 = vunpack.c.l.b16 %v4843
    %v4880 = vunpack.c.l.b16 %v4844
    %v4881 = vunpack.c.l.b16 %v4845
    %v4882 = vunpack.c.l.b16 %v4846
    %v4883 = vunpack.c.l.b16 %v4847
    %v4884 = vunpack.c.l.b16 %v4848
    %v4885 = vunpack.c.l.b16 %v4849
    %v4886 = vunpack.c.l.b16 %v4850
    %v4887 = vunpack.c.l.b16 %v4851
    %v4888 = vunpack.c.l.b16 %v4852
    %v4889 = vunpack.c.l.b16 %v4853
    %v4890 = vunpack.c.l.b16 %v4854
    %v4891 = vunpack.c.l.b16 %v4855
    %v4892 = vunpack.c.l.b16 %v4856
    %v4893 = vunpack.c.l.b16 %v4857
    %v4894 = vpack.c.b16 %v4879, %v4878
    %v4895 = vpack.c.b16 %v4881, %v4880
    %v4896 = vpack.c.b16 %v4883, %v4882
    %v4897 = vpack.c.b16 %v4885, %v4884
    %v4898 = vpack.c.b16 %v4887, %v4886
    %v4899 = vpack.c.b16 %v4889, %v4888
    %v4900 = vpack.c.b16 %v4891, %v4890
    %v4901 = vpack.c.b16 %v4893, %v4892
    %4910 = vmatpush.bf16.msra.mxu0 %v4901
    %4911 = vmatpush.bf16.msra.mxu0 %v4900
    %4912 = vmatpush.bf16.msra.mxu0 %v4899
    %4913 = vmatpush.bf16.msra.mxu0 %v4898
    %4914 = vmatpush.bf16.msra.mxu0 %v4897
    %4915 = vmatpush.bf16.msra.mxu0 %v4896
    %4916 = vmatpush.bf16.msra.mxu0 %v4895
    %4917 = vmatpush.bf16.msra.mxu0 %v4894
    %4918 = vmatmul.bf16.gmra.mxu0 %v4841
    %v4919 = vpop.f32.mrf.mxu0
    %v4920 = vadd.f32 %v4860, %v4919
    %v4921 = vpop.f32.mrf.mxu0
    %4922 = vdwg.mxu0
    %4923 = vmax.xlane.f32.xlu0 %v4920
    %v4924 = vpop.xlane.xlu0 %4923
    %v4925 = vsub.f32 %v4920, %v4924
    %v4926 = vmul.f32 %v4925, 1.442695
    %v4927 = vpow.pop %v4926
    %4928 = vadd.xlane.f32.xlu0 %v4927
    %v4929 = vpop.xlane.xlu0 %4928
    %v4930 = vrcp.pop %v4929
    %v4931 = vmul.f32 %v4927, %v4930
    %v4932 = vadd.f32 %v4145, %v4599
    %v4933 = vadd.f32 %v4932, %v4832
    %4934 = vadd.xlane.f32.xlu0 %v4933
    %v4935 = vpop.xlane.xlu0 %4934
    %v4936 = vsub.f32 0.0, %v4935
    %v4937 = vmul.f32 %v4936, 1.442695
    %v4938 = vpow.pop %v4937
    %v4939 = vadd.f32 %v4938, 1.0
    %v4940 = vrcp.pop %v4939
    %v4941 = vmul.f32 %v4939, %v4940
    %v4942 = vsub.f32 1.0, %v4941
    %v4943 = vmul.f32 %v4940, %v4942
    %v4944 = vadd.f32 %v4940, %v4943
    %vm4945 = vweird.f32 %v4939
    %vm4946 = vweird.f32 %v4940
    %vm4947 = vmor %vm4945, %vm4946
    %v4948 = vsel %vm4947, %v4940, %v4944
    %v4949 = vand.u32 2147483647, %v4939
    %vm4950 = vcmp.eq.f32.partialorder %v4949, 8.507059e+37
    %v4951 = vand.u32 %v4939, 2147483648
    %v4952 = vor.u32 1.1754944e-38, %v4951
    %v4953 = vsel %vm4950, %v4952, %v4948
    %v4954 = vmul.f32 1.0, %v4953
    %v4955 = vmul.f32 %v4931, %v4954
    %v4956 = vld [vmem:[#allocation3] sm:$0xff]
    %v4957 = vmul.f32 %v4955, %v4956
    %v4958 = vsub.f32 1.0, %v4954
    %v4959 = vmul.f32 %v4690, %v4958
    %v4960 = vpack.c.bf16 %v4959, %v4959
    %v4961 = vld [vmem:[%s6] sm:$0xf]
    %v4963 = vsel %vm1200, %v4960, 0
    %v4966 = vsel %vm1217, %v4961, 0
    %4968 = vmatpush.bf16.msra.mxu0 0
    %4969 = vmatpush.bf16.msra.mxu0 0
    %4970 = vmatpush.bf16.msra.mxu0 0
    %4971 = vmatpush.bf16.msra.mxu0 0
    %4972 = vmatpush.bf16.msra.mxu0 0
    %4973 = vmatpush.bf16.msra.mxu0 0
    %4974 = vmatpush.bf16.msra.mxu0 0
    %4975 = vmatpush.bf16.msra.mxu0 %v4966
    %4976 = vmatmul.bf16.gmra.mxu0 %v4963
    %v4977 = vpop.f32.mrf.mxu0
    %v4978 = vadd.f32 0.0, %v4977
    %v4979 = vpop.f32.mrf.mxu0
    %4980 = vdwg.mxu0
    %v4981 = vadd.f32 %v4957, %v4978
    %v4983 = vrot.slane %v4981, 1
    %v4984 = vrot.slane %v4981, 2
    %v4985 = vrot.slane %v4981, 3
    %v4986 = vrot.slane %v4981, 4
    %v4987 = vrot.slane %v4981, 5
    %v4988 = vrot.slane %v4981, 6
    %v4989 = vrot.slane %v4981, 7
    %v4997 = vpack.c.bf16 %v4981, %v4981
    %v4998 = vpack.c.bf16 %v4983, %v4983
    %v4999 = vpack.c.bf16 %v4984, %v4984
    %v5000 = vpack.c.bf16 %v4985, %v4985
    %v5001 = vpack.c.bf16 %v4986, %v4986
    %v5002 = vpack.c.bf16 %v4987, %v4987
    %v5003 = vpack.c.bf16 %v4988, %v4988
    %v5004 = vpack.c.bf16 %v4989, %v4989
    %v5006 = vshll.u32 %v4997, 16
    %v5008 = vrot.slane %v5006, 7
    %v5010 = vshll.u32 %v4998, 16
    %v5012 = vrot.slane %v5010, 7
    %v5014 = vshll.u32 %v4999, 16
    %v5016 = vrot.slane %v5014, 7
    %v5018 = vshll.u32 %v5000, 16
    %v5020 = vrot.slane %v5018, 7
    %v5022 = vshll.u32 %v5001, 16
    %v5024 = vrot.slane %v5022, 7
    %v5026 = vshll.u32 %v5002, 16
    %v5028 = vrot.slane %v5026, 7
    %v5030 = vshll.u32 %v5003, 16
    %v5032 = vrot.slane %v5030, 7
    %v5034 = vshll.u32 %v5004, 16
    %v5036 = vrot.slane %v5034, 7
    %vm5045 = vsmask.f32 7942
    %vm5046 = vmand %vm3864, %vm5045
    %v5047 = vld [vmem:[%s21] sm:$0x2]
    %v5048 = vsel %vm5046, %v5008, %v5047
    %5049 = vst [vmem:[%s21] sm:$0x2] %v5048
    %v5050 = vld [vmem:[%s21 + $0x4] sm:$0x2]
    %v5051 = vsel %vm5046, %v5012, %v5050
    %5052 = vst [vmem:[%s21 + $0x4] sm:$0x2] %v5051
    %v5053 = vld [vmem:[%s21 + $0x8] sm:$0x2]
    %v5054 = vsel %vm5046, %v5016, %v5053
    %5055 = vst [vmem:[%s21 + $0x8] sm:$0x2] %v5054
    %v5056 = vld [vmem:[%s21 + $0xc] sm:$0x2]
    %v5057 = vsel %vm5046, %v5020, %v5056
    %5058 = vst [vmem:[%s21 + $0xc] sm:$0x2] %v5057
    %v5059 = vld [vmem:[%s21 + $0x10] sm:$0x2]
    %v5060 = vsel %vm5046, %v5024, %v5059
    %5061 = vst [vmem:[%s21 + $0x10] sm:$0x2] %v5060
    %v5062 = vld [vmem:[%s21 + $0x14] sm:$0x2]
    %v5063 = vsel %vm5046, %v5028, %v5062
    %5064 = vst [vmem:[%s21 + $0x14] sm:$0x2] %v5063
    %v5065 = vld [vmem:[%s21 + $0x18] sm:$0x2]
    %v5066 = vsel %vm5046, %v5032, %v5065
    %5067 = vst [vmem:[%s21 + $0x18] sm:$0x2] %v5066
    %v5068 = vld [vmem:[%s21 + $0x1c] sm:$0x2]
    %v5069 = vsel %vm5046, %v5036, %v5068
    %5070 = vst [vmem:[%s21 + $0x1c] sm:$0x2] %v5069
    %s5071 = scalar_lea.vmem [#allocation4], 32
    %v5072 = vld [vmem:[%s5071] sm:$0xff]
    %v5073 = vpack.c.bf16 %v5072, %v5072
    %v5074 = vld [vmem:[#allocation12] sm:$0xff]
    %v5075 = vld [vmem:[#allocation12 + $0x8] sm:$0xff]
    %v5076 = vld [vmem:[#allocation12 + $0x10] sm:$0xff]
    %v5077 = vld [vmem:[#allocation12 + $0x18] sm:$0xff]
    %v5078 = vld [vmem:[#allocation12 + $0x20] sm:$0xff]
    %v5079 = vld [vmem:[#allocation12 + $0x28] sm:$0xff]
    %v5080 = vld [vmem:[#allocation12 + $0x30] sm:$0xff]
    %v5081 = vld [vmem:[#allocation12 + $0x38] sm:$0xff]
    %v5082 = vld [vmem:[#allocation12 + $0x40] sm:$0xff]
    %v5083 = vld [vmem:[#allocation12 + $0x48] sm:$0xff]
    %v5084 = vld [vmem:[#allocation12 + $0x50] sm:$0xff]
    %v5085 = vld [vmem:[#allocation12 + $0x58] sm:$0xff]
    %v5086 = vld [vmem:[#allocation12 + $0x60] sm:$0xff]
    %v5087 = vld [vmem:[#allocation12 + $0x68] sm:$0xff]
    %v5088 = vld [vmem:[#allocation12 + $0x70] sm:$0xff]
    %v5089 = vld [vmem:[#allocation12 + $0x78] sm:$0xff]
    %v5090 = vld [vmem:[#allocation12 + $0x80] sm:$0xff]
    %v5091 = vld [vmem:[#allocation12 + $0x88] sm:$0xff]
    %v5092 = vld [vmem:[#allocation12 + $0x90] sm:$0xff]
    %v5093 = vld [vmem:[#allocation12 + $0x98] sm:$0xff]
    %v5094 = vld [vmem:[#allocation12 + $0xa0] sm:$0xff]
    %v5095 = vld [vmem:[#allocation12 + $0xa8] sm:$0xff]
    %v5096 = vld [vmem:[#allocation12 + $0xb0] sm:$0xff]
    %v5097 = vld [vmem:[#allocation12 + $0xb8] sm:$0xff]
    %v5098 = vld [vmem:[#allocation12 + $0xc0] sm:$0xff]
    %v5099 = vld [vmem:[#allocation12 + $0xc8] sm:$0xff]
    %v5100 = vld [vmem:[#allocation12 + $0xd0] sm:$0xff]
    %v5101 = vld [vmem:[#allocation12 + $0xd8] sm:$0xff]
    %v5102 = vld [vmem:[#allocation12 + $0xe0] sm:$0xff]
    %v5103 = vld [vmem:[#allocation12 + $0xe8] sm:$0xff]
    %v5104 = vld [vmem:[#allocation12 + $0xf0] sm:$0xff]
    %v5105 = vld [vmem:[#allocation12 + $0xf8] sm:$0xff]
    %v5106 = vld [vmem:[%s13] sm:$0xf]
    %v5108 = vperm.slane %v5106, 0
    %v5109 = vperm.slane %v5106, 1
    %v5110 = vperm.slane %v5106, 2
    %v5111 = vperm.slane %v5106, 3
    %v5148 = vunpack.c.l.b16 %v5074
    %v5149 = vunpack.c.h.b16 %v5074
    %v5150 = vunpack.c.l.b16 %v5075
    %v5151 = vunpack.c.h.b16 %v5075
    %v5152 = vunpack.c.l.b16 %v5076
    %v5153 = vunpack.c.h.b16 %v5076
    %v5154 = vunpack.c.l.b16 %v5077
    %v5155 = vunpack.c.h.b16 %v5077
    %v5156 = vunpack.c.l.b16 %v5078
    %v5157 = vunpack.c.h.b16 %v5078
    %v5158 = vunpack.c.l.b16 %v5079
    %v5159 = vunpack.c.h.b16 %v5079
    %v5160 = vunpack.c.l.b16 %v5080
    %v5161 = vunpack.c.h.b16 %v5080
    %v5162 = vunpack.c.l.b16 %v5081
    %v5163 = vunpack.c.h.b16 %v5081
    %v5164 = vunpack.c.l.b16 %v5082
    %v5165 = vunpack.c.h.b16 %v5082
    %v5166 = vunpack.c.l.b16 %v5083
    %v5167 = vunpack.c.h.b16 %v5083
    %v5168 = vunpack.c.l.b16 %v5084
    %v5169 = vunpack.c.h.b16 %v5084
    %v5170 = vunpack.c.l.b16 %v5085
    %v5171 = vunpack.c.h.b16 %v5085
    %v5172 = vunpack.c.l.b16 %v5086
    %v5173 = vunpack.c.h.b16 %v5086
    %v5174 = vunpack.c.l.b16 %v5087
    %v5175 = vunpack.c.h.b16 %v5087
    %v5176 = vunpack.c.l.b16 %v5088
    %v5177 = vunpack.c.h.b16 %v5088
    %v5178 = vunpack.c.l.b16 %v5089
    %v5179 = vunpack.c.h.b16 %v5089
    %v5180 = vunpack.c.l.b16 %v5090
    %v5181 = vunpack.c.h.b16 %v5090
    %v5182 = vunpack.c.l.b16 %v5091
    %v5183 = vunpack.c.h.b16 %v5091
    %v5184 = vunpack.c.l.b16 %v5092
    %v5185 = vunpack.c.h.b16 %v5092
    %v5186 = vunpack.c.l.b16 %v5093
    %v5187 = vunpack.c.h.b16 %v5093
    %v5188 = vunpack.c.l.b16 %v5094
    %v5189 = vunpack.c.h.b16 %v5094
    %v5190 = vunpack.c.l.b16 %v5095
    %v5191 = vunpack.c.h.b16 %v5095
    %v5192 = vunpack.c.l.b16 %v5096
    %v5193 = vunpack.c.h.b16 %v5096
    %v5194 = vunpack.c.l.b16 %v5097
    %v5195 = vunpack.c.h.b16 %v5097
    %v5196 = vunpack.c.l.b16 %v5098
    %v5197 = vunpack.c.h.b16 %v5098
    %v5198 = vunpack.c.l.b16 %v5099
    %v5199 = vunpack.c.h.b16 %v5099
    %v5200 = vunpack.c.l.b16 %v5100
    %v5201 = vunpack.c.h.b16 %v5100
    %v5202 = vunpack.c.l.b16 %v5101
    %v5203 = vunpack.c.h.b16 %v5101
    %v5204 = vunpack.c.l.b16 %v5102
    %v5205 = vunpack.c.h.b16 %v5102
    %v5206 = vunpack.c.l.b16 %v5103
    %v5207 = vunpack.c.h.b16 %v5103
    %v5208 = vunpack.c.l.b16 %v5104
    %v5209 = vunpack.c.h.b16 %v5104
    %v5210 = vunpack.c.l.b16 %v5105
    %v5211 = vunpack.c.h.b16 %v5105
    %v5212 = vpack.c.b16 %v5152, %v5148
    %v5213 = vpack.c.b16 %v5153, %v5149
    %v5214 = vpack.c.b16 %v5154, %v5150
    %v5215 = vpack.c.b16 %v5155, %v5151
    %v5216 = vpack.c.b16 %v5160, %v5156
    %v5217 = vpack.c.b16 %v5161, %v5157
    %v5218 = vpack.c.b16 %v5162, %v5158
    %v5219 = vpack.c.b16 %v5163, %v5159
    %v5220 = vpack.c.b16 %v5168, %v5164
    %v5221 = vpack.c.b16 %v5169, %v5165
    %v5222 = vpack.c.b16 %v5170, %v5166
    %v5223 = vpack.c.b16 %v5171, %v5167
    %v5224 = vpack.c.b16 %v5176, %v5172
    %v5225 = vpack.c.b16 %v5177, %v5173
    %v5226 = vpack.c.b16 %v5178, %v5174
    %v5227 = vpack.c.b16 %v5179, %v5175
    %v5228 = vpack.c.b16 %v5184, %v5180
    %v5229 = vpack.c.b16 %v5185, %v5181
    %v5230 = vpack.c.b16 %v5186, %v5182
    %v5231 = vpack.c.b16 %v5187, %v5183
    %v5232 = vpack.c.b16 %v5192, %v5188
    %v5233 = vpack.c.b16 %v5193, %v5189
    %v5234 = vpack.c.b16 %v5194, %v5190
    %v5235 = vpack.c.b16 %v5195, %v5191
    %v5236 = vpack.c.b16 %v5200, %v5196
    %v5237 = vpack.c.b16 %v5201, %v5197
    %v5238 = vpack.c.b16 %v5202, %v5198
    %v5239 = vpack.c.b16 %v5203, %v5199
    %v5240 = vpack.c.b16 %v5208, %v5204
    %v5241 = vpack.c.b16 %v5209, %v5205
    %v5242 = vpack.c.b16 %v5210, %v5206
    %v5243 = vpack.c.b16 %v5211, %v5207
    %5276 = vmatpush.bf16.msra.mxu0 %v5240
    %5277 = vmatpush.bf16.msra.mxu0 %v5236
    %5278 = vmatpush.bf16.msra.mxu0 %v5232
    %5279 = vmatpush.bf16.msra.mxu0 %v5228
    %5280 = vmatpush.bf16.msra.mxu0 %v5224
    %5281 = vmatpush.bf16.msra.mxu0 %v5220
    %5282 = vmatpush.bf16.msra.mxu0 %v5216
    %5283 = vmatpush.bf16.msra.mxu0 %v5212
    %5284 = vmatmul.bf16.gmra.mxu0 %v5073
    %v5285 = vpop.f32.mrf.mxu0
    %v5286 = vadd.f32 %v5108, %v5285
    %v5287 = vpop.f32.mrf.mxu0
    %5288 = vdwg.mxu0
    %5289 = vmatpush.bf16.msra.mxu0 %v5241
    %5290 = vmatpush.bf16.msra.mxu0 %v5237
    %5291 = vmatpush.bf16.msra.mxu0 %v5233
    %5292 = vmatpush.bf16.msra.mxu0 %v5229
    %5293 = vmatpush.bf16.msra.mxu0 %v5225
    %5294 = vmatpush.bf16.msra.mxu0 %v5221
    %5295 = vmatpush.bf16.msra.mxu0 %v5217
    %5296 = vmatpush.bf16.msra.mxu0 %v5213
    %5297 = vmatmul.bf16.gmra.mxu0 %v5073
    %v5298 = vpop.f32.mrf.mxu0
    %v5299 = vadd.f32 %v5109, %v5298
    %v5300 = vpop.f32.mrf.mxu0
    %5301 = vdwg.mxu0
    %5302 = vmatpush.bf16.msra.mxu0 %v5242
    %5303 = vmatpush.bf16.msra.mxu0 %v5238
    %5304 = vmatpush.bf16.msra.mxu0 %v5234
    %5305 = vmatpush.bf16.msra.mxu0 %v5230
    %5306 = vmatpush.bf16.msra.mxu0 %v5226
    %5307 = vmatpush.bf16.msra.mxu0 %v5222
    %5308 = vmatpush.bf16.msra.mxu0 %v5218
    %5309 = vmatpush.bf16.msra.mxu0 %v5214
    %5310 = vmatmul.bf16.gmra.mxu0 %v5073
    %v5311 = vpop.f32.mrf.mxu0
    %v5312 = vadd.f32 %v5110, %v5311
    %v5313 = vpop.f32.mrf.mxu0
    %5314 = vdwg.mxu0
    %5315 = vmatpush.bf16.msra.mxu0 %v5243
    %5316 = vmatpush.bf16.msra.mxu0 %v5239
    %5317 = vmatpush.bf16.msra.mxu0 %v5235
    %5318 = vmatpush.bf16.msra.mxu0 %v5231
    %5319 = vmatpush.bf16.msra.mxu0 %v5227
    %5320 = vmatpush.bf16.msra.mxu0 %v5223
    %5321 = vmatpush.bf16.msra.mxu0 %v5219
    %5322 = vmatpush.bf16.msra.mxu0 %v5215
    %5323 = vmatmul.bf16.gmra.mxu0 %v5073
    %v5324 = vpop.f32.mrf.mxu0
    %v5325 = vadd.f32 %v5111, %v5324
    %v5326 = vpop.f32.mrf.mxu0
    %5327 = vdwg.mxu0
    %v5328 = vld [vmem:[#allocation14] sm:$0xff]
    %v5329 = vld [vmem:[#allocation14 + $0x8] sm:$0xf]
    %v5330 = vld [vmem:[#allocation14 + $0xc] sm:$0xff]
    %v5331 = vld [vmem:[#allocation14 + $0x14] sm:$0xf]
    %v5332 = vld [vmem:[#allocation14 + $0x18] sm:$0xff]
    %v5333 = vld [vmem:[#allocation14 + $0x20] sm:$0xf]
    %v5334 = vld [vmem:[#allocation14 + $0x24] sm:$0xff]
    %v5335 = vld [vmem:[#allocation14 + $0x2c] sm:$0xf]
    %v5336 = vld [vmem:[#allocation14 + $0x30] sm:$0xff]
    %v5337 = vld [vmem:[#allocation14 + $0x38] sm:$0xf]
    %v5338 = vld [vmem:[#allocation14 + $0x3c] sm:$0xff]
    %v5339 = vld [vmem:[#allocation14 + $0x44] sm:$0xf]
    %v5340 = vld [vmem:[#allocation14 + $0x48] sm:$0xff]
    %v5341 = vld [vmem:[#allocation14 + $0x50] sm:$0xf]
    %v5342 = vld [vmem:[#allocation14 + $0x54] sm:$0xff]
    %v5343 = vld [vmem:[#allocation14 + $0x5c] sm:$0xf]
    %v5344 = vld [vmem:[#allocation14 + $0x60] sm:$0xff]
    %v5345 = vld [vmem:[#allocation14 + $0x68] sm:$0xf]
    %v5346 = vld [vmem:[#allocation14 + $0x6c] sm:$0xff]
    %v5347 = vld [vmem:[#allocation14 + $0x74] sm:$0xf]
    %v5348 = vld [vmem:[#allocation14 + $0x78] sm:$0xff]
    %v5349 = vld [vmem:[#allocation14 + $0x80] sm:$0xf]
    %v5350 = vld [vmem:[#allocation14 + $0x84] sm:$0xff]
    %v5351 = vld [vmem:[#allocation14 + $0x8c] sm:$0xf]
    %v5352 = vld [vmem:[#allocation14 + $0x90] sm:$0xff]
    %v5353 = vld [vmem:[#allocation14 + $0x98] sm:$0xf]
    %v5354 = vld [vmem:[#allocation14 + $0x9c] sm:$0xff]
    %v5355 = vld [vmem:[#allocation14 + $0xa4] sm:$0xf]
    %v5356 = vld [vmem:[#allocation14 + $0xa8] sm:$0xff]
    %v5357 = vld [vmem:[#allocation14 + $0xb0] sm:$0xf]
    %v5358 = vld [vmem:[#allocation14 + $0xb4] sm:$0xff]
    %v5359 = vld [vmem:[#allocation14 + $0xbc] sm:$0xf]
    %v5360 = vld [vmem:[%s15] sm:$0x7]
    %v5362 = vperm.slane %v5360, 0
    %v5363 = vperm.slane %v5360, 1
    %v5364 = vperm.slane %v5360, 2
    %v5400 = vunpack.c.l.b16 %v5328
    %v5401 = vunpack.c.h.b16 %v5328
    %v5402 = vunpack.c.l.b16 %v5329
    %v5403 = vunpack.c.l.b16 %v5330
    %v5404 = vunpack.c.h.b16 %v5330
    %v5405 = vunpack.c.l.b16 %v5331
    %v5406 = vunpack.c.l.b16 %v5332
    %v5407 = vunpack.c.h.b16 %v5332
    %v5408 = vunpack.c.l.b16 %v5333
    %v5409 = vunpack.c.l.b16 %v5334
    %v5410 = vunpack.c.h.b16 %v5334
    %v5411 = vunpack.c.l.b16 %v5335
    %v5412 = vunpack.c.l.b16 %v5336
    %v5413 = vunpack.c.h.b16 %v5336
    %v5414 = vunpack.c.l.b16 %v5337
    %v5415 = vunpack.c.l.b16 %v5338
    %v5416 = vunpack.c.h.b16 %v5338
    %v5417 = vunpack.c.l.b16 %v5339
    %v5418 = vunpack.c.l.b16 %v5340
    %v5419 = vunpack.c.h.b16 %v5340
    %v5420 = vunpack.c.l.b16 %v5341
    %v5421 = vunpack.c.l.b16 %v5342
    %v5422 = vunpack.c.h.b16 %v5342
    %v5423 = vunpack.c.l.b16 %v5343
    %v5424 = vunpack.c.l.b16 %v5344
    %v5425 = vunpack.c.h.b16 %v5344
    %v5426 = vunpack.c.l.b16 %v5345
    %v5427 = vunpack.c.l.b16 %v5346
    %v5428 = vunpack.c.h.b16 %v5346
    %v5429 = vunpack.c.l.b16 %v5347
    %v5430 = vunpack.c.l.b16 %v5348
    %v5431 = vunpack.c.h.b16 %v5348
    %v5432 = vunpack.c.l.b16 %v5349
    %v5433 = vunpack.c.l.b16 %v5350
    %v5434 = vunpack.c.h.b16 %v5350
    %v5435 = vunpack.c.l.b16 %v5351
    %v5436 = vunpack.c.l.b16 %v5352
    %v5437 = vunpack.c.h.b16 %v5352
    %v5438 = vunpack.c.l.b16 %v5353
    %v5439 = vunpack.c.l.b16 %v5354
    %v5440 = vunpack.c.h.b16 %v5354
    %v5441 = vunpack.c.l.b16 %v5355
    %v5442 = vunpack.c.l.b16 %v5356
    %v5443 = vunpack.c.h.b16 %v5356
    %v5444 = vunpack.c.l.b16 %v5357
    %v5445 = vunpack.c.l.b16 %v5358
    %v5446 = vunpack.c.h.b16 %v5358
    %v5447 = vunpack.c.l.b16 %v5359
    %v5448 = vpack.c.b16 %v5403, %v5400
    %v5449 = vpack.c.b16 %v5404, %v5401
    %v5450 = vpack.c.b16 %v5405, %v5402
    %v5451 = vpack.c.b16 %v5409, %v5406
    %v5452 = vpack.c.b16 %v5410, %v5407
    %v5453 = vpack.c.b16 %v5411, %v5408
    %v5454 = vpack.c.b16 %v5415, %v5412
    %v5455 = vpack.c.b16 %v5416, %v5413
    %v5456 = vpack.c.b16 %v5417, %v5414
    %v5457 = vpack.c.b16 %v5421, %v5418
    %v5458 = vpack.c.b16 %v5422, %v5419
    %v5459 = vpack.c.b16 %v5423, %v5420
    %v5460 = vpack.c.b16 %v5427, %v5424
    %v5461 = vpack.c.b16 %v5428, %v5425
    %v5462 = vpack.c.b16 %v5429, %v5426
    %v5463 = vpack.c.b16 %v5433, %v5430
    %v5464 = vpack.c.b16 %v5434, %v5431
    %v5465 = vpack.c.b16 %v5435, %v5432
    %v5466 = vpack.c.b16 %v5439, %v5436
    %v5467 = vpack.c.b16 %v5440, %v5437
    %v5468 = vpack.c.b16 %v5441, %v5438
    %v5469 = vpack.c.b16 %v5445, %v5442
    %v5470 = vpack.c.b16 %v5446, %v5443
    %v5471 = vpack.c.b16 %v5447, %v5444
    %5496 = vmatpush.bf16.msra.mxu0 %v5469
    %5497 = vmatpush.bf16.msra.mxu0 %v5466
    %5498 = vmatpush.bf16.msra.mxu0 %v5463
    %5499 = vmatpush.bf16.msra.mxu0 %v5460
    %5500 = vmatpush.bf16.msra.mxu0 %v5457
    %5501 = vmatpush.bf16.msra.mxu0 %v5454
    %5502 = vmatpush.bf16.msra.mxu0 %v5451
    %5503 = vmatpush.bf16.msra.mxu0 %v5448
    %5504 = vmatmul.bf16.gmra.mxu0 %v4402
    %v5505 = vpop.f32.mrf.mxu0
    %v5506 = vadd.f32 %v5362, %v5505
    %v5507 = vpop.f32.mrf.mxu0
    %5508 = vdwg.mxu0
    %5509 = vmatpush.bf16.msra.mxu0 %v5470
    %5510 = vmatpush.bf16.msra.mxu0 %v5467
    %5511 = vmatpush.bf16.msra.mxu0 %v5464
    %5512 = vmatpush.bf16.msra.mxu0 %v5461
    %5513 = vmatpush.bf16.msra.mxu0 %v5458
    %5514 = vmatpush.bf16.msra.mxu0 %v5455
    %5515 = vmatpush.bf16.msra.mxu0 %v5452
    %5516 = vmatpush.bf16.msra.mxu0 %v5449
    %5517 = vmatmul.bf16.gmra.mxu0 %v4402
    %v5518 = vpop.f32.mrf.mxu0
    %v5519 = vadd.f32 %v5363, %v5518
    %v5520 = vpop.f32.mrf.mxu0
    %5521 = vdwg.mxu0
    %5522 = vmatpush.bf16.msra.mxu0 %v5471
    %5523 = vmatpush.bf16.msra.mxu0 %v5468
    %5524 = vmatpush.bf16.msra.mxu0 %v5465
    %5525 = vmatpush.bf16.msra.mxu0 %v5462
    %5526 = vmatpush.bf16.msra.mxu0 %v5459
    %5527 = vmatpush.bf16.msra.mxu0 %v5456
    %5528 = vmatpush.bf16.msra.mxu0 %v5453
    %5529 = vmatpush.bf16.msra.mxu0 %v5450
    %5530 = vmatmul.bf16.gmra.mxu0 %v4402
    %v5531 = vpop.f32.mrf.mxu0
    %v5532 = vadd.f32 %v5364, %v5531
    %v5533 = vpop.f32.mrf.mxu0
    %5534 = vdwg.mxu0
    %v5535 = vadd.f32 %v5286, %v5506
    %v5536 = vsub.f32 0.0, %v5535
    %v5537 = vmul.f32 %v5536, 1.442695
    %v5538 = vpow.pop %v5537
    %v5539 = vadd.f32 %v5538, 1.0
    %v5540 = vrcp.pop %v5539
    %v5541 = vmul.f32 %v5539, %v5540
    %v5542 = vsub.f32 1.0, %v5541
    %v5543 = vmul.f32 %v5540, %v5542
    %v5544 = vadd.f32 %v5540, %v5543
    %vm5545 = vweird.f32 %v5539
    %vm5546 = vweird.f32 %v5540
    %vm5547 = vmor %vm5545, %vm5546
    %v5548 = vsel %vm5547, %v5540, %v5544
    %v5549 = vand.u32 2147483647, %v5539
    %vm5550 = vcmp.eq.f32.partialorder %v5549, 8.507059e+37
    %v5551 = vand.u32 %v5539, 2147483648
    %v5552 = vor.u32 1.1754944e-38, %v5551
    %v5553 = vsel %vm5550, %v5552, %v5548
    %v5554 = vmul.f32 1.0, %v5553
    %v5555 = vadd.f32 %v5299, %v5519
    %v5556 = vsub.f32 0.0, %v5555
    %v5557 = vmul.f32 %v5556, 1.442695
    %v5558 = vpow.pop %v5557
    %v5559 = vadd.f32 %v5558, 1.0
    %v5560 = vrcp.pop %v5559
    %v5561 = vmul.f32 %v5559, %v5560
    %v5562 = vsub.f32 1.0, %v5561
    %v5563 = vmul.f32 %v5560, %v5562
    %v5564 = vadd.f32 %v5560, %v5563
    %vm5565 = vweird.f32 %v5559
    %vm5566 = vweird.f32 %v5560
    %vm5567 = vmor %vm5565, %vm5566
    %v5568 = vsel %vm5567, %v5560, %v5564
    %v5569 = vand.u32 2147483647, %v5559
    %vm5570 = vcmp.eq.f32.partialorder %v5569, 8.507059e+37
    %v5571 = vand.u32 %v5559, 2147483648
    %v5572 = vor.u32 1.1754944e-38, %v5571
    %v5573 = vsel %vm5570, %v5572, %v5568
    %v5574 = vmul.f32 1.0, %v5573
    %v5575 = vmul.f32 %v5554, %v5532
    %v5576 = vadd.f32 %v5312, %v5575
    %v5577 = vtanh.pop %v5576
    %v5578 = vsub.f32 1.0, %v5574
    %v5579 = vmul.f32 %v5578, %v5577
    %v5580 = vmul.f32 %v5574, %v4401
    %v5581 = vadd.f32 %v5579, %v5580
    %v5582 = vpack.c.bf16 %v5581, %v5581
    %v5583 = vld [vmem:[#allocation15] sm:$0xff]
    %v5584 = vld [vmem:[#allocation15 + $0x8] sm:$0xf]
    %v5585 = vld [vmem:[#allocation15 + $0xc] sm:$0xff]
    %v5586 = vld [vmem:[#allocation15 + $0x14] sm:$0xf]
    %v5587 = vld [vmem:[#allocation15 + $0x18] sm:$0xff]
    %v5588 = vld [vmem:[#allocation15 + $0x20] sm:$0xf]
    %v5589 = vld [vmem:[#allocation15 + $0x24] sm:$0xff]
    %v5590 = vld [vmem:[#allocation15 + $0x2c] sm:$0xf]
    %v5591 = vld [vmem:[#allocation15 + $0x30] sm:$0xff]
    %v5592 = vld [vmem:[#allocation15 + $0x38] sm:$0xf]
    %v5593 = vld [vmem:[#allocation15 + $0x3c] sm:$0xff]
    %v5594 = vld [vmem:[#allocation15 + $0x44] sm:$0xf]
    %v5595 = vld [vmem:[#allocation15 + $0x48] sm:$0xff]
    %v5596 = vld [vmem:[#allocation15 + $0x50] sm:$0xf]
    %v5597 = vld [vmem:[#allocation15 + $0x54] sm:$0xff]
    %v5598 = vld [vmem:[#allocation15 + $0x5c] sm:$0xf]
    %v5599 = vld [vmem:[#allocation15 + $0x60] sm:$0xff]
    %v5600 = vld [vmem:[#allocation15 + $0x68] sm:$0xf]
    %v5601 = vld [vmem:[#allocation15 + $0x6c] sm:$0xff]
    %v5602 = vld [vmem:[#allocation15 + $0x74] sm:$0xf]
    %v5603 = vld [vmem:[#allocation15 + $0x78] sm:$0xff]
    %v5604 = vld [vmem:[#allocation15 + $0x80] sm:$0xf]
    %v5605 = vld [vmem:[#allocation15 + $0x84] sm:$0xff]
    %v5606 = vld [vmem:[#allocation15 + $0x8c] sm:$0xf]
    %v5607 = vld [vmem:[#allocation15 + $0x90] sm:$0xff]
    %v5608 = vld [vmem:[#allocation15 + $0x98] sm:$0xf]
    %v5609 = vld [vmem:[#allocation15 + $0x9c] sm:$0xff]
    %v5610 = vld [vmem:[#allocation15 + $0xa4] sm:$0xf]
    %v5611 = vld [vmem:[#allocation15 + $0xa8] sm:$0xff]
    %v5612 = vld [vmem:[#allocation15 + $0xb0] sm:$0xf]
    %v5613 = vld [vmem:[#allocation15 + $0xb4] sm:$0xff]
    %v5614 = vld [vmem:[#allocation15 + $0xbc] sm:$0xf]
    %v5647 = vunpack.c.l.b16 %v5583
    %v5648 = vunpack.c.h.b16 %v5583
    %v5649 = vunpack.c.l.b16 %v5584
    %v5650 = vunpack.c.l.b16 %v5585
    %v5651 = vunpack.c.h.b16 %v5585
    %v5652 = vunpack.c.l.b16 %v5586
    %v5653 = vunpack.c.l.b16 %v5587
    %v5654 = vunpack.c.h.b16 %v5587
    %v5655 = vunpack.c.l.b16 %v5588
    %v5656 = vunpack.c.l.b16 %v5589
    %v5657 = vunpack.c.h.b16 %v5589
    %v5658 = vunpack.c.l.b16 %v5590
    %v5659 = vunpack.c.l.b16 %v5591
    %v5660 = vunpack.c.h.b16 %v5591
    %v5661 = vunpack.c.l.b16 %v5592
    %v5662 = vunpack.c.l.b16 %v5593
    %v5663 = vunpack.c.h.b16 %v5593
    %v5664 = vunpack.c.l.b16 %v5594
    %v5665 = vunpack.c.l.b16 %v5595
    %v5666 = vunpack.c.h.b16 %v5595
    %v5667 = vunpack.c.l.b16 %v5596
    %v5668 = vunpack.c.l.b16 %v5597
    %v5669 = vunpack.c.h.b16 %v5597
    %v5670 = vunpack.c.l.b16 %v5598
    %v5671 = vunpack.c.l.b16 %v5599
    %v5672 = vunpack.c.h.b16 %v5599
    %v5673 = vunpack.c.l.b16 %v5600
    %v5674 = vunpack.c.l.b16 %v5601
    %v5675 = vunpack.c.h.b16 %v5601
    %v5676 = vunpack.c.l.b16 %v5602
    %v5677 = vunpack.c.l.b16 %v5603
    %v5678 = vunpack.c.h.b16 %v5603
    %v5679 = vunpack.c.l.b16 %v5604
    %v5680 = vunpack.c.l.b16 %v5605
    %v5681 = vunpack.c.h.b16 %v5605
    %v5682 = vunpack.c.l.b16 %v5606
    %v5683 = vunpack.c.l.b16 %v5607
    %v5684 = vunpack.c.h.b16 %v5607
    %v5685 = vunpack.c.l.b16 %v5608
    %v5686 = vunpack.c.l.b16 %v5609
    %v5687 = vunpack.c.h.b16 %v5609
    %v5688 = vunpack.c.l.b16 %v5610
    %v5689 = vunpack.c.l.b16 %v5611
    %v5690 = vunpack.c.h.b16 %v5611
    %v5691 = vunpack.c.l.b16 %v5612
    %v5692 = vunpack.c.l.b16 %v5613
    %v5693 = vunpack.c.h.b16 %v5613
    %v5694 = vunpack.c.l.b16 %v5614
    %v5695 = vpack.c.b16 %v5650, %v5647
    %v5696 = vpack.c.b16 %v5651, %v5648
    %v5697 = vpack.c.b16 %v5652, %v5649
    %v5698 = vpack.c.b16 %v5656, %v5653
    %v5699 = vpack.c.b16 %v5657, %v5654
    %v5700 = vpack.c.b16 %v5658, %v5655
    %v5701 = vpack.c.b16 %v5662, %v5659
    %v5702 = vpack.c.b16 %v5663, %v5660
    %v5703 = vpack.c.b16 %v5664, %v5661
    %v5704 = vpack.c.b16 %v5668, %v5665
    %v5705 = vpack.c.b16 %v5669, %v5666
    %v5706 = vpack.c.b16 %v5670, %v5667
    %v5707 = vpack.c.b16 %v5674, %v5671
    %v5708 = vpack.c.b16 %v5675, %v5672
    %v5709 = vpack.c.b16 %v5676, %v5673
    %v5710 = vpack.c.b16 %v5680, %v5677
    %v5711 = vpack.c.b16 %v5681, %v5678
    %v5712 = vpack.c.b16 %v5682, %v5679
    %v5713 = vpack.c.b16 %v5686, %v5683
    %v5714 = vpack.c.b16 %v5687, %v5684
    %v5715 = vpack.c.b16 %v5688, %v5685
    %v5716 = vpack.c.b16 %v5692, %v5689
    %v5717 = vpack.c.b16 %v5693, %v5690
    %v5718 = vpack.c.b16 %v5694, %v5691
    %5743 = vmatpush.bf16.msra.mxu0 %v5716
    %5744 = vmatpush.bf16.msra.mxu0 %v5713
    %5745 = vmatpush.bf16.msra.mxu0 %v5710
    %5746 = vmatpush.bf16.msra.mxu0 %v5707
    %5747 = vmatpush.bf16.msra.mxu0 %v5704
    %5748 = vmatpush.bf16.msra.mxu0 %v5701
    %5749 = vmatpush.bf16.msra.mxu0 %v5698
    %5750 = vmatpush.bf16.msra.mxu0 %v5695
    %5751 = vmatmul.bf16.gmra.mxu0 %v5582
    %v5752 = vpop.f32.mrf.mxu0
    %v5753 = vadd.f32 0.0, %v5752
    %v5754 = vpop.f32.mrf.mxu0
    %5755 = vdwg.mxu0
    %5756 = vmatpush.bf16.msra.mxu0 %v5717
    %5757 = vmatpush.bf16.msra.mxu0 %v5714
    %5758 = vmatpush.bf16.msra.mxu0 %v5711
    %5759 = vmatpush.bf16.msra.mxu0 %v5708
    %5760 = vmatpush.bf16.msra.mxu0 %v5705
    %5761 = vmatpush.bf16.msra.mxu0 %v5702
    %5762 = vmatpush.bf16.msra.mxu0 %v5699
    %5763 = vmatpush.bf16.msra.mxu0 %v5696
    %5764 = vmatmul.bf16.gmra.mxu0 %v5582
    %v5765 = vpop.f32.mrf.mxu0
    %v5766 = vadd.f32 0.0, %v5765
    %v5767 = vpop.f32.mrf.mxu0
    %5768 = vdwg.mxu0
    %5769 = vmatpush.bf16.msra.mxu0 %v5718
    %5770 = vmatpush.bf16.msra.mxu0 %v5715
    %5771 = vmatpush.bf16.msra.mxu0 %v5712
    %5772 = vmatpush.bf16.msra.mxu0 %v5709
    %5773 = vmatpush.bf16.msra.mxu0 %v5706
    %5774 = vmatpush.bf16.msra.mxu0 %v5703
    %5775 = vmatpush.bf16.msra.mxu0 %v5700
    %5776 = vmatpush.bf16.msra.mxu0 %v5697
    %5777 = vmatmul.bf16.gmra.mxu0 %v5582
    %v5778 = vpop.f32.mrf.mxu0
    %v5779 = vadd.f32 0.0, %v5778
    %v5780 = vpop.f32.mrf.mxu0
    %5781 = vdwg.mxu0
    %v5782 = vpack.c.bf16 %v5753, %v5753
    %v5783 = vld [vmem:[%s5] sm:$0xf]
    %v5784 = vld [vmem:[%s5 + $0x4] sm:$0xf]
    %v5785 = vld [vmem:[%s5 + $0x8] sm:$0xf]
    %v5786 = vld [vmem:[%s5 + $0xc] sm:$0xf]
    %v5787 = vld [vmem:[%s5 + $0x10] sm:$0xf]
    %v5788 = vld [vmem:[%s5 + $0x14] sm:$0xf]
    %v5789 = vld [vmem:[%s5 + $0x18] sm:$0xf]
    %v5790 = vld [vmem:[%s5 + $0x1c] sm:$0xf]
    %v5791 = vld [vmem:[%s5 + $0x20] sm:$0xf]
    %v5792 = vld [vmem:[%s5 + $0x24] sm:$0xf]
    %v5793 = vld [vmem:[%s5 + $0x28] sm:$0xf]
    %v5794 = vld [vmem:[%s5 + $0x2c] sm:$0xf]
    %v5795 = vld [vmem:[%s5 + $0x30] sm:$0xf]
    %v5796 = vld [vmem:[%s5 + $0x34] sm:$0xf]
    %v5797 = vld [vmem:[%s5 + $0x38] sm:$0xf]
    %v5798 = vld [vmem:[%s5 + $0x3c] sm:$0xf]
    %v5815 = vunpack.c.l.b16 %v5783
    %v5816 = vunpack.c.l.b16 %v5784
    %v5817 = vunpack.c.l.b16 %v5785
    %v5818 = vunpack.c.l.b16 %v5786
    %v5819 = vunpack.c.l.b16 %v5787
    %v5820 = vunpack.c.l.b16 %v5788
    %v5821 = vunpack.c.l.b16 %v5789
    %v5822 = vunpack.c.l.b16 %v5790
    %v5823 = vunpack.c.l.b16 %v5791
    %v5824 = vunpack.c.l.b16 %v5792
    %v5825 = vunpack.c.l.b16 %v5793
    %v5826 = vunpack.c.l.b16 %v5794
    %v5827 = vunpack.c.l.b16 %v5795
    %v5828 = vunpack.c.l.b16 %v5796
    %v5829 = vunpack.c.l.b16 %v5797
    %v5830 = vunpack.c.l.b16 %v5798
    %v5831 = vpack.c.b16 %v5816, %v5815
    %v5832 = vpack.c.b16 %v5818, %v5817
    %v5833 = vpack.c.b16 %v5820, %v5819
    %v5834 = vpack.c.b16 %v5822, %v5821
    %v5835 = vpack.c.b16 %v5824, %v5823
    %v5836 = vpack.c.b16 %v5826, %v5825
    %v5837 = vpack.c.b16 %v5828, %v5827
    %v5838 = vpack.c.b16 %v5830, %v5829
    %5847 = vmatpush.bf16.msra.mxu0 %v5838
    %5848 = vmatpush.bf16.msra.mxu0 %v5837
    %5849 = vmatpush.bf16.msra.mxu0 %v5836
    %5850 = vmatpush.bf16.msra.mxu0 %v5835
    %5851 = vmatpush.bf16.msra.mxu0 %v5834
    %5852 = vmatpush.bf16.msra.mxu0 %v5833
    %5853 = vmatpush.bf16.msra.mxu0 %v5832
    %5854 = vmatpush.bf16.msra.mxu0 %v5831
    %5855 = vmatmul.bf16.gmra.mxu0 %v5782
    %v5856 = vpop.f32.mrf.mxu0
    %v5857 = vadd.f32 0.0, %v5856
    %v5858 = vpop.f32.mrf.mxu0
    %5859 = vdwg.mxu0
    %v5860 = vsel %vm1200, %v5857, -inf
    %5861 = vmax.xlane.f32.xlu0 %v5860
    %v5862 = vpop.xlane.xlu0 %5861
    %v5863 = vsub.f32 %v5857, %v5862
    %v5864 = vmul.f32 %v5863, 1.442695
    %v5865 = vpow.pop %v5864
    %v5866 = vsel %vm1200, %v5865, 0.0
    %5867 = vadd.xlane.f32.xlu0 %v5866
    %v5868 = vpop.xlane.xlu0 %5867
    %v5869 = vrcp.pop %v5868
    %v5870 = vmul.f32 %v5865, %v5869
    %v5871 = vpack.c.bf16 %v5870, %v5870
    %v5872 = vld [vmem:[#allocation6] sm:$0xf]
    %v5874 = vsel %vm1200, %v5871, 0
    %v5877 = vsel %vm1217, %v5872, 0
    %5879 = vmatpush.bf16.msra.mxu0 0
    %5880 = vmatpush.bf16.msra.mxu0 0
    %5881 = vmatpush.bf16.msra.mxu0 0
    %5882 = vmatpush.bf16.msra.mxu0 0
    %5883 = vmatpush.bf16.msra.mxu0 0
    %5884 = vmatpush.bf16.msra.mxu0 0
    %5885 = vmatpush.bf16.msra.mxu0 0
    %5886 = vmatpush.bf16.msra.mxu0 %v5877
    %5887 = vmatmul.bf16.gmra.mxu0 %v5874
    %v5888 = vpop.f32.mrf.mxu0
    %v5889 = vadd.f32 0.0, %v5888
    %v5890 = vpop.f32.mrf.mxu0
    %5891 = vdwg.mxu0
    %v5892 = vpack.c.bf16 %v5889, %v5889
    %v5893 = vld [vmem:[#allocation17] sm:$0xff]
    %v5894 = vld [vmem:[#allocation17 + $0x8] sm:$0xff]
    %v5895 = vld [vmem:[#allocation17 + $0x10] sm:$0xff]
    %v5896 = vld [vmem:[#allocation17 + $0x18] sm:$0xff]
    %v5897 = vld [vmem:[#allocation17 + $0x20] sm:$0xff]
    %v5898 = vld [vmem:[#allocation17 + $0x28] sm:$0xff]
    %v5899 = vld [vmem:[#allocation17 + $0x30] sm:$0xff]
    %v5900 = vld [vmem:[#allocation17 + $0x38] sm:$0xff]
    %v5901 = vld [vmem:[#allocation17 + $0x40] sm:$0xff]
    %v5902 = vld [vmem:[#allocation17 + $0x48] sm:$0xff]
    %v5903 = vld [vmem:[#allocation17 + $0x50] sm:$0xff]
    %v5904 = vld [vmem:[#allocation17 + $0x58] sm:$0xff]
    %v5905 = vld [vmem:[#allocation17 + $0x60] sm:$0xff]
    %v5906 = vld [vmem:[#allocation17 + $0x68] sm:$0xff]
    %v5907 = vld [vmem:[#allocation17 + $0x70] sm:$0xff]
    %v5908 = vld [vmem:[#allocation17 + $0x78] sm:$0xff]
    %v5925 = vunpack.c.l.b16 %v5893
    %v5926 = vunpack.c.h.b16 %v5893
    %v5927 = vunpack.c.l.b16 %v5894
    %v5928 = vunpack.c.h.b16 %v5894
    %v5929 = vunpack.c.l.b16 %v5895
    %v5930 = vunpack.c.h.b16 %v5895
    %v5931 = vunpack.c.l.b16 %v5896
    %v5932 = vunpack.c.h.b16 %v5896
    %v5933 = vunpack.c.l.b16 %v5897
    %v5934 = vunpack.c.h.b16 %v5897
    %v5935 = vunpack.c.l.b16 %v5898
    %v5936 = vunpack.c.h.b16 %v5898
    %v5937 = vunpack.c.l.b16 %v5899
    %v5938 = vunpack.c.h.b16 %v5899
    %v5939 = vunpack.c.l.b16 %v5900
    %v5940 = vunpack.c.h.b16 %v5900
    %v5941 = vunpack.c.l.b16 %v5901
    %v5942 = vunpack.c.h.b16 %v5901
    %v5943 = vunpack.c.l.b16 %v5902
    %v5944 = vunpack.c.h.b16 %v5902
    %v5945 = vunpack.c.l.b16 %v5903
    %v5946 = vunpack.c.h.b16 %v5903
    %v5947 = vunpack.c.l.b16 %v5904
    %v5948 = vunpack.c.h.b16 %v5904
    %v5949 = vunpack.c.l.b16 %v5905
    %v5950 = vunpack.c.h.b16 %v5905
    %v5951 = vunpack.c.l.b16 %v5906
    %v5952 = vunpack.c.h.b16 %v5906
    %v5953 = vunpack.c.l.b16 %v5907
    %v5954 = vunpack.c.h.b16 %v5907
    %v5955 = vunpack.c.l.b16 %v5908
    %v5956 = vunpack.c.h.b16 %v5908
    %v5957 = vpack.c.b16 %v5927, %v5925
    %v5958 = vpack.c.b16 %v5928, %v5926
    %v5959 = vpack.c.b16 %v5931, %v5929
    %v5960 = vpack.c.b16 %v5932, %v5930
    %v5961 = vpack.c.b16 %v5935, %v5933
    %v5962 = vpack.c.b16 %v5936, %v5934
    %v5963 = vpack.c.b16 %v5939, %v5937
    %v5964 = vpack.c.b16 %v5940, %v5938
    %v5965 = vpack.c.b16 %v5943, %v5941
    %v5966 = vpack.c.b16 %v5944, %v5942
    %v5967 = vpack.c.b16 %v5947, %v5945
    %v5968 = vpack.c.b16 %v5948, %v5946
    %v5969 = vpack.c.b16 %v5951, %v5949
    %v5970 = vpack.c.b16 %v5952, %v5950
    %v5971 = vpack.c.b16 %v5955, %v5953
    %v5972 = vpack.c.b16 %v5956, %v5954
    %5989 = vmatpush.bf16.msra.mxu0 %v5971
    %5990 = vmatpush.bf16.msra.mxu0 %v5969
    %5991 = vmatpush.bf16.msra.mxu0 %v5967
    %5992 = vmatpush.bf16.msra.mxu0 %v5965
    %5993 = vmatpush.bf16.msra.mxu0 %v5963
    %5994 = vmatpush.bf16.msra.mxu0 %v5961
    %5995 = vmatpush.bf16.msra.mxu0 %v5959
    %5996 = vmatpush.bf16.msra.mxu0 %v5957
    %5997 = vmatmul.bf16.gmra.mxu0 %v5892
    %v5998 = vpop.f32.mrf.mxu0
    %v5999 = vadd.f32 0.0, %v5998
    %v6000 = vpop.f32.mrf.mxu0
    %6001 = vdwg.mxu0
    %6002 = vmatpush.bf16.msra.mxu0 %v5972
    %6003 = vmatpush.bf16.msra.mxu0 %v5970
    %6004 = vmatpush.bf16.msra.mxu0 %v5968
    %6005 = vmatpush.bf16.msra.mxu0 %v5966
    %6006 = vmatpush.bf16.msra.mxu0 %v5964
    %6007 = vmatpush.bf16.msra.mxu0 %v5962
    %6008 = vmatpush.bf16.msra.mxu0 %v5960
    %6009 = vmatpush.bf16.msra.mxu0 %v5958
    %6010 = vmatmul.bf16.gmra.mxu0 %v5892
    %v6011 = vpop.f32.mrf.mxu0
    %v6012 = vadd.f32 0.0, %v6011
    %v6013 = vpop.f32.mrf.mxu0
    %6014 = vdwg.mxu0
    %v6015 = vadd.f32 %v5766, %v5999
    %v6016 = vld [vmem:[%s18] sm:$0x1]
    %v6018 = vperm.slane %v6016, 0
    %v6020 = vadd.f32 %v6015, %v6018
    %v6021 = vpack.c.bf16 %v6020, %v6020
    %v6022 = vld [vmem:[#allocation18] sm:$0xf]
    %v6023 = vld [vmem:[#allocation18 + $0x4] sm:$0xf]
    %v6024 = vld [vmem:[#allocation18 + $0x8] sm:$0xf]
    %v6025 = vld [vmem:[#allocation18 + $0xc] sm:$0xf]
    %v6026 = vld [vmem:[#allocation18 + $0x10] sm:$0xf]
    %v6027 = vld [vmem:[#allocation18 + $0x14] sm:$0xf]
    %v6028 = vld [vmem:[#allocation18 + $0x18] sm:$0xf]
    %v6029 = vld [vmem:[#allocation18 + $0x1c] sm:$0xf]
    %v6030 = vld [vmem:[#allocation18 + $0x20] sm:$0xf]
    %v6031 = vld [vmem:[#allocation18 + $0x24] sm:$0xf]
    %v6032 = vld [vmem:[#allocation18 + $0x28] sm:$0xf]
    %v6033 = vld [vmem:[#allocation18 + $0x2c] sm:$0xf]
    %v6034 = vld [vmem:[#allocation18 + $0x30] sm:$0xf]
    %v6035 = vld [vmem:[#allocation18 + $0x34] sm:$0xf]
    %v6036 = vld [vmem:[#allocation18 + $0x38] sm:$0xf]
    %v6037 = vld [vmem:[#allocation18 + $0x3c] sm:$0xf]
    %v6038 = vld [vmem:[%s20] sm:$0x1]
    %v6040 = vperm.slane %v6038, 0
    %v6058 = vunpack.c.l.b16 %v6022
    %v6059 = vunpack.c.l.b16 %v6023
    %v6060 = vunpack.c.l.b16 %v6024
    %v6061 = vunpack.c.l.b16 %v6025
    %v6062 = vunpack.c.l.b16 %v6026
    %v6063 = vunpack.c.l.b16 %v6027
    %v6064 = vunpack.c.l.b16 %v6028
    %v6065 = vunpack.c.l.b16 %v6029
    %v6066 = vunpack.c.l.b16 %v6030
    %v6067 = vunpack.c.l.b16 %v6031
    %v6068 = vunpack.c.l.b16 %v6032
    %v6069 = vunpack.c.l.b16 %v6033
    %v6070 = vunpack.c.l.b16 %v6034
    %v6071 = vunpack.c.l.b16 %v6035
    %v6072 = vunpack.c.l.b16 %v6036
    %v6073 = vunpack.c.l.b16 %v6037
    %v6074 = vpack.c.b16 %v6059, %v6058
    %v6075 = vpack.c.b16 %v6061, %v6060
    %v6076 = vpack.c.b16 %v6063, %v6062
    %v6077 = vpack.c.b16 %v6065, %v6064
    %v6078 = vpack.c.b16 %v6067, %v6066
    %v6079 = vpack.c.b16 %v6069, %v6068
    %v6080 = vpack.c.b16 %v6071, %v6070
    %v6081 = vpack.c.b16 %v6073, %v6072
    %6090 = vmatpush.bf16.msra.mxu0 %v6081
    %6091 = vmatpush.bf16.msra.mxu0 %v6080
    %6092 = vmatpush.bf16.msra.mxu0 %v6079
    %6093 = vmatpush.bf16.msra.mxu0 %v6078
    %6094 = vmatpush.bf16.msra.mxu0 %v6077
    %6095 = vmatpush.bf16.msra.mxu0 %v6076
    %6096 = vmatpush.bf16.msra.mxu0 %v6075
    %6097 = vmatpush.bf16.msra.mxu0 %v6074
    %6098 = vmatmul.bf16.gmra.mxu0 %v6021
    %v6099 = vpop.f32.mrf.mxu0
    %v6100 = vadd.f32 %v6040, %v6099
    %v6101 = vpop.f32.mrf.mxu0
    %6102 = vdwg.mxu0
    %6103 = vmax.xlane.f32.xlu0 %v6100
    %v6104 = vpop.xlane.xlu0 %6103
    %v6105 = vsub.f32 %v6100, %v6104
    %v6106 = vmul.f32 %v6105, 1.442695
    %v6107 = vpow.pop %v6106
    %6108 = vadd.xlane.f32.xlu0 %v6107
    %v6109 = vpop.xlane.xlu0 %6108
    %v6110 = vrcp.pop %v6109
    %v6111 = vmul.f32 %v6107, %v6110
    %v6112 = vadd.f32 %v5325, %v5779
    %v6113 = vadd.f32 %v6112, %v6012
    %6114 = vadd.xlane.f32.xlu0 %v6113
    %v6115 = vpop.xlane.xlu0 %6114
    %v6116 = vsub.f32 0.0, %v6115
    %v6117 = vmul.f32 %v6116, 1.442695
    %v6118 = vpow.pop %v6117
    %v6119 = vadd.f32 %v6118, 1.0
    %v6120 = vrcp.pop %v6119
    %v6121 = vmul.f32 %v6119, %v6120
    %v6122 = vsub.f32 1.0, %v6121
    %v6123 = vmul.f32 %v6120, %v6122
    %v6124 = vadd.f32 %v6120, %v6123
    %vm6125 = vweird.f32 %v6119
    %vm6126 = vweird.f32 %v6120
    %vm6127 = vmor %vm6125, %vm6126
    %v6128 = vsel %vm6127, %v6120, %v6124
    %v6129 = vand.u32 2147483647, %v6119
    %vm6130 = vcmp.eq.f32.partialorder %v6129, 8.507059e+37
    %v6131 = vand.u32 %v6119, 2147483648
    %v6132 = vor.u32 1.1754944e-38, %v6131
    %v6133 = vsel %vm6130, %v6132, %v6128
    %v6134 = vmul.f32 1.0, %v6133
    %v6135 = vmul.f32 %v6111, %v6134
    %v6136 = vld [vmem:[#allocation3] sm:$0xff]
    %v6137 = vmul.f32 %v6135, %v6136
    %v6138 = vsub.f32 1.0, %v6134
    %v6139 = vmul.f32 %v5870, %v6138
    %v6140 = vpack.c.bf16 %v6139, %v6139
    %v6141 = vld [vmem:[%s6] sm:$0xf]
    %v6143 = vsel %vm1200, %v6140, 0
    %v6146 = vsel %vm1217, %v6141, 0
    %6148 = vmatpush.bf16.msra.mxu0 0
    %6149 = vmatpush.bf16.msra.mxu0 0
    %6150 = vmatpush.bf16.msra.mxu0 0
    %6151 = vmatpush.bf16.msra.mxu0 0
    %6152 = vmatpush.bf16.msra.mxu0 0
    %6153 = vmatpush.bf16.msra.mxu0 0
    %6154 = vmatpush.bf16.msra.mxu0 0
    %6155 = vmatpush.bf16.msra.mxu0 %v6146
    %6156 = vmatmul.bf16.gmra.mxu0 %v6143
    %v6157 = vpop.f32.mrf.mxu0
    %v6158 = vadd.f32 0.0, %v6157
    %v6159 = vpop.f32.mrf.mxu0
    %6160 = vdwg.mxu0
    %v6161 = vadd.f32 %v6137, %v6158
    %v6163 = vrot.slane %v6161, 1
    %v6164 = vrot.slane %v6161, 2
    %v6165 = vrot.slane %v6161, 3
    %v6166 = vrot.slane %v6161, 4
    %v6167 = vrot.slane %v6161, 5
    %v6168 = vrot.slane %v6161, 6
    %v6169 = vrot.slane %v6161, 7
    %v6177 = vpack.c.bf16 %v6161, %v6161
    %v6178 = vpack.c.bf16 %v6163, %v6163
    %v6179 = vpack.c.bf16 %v6164, %v6164
    %v6180 = vpack.c.bf16 %v6165, %v6165
    %v6181 = vpack.c.bf16 %v6166, %v6166
    %v6182 = vpack.c.bf16 %v6167, %v6167
    %v6183 = vpack.c.bf16 %v6168, %v6168
    %v6184 = vpack.c.bf16 %v6169, %v6169
    %v6193 = vrot.slane %v6177, 6
    %v6194 = vrot.slane %v6178, 6
    %v6195 = vrot.slane %v6179, 6
    %v6196 = vrot.slane %v6180, 6
    %v6197 = vrot.slane %v6181, 6
    %v6198 = vrot.slane %v6182, 6
    %v6199 = vrot.slane %v6183, 6
    %v6200 = vrot.slane %v6184, 6
    %vm6209 = vcmask 1042434
    %vm6210 = vsmask.f32 2304
    %vm6211 = vmand %vm6209, %vm6210
    %v6212 = vld [vmem:[%s21] sm:$0x4]
    %v6213 = vsel %vm6211, %v6193, %v6212
    %6214 = vst [vmem:[%s21] sm:$0x4] %v6213
    %v6215 = vld [vmem:[%s21 + $0x4] sm:$0x4]
    %v6216 = vsel %vm6211, %v6194, %v6215
    %6217 = vst [vmem:[%s21 + $0x4] sm:$0x4] %v6216
    %v6218 = vld [vmem:[%s21 + $0x8] sm:$0x4]
    %v6219 = vsel %vm6211, %v6195, %v6218
    %6220 = vst [vmem:[%s21 + $0x8] sm:$0x4] %v6219
    %v6221 = vld [vmem:[%s21 + $0xc] sm:$0x4]
    %v6222 = vsel %vm6211, %v6196, %v6221
    %6223 = vst [vmem:[%s21 + $0xc] sm:$0x4] %v6222
    %v6224 = vld [vmem:[%s21 + $0x10] sm:$0x4]
    %v6225 = vsel %vm6211, %v6197, %v6224
    %6226 = vst [vmem:[%s21 + $0x10] sm:$0x4] %v6225
    %v6227 = vld [vmem:[%s21 + $0x14] sm:$0x4]
    %v6228 = vsel %vm6211, %v6198, %v6227
    %6229 = vst [vmem:[%s21 + $0x14] sm:$0x4] %v6228
    %v6230 = vld [vmem:[%s21 + $0x18] sm:$0x4]
    %v6231 = vsel %vm6211, %v6199, %v6230
    %6232 = vst [vmem:[%s21 + $0x18] sm:$0x4] %v6231
    %v6233 = vld [vmem:[%s21 + $0x1c] sm:$0x4]
    %v6234 = vsel %vm6211, %v6200, %v6233
    %6235 = vst [vmem:[%s21 + $0x1c] sm:$0x4] %v6234
    %s6236 = scalar_lea.vmem [#allocation4], 40
    %v6237 = vld [vmem:[%s6236] sm:$0xff]
    %v6238 = vpack.c.bf16 %v6237, %v6237
    %v6239 = vld [vmem:[#allocation12] sm:$0xff]
    %v6240 = vld [vmem:[#allocation12 + $0x8] sm:$0xff]
    %v6241 = vld [vmem:[#allocation12 + $0x10] sm:$0xff]
    %v6242 = vld [vmem:[#allocation12 + $0x18] sm:$0xff]
    %v6243 = vld [vmem:[#allocation12 + $0x20] sm:$0xff]
    %v6244 = vld [vmem:[#allocation12 + $0x28] sm:$0xff]
    %v6245 = vld [vmem:[#allocation12 + $0x30] sm:$0xff]
    %v6246 = vld [vmem:[#allocation12 + $0x38] sm:$0xff]
    %v6247 = vld [vmem:[#allocation12 + $0x40] sm:$0xff]
    %v6248 = vld [vmem:[#allocation12 + $0x48] sm:$0xff]
    %v6249 = vld [vmem:[#allocation12 + $0x50] sm:$0xff]
    %v6250 = vld [vmem:[#allocation12 + $0x58] sm:$0xff]
    %v6251 = vld [vmem:[#allocation12 + $0x60] sm:$0xff]
    %v6252 = vld [vmem:[#allocation12 + $0x68] sm:$0xff]
    %v6253 = vld [vmem:[#allocation12 + $0x70] sm:$0xff]
    %v6254 = vld [vmem:[#allocation12 + $0x78] sm:$0xff]
    %v6255 = vld [vmem:[#allocation12 + $0x80] sm:$0xff]
    %v6256 = vld [vmem:[#allocation12 + $0x88] sm:$0xff]
    %v6257 = vld [vmem:[#allocation12 + $0x90] sm:$0xff]
    %v6258 = vld [vmem:[#allocation12 + $0x98] sm:$0xff]
    %v6259 = vld [vmem:[#allocation12 + $0xa0] sm:$0xff]
    %v6260 = vld [vmem:[#allocation12 + $0xa8] sm:$0xff]
    %v6261 = vld [vmem:[#allocation12 + $0xb0] sm:$0xff]
    %v6262 = vld [vmem:[#allocation12 + $0xb8] sm:$0xff]
    %v6263 = vld [vmem:[#allocation12 + $0xc0] sm:$0xff]
    %v6264 = vld [vmem:[#allocation12 + $0xc8] sm:$0xff]
    %v6265 = vld [vmem:[#allocation12 + $0xd0] sm:$0xff]
    %v6266 = vld [vmem:[#allocation12 + $0xd8] sm:$0xff]
    %v6267 = vld [vmem:[#allocation12 + $0xe0] sm:$0xff]
    %v6268 = vld [vmem:[#allocation12 + $0xe8] sm:$0xff]
    %v6269 = vld [vmem:[#allocation12 + $0xf0] sm:$0xff]
    %v6270 = vld [vmem:[#allocation12 + $0xf8] sm:$0xff]
    %v6271 = vld [vmem:[%s13] sm:$0xf]
    %v6273 = vperm.slane %v6271, 0
    %v6274 = vperm.slane %v6271, 1
    %v6275 = vperm.slane %v6271, 2
    %v6276 = vperm.slane %v6271, 3
    %v6313 = vunpack.c.l.b16 %v6239
    %v6314 = vunpack.c.h.b16 %v6239
    %v6315 = vunpack.c.l.b16 %v6240
    %v6316 = vunpack.c.h.b16 %v6240
    %v6317 = vunpack.c.l.b16 %v6241
    %v6318 = vunpack.c.h.b16 %v6241
    %v6319 = vunpack.c.l.b16 %v6242
    %v6320 = vunpack.c.h.b16 %v6242
    %v6321 = vunpack.c.l.b16 %v6243
    %v6322 = vunpack.c.h.b16 %v6243
    %v6323 = vunpack.c.l.b16 %v6244
    %v6324 = vunpack.c.h.b16 %v6244
    %v6325 = vunpack.c.l.b16 %v6245
    %v6326 = vunpack.c.h.b16 %v6245
    %v6327 = vunpack.c.l.b16 %v6246
    %v6328 = vunpack.c.h.b16 %v6246
    %v6329 = vunpack.c.l.b16 %v6247
    %v6330 = vunpack.c.h.b16 %v6247
    %v6331 = vunpack.c.l.b16 %v6248
    %v6332 = vunpack.c.h.b16 %v6248
    %v6333 = vunpack.c.l.b16 %v6249
    %v6334 = vunpack.c.h.b16 %v6249
    %v6335 = vunpack.c.l.b16 %v6250
    %v6336 = vunpack.c.h.b16 %v6250
    %v6337 = vunpack.c.l.b16 %v6251
    %v6338 = vunpack.c.h.b16 %v6251
    %v6339 = vunpack.c.l.b16 %v6252
    %v6340 = vunpack.c.h.b16 %v6252
    %v6341 = vunpack.c.l.b16 %v6253
    %v6342 = vunpack.c.h.b16 %v6253
    %v6343 = vunpack.c.l.b16 %v6254
    %v6344 = vunpack.c.h.b16 %v6254
    %v6345 = vunpack.c.l.b16 %v6255
    %v6346 = vunpack.c.h.b16 %v6255
    %v6347 = vunpack.c.l.b16 %v6256
    %v6348 = vunpack.c.h.b16 %v6256
    %v6349 = vunpack.c.l.b16 %v6257
    %v6350 = vunpack.c.h.b16 %v6257
    %v6351 = vunpack.c.l.b16 %v6258
    %v6352 = vunpack.c.h.b16 %v6258
    %v6353 = vunpack.c.l.b16 %v6259
    %v6354 = vunpack.c.h.b16 %v6259
    %v6355 = vunpack.c.l.b16 %v6260
    %v6356 = vunpack.c.h.b16 %v6260
    %v6357 = vunpack.c.l.b16 %v6261
    %v6358 = vunpack.c.h.b16 %v6261
    %v6359 = vunpack.c.l.b16 %v6262
    %v6360 = vunpack.c.h.b16 %v6262
    %v6361 = vunpack.c.l.b16 %v6263
    %v6362 = vunpack.c.h.b16 %v6263
    %v6363 = vunpack.c.l.b16 %v6264
    %v6364 = vunpack.c.h.b16 %v6264
    %v6365 = vunpack.c.l.b16 %v6265
    %v6366 = vunpack.c.h.b16 %v6265
    %v6367 = vunpack.c.l.b16 %v6266
    %v6368 = vunpack.c.h.b16 %v6266
    %v6369 = vunpack.c.l.b16 %v6267
    %v6370 = vunpack.c.h.b16 %v6267
    %v6371 = vunpack.c.l.b16 %v6268
    %v6372 = vunpack.c.h.b16 %v6268
    %v6373 = vunpack.c.l.b16 %v6269
    %v6374 = vunpack.c.h.b16 %v6269
    %v6375 = vunpack.c.l.b16 %v6270
    %v6376 = vunpack.c.h.b16 %v6270
    %v6377 = vpack.c.b16 %v6317, %v6313
    %v6378 = vpack.c.b16 %v6318, %v6314
    %v6379 = vpack.c.b16 %v6319, %v6315
    %v6380 = vpack.c.b16 %v6320, %v6316
    %v6381 = vpack.c.b16 %v6325, %v6321
    %v6382 = vpack.c.b16 %v6326, %v6322
    %v6383 = vpack.c.b16 %v6327, %v6323
    %v6384 = vpack.c.b16 %v6328, %v6324
    %v6385 = vpack.c.b16 %v6333, %v6329
    %v6386 = vpack.c.b16 %v6334, %v6330
    %v6387 = vpack.c.b16 %v6335, %v6331
    %v6388 = vpack.c.b16 %v6336, %v6332
    %v6389 = vpack.c.b16 %v6341, %v6337
    %v6390 = vpack.c.b16 %v6342, %v6338
    %v6391 = vpack.c.b16 %v6343, %v6339
    %v6392 = vpack.c.b16 %v6344, %v6340
    %v6393 = vpack.c.b16 %v6349, %v6345
    %v6394 = vpack.c.b16 %v6350, %v6346
    %v6395 = vpack.c.b16 %v6351, %v6347
    %v6396 = vpack.c.b16 %v6352, %v6348
    %v6397 = vpack.c.b16 %v6357, %v6353
    %v6398 = vpack.c.b16 %v6358, %v6354
    %v6399 = vpack.c.b16 %v6359, %v6355
    %v6400 = vpack.c.b16 %v6360, %v6356
    %v6401 = vpack.c.b16 %v6365, %v6361
    %v6402 = vpack.c.b16 %v6366, %v6362
    %v6403 = vpack.c.b16 %v6367, %v6363
    %v6404 = vpack.c.b16 %v6368, %v6364
    %v6405 = vpack.c.b16 %v6373, %v6369
    %v6406 = vpack.c.b16 %v6374, %v6370
    %v6407 = vpack.c.b16 %v6375, %v6371
    %v6408 = vpack.c.b16 %v6376, %v6372
    %6441 = vmatpush.bf16.msra.mxu0 %v6405
    %6442 = vmatpush.bf16.msra.mxu0 %v6401
    %6443 = vmatpush.bf16.msra.mxu0 %v6397
    %6444 = vmatpush.bf16.msra.mxu0 %v6393
    %6445 = vmatpush.bf16.msra.mxu0 %v6389
    %6446 = vmatpush.bf16.msra.mxu0 %v6385
    %6447 = vmatpush.bf16.msra.mxu0 %v6381
    %6448 = vmatpush.bf16.msra.mxu0 %v6377
    %6449 = vmatmul.bf16.gmra.mxu0 %v6238
    %v6450 = vpop.f32.mrf.mxu0
    %v6451 = vadd.f32 %v6273, %v6450
    %v6452 = vpop.f32.mrf.mxu0
    %6453 = vdwg.mxu0
    %6454 = vmatpush.bf16.msra.mxu0 %v6406
    %6455 = vmatpush.bf16.msra.mxu0 %v6402
    %6456 = vmatpush.bf16.msra.mxu0 %v6398
    %6457 = vmatpush.bf16.msra.mxu0 %v6394
    %6458 = vmatpush.bf16.msra.mxu0 %v6390
    %6459 = vmatpush.bf16.msra.mxu0 %v6386
    %6460 = vmatpush.bf16.msra.mxu0 %v6382
    %6461 = vmatpush.bf16.msra.mxu0 %v6378
    %6462 = vmatmul.bf16.gmra.mxu0 %v6238
    %v6463 = vpop.f32.mrf.mxu0
    %v6464 = vadd.f32 %v6274, %v6463
    %v6465 = vpop.f32.mrf.mxu0
    %6466 = vdwg.mxu0
    %6467 = vmatpush.bf16.msra.mxu0 %v6407
    %6468 = vmatpush.bf16.msra.mxu0 %v6403
    %6469 = vmatpush.bf16.msra.mxu0 %v6399
    %6470 = vmatpush.bf16.msra.mxu0 %v6395
    %6471 = vmatpush.bf16.msra.mxu0 %v6391
    %6472 = vmatpush.bf16.msra.mxu0 %v6387
    %6473 = vmatpush.bf16.msra.mxu0 %v6383
    %6474 = vmatpush.bf16.msra.mxu0 %v6379
    %6475 = vmatmul.bf16.gmra.mxu0 %v6238
    %v6476 = vpop.f32.mrf.mxu0
    %v6477 = vadd.f32 %v6275, %v6476
    %v6478 = vpop.f32.mrf.mxu0
    %6479 = vdwg.mxu0
    %6480 = vmatpush.bf16.msra.mxu0 %v6408
    %6481 = vmatpush.bf16.msra.mxu0 %v6404
    %6482 = vmatpush.bf16.msra.mxu0 %v6400
    %6483 = vmatpush.bf16.msra.mxu0 %v6396
    %6484 = vmatpush.bf16.msra.mxu0 %v6392
    %6485 = vmatpush.bf16.msra.mxu0 %v6388
    %6486 = vmatpush.bf16.msra.mxu0 %v6384
    %6487 = vmatpush.bf16.msra.mxu0 %v6380
    %6488 = vmatmul.bf16.gmra.mxu0 %v6238
    %v6489 = vpop.f32.mrf.mxu0
    %v6490 = vadd.f32 %v6276, %v6489
    %v6491 = vpop.f32.mrf.mxu0
    %6492 = vdwg.mxu0
    %v6493 = vld [vmem:[#allocation14] sm:$0xff]
    %v6494 = vld [vmem:[#allocation14 + $0x8] sm:$0xf]
    %v6495 = vld [vmem:[#allocation14 + $0xc] sm:$0xff]
    %v6496 = vld [vmem:[#allocation14 + $0x14] sm:$0xf]
    %v6497 = vld [vmem:[#allocation14 + $0x18] sm:$0xff]
    %v6498 = vld [vmem:[#allocation14 + $0x20] sm:$0xf]
    %v6499 = vld [vmem:[#allocation14 + $0x24] sm:$0xff]
    %v6500 = vld [vmem:[#allocation14 + $0x2c] sm:$0xf]
    %v6501 = vld [vmem:[#allocation14 + $0x30] sm:$0xff]
    %v6502 = vld [vmem:[#allocation14 + $0x38] sm:$0xf]
    %v6503 = vld [vmem:[#allocation14 + $0x3c] sm:$0xff]
    %v6504 = vld [vmem:[#allocation14 + $0x44] sm:$0xf]
    %v6505 = vld [vmem:[#allocation14 + $0x48] sm:$0xff]
    %v6506 = vld [vmem:[#allocation14 + $0x50] sm:$0xf]
    %v6507 = vld [vmem:[#allocation14 + $0x54] sm:$0xff]
    %v6508 = vld [vmem:[#allocation14 + $0x5c] sm:$0xf]
    %v6509 = vld [vmem:[#allocation14 + $0x60] sm:$0xff]
    %v6510 = vld [vmem:[#allocation14 + $0x68] sm:$0xf]
    %v6511 = vld [vmem:[#allocation14 + $0x6c] sm:$0xff]
    %v6512 = vld [vmem:[#allocation14 + $0x74] sm:$0xf]
    %v6513 = vld [vmem:[#allocation14 + $0x78] sm:$0xff]
    %v6514 = vld [vmem:[#allocation14 + $0x80] sm:$0xf]
    %v6515 = vld [vmem:[#allocation14 + $0x84] sm:$0xff]
    %v6516 = vld [vmem:[#allocation14 + $0x8c] sm:$0xf]
    %v6517 = vld [vmem:[#allocation14 + $0x90] sm:$0xff]
    %v6518 = vld [vmem:[#allocation14 + $0x98] sm:$0xf]
    %v6519 = vld [vmem:[#allocation14 + $0x9c] sm:$0xff]
    %v6520 = vld [vmem:[#allocation14 + $0xa4] sm:$0xf]
    %v6521 = vld [vmem:[#allocation14 + $0xa8] sm:$0xff]
    %v6522 = vld [vmem:[#allocation14 + $0xb0] sm:$0xf]
    %v6523 = vld [vmem:[#allocation14 + $0xb4] sm:$0xff]
    %v6524 = vld [vmem:[#allocation14 + $0xbc] sm:$0xf]
    %v6525 = vld [vmem:[%s15] sm:$0x7]
    %v6527 = vperm.slane %v6525, 0
    %v6528 = vperm.slane %v6525, 1
    %v6529 = vperm.slane %v6525, 2
    %v6565 = vunpack.c.l.b16 %v6493
    %v6566 = vunpack.c.h.b16 %v6493
    %v6567 = vunpack.c.l.b16 %v6494
    %v6568 = vunpack.c.l.b16 %v6495
    %v6569 = vunpack.c.h.b16 %v6495
    %v6570 = vunpack.c.l.b16 %v6496
    %v6571 = vunpack.c.l.b16 %v6497
    %v6572 = vunpack.c.h.b16 %v6497
    %v6573 = vunpack.c.l.b16 %v6498
    %v6574 = vunpack.c.l.b16 %v6499
    %v6575 = vunpack.c.h.b16 %v6499
    %v6576 = vunpack.c.l.b16 %v6500
    %v6577 = vunpack.c.l.b16 %v6501
    %v6578 = vunpack.c.h.b16 %v6501
    %v6579 = vunpack.c.l.b16 %v6502
    %v6580 = vunpack.c.l.b16 %v6503
    %v6581 = vunpack.c.h.b16 %v6503
    %v6582 = vunpack.c.l.b16 %v6504
    %v6583 = vunpack.c.l.b16 %v6505
    %v6584 = vunpack.c.h.b16 %v6505
    %v6585 = vunpack.c.l.b16 %v6506
    %v6586 = vunpack.c.l.b16 %v6507
    %v6587 = vunpack.c.h.b16 %v6507
    %v6588 = vunpack.c.l.b16 %v6508
    %v6589 = vunpack.c.l.b16 %v6509
    %v6590 = vunpack.c.h.b16 %v6509
    %v6591 = vunpack.c.l.b16 %v6510
    %v6592 = vunpack.c.l.b16 %v6511
    %v6593 = vunpack.c.h.b16 %v6511
    %v6594 = vunpack.c.l.b16 %v6512
    %v6595 = vunpack.c.l.b16 %v6513
    %v6596 = vunpack.c.h.b16 %v6513
    %v6597 = vunpack.c.l.b16 %v6514
    %v6598 = vunpack.c.l.b16 %v6515
    %v6599 = vunpack.c.h.b16 %v6515
    %v6600 = vunpack.c.l.b16 %v6516
    %v6601 = vunpack.c.l.b16 %v6517
    %v6602 = vunpack.c.h.b16 %v6517
    %v6603 = vunpack.c.l.b16 %v6518
    %v6604 = vunpack.c.l.b16 %v6519
    %v6605 = vunpack.c.h.b16 %v6519
    %v6606 = vunpack.c.l.b16 %v6520
    %v6607 = vunpack.c.l.b16 %v6521
    %v6608 = vunpack.c.h.b16 %v6521
    %v6609 = vunpack.c.l.b16 %v6522
    %v6610 = vunpack.c.l.b16 %v6523
    %v6611 = vunpack.c.h.b16 %v6523
    %v6612 = vunpack.c.l.b16 %v6524
    %v6613 = vpack.c.b16 %v6568, %v6565
    %v6614 = vpack.c.b16 %v6569, %v6566
    %v6615 = vpack.c.b16 %v6570, %v6567
    %v6616 = vpack.c.b16 %v6574, %v6571
    %v6617 = vpack.c.b16 %v6575, %v6572
    %v6618 = vpack.c.b16 %v6576, %v6573
    %v6619 = vpack.c.b16 %v6580, %v6577
    %v6620 = vpack.c.b16 %v6581, %v6578
    %v6621 = vpack.c.b16 %v6582, %v6579
    %v6622 = vpack.c.b16 %v6586, %v6583
    %v6623 = vpack.c.b16 %v6587, %v6584
    %v6624 = vpack.c.b16 %v6588, %v6585
    %v6625 = vpack.c.b16 %v6592, %v6589
    %v6626 = vpack.c.b16 %v6593, %v6590
    %v6627 = vpack.c.b16 %v6594, %v6591
    %v6628 = vpack.c.b16 %v6598, %v6595
    %v6629 = vpack.c.b16 %v6599, %v6596
    %v6630 = vpack.c.b16 %v6600, %v6597
    %v6631 = vpack.c.b16 %v6604, %v6601
    %v6632 = vpack.c.b16 %v6605, %v6602
    %v6633 = vpack.c.b16 %v6606, %v6603
    %v6634 = vpack.c.b16 %v6610, %v6607
    %v6635 = vpack.c.b16 %v6611, %v6608
    %v6636 = vpack.c.b16 %v6612, %v6609
    %6661 = vmatpush.bf16.msra.mxu0 %v6634
    %6662 = vmatpush.bf16.msra.mxu0 %v6631
    %6663 = vmatpush.bf16.msra.mxu0 %v6628
    %6664 = vmatpush.bf16.msra.mxu0 %v6625
    %6665 = vmatpush.bf16.msra.mxu0 %v6622
    %6666 = vmatpush.bf16.msra.mxu0 %v6619
    %6667 = vmatpush.bf16.msra.mxu0 %v6616
    %6668 = vmatpush.bf16.msra.mxu0 %v6613
    %6669 = vmatmul.bf16.gmra.mxu0 %v5582
    %v6670 = vpop.f32.mrf.mxu0
    %v6671 = vadd.f32 %v6527, %v6670
    %v6672 = vpop.f32.mrf.mxu0
    %6673 = vdwg.mxu0
    %6674 = vmatpush.bf16.msra.mxu0 %v6635
    %6675 = vmatpush.bf16.msra.mxu0 %v6632
    %6676 = vmatpush.bf16.msra.mxu0 %v6629
    %6677 = vmatpush.bf16.msra.mxu0 %v6626
    %6678 = vmatpush.bf16.msra.mxu0 %v6623
    %6679 = vmatpush.bf16.msra.mxu0 %v6620
    %6680 = vmatpush.bf16.msra.mxu0 %v6617
    %6681 = vmatpush.bf16.msra.mxu0 %v6614
    %6682 = vmatmul.bf16.gmra.mxu0 %v5582
    %v6683 = vpop.f32.mrf.mxu0
    %v6684 = vadd.f32 %v6528, %v6683
    %v6685 = vpop.f32.mrf.mxu0
    %6686 = vdwg.mxu0
    %6687 = vmatpush.bf16.msra.mxu0 %v6636
    %6688 = vmatpush.bf16.msra.mxu0 %v6633
    %6689 = vmatpush.bf16.msra.mxu0 %v6630
    %6690 = vmatpush.bf16.msra.mxu0 %v6627
    %6691 = vmatpush.bf16.msra.mxu0 %v6624
    %6692 = vmatpush.bf16.msra.mxu0 %v6621
    %6693 = vmatpush.bf16.msra.mxu0 %v6618
    %6694 = vmatpush.bf16.msra.mxu0 %v6615
    %6695 = vmatmul.bf16.gmra.mxu0 %v5582
    %v6696 = vpop.f32.mrf.mxu0
    %v6697 = vadd.f32 %v6529, %v6696
    %v6698 = vpop.f32.mrf.mxu0
    %6699 = vdwg.mxu0
    %v6700 = vadd.f32 %v6451, %v6671
    %v6701 = vsub.f32 0.0, %v6700
    %v6702 = vmul.f32 %v6701, 1.442695
    %v6703 = vpow.pop %v6702
    %v6704 = vadd.f32 %v6703, 1.0
    %v6705 = vrcp.pop %v6704
    %v6706 = vmul.f32 %v6704, %v6705
    %v6707 = vsub.f32 1.0, %v6706
    %v6708 = vmul.f32 %v6705, %v6707
    %v6709 = vadd.f32 %v6705, %v6708
    %vm6710 = vweird.f32 %v6704
    %vm6711 = vweird.f32 %v6705
    %vm6712 = vmor %vm6710, %vm6711
    %v6713 = vsel %vm6712, %v6705, %v6709
    %v6714 = vand.u32 2147483647, %v6704
    %vm6715 = vcmp.eq.f32.partialorder %v6714, 8.507059e+37
    %v6716 = vand.u32 %v6704, 2147483648
    %v6717 = vor.u32 1.1754944e-38, %v6716
    %v6718 = vsel %vm6715, %v6717, %v6713
    %v6719 = vmul.f32 1.0, %v6718
    %v6720 = vadd.f32 %v6464, %v6684
    %v6721 = vsub.f32 0.0, %v6720
    %v6722 = vmul.f32 %v6721, 1.442695
    %v6723 = vpow.pop %v6722
    %v6724 = vadd.f32 %v6723, 1.0
    %v6725 = vrcp.pop %v6724
    %v6726 = vmul.f32 %v6724, %v6725
    %v6727 = vsub.f32 1.0, %v6726
    %v6728 = vmul.f32 %v6725, %v6727
    %v6729 = vadd.f32 %v6725, %v6728
    %vm6730 = vweird.f32 %v6724
    %vm6731 = vweird.f32 %v6725
    %vm6732 = vmor %vm6730, %vm6731
    %v6733 = vsel %vm6732, %v6725, %v6729
    %v6734 = vand.u32 2147483647, %v6724
    %vm6735 = vcmp.eq.f32.partialorder %v6734, 8.507059e+37
    %v6736 = vand.u32 %v6724, 2147483648
    %v6737 = vor.u32 1.1754944e-38, %v6736
    %v6738 = vsel %vm6735, %v6737, %v6733
    %v6739 = vmul.f32 1.0, %v6738
    %v6740 = vmul.f32 %v6719, %v6697
    %v6741 = vadd.f32 %v6477, %v6740
    %v6742 = vtanh.pop %v6741
    %v6743 = vsub.f32 1.0, %v6739
    %v6744 = vmul.f32 %v6743, %v6742
    %v6745 = vmul.f32 %v6739, %v5581
    %v6746 = vadd.f32 %v6744, %v6745
    %v6747 = vpack.c.bf16 %v6746, %v6746
    %v6748 = vld [vmem:[#allocation15] sm:$0xff]
    %v6749 = vld [vmem:[#allocation15 + $0x8] sm:$0xf]
    %v6750 = vld [vmem:[#allocation15 + $0xc] sm:$0xff]
    %v6751 = vld [vmem:[#allocation15 + $0x14] sm:$0xf]
    %v6752 = vld [vmem:[#allocation15 + $0x18] sm:$0xff]
    %v6753 = vld [vmem:[#allocation15 + $0x20] sm:$0xf]
    %v6754 = vld [vmem:[#allocation15 + $0x24] sm:$0xff]
    %v6755 = vld [vmem:[#allocation15 + $0x2c] sm:$0xf]
    %v6756 = vld [vmem:[#allocation15 + $0x30] sm:$0xff]
    %v6757 = vld [vmem:[#allocation15 + $0x38] sm:$0xf]
    %v6758 = vld [vmem:[#allocation15 + $0x3c] sm:$0xff]
    %v6759 = vld [vmem:[#allocation15 + $0x44] sm:$0xf]
    %v6760 = vld [vmem:[#allocation15 + $0x48] sm:$0xff]
    %v6761 = vld [vmem:[#allocation15 + $0x50] sm:$0xf]
    %v6762 = vld [vmem:[#allocation15 + $0x54] sm:$0xff]
    %v6763 = vld [vmem:[#allocation15 + $0x5c] sm:$0xf]
    %v6764 = vld [vmem:[#allocation15 + $0x60] sm:$0xff]
    %v6765 = vld [vmem:[#allocation15 + $0x68] sm:$0xf]
    %v6766 = vld [vmem:[#allocation15 + $0x6c] sm:$0xff]
    %v6767 = vld [vmem:[#allocation15 + $0x74] sm:$0xf]
    %v6768 = vld [vmem:[#allocation15 + $0x78] sm:$0xff]
    %v6769 = vld [vmem:[#allocation15 + $0x80] sm:$0xf]
    %v6770 = vld [vmem:[#allocation15 + $0x84] sm:$0xff]
    %v6771 = vld [vmem:[#allocation15 + $0x8c] sm:$0xf]
    %v6772 = vld [vmem:[#allocation15 + $0x90] sm:$0xff]
    %v6773 = vld [vmem:[#allocation15 + $0x98] sm:$0xf]
    %v6774 = vld [vmem:[#allocation15 + $0x9c] sm:$0xff]
    %v6775 = vld [vmem:[#allocation15 + $0xa4] sm:$0xf]
    %v6776 = vld [vmem:[#allocation15 + $0xa8] sm:$0xff]
    %v6777 = vld [vmem:[#allocation15 + $0xb0] sm:$0xf]
    %v6778 = vld [vmem:[#allocation15 + $0xb4] sm:$0xff]
    %v6779 = vld [vmem:[#allocation15 + $0xbc] sm:$0xf]
    %v6812 = vunpack.c.l.b16 %v6748
    %v6813 = vunpack.c.h.b16 %v6748
    %v6814 = vunpack.c.l.b16 %v6749
    %v6815 = vunpack.c.l.b16 %v6750
    %v6816 = vunpack.c.h.b16 %v6750
    %v6817 = vunpack.c.l.b16 %v6751
    %v6818 = vunpack.c.l.b16 %v6752
    %v6819 = vunpack.c.h.b16 %v6752
    %v6820 = vunpack.c.l.b16 %v6753
    %v6821 = vunpack.c.l.b16 %v6754
    %v6822 = vunpack.c.h.b16 %v6754
    %v6823 = vunpack.c.l.b16 %v6755
    %v6824 = vunpack.c.l.b16 %v6756
    %v6825 = vunpack.c.h.b16 %v6756
    %v6826 = vunpack.c.l.b16 %v6757
    %v6827 = vunpack.c.l.b16 %v6758
    %v6828 = vunpack.c.h.b16 %v6758
    %v6829 = vunpack.c.l.b16 %v6759
    %v6830 = vunpack.c.l.b16 %v6760
    %v6831 = vunpack.c.h.b16 %v6760
    %v6832 = vunpack.c.l.b16 %v6761
    %v6833 = vunpack.c.l.b16 %v6762
    %v6834 = vunpack.c.h.b16 %v6762
    %v6835 = vunpack.c.l.b16 %v6763
    %v6836 = vunpack.c.l.b16 %v6764
    %v6837 = vunpack.c.h.b16 %v6764
    %v6838 = vunpack.c.l.b16 %v6765
    %v6839 = vunpack.c.l.b16 %v6766
    %v6840 = vunpack.c.h.b16 %v6766
    %v6841 = vunpack.c.l.b16 %v6767
    %v6842 = vunpack.c.l.b16 %v6768
    %v6843 = vunpack.c.h.b16 %v6768
    %v6844 = vunpack.c.l.b16 %v6769
    %v6845 = vunpack.c.l.b16 %v6770
    %v6846 = vunpack.c.h.b16 %v6770
    %v6847 = vunpack.c.l.b16 %v6771
    %v6848 = vunpack.c.l.b16 %v6772
    %v6849 = vunpack.c.h.b16 %v6772
    %v6850 = vunpack.c.l.b16 %v6773
    %v6851 = vunpack.c.l.b16 %v6774
    %v6852 = vunpack.c.h.b16 %v6774
    %v6853 = vunpack.c.l.b16 %v6775
    %v6854 = vunpack.c.l.b16 %v6776
    %v6855 = vunpack.c.h.b16 %v6776
    %v6856 = vunpack.c.l.b16 %v6777
    %v6857 = vunpack.c.l.b16 %v6778
    %v6858 = vunpack.c.h.b16 %v6778
    %v6859 = vunpack.c.l.b16 %v6779
    %v6860 = vpack.c.b16 %v6815, %v6812
    %v6861 = vpack.c.b16 %v6816, %v6813
    %v6862 = vpack.c.b16 %v6817, %v6814
    %v6863 = vpack.c.b16 %v6821, %v6818
    %v6864 = vpack.c.b16 %v6822, %v6819
    %v6865 = vpack.c.b16 %v6823, %v6820
    %v6866 = vpack.c.b16 %v6827, %v6824
    %v6867 = vpack.c.b16 %v6828, %v6825
    %v6868 = vpack.c.b16 %v6829, %v6826
    %v6869 = vpack.c.b16 %v6833, %v6830
    %v6870 = vpack.c.b16 %v6834, %v6831
    %v6871 = vpack.c.b16 %v6835, %v6832
    %v6872 = vpack.c.b16 %v6839, %v6836
    %v6873 = vpack.c.b16 %v6840, %v6837
    %v6874 = vpack.c.b16 %v6841, %v6838
    %v6875 = vpack.c.b16 %v6845, %v6842
    %v6876 = vpack.c.b16 %v6846, %v6843
    %v6877 = vpack.c.b16 %v6847, %v6844
    %v6878 = vpack.c.b16 %v6851, %v6848
    %v6879 = vpack.c.b16 %v6852, %v6849
    %v6880 = vpack.c.b16 %v6853, %v6850
    %v6881 = vpack.c.b16 %v6857, %v6854
    %v6882 = vpack.c.b16 %v6858, %v6855
    %v6883 = vpack.c.b16 %v6859, %v6856
    %6908 = vmatpush.bf16.msra.mxu0 %v6881
    %6909 = vmatpush.bf16.msra.mxu0 %v6878
    %6910 = vmatpush.bf16.msra.mxu0 %v6875
    %6911 = vmatpush.bf16.msra.mxu0 %v6872
    %6912 = vmatpush.bf16.msra.mxu0 %v6869
    %6913 = vmatpush.bf16.msra.mxu0 %v6866
    %6914 = vmatpush.bf16.msra.mxu0 %v6863
    %6915 = vmatpush.bf16.msra.mxu0 %v6860
    %6916 = vmatmul.bf16.gmra.mxu0 %v6747
    %v6917 = vpop.f32.mrf.mxu0
    %v6918 = vadd.f32 0.0, %v6917
    %v6919 = vpop.f32.mrf.mxu0
    %6920 = vdwg.mxu0
    %6921 = vmatpush.bf16.msra.mxu0 %v6882
    %6922 = vmatpush.bf16.msra.mxu0 %v6879
    %6923 = vmatpush.bf16.msra.mxu0 %v6876
    %6924 = vmatpush.bf16.msra.mxu0 %v6873
    %6925 = vmatpush.bf16.msra.mxu0 %v6870
    %6926 = vmatpush.bf16.msra.mxu0 %v6867
    %6927 = vmatpush.bf16.msra.mxu0 %v6864
    %6928 = vmatpush.bf16.msra.mxu0 %v6861
    %6929 = vmatmul.bf16.gmra.mxu0 %v6747
    %v6930 = vpop.f32.mrf.mxu0
    %v6931 = vadd.f32 0.0, %v6930
    %v6932 = vpop.f32.mrf.mxu0
    %6933 = vdwg.mxu0
    %6934 = vmatpush.bf16.msra.mxu0 %v6883
    %6935 = vmatpush.bf16.msra.mxu0 %v6880
    %6936 = vmatpush.bf16.msra.mxu0 %v6877
    %6937 = vmatpush.bf16.msra.mxu0 %v6874
    %6938 = vmatpush.bf16.msra.mxu0 %v6871
    %6939 = vmatpush.bf16.msra.mxu0 %v6868
    %6940 = vmatpush.bf16.msra.mxu0 %v6865
    %6941 = vmatpush.bf16.msra.mxu0 %v6862
    %6942 = vmatmul.bf16.gmra.mxu0 %v6747
    %v6943 = vpop.f32.mrf.mxu0
    %v6944 = vadd.f32 0.0, %v6943
    %v6945 = vpop.f32.mrf.mxu0
    %6946 = vdwg.mxu0
    %v6947 = vpack.c.bf16 %v6918, %v6918
    %v6948 = vld [vmem:[%s5] sm:$0xf]
    %v6949 = vld [vmem:[%s5 + $0x4] sm:$0xf]
    %v6950 = vld [vmem:[%s5 + $0x8] sm:$0xf]
    %v6951 = vld [vmem:[%s5 + $0xc] sm:$0xf]
    %v6952 = vld [vmem:[%s5 + $0x10] sm:$0xf]
    %v6953 = vld [vmem:[%s5 + $0x14] sm:$0xf]
    %v6954 = vld [vmem:[%s5 + $0x18] sm:$0xf]
    %v6955 = vld [vmem:[%s5 + $0x1c] sm:$0xf]
    %v6956 = vld [vmem:[%s5 + $0x20] sm:$0xf]
    %v6957 = vld [vmem:[%s5 + $0x24] sm:$0xf]
    %v6958 = vld [vmem:[%s5 + $0x28] sm:$0xf]
    %v6959 = vld [vmem:[%s5 + $0x2c] sm:$0xf]
    %v6960 = vld [vmem:[%s5 + $0x30] sm:$0xf]
    %v6961 = vld [vmem:[%s5 + $0x34] sm:$0xf]
    %v6962 = vld [vmem:[%s5 + $0x38] sm:$0xf]
    %v6963 = vld [vmem:[%s5 + $0x3c] sm:$0xf]
    %v6980 = vunpack.c.l.b16 %v6948
    %v6981 = vunpack.c.l.b16 %v6949
    %v6982 = vunpack.c.l.b16 %v6950
    %v6983 = vunpack.c.l.b16 %v6951
    %v6984 = vunpack.c.l.b16 %v6952
    %v6985 = vunpack.c.l.b16 %v6953
    %v6986 = vunpack.c.l.b16 %v6954
    %v6987 = vunpack.c.l.b16 %v6955
    %v6988 = vunpack.c.l.b16 %v6956
    %v6989 = vunpack.c.l.b16 %v6957
    %v6990 = vunpack.c.l.b16 %v6958
    %v6991 = vunpack.c.l.b16 %v6959
    %v6992 = vunpack.c.l.b16 %v6960
    %v6993 = vunpack.c.l.b16 %v6961
    %v6994 = vunpack.c.l.b16 %v6962
    %v6995 = vunpack.c.l.b16 %v6963
    %v6996 = vpack.c.b16 %v6981, %v6980
    %v6997 = vpack.c.b16 %v6983, %v6982
    %v6998 = vpack.c.b16 %v6985, %v6984
    %v6999 = vpack.c.b16 %v6987, %v6986
    %v7000 = vpack.c.b16 %v6989, %v6988
    %v7001 = vpack.c.b16 %v6991, %v6990
    %v7002 = vpack.c.b16 %v6993, %v6992
    %v7003 = vpack.c.b16 %v6995, %v6994
    %7012 = vmatpush.bf16.msra.mxu0 %v7003
    %7013 = vmatpush.bf16.msra.mxu0 %v7002
    %7014 = vmatpush.bf16.msra.mxu0 %v7001
    %7015 = vmatpush.bf16.msra.mxu0 %v7000
    %7016 = vmatpush.bf16.msra.mxu0 %v6999
    %7017 = vmatpush.bf16.msra.mxu0 %v6998
    %7018 = vmatpush.bf16.msra.mxu0 %v6997
    %7019 = vmatpush.bf16.msra.mxu0 %v6996
    %7020 = vmatmul.bf16.gmra.mxu0 %v6947
    %v7021 = vpop.f32.mrf.mxu0
    %v7022 = vadd.f32 0.0, %v7021
    %v7023 = vpop.f32.mrf.mxu0
    %7024 = vdwg.mxu0
    %v7025 = vsel %vm1200, %v7022, -inf
    %7026 = vmax.xlane.f32.xlu0 %v7025
    %v7027 = vpop.xlane.xlu0 %7026
    %v7028 = vsub.f32 %v7022, %v7027
    %v7029 = vmul.f32 %v7028, 1.442695
    %v7030 = vpow.pop %v7029
    %v7031 = vsel %vm1200, %v7030, 0.0
    %7032 = vadd.xlane.f32.xlu0 %v7031
    %v7033 = vpop.xlane.xlu0 %7032
    %v7034 = vrcp.pop %v7033
    %v7035 = vmul.f32 %v7030, %v7034
    %v7036 = vpack.c.bf16 %v7035, %v7035
    %v7037 = vld [vmem:[#allocation6] sm:$0xf]
    %v7039 = vsel %vm1200, %v7036, 0
    %v7042 = vsel %vm1217, %v7037, 0
    %7044 = vmatpush.bf16.msra.mxu0 0
    %7045 = vmatpush.bf16.msra.mxu0 0
    %7046 = vmatpush.bf16.msra.mxu0 0
    %7047 = vmatpush.bf16.msra.mxu0 0
    %7048 = vmatpush.bf16.msra.mxu0 0
    %7049 = vmatpush.bf16.msra.mxu0 0
    %7050 = vmatpush.bf16.msra.mxu0 0
    %7051 = vmatpush.bf16.msra.mxu0 %v7042
    %7052 = vmatmul.bf16.gmra.mxu0 %v7039
    %v7053 = vpop.f32.mrf.mxu0
    %v7054 = vadd.f32 0.0, %v7053
    %v7055 = vpop.f32.mrf.mxu0
    %7056 = vdwg.mxu0
    %v7057 = vpack.c.bf16 %v7054, %v7054
    %v7058 = vld [vmem:[#allocation17] sm:$0xff]
    %v7059 = vld [vmem:[#allocation17 + $0x8] sm:$0xff]
    %v7060 = vld [vmem:[#allocation17 + $0x10] sm:$0xff]
    %v7061 = vld [vmem:[#allocation17 + $0x18] sm:$0xff]
    %v7062 = vld [vmem:[#allocation17 + $0x20] sm:$0xff]
    %v7063 = vld [vmem:[#allocation17 + $0x28] sm:$0xff]
    %v7064 = vld [vmem:[#allocation17 + $0x30] sm:$0xff]
    %v7065 = vld [vmem:[#allocation17 + $0x38] sm:$0xff]
    %v7066 = vld [vmem:[#allocation17 + $0x40] sm:$0xff]
    %v7067 = vld [vmem:[#allocation17 + $0x48] sm:$0xff]
    %v7068 = vld [vmem:[#allocation17 + $0x50] sm:$0xff]
    %v7069 = vld [vmem:[#allocation17 + $0x58] sm:$0xff]
    %v7070 = vld [vmem:[#allocation17 + $0x60] sm:$0xff]
    %v7071 = vld [vmem:[#allocation17 + $0x68] sm:$0xff]
    %v7072 = vld [vmem:[#allocation17 + $0x70] sm:$0xff]
    %v7073 = vld [vmem:[#allocation17 + $0x78] sm:$0xff]
    %v7090 = vunpack.c.l.b16 %v7058
    %v7091 = vunpack.c.h.b16 %v7058
    %v7092 = vunpack.c.l.b16 %v7059
    %v7093 = vunpack.c.h.b16 %v7059
    %v7094 = vunpack.c.l.b16 %v7060
    %v7095 = vunpack.c.h.b16 %v7060
    %v7096 = vunpack.c.l.b16 %v7061
    %v7097 = vunpack.c.h.b16 %v7061
    %v7098 = vunpack.c.l.b16 %v7062
    %v7099 = vunpack.c.h.b16 %v7062
    %v7100 = vunpack.c.l.b16 %v7063
    %v7101 = vunpack.c.h.b16 %v7063
    %v7102 = vunpack.c.l.b16 %v7064
    %v7103 = vunpack.c.h.b16 %v7064
    %v7104 = vunpack.c.l.b16 %v7065
    %v7105 = vunpack.c.h.b16 %v7065
    %v7106 = vunpack.c.l.b16 %v7066
    %v7107 = vunpack.c.h.b16 %v7066
    %v7108 = vunpack.c.l.b16 %v7067
    %v7109 = vunpack.c.h.b16 %v7067
    %v7110 = vunpack.c.l.b16 %v7068
    %v7111 = vunpack.c.h.b16 %v7068
    %v7112 = vunpack.c.l.b16 %v7069
    %v7113 = vunpack.c.h.b16 %v7069
    %v7114 = vunpack.c.l.b16 %v7070
    %v7115 = vunpack.c.h.b16 %v7070
    %v7116 = vunpack.c.l.b16 %v7071
    %v7117 = vunpack.c.h.b16 %v7071
    %v7118 = vunpack.c.l.b16 %v7072
    %v7119 = vunpack.c.h.b16 %v7072
    %v7120 = vunpack.c.l.b16 %v7073
    %v7121 = vunpack.c.h.b16 %v7073
    %v7122 = vpack.c.b16 %v7092, %v7090
    %v7123 = vpack.c.b16 %v7093, %v7091
    %v7124 = vpack.c.b16 %v7096, %v7094
    %v7125 = vpack.c.b16 %v7097, %v7095
    %v7126 = vpack.c.b16 %v7100, %v7098
    %v7127 = vpack.c.b16 %v7101, %v7099
    %v7128 = vpack.c.b16 %v7104, %v7102
    %v7129 = vpack.c.b16 %v7105, %v7103
    %v7130 = vpack.c.b16 %v7108, %v7106
    %v7131 = vpack.c.b16 %v7109, %v7107
    %v7132 = vpack.c.b16 %v7112, %v7110
    %v7133 = vpack.c.b16 %v7113, %v7111
    %v7134 = vpack.c.b16 %v7116, %v7114
    %v7135 = vpack.c.b16 %v7117, %v7115
    %v7136 = vpack.c.b16 %v7120, %v7118
    %v7137 = vpack.c.b16 %v7121, %v7119
    %7154 = vmatpush.bf16.msra.mxu0 %v7136
    %7155 = vmatpush.bf16.msra.mxu0 %v7134
    %7156 = vmatpush.bf16.msra.mxu0 %v7132
    %7157 = vmatpush.bf16.msra.mxu0 %v7130
    %7158 = vmatpush.bf16.msra.mxu0 %v7128
    %7159 = vmatpush.bf16.msra.mxu0 %v7126
    %7160 = vmatpush.bf16.msra.mxu0 %v7124
    %7161 = vmatpush.bf16.msra.mxu0 %v7122
    %7162 = vmatmul.bf16.gmra.mxu0 %v7057
    %v7163 = vpop.f32.mrf.mxu0
    %v7164 = vadd.f32 0.0, %v7163
    %v7165 = vpop.f32.mrf.mxu0
    %7166 = vdwg.mxu0
    %7167 = vmatpush.bf16.msra.mxu0 %v7137
    %7168 = vmatpush.bf16.msra.mxu0 %v7135
    %7169 = vmatpush.bf16.msra.mxu0 %v7133
    %7170 = vmatpush.bf16.msra.mxu0 %v7131
    %7171 = vmatpush.bf16.msra.mxu0 %v7129
    %7172 = vmatpush.bf16.msra.mxu0 %v7127
    %7173 = vmatpush.bf16.msra.mxu0 %v7125
    %7174 = vmatpush.bf16.msra.mxu0 %v7123
    %7175 = vmatmul.bf16.gmra.mxu0 %v7057
    %v7176 = vpop.f32.mrf.mxu0
    %v7177 = vadd.f32 0.0, %v7176
    %v7178 = vpop.f32.mrf.mxu0
    %7179 = vdwg.mxu0
    %v7180 = vadd.f32 %v6931, %v7164
    %v7181 = vld [vmem:[%s18] sm:$0x1]
    %v7183 = vperm.slane %v7181, 0
    %v7185 = vadd.f32 %v7180, %v7183
    %v7186 = vpack.c.bf16 %v7185, %v7185
    %v7187 = vld [vmem:[#allocation18] sm:$0xf]
    %v7188 = vld [vmem:[#allocation18 + $0x4] sm:$0xf]
    %v7189 = vld [vmem:[#allocation18 + $0x8] sm:$0xf]
    %v7190 = vld [vmem:[#allocation18 + $0xc] sm:$0xf]
    %v7191 = vld [vmem:[#allocation18 + $0x10] sm:$0xf]
    %v7192 = vld [vmem:[#allocation18 + $0x14] sm:$0xf]
    %v7193 = vld [vmem:[#allocation18 + $0x18] sm:$0xf]
    %v7194 = vld [vmem:[#allocation18 + $0x1c] sm:$0xf]
    %v7195 = vld [vmem:[#allocation18 + $0x20] sm:$0xf]
    %v7196 = vld [vmem:[#allocation18 + $0x24] sm:$0xf]
    %v7197 = vld [vmem:[#allocation18 + $0x28] sm:$0xf]
    %v7198 = vld [vmem:[#allocation18 + $0x2c] sm:$0xf]
    %v7199 = vld [vmem:[#allocation18 + $0x30] sm:$0xf]
    %v7200 = vld [vmem:[#allocation18 + $0x34] sm:$0xf]
    %v7201 = vld [vmem:[#allocation18 + $0x38] sm:$0xf]
    %v7202 = vld [vmem:[#allocation18 + $0x3c] sm:$0xf]
    %v7203 = vld [vmem:[%s20] sm:$0x1]
    %v7205 = vperm.slane %v7203, 0
    %v7223 = vunpack.c.l.b16 %v7187
    %v7224 = vunpack.c.l.b16 %v7188
    %v7225 = vunpack.c.l.b16 %v7189
    %v7226 = vunpack.c.l.b16 %v7190
    %v7227 = vunpack.c.l.b16 %v7191
    %v7228 = vunpack.c.l.b16 %v7192
    %v7229 = vunpack.c.l.b16 %v7193
    %v7230 = vunpack.c.l.b16 %v7194
    %v7231 = vunpack.c.l.b16 %v7195
    %v7232 = vunpack.c.l.b16 %v7196
    %v7233 = vunpack.c.l.b16 %v7197
    %v7234 = vunpack.c.l.b16 %v7198
    %v7235 = vunpack.c.l.b16 %v7199
    %v7236 = vunpack.c.l.b16 %v7200
    %v7237 = vunpack.c.l.b16 %v7201
    %v7238 = vunpack.c.l.b16 %v7202
    %v7239 = vpack.c.b16 %v7224, %v7223
    %v7240 = vpack.c.b16 %v7226, %v7225
    %v7241 = vpack.c.b16 %v7228, %v7227
    %v7242 = vpack.c.b16 %v7230, %v7229
    %v7243 = vpack.c.b16 %v7232, %v7231
    %v7244 = vpack.c.b16 %v7234, %v7233
    %v7245 = vpack.c.b16 %v7236, %v7235
    %v7246 = vpack.c.b16 %v7238, %v7237
    %7255 = vmatpush.bf16.msra.mxu0 %v7246
    %7256 = vmatpush.bf16.msra.mxu0 %v7245
    %7257 = vmatpush.bf16.msra.mxu0 %v7244
    %7258 = vmatpush.bf16.msra.mxu0 %v7243
    %7259 = vmatpush.bf16.msra.mxu0 %v7242
    %7260 = vmatpush.bf16.msra.mxu0 %v7241
    %7261 = vmatpush.bf16.msra.mxu0 %v7240
    %7262 = vmatpush.bf16.msra.mxu0 %v7239
    %7263 = vmatmul.bf16.gmra.mxu0 %v7186
    %v7264 = vpop.f32.mrf.mxu0
    %v7265 = vadd.f32 %v7205, %v7264
    %v7266 = vpop.f32.mrf.mxu0
    %7267 = vdwg.mxu0
    %7268 = vmax.xlane.f32.xlu0 %v7265
    %v7269 = vpop.xlane.xlu0 %7268
    %v7270 = vsub.f32 %v7265, %v7269
    %v7271 = vmul.f32 %v7270, 1.442695
    %v7272 = vpow.pop %v7271
    %7273 = vadd.xlane.f32.xlu0 %v7272
    %v7274 = vpop.xlane.xlu0 %7273
    %v7275 = vrcp.pop %v7274
    %v7276 = vmul.f32 %v7272, %v7275
    %v7277 = vadd.f32 %v6490, %v6944
    %v7278 = vadd.f32 %v7277, %v7177
    %7279 = vadd.xlane.f32.xlu0 %v7278
    %v7280 = vpop.xlane.xlu0 %7279
    %v7281 = vsub.f32 0.0, %v7280
    %v7282 = vmul.f32 %v7281, 1.442695
    %v7283 = vpow.pop %v7282
    %v7284 = vadd.f32 %v7283, 1.0
    %v7285 = vrcp.pop %v7284
    %v7286 = vmul.f32 %v7284, %v7285
    %v7287 = vsub.f32 1.0, %v7286
    %v7288 = vmul.f32 %v7285, %v7287
    %v7289 = vadd.f32 %v7285, %v7288
    %vm7290 = vweird.f32 %v7284
    %vm7291 = vweird.f32 %v7285
    %vm7292 = vmor %vm7290, %vm7291
    %v7293 = vsel %vm7292, %v7285, %v7289
    %v7294 = vand.u32 2147483647, %v7284
    %vm7295 = vcmp.eq.f32.partialorder %v7294, 8.507059e+37
    %v7296 = vand.u32 %v7284, 2147483648
    %v7297 = vor.u32 1.1754944e-38, %v7296
    %v7298 = vsel %vm7295, %v7297, %v7293
    %v7299 = vmul.f32 1.0, %v7298
    %v7300 = vmul.f32 %v7276, %v7299
    %v7301 = vld [vmem:[#allocation3] sm:$0xff]
    %v7302 = vmul.f32 %v7300, %v7301
    %v7303 = vsub.f32 1.0, %v7299
    %v7304 = vmul.f32 %v7035, %v7303
    %v7305 = vpack.c.bf16 %v7304, %v7304
    %v7306 = vld [vmem:[%s6] sm:$0xf]
    %v7308 = vsel %vm1200, %v7305, 0
    %v7311 = vsel %vm1217, %v7306, 0
    %7313 = vmatpush.bf16.msra.mxu0 0
    %7314 = vmatpush.bf16.msra.mxu0 0
    %7315 = vmatpush.bf16.msra.mxu0 0
    %7316 = vmatpush.bf16.msra.mxu0 0
    %7317 = vmatpush.bf16.msra.mxu0 0
    %7318 = vmatpush.bf16.msra.mxu0 0
    %7319 = vmatpush.bf16.msra.mxu0 0
    %7320 = vmatpush.bf16.msra.mxu0 %v7311
    %7321 = vmatmul.bf16.gmra.mxu0 %v7308
    %v7322 = vpop.f32.mrf.mxu0
    %v7323 = vadd.f32 0.0, %v7322
    %v7324 = vpop.f32.mrf.mxu0
    %7325 = vdwg.mxu0
    %v7326 = vadd.f32 %v7302, %v7323
    %v7328 = vrot.slane %v7326, 1
    %v7329 = vrot.slane %v7326, 2
    %v7330 = vrot.slane %v7326, 3
    %v7331 = vrot.slane %v7326, 4
    %v7332 = vrot.slane %v7326, 5
    %v7333 = vrot.slane %v7326, 6
    %v7334 = vrot.slane %v7326, 7
    %v7342 = vpack.c.bf16 %v7326, %v7326
    %v7343 = vpack.c.bf16 %v7328, %v7328
    %v7344 = vpack.c.bf16 %v7329, %v7329
    %v7345 = vpack.c.bf16 %v7330, %v7330
    %v7346 = vpack.c.bf16 %v7331, %v7331
    %v7347 = vpack.c.bf16 %v7332, %v7332
    %v7348 = vpack.c.bf16 %v7333, %v7333
    %v7349 = vpack.c.bf16 %v7334, %v7334
    %v7351 = vshll.u32 %v7342, 16
    %v7353 = vrot.slane %v7351, 6
    %v7355 = vshll.u32 %v7343, 16
    %v7357 = vrot.slane %v7355, 6
    %v7359 = vshll.u32 %v7344, 16
    %v7361 = vrot.slane %v7359, 6
    %v7363 = vshll.u32 %v7345, 16
    %v7365 = vrot.slane %v7363, 6
    %v7367 = vshll.u32 %v7346, 16
    %v7369 = vrot.slane %v7367, 6
    %v7371 = vshll.u32 %v7347, 16
    %v7373 = vrot.slane %v7371, 6
    %v7375 = vshll.u32 %v7348, 16
    %v7377 = vrot.slane %v7375, 6
    %v7379 = vshll.u32 %v7349, 16
    %v7381 = vrot.slane %v7379, 6
    %vm7390 = vsmask.f32 7946
    %vm7391 = vmand %vm6209, %vm7390
    %v7392 = vld [vmem:[%s21] sm:$0x4]
    %v7393 = vsel %vm7391, %v7353, %v7392
    %7394 = vst [vmem:[%s21] sm:$0x4] %v7393
    %v7395 = vld [vmem:[%s21 + $0x4] sm:$0x4]
    %v7396 = vsel %vm7391, %v7357, %v7395
    %7397 = vst [vmem:[%s21 + $0x4] sm:$0x4] %v7396
    %v7398 = vld [vmem:[%s21 + $0x8] sm:$0x4]
    %v7399 = vsel %vm7391, %v7361, %v7398
    %7400 = vst [vmem:[%s21 + $0x8] sm:$0x4] %v7399
    %v7401 = vld [vmem:[%s21 + $0xc] sm:$0x4]
    %v7402 = vsel %vm7391, %v7365, %v7401
    %7403 = vst [vmem:[%s21 + $0xc] sm:$0x4] %v7402
    %v7404 = vld [vmem:[%s21 + $0x10] sm:$0x4]
    %v7405 = vsel %vm7391, %v7369, %v7404
    %7406 = vst [vmem:[%s21 + $0x10] sm:$0x4] %v7405
    %v7407 = vld [vmem:[%s21 + $0x14] sm:$0x4]
    %v7408 = vsel %vm7391, %v7373, %v7407
    %7409 = vst [vmem:[%s21 + $0x14] sm:$0x4] %v7408
    %v7410 = vld [vmem:[%s21 + $0x18] sm:$0x4]
    %v7411 = vsel %vm7391, %v7377, %v7410
    %7412 = vst [vmem:[%s21 + $0x18] sm:$0x4] %v7411
    %v7413 = vld [vmem:[%s21 + $0x1c] sm:$0x4]
    %v7414 = vsel %vm7391, %v7381, %v7413
    %7415 = vst [vmem:[%s21 + $0x1c] sm:$0x4] %v7414
    %7416 = vst [vmem:[#allocation2] sm:$0xff] %v6746
    // Predicated region
    $region130: #{tpu_custom_call.1} parent=1 // pred_check
      _
    $region131: #{tpu_custom_call.1} parent=1 // pred_check_branch
      %7418 = sbr.rel (0) target = $region133
    $region132: #{tpu_custom_call.1} parent=1 // pred_region
      _
    $region133: #{tpu_custom_call.1} parent=1 // pred_fallthru
      _
    // Predicated region
    $region134: #{tpu_custom_call.1} parent=1 // pred_check
      _
    $region135: #{tpu_custom_call.1} parent=1 // pred_check_branch
      %7420 = sbr.rel (0) target = $region137
    $region136: #{tpu_custom_call.1} parent=1 // pred_region
      _
    $region137: #{tpu_custom_call.1} parent=1 // pred_fallthru
      _
    %7421 = vsyncpa [#allocation5], 1
    %7422 = vsyncpa [#allocation7], 1
    %7423 = vsyncpa [#allocation10], 1
    %7424 = vsyncpa [#allocation13], 1
    %7425 = vsyncpa [#allocation16], 1
    %7426 = vsyncpa [#allocation19], 1

</llo_original>
